<compile_context>
chip_gen: v7x
topology: tpu7x:2x2x1
jax: 0.10.0
libtpu: 0.0.40
codegen_flags: <defaults>
</compile_context>

<pallas_src>
import math
from functools import partial

import jax
import jax.numpy as jnp
import numpy as np
from jax import lax
from jax.experimental import pallas as pl
from jax.experimental.pallas import tpu as pltpu


# ---------------------------------------------------------------------------
# Pallas kernel: one (batch-tile, class-tile) grid step.
# ---------------------------------------------------------------------------
def semantic_kernel(x_ref, w1t_ref, fwd_ref, w3a_ref, out_ref, fwh_ref, *,
                    gate_dtype):
    """Shapes per grid step:
      x_ref   : (TB, HW, C)  bf16   image features (NHWC, spatial flattened)
      w1t_ref : (C, D)       bf16   fc_1 weight, pre-transposed
      fwd_ref : (KT, D)      f32    fc_2(word_features) slice for this K tile
      w3a_ref : (1, D)       f32    folded fc_a ∘ fc_3 vector (wa @ W3)
      out_ref : (TB, KT, C)  f32
      fwh_ref : (TB, HW, D)  gate_dtype scratch holding fc_1 output
    """
    TB = x_ref.shape[0]

    # fc_1 on the MXU, once per batch tile; reused across the innermost
    # ("arbitrary") class-tile grid axis via the persistent VMEM scratch.
    @pl.when(pl.program_id(1) == 0)
    def _():
        w1t = w1t_ref[...]

        def init(b, carry):
            fwh_ref[b] = jnp.dot(
                x_ref[b], w1t, preferred_element_type=jnp.float32
            ).astype(fwh_ref.dtype)
            return carry

        lax.fori_loop(0, TB, init, 0, unroll=True)

    # Hoisted out of the per-batch loop: casts / broadcast shaping.
    fwd = fwd_ref[...].astype(gate_dtype)[:, None, :]       # (KT, 1, D)
    w3a = w3a_ref[...][None, :, :]                          # (1, 1, D) f32

    def body(b, carry):
        # tanh gate, bounded to one (KT, HW, D) tile (bf16 on v6e/v7x).
        t = jnp.tanh(fwh_ref[b][None, :, :] * fwd)          # (KT, HW, D)

        # Folded fc_3 ∘ fc_a contraction over D.  Multiplying by the f32 w3a
        # promotes to f32, so the lane reduction accumulates in f32.
        # (The additive constant b3·waᵀ + ba is uniform over the spatial
        #  softmax axis and was dropped in the fold — exact.)
        c = jnp.sum(t * w3a, axis=-1)                        # (KT, HW) f32

        # Spatial softmax along the lane (HW) axis.
        m = jnp.max(c, axis=-1, keepdims=True)               # (KT, 1)
        e = jnp.exp(c - m)                                   # (KT, HW)
        inv = pl.reciprocal(jnp.sum(e, axis=-1, keepdims=True), approx=True)

        # Weighted spatial pooling on the MXU: (KT, HW) @ (HW, C) -> (KT, C);
        # normalize the f32 accumulator afterwards.
        pooled = jnp.dot(e.astype(jnp.bfloat16), x_ref[b],
                         preferred_element_type=jnp.float32)  # (KT, C)
        out_ref[b] = pooled * inv
        return carry

    lax.fori_loop(0, TB, body, 0, unroll=True)


# ---------------------------------------------------------------------------
# Wrapper helpers
# ---------------------------------------------------------------------------
def _gate_dtype():
    """bf16 gate/tanh on chips with bf16 VPU/EUP (v6e, v7x); f32 otherwise."""
    try:
        kind = jax.devices()[0].device_kind.lower()
    except Exception:
        return jnp.float32
    if any(v in kind for v in ("v2", "v3", "v4", "v5")):
        return jnp.float32          # v5e and earlier: no bf16 VPU/EUP
    if "tpu" not in kind:
        return jnp.float32          # non-TPU fallback (interpret mode etc.)
    return jnp.bfloat16


def _pick_k_tile(K, max_tile=8):
    """Largest class-tile <= max_tile that divides K and keeps (8,128) tiling."""
    if K <= max_tile:
        return K
    for kt in range(max_tile, 0, -1):
        if K % kt == 0 and kt % 8 == 0:
            return kt
    return K


def _pick_b_tile(B, max_tile=4):
    """Batch elements per grid step; keep >=2 steps on the parallel axis."""
    candidates = [tb for tb in range(1, min(B, max_tile) + 1)
                  if B % tb == 0 and B // tb >= 2]
    return max(candidates) if candidates else B


def _vmem_limit_bytes(TB, KT, HW, C, D, gate_bytes):
    est = (2 * TB * HW * C * 2            # x block, bf16, double-buffered
           + 2 * TB * KT * C * 4          # out block, f32, double-buffered
           + 2 * C * D * 2                # w1t
           + 2 * KT * D * 4               # fwd tile
           + 2 * D * 4                    # w3a
           + TB * HW * D * gate_bytes     # fwh scratch
           + 2 * KT * HW * D * (gate_bytes + 4))   # gate temporaries / spill
    return min(max(int(est * 1.5) + (4 << 20), 32 << 20), 64 << 20)


# ---------------------------------------------------------------------------
# Wrapper
# ---------------------------------------------------------------------------
def semantic_forward(img_nchw, word_features, params):
    B, C, H, W = img_nchw.shape
    assert H == W, "module assumes a square feature map"
    HW = H * W
    K = word_features.shape[0]
    D = params["w3"].shape[0]

    gate_dtype = _gate_dtype()
    KT = _pick_k_tile(K)
    TB = _pick_b_tile(B)

    # NCHW -> NHWC -> (B, HW, C); bf16 MXU operand (f32 accumulation in-kernel).
    x = jnp.transpose(img_nchw, (0, 2, 3, 1)).reshape(B, HW, C)
    x = x.astype(jnp.bfloat16)

    # PyTorch Linear weights are (out, in); pre-transpose for x @ W^T.
    w1t = params["w1"].T.astype(jnp.bfloat16)                   # (C, D)

    # Hoisted, batch-invariant fc_2: (K, Wd) @ (Wd, D) -> (K, D).
    fwd = (word_features @ params["w2"].T).astype(jnp.float32)  # (K, D)

    # Fold fc_3 ∘ fc_a:  (t @ W3^T + b3) @ wa^T + ba == t @ (wa @ W3)^T + const;
    # the constant is uniform over the spatial softmax axis and cancels.
    w3a = (params["wa"] @ params["w3"]).reshape(1, D).astype(jnp.float32)

    kernel = partial(semantic_kernel, gate_dtype=gate_dtype)
    gate_bytes = jnp.dtype(gate_dtype).itemsize
    vmem_limit = _vmem_limit_bytes(TB, KT, HW, C, D, gate_bytes)

    def build(single_buffer_weights):
        def weight_spec(shape):
            kwargs = {}
            if single_buffer_weights:
                # Grid-invariant weights: no need for double buffering.
                kwargs["pipeline_mode"] = pl.Buffered(buffer_count=1)
            return pl.BlockSpec(shape, lambda b, k: (0,) * len(shape), **kwargs)

        grid_spec = pltpu.PrefetchScalarGridSpec(
            num_scalar_prefetch=0,
            grid=(B // TB, K // KT),          # class-tile axis innermost
            in_specs=[
                pl.BlockSpec((TB, HW, C), lambda b, k: (b, 0, 0)),
                weight_spec((C, D)),
                pl.BlockSpec((KT, D), lambda b, k: (k, 0)),
                weight_spec((1, D)),
            ],
            out_specs=pl.BlockSpec((TB, KT, C), lambda b, k: (b, k, 0)),
            scratch_shapes=[pltpu.VMEM((TB, HW, D), gate_dtype)],
        )
        return pl.pallas_call(
            kernel,
            out_shape=jax.ShapeDtypeStruct((B, K, C), jnp.float32),
            grid_spec=grid_spec,
            compiler_params=pltpu.CompilerParams(
                dimension_semantics=("parallel", "arbitrary"),
                vmem_limit_bytes=vmem_limit),
        )(x, w1t, fwd, w3a)

    try:
        return build(single_buffer_weights=True)
    except Exception:
        # Fallback if this Pallas version rejects pipeline_mode / Buffered(1);
        # default double-buffered weights are functionally identical.
        return build(single_buffer_weights=False)


# ---------------------------------------------------------------------------
# Pure-JAX reference mirroring the PyTorch forward exactly (unfused, f32,
# with the full fc_3 + fc_a path including both biases).
# ---------------------------------------------------------------------------
def semantic_ref(img_nchw, word_features, params):
    B, C, H, W = img_nchw.shape
    K = word_features.shape[0]
    D = params["w3"].shape[0]
    conv = W

    fm = jnp.transpose(img_nchw, (0, 2, 3, 1))                       # (B,H,W,C)
    f_wh = fm.reshape(B * conv * conv, C) @ params["w1"].T           # (N, D)
    f_wh = jnp.repeat(f_wh[:, None, :], K, axis=1)                   # (N, K, D)
    f_wd = (word_features @ params["w2"].T)[None]                    # (1, K, D)
    t = jnp.tanh(f_wh * f_wd).reshape(-1, D)
    lb = t @ params["w3"].T + params["b3"]
    coef = lb @ params["wa"].T + params["ba"]                        # (N*K, 1)
    coef = coef.reshape(B, conv, conv, K)
    coef = jnp.transpose(coef, (0, 3, 1, 2)).reshape(B, K, -1)
    coef = jax.nn.softmax(coef, axis=2).reshape(B, K, conv, conv)
    coef = jnp.transpose(coef, (0, 2, 3, 1))[..., None]              # (B,H,W,K,1)
    weighted = fm[:, :, :, None, :] * coef                           # (B,H,W,K,C)
    return weighted.sum(axis=(1, 2))                                 # (B, K, C)


# ---------------------------------------------------------------------------
# Deterministic parameter init (PyTorch-Linear-style uniform bounds)
# ---------------------------------------------------------------------------
def init_params(key, num_classes, image_feature_dim, word_feature_dim,
                intermediary_dim):
    def linear(k, out_dim, in_dim, bias):
        kw, kb = jax.random.split(k)
        bound = 1.0 / math.sqrt(in_dim)
        w = jax.random.uniform(kw, (out_dim, in_dim), jnp.float32, -bound, bound)
        b = (jax.random.uniform(kb, (out_dim,), jnp.float32, -bound, bound)
             if bias else None)
        return w, b

    k1, k2, k3, k4 = jax.random.split(key, 4)
    w1, _ = linear(k1, intermediary_dim, image_feature_dim, bias=False)
    w2, _ = linear(k2, intermediary_dim, word_feature_dim, bias=False)
    w3, b3 = linear(k3, intermediary_dim, intermediary_dim, bias=True)
    wa, ba = linear(k4, 1, intermediary_dim, bias=True)
    return {"w1": w1, "w2": w2, "w3": w3, "b3": b3, "wa": wa, "ba": ba}


if __name__ == "__main__":
    # Small shapes consistent with the module, chosen to exercise both the
    # batch-tile grid axis (B=4, TB=2) and the class-tile axis (K=16, KT=8).
    B = 4                    # batch
    C = 16                   # image_feature_dim (channels of NCHW feature map)
    H = W = 8                # convsize
    K = 16                   # num_classes
    WD = 32                  # word_feature_dim
    D = 128                  # intermediary_dim (PyTorch default 1024; the
                             # forward's hard-coded 1024 == intermediary_dim,
                             # so any consistent D preserves the semantics)

    key = jax.random.PRNGKey(0)
    k_img, k_word, k_par = jax.random.split(key, 3)
    img_feature_map = jax.random.normal(k_img, (B, C, H, W), jnp.float32)
    word_features = jax.random.normal(k_word, (K, WD), jnp.float32)
    params = init_params(k_par, K, C, WD, D)

    out = semantic_forward(img_feature_map, word_features, params)
    out = jax.block_until_ready(out)

    ref = jax.block_until_ready(semantic_ref(img_feature_map, word_features, params))
    assert out.shape == (B, K, C), out.shape
    np.testing.assert_allclose(np.asarray(out), np.asarray(ref),
                               rtol=2e-2, atol=2e-2)
    print("KERNEL_OK")
</pallas_src>

<mosaic_0001>
module attributes {stable_mosaic.version = 11 : i64} {
  func.func @semantic_kernel(%arg0: i32, %arg1: i32, %arg2: memref<2x64x16xbf16, #tpu.memory_space<vmem>>, %arg3: memref<16x128xbf16, #tpu.memory_space<vmem>>, %arg4: memref<8x128xf32, #tpu.memory_space<vmem>>, %arg5: memref<1x128xf32, #tpu.memory_space<vmem>>, %arg6: memref<2x8x16xf32, #tpu.memory_space<vmem>>, %arg7: memref<2x64x128xf32, #tpu.memory_space<vmem>>) attributes {dimension_semantics = [#tpu.dimension_semantics<parallel>, #tpu.dimension_semantics<arbitrary>], iteration_bounds = array<i64: 2, 2>, scalar_prefetch = 0 : i64, scratch_operands = 1 : i64, tpu.core_type = #tpu.core_type<tc>, window_params = [{transform_indices = @transform_0, window_bounds = array<i64: 2, 64, 16>}, {pipeline_mode = #tpu.pipeline_mode<synchronous>, transform_indices = @transform_1, window_bounds = array<i64: 16, 128>}, {transform_indices = @transform_2, window_bounds = array<i64: 8, 128>}, {pipeline_mode = #tpu.pipeline_mode<synchronous>, transform_indices = @transform_3, window_bounds = array<i64: 1, 128>}, {transform_indices = @transform_4, window_bounds = array<i64: 2, 8, 16>}]} {
    %c0_i32 = arith.constant 0 : i32
    %0 = arith.cmpi eq, %arg1, %c0_i32 : i32
    %1 = arith.extui %0 : i1 to i32
    %c0_i32_0 = arith.constant 0 : i32
    %2 = arith.cmpi ne, %1, %c0_i32_0 : i32
    scf.if %2 {
      %c0_24 = arith.constant 0 : index
      %c0_25 = arith.constant 0 : index
      %67 = vector.load %arg3[%c0_24, %c0_25] : memref<16x128xbf16, #tpu.memory_space<vmem>>, vector<16x128xbf16>
      %c0_i32_26 = arith.constant 0 : i32
      %68 = arith.index_cast %c0_i32_26 : i32 to index
      %c0_27 = arith.constant 0 : index
      %c0_28 = arith.constant 0 : index
      %69 = vector.load %arg2[%68, %c0_27, %c0_28] : memref<2x64x16xbf16, #tpu.memory_space<vmem>>, vector<1x64x16xbf16>
      %70 = vector.shape_cast %69 : vector<1x64x16xbf16> to vector<64x16xbf16>
      %cst_29 = arith.constant dense<0.000000e+00> : vector<64x128xf32>
      %71 = tpu.matmul %70, %67, %cst_29 {dimension_numbers = #tpu.dot_dimension_numbers<[1], [0], [0], [1], [0, 0, 1, 1], [], []>} : vector<64x16xbf16>, vector<16x128xbf16>, vector<64x128xf32> -> vector<64x128xf32>
      %72 = arith.index_cast %c0_i32_26 : i32 to index
      %c0_30 = arith.constant 0 : index
      %c0_31 = arith.constant 0 : index
      %73 = vector.load %arg7[%72, %c0_30, %c0_31] : memref<2x64x128xf32, #tpu.memory_space<vmem>>, vector<1x64x128xf32>
      %74 = vector.shape_cast %73 : vector<1x64x128xf32> to vector<64x128xf32>
      %75 = vector.shape_cast %71 : vector<64x128xf32> to vector<1x64x128xf32>
      tpu.vector_store %arg7[%72, %c0_30, %c0_31], %75 {strides = array<i32>} : memref<2x64x128xf32, #tpu.memory_space<vmem>>, vector<1x64x128xf32>,
      %c1_i32_32 = arith.constant 1 : i32
      %76 = arith.index_cast %c1_i32_32 : i32 to index
      %c0_33 = arith.constant 0 : index
      %c0_34 = arith.constant 0 : index
      %77 = vector.load %arg2[%76, %c0_33, %c0_34] : memref<2x64x16xbf16, #tpu.memory_space<vmem>>, vector<1x64x16xbf16>
      %78 = vector.shape_cast %77 : vector<1x64x16xbf16> to vector<64x16xbf16>
      %cst_35 = arith.constant dense<0.000000e+00> : vector<64x128xf32>
      %79 = tpu.matmul %78, %67, %cst_35 {dimension_numbers = #tpu.dot_dimension_numbers<[1], [0], [0], [1], [0, 0, 1, 1], [], []>} : vector<64x16xbf16>, vector<16x128xbf16>, vector<64x128xf32> -> vector<64x128xf32>
      %80 = arith.index_cast %c1_i32_32 : i32 to index
      %c0_36 = arith.constant 0 : index
      %c0_37 = arith.constant 0 : index
      %81 = vector.load %arg7[%80, %c0_36, %c0_37] : memref<2x64x128xf32, #tpu.memory_space<vmem>>, vector<1x64x128xf32>
      %82 = vector.shape_cast %81 : vector<1x64x128xf32> to vector<64x128xf32>
      %83 = vector.shape_cast %79 : vector<64x128xf32> to vector<1x64x128xf32>
      tpu.vector_store %arg7[%80, %c0_36, %c0_37], %83 {strides = array<i32>} : memref<2x64x128xf32, #tpu.memory_space<vmem>>, vector<1x64x128xf32>,
      %c2_i32_38 = arith.constant 2 : i32
    } else {
    }
    %c0 = arith.constant 0 : index
    %c0_1 = arith.constant 0 : index
    %3 = vector.load %arg4[%c0, %c0_1] : memref<8x128xf32, #tpu.memory_space<vmem>>, vector<8x128xf32>
    %4 = vector.shape_cast %3 : vector<8x128xf32> to vector<8x1x128xf32>
    %c0_2 = arith.constant 0 : index
    %c0_3 = arith.constant 0 : index
    %5 = vector.load %arg5[%c0_2, %c0_3] : memref<1x128xf32, #tpu.memory_space<vmem>>, vector<1x128xf32>
    %6 = vector.shape_cast %5 : vector<1x128xf32> to vector<1x1x128xf32>
    %c0_i32_4 = arith.constant 0 : i32
    %7 = arith.index_cast %c0_i32_4 : i32 to index
    %c0_5 = arith.constant 0 : index
    %c0_6 = arith.constant 0 : index
    %8 = vector.load %arg7[%7, %c0_5, %c0_6] : memref<2x64x128xf32, #tpu.memory_space<vmem>>, vector<1x64x128xf32>
    %9 = vector.shape_cast %8 : vector<1x64x128xf32> to vector<64x128xf32>
    %10 = vector.shape_cast %9 : vector<64x128xf32> to vector<1x64x128xf32>
    %11 = vector.broadcast %10 : vector<1x64x128xf32> to vector<8x64x128xf32>
    %12 = vector.broadcast %4 : vector<8x1x128xf32> to vector<8x64x128xf32>
    %13 = arith.mulf %11, %12 : vector<8x64x128xf32>
    %14 = math.tanh %13 : vector<8x64x128xf32>
    %15 = vector.broadcast %6 : vector<1x1x128xf32> to vector<8x64x128xf32>
    %16 = arith.mulf %14, %15 : vector<8x64x128xf32>
    %cst = arith.constant dense<0.000000e+00> : vector<8x64xf32>
    %17 = vector.multi_reduction <add>, %16, %cst [2] : vector<8x64x128xf32> to vector<8x64xf32>
    %cst_7 = arith.constant dense<0xFF800000> : vector<8xf32>
    %18 = vector.multi_reduction <maximumf>, %17, %cst_7 [1] : vector<8x64xf32> to vector<8xf32>
    %19 = vector.shape_cast %18 : vector<8xf32> to vector<8x1xf32>
    %20 = vector.broadcast %19 : vector<8x1xf32> to vector<8x64xf32>
    %21 = arith.subf %17, %20 : vector<8x64xf32>
    %22 = math.exp %21 : vector<8x64xf32>
    %cst_8 = arith.constant dense<0.000000e+00> : vector<8xf32>
    %23 = vector.multi_reduction <add>, %22, %cst_8 [1] : vector<8x64xf32> to vector<8xf32>
    %24 = vector.shape_cast %23 : vector<8xf32> to vector<8x1xf32>
    %25 = tpu.reciprocal %24 {approx = true} : vector<8x1xf32> -> vector<8x1xf32>
    %26 = arith.truncf %22 : vector<8x64xf32> to vector<8x64xbf16>
    %27 = arith.index_cast %c0_i32_4 : i32 to index
    %c0_9 = arith.constant 0 : index
    %c0_10 = arith.constant 0 : index
    %28 = vector.load %arg2[%27, %c0_9, %c0_10] : memref<2x64x16xbf16, #tpu.memory_space<vmem>>, vector<1x64x16xbf16>
    %29 = vector.shape_cast %28 : vector<1x64x16xbf16> to vector<64x16xbf16>
    %cst_11 = arith.constant dense<0.000000e+00> : vector<8x16xf32>
    %30 = tpu.matmul %26, %29, %cst_11 {dimension_numbers = #tpu.dot_dimension_numbers<[1], [0], [0], [1], [0, 0, 1, 1], [], []>} : vector<8x64xbf16>, vector<64x16xbf16>, vector<8x16xf32> -> vector<8x16xf32>
    %31 = vector.broadcast %25 : vector<8x1xf32> to vector<8x16xf32>
    %32 = arith.mulf %30, %31 : vector<8x16xf32>
    %33 = arith.index_cast %c0_i32_4 : i32 to index
    %c0_12 = arith.constant 0 : index
    %c0_13 = arith.constant 0 : index
    %34 = vector.load %arg6[%33, %c0_12, %c0_13] : memref<2x8x16xf32, #tpu.memory_space<vmem>>, vector<1x8x16xf32>
    %35 = vector.shape_cast %34 : vector<1x8x16xf32> to vector<8x16xf32>
    %36 = vector.shape_cast %32 : vector<8x16xf32> to vector<1x8x16xf32>
    tpu.vector_store %arg6[%33, %c0_12, %c0_13], %36 {strides = array<i32>} : memref<2x8x16xf32, #tpu.memory_space<vmem>>, vector<1x8x16xf32>,
    %c1_i32 = arith.constant 1 : i32
    %37 = arith.index_cast %c1_i32 : i32 to index
    %c0_14 = arith.constant 0 : index
    %c0_15 = arith.constant 0 : index
    %38 = vector.load %arg7[%37, %c0_14, %c0_15] : memref<2x64x128xf32, #tpu.memory_space<vmem>>, vector<1x64x128xf32>
    %39 = vector.shape_cast %38 : vector<1x64x128xf32> to vector<64x128xf32>
    %40 = vector.shape_cast %39 : vector<64x128xf32> to vector<1x64x128xf32>
    %41 = vector.broadcast %40 : vector<1x64x128xf32> to vector<8x64x128xf32>
    %42 = vector.broadcast %4 : vector<8x1x128xf32> to vector<8x64x128xf32>
    %43 = arith.mulf %41, %42 : vector<8x64x128xf32>
    %44 = math.tanh %43 : vector<8x64x128xf32>
    %45 = vector.broadcast %6 : vector<1x1x128xf32> to vector<8x64x128xf32>
    %46 = arith.mulf %44, %45 : vector<8x64x128xf32>
    %cst_16 = arith.constant dense<0.000000e+00> : vector<8x64xf32>
    %47 = vector.multi_reduction <add>, %46, %cst_16 [2] : vector<8x64x128xf32> to vector<8x64xf32>
    %cst_17 = arith.constant dense<0xFF800000> : vector<8xf32>
    %48 = vector.multi_reduction <maximumf>, %47, %cst_17 [1] : vector<8x64xf32> to vector<8xf32>
    %49 = vector.shape_cast %48 : vector<8xf32> to vector<8x1xf32>
    %50 = vector.broadcast %49 : vector<8x1xf32> to vector<8x64xf32>
    %51 = arith.subf %47, %50 : vector<8x64xf32>
    %52 = math.exp %51 : vector<8x64xf32>
    %cst_18 = arith.constant dense<0.000000e+00> : vector<8xf32>
    %53 = vector.multi_reduction <add>, %52, %cst_18 [1] : vector<8x64xf32> to vector<8xf32>
    %54 = vector.shape_cast %53 : vector<8xf32> to vector<8x1xf32>
    %55 = tpu.reciprocal %54 {approx = true} : vector<8x1xf32> -> vector<8x1xf32>
    %56 = arith.truncf %52 : vector<8x64xf32> to vector<8x64xbf16>
    %57 = arith.index_cast %c1_i32 : i32 to index
    %c0_19 = arith.constant 0 : index
    %c0_20 = arith.constant 0 : index
    %58 = vector.load %arg2[%57, %c0_19, %c0_20] : memref<2x64x16xbf16, #tpu.memory_space<vmem>>, vector<1x64x16xbf16>
    %59 = vector.shape_cast %58 : vector<1x64x16xbf16> to vector<64x16xbf16>
    %cst_21 = arith.constant dense<0.000000e+00> : vector<8x16xf32>
    %60 = tpu.matmul %56, %59, %cst_21 {dimension_numbers = #tpu.dot_dimension_numbers<[1], [0], [0], [1], [0, 0, 1, 1], [], []>} : vector<8x64xbf16>, vector<64x16xbf16>, vector<8x16xf32> -> vector<8x16xf32>
    %61 = vector.broadcast %55 : vector<8x1xf32> to vector<8x16xf32>
    %62 = arith.mulf %60, %61 : vector<8x16xf32>
    %63 = arith.index_cast %c1_i32 : i32 to index
    %c0_22 = arith.constant 0 : index
    %c0_23 = arith.constant 0 : index
    %64 = vector.load %arg6[%63, %c0_22, %c0_23] : memref<2x8x16xf32, #tpu.memory_space<vmem>>, vector<1x8x16xf32>
    %65 = vector.shape_cast %64 : vector<1x8x16xf32> to vector<8x16xf32>
    %66 = vector.shape_cast %62 : vector<8x16xf32> to vector<1x8x16xf32>
    tpu.vector_store %arg6[%63, %c0_22, %c0_23], %66 {strides = array<i32>} : memref<2x8x16xf32, #tpu.memory_space<vmem>>, vector<1x8x16xf32>,
    %c2_i32 = arith.constant 2 : i32
    return
  }
  func.func @transform_0(%arg0: i32, %arg1: i32) -> (i32, i32, i32) {
    %c0_i32 = arith.constant 0 : i32
    %c0_i32_0 = arith.constant 0 : i32
    %c0_i32_1 = arith.constant 0 : i32
    return %arg0, %c0_i32, %c0_i32_0 : i32, i32, i32
  }
  func.func @transform_1(%arg0: i32, %arg1: i32) -> (i32, i32) {
    %c0_i32 = arith.constant 0 : i32
    %c0_i32_0 = arith.constant 0 : i32
    %c0_i32_1 = arith.constant 0 : i32
    return %c0_i32, %c0_i32_0 : i32, i32
  }
  func.func @transform_2(%arg0: i32, %arg1: i32) -> (i32, i32) {
    %c0_i32 = arith.constant 0 : i32
    %c0_i32_0 = arith.constant 0 : i32
    return %arg1, %c0_i32 : i32, i32
  }
  func.func @transform_3(%arg0: i32, %arg1: i32) -> (i32, i32) {
    %c0_i32 = arith.constant 0 : i32
    %c0_i32_0 = arith.constant 0 : i32
    %c0_i32_1 = arith.constant 0 : i32
    return %c0_i32, %c0_i32_0 : i32, i32
  }
  func.func @transform_4(%arg0: i32, %arg1: i32) -> (i32, i32, i32) {
    %c0_i32 = arith.constant 0 : i32
    %c0_i32_0 = arith.constant 0 : i32
    return %arg0, %arg1, %c0_i32 : i32, i32, i32
  }
}

module attributes {stable_mosaic.version = 11 : i64} {
  func.func @semantic_kernel(%arg0: i32, %arg1: i32, %arg2: memref<2x64x16xbf16, #tpu.memory_space<vmem>>, %arg3: memref<16x128xbf16, #tpu.memory_space<vmem>>, %arg4: memref<8x128xf32, #tpu.memory_space<vmem>>, %arg5: memref<1x128xf32, #tpu.memory_space<vmem>>, %arg6: memref<2x8x16xf32, #tpu.memory_space<vmem>>, %arg7: memref<2x64x128xf32, #tpu.memory_space<vmem>>) attributes {dimension_semantics = [#tpu.dimension_semantics<parallel>, #tpu.dimension_semantics<arbitrary>], iteration_bounds = array<i64: 2, 2>, scalar_prefetch = 0 : i64, scratch_operands = 1 : i64, tpu.core_type = #tpu.core_type<tc>, window_params = [{transform_indices = @transform_0, window_bounds = array<i64: 2, 64, 16>}, {pipeline_mode = #tpu.pipeline_mode<synchronous>, transform_indices = @transform_1, window_bounds = array<i64: 16, 128>}, {transform_indices = @transform_2, window_bounds = array<i64: 8, 128>}, {pipeline_mode = #tpu.pipeline_mode<synchronous>, transform_indices = @transform_3, window_bounds = array<i64: 1, 128>}, {transform_indices = @transform_4, window_bounds = array<i64: 2, 8, 16>}]} {
    %c0_i32 = arith.constant 0 : i32
    %0 = arith.cmpi eq, %arg1, %c0_i32 : i32
    %1 = arith.extui %0 : i1 to i32
    %c0_i32_0 = arith.constant 0 : i32
    %2 = arith.cmpi ne, %1, %c0_i32_0 : i32
    scf.if %2 {
      %c0_24 = arith.constant 0 : index
      %c0_25 = arith.constant 0 : index
      %67 = vector.load %arg3[%c0_24, %c0_25] : memref<16x128xbf16, #tpu.memory_space<vmem>>, vector<16x128xbf16>
      %c0_i32_26 = arith.constant 0 : i32
      %68 = arith.index_cast %c0_i32_26 : i32 to index
      %c0_27 = arith.constant 0 : index
      %c0_28 = arith.constant 0 : index
      %69 = vector.load %arg2[%68, %c0_27, %c0_28] : memref<2x64x16xbf16, #tpu.memory_space<vmem>>, vector<1x64x16xbf16>
      %70 = vector.shape_cast %69 : vector<1x64x16xbf16> to vector<64x16xbf16>
      %cst_29 = arith.constant dense<0.000000e+00> : vector<64x128xf32>
      %71 = tpu.matmul %70, %67, %cst_29 {dimension_numbers = #tpu.dot_dimension_numbers<[1], [0], [0], [1], [0, 0, 1, 1], [], []>} : vector<64x16xbf16>, vector<16x128xbf16>, vector<64x128xf32> -> vector<64x128xf32>
      %72 = arith.index_cast %c0_i32_26 : i32 to index
      %c0_30 = arith.constant 0 : index
      %c0_31 = arith.constant 0 : index
      %73 = vector.load %arg7[%72, %c0_30, %c0_31] : memref<2x64x128xf32, #tpu.memory_space<vmem>>, vector<1x64x128xf32>
      %74 = vector.shape_cast %73 : vector<1x64x128xf32> to vector<64x128xf32>
      %75 = vector.shape_cast %71 : vector<64x128xf32> to vector<1x64x128xf32>
      tpu.vector_store %arg7[%72, %c0_30, %c0_31], %75 {strides = array<i32>} : memref<2x64x128xf32, #tpu.memory_space<vmem>>, vector<1x64x128xf32>,
      %c1_i32_32 = arith.constant 1 : i32
      %76 = arith.index_cast %c1_i32_32 : i32 to index
      %c0_33 = arith.constant 0 : index
      %c0_34 = arith.constant 0 : index
      %77 = vector.load %arg2[%76, %c0_33, %c0_34] : memref<2x64x16xbf16, #tpu.memory_space<vmem>>, vector<1x64x16xbf16>
      %78 = vector.shape_cast %77 : vector<1x64x16xbf16> to vector<64x16xbf16>
      %cst_35 = arith.constant dense<0.000000e+00> : vector<64x128xf32>
      %79 = tpu.matmul %78, %67, %cst_35 {dimension_numbers = #tpu.dot_dimension_numbers<[1], [0], [0], [1], [0, 0, 1, 1], [], []>} : vector<64x16xbf16>, vector<16x128xbf16>, vector<64x128xf32> -> vector<64x128xf32>
      %80 = arith.index_cast %c1_i32_32 : i32 to index
      %c0_36 = arith.constant 0 : index
      %c0_37 = arith.constant 0 : index
      %81 = vector.load %arg7[%80, %c0_36, %c0_37] : memref<2x64x128xf32, #tpu.memory_space<vmem>>, vector<1x64x128xf32>
      %82 = vector.shape_cast %81 : vector<1x64x128xf32> to vector<64x128xf32>
      %83 = vector.shape_cast %79 : vector<64x128xf32> to vector<1x64x128xf32>
      tpu.vector_store %arg7[%80, %c0_36, %c0_37], %83 {strides = array<i32>} : memref<2x64x128xf32, #tpu.memory_space<vmem>>, vector<1x64x128xf32>,
      %c2_i32_38 = arith.constant 2 : i32
    } else {
    }
    %c0 = arith.constant 0 : index
    %c0_1 = arith.constant 0 : index
    %3 = vector.load %arg4[%c0, %c0_1] : memref<8x128xf32, #tpu.memory_space<vmem>>, vector<8x128xf32>
    %4 = vector.shape_cast %3 : vector<8x128xf32> to vector<8x1x128xf32>
    %c0_2 = arith.constant 0 : index
    %c0_3 = arith.constant 0 : index
    %5 = vector.load %arg5[%c0_2, %c0_3] : memref<1x128xf32, #tpu.memory_space<vmem>>, vector<1x128xf32>
    %6 = vector.shape_cast %5 : vector<1x128xf32> to vector<1x1x128xf32>
    %c0_i32_4 = arith.constant 0 : i32
    %7 = arith.index_cast %c0_i32_4 : i32 to index
    %c0_5 = arith.constant 0 : index
    %c0_6 = arith.constant 0 : index
    %8 = vector.load %arg7[%7, %c0_5, %c0_6] : memref<2x64x128xf32, #tpu.memory_space<vmem>>, vector<1x64x128xf32>
    %9 = vector.shape_cast %8 : vector<1x64x128xf32> to vector<64x128xf32>
    %10 = vector.shape_cast %9 : vector<64x128xf32> to vector<1x64x128xf32>
    %11 = vector.broadcast %10 : vector<1x64x128xf32> to vector<8x64x128xf32>
    %12 = vector.broadcast %4 : vector<8x1x128xf32> to vector<8x64x128xf32>
    %13 = arith.mulf %11, %12 : vector<8x64x128xf32>
    %14 = math.tanh %13 : vector<8x64x128xf32>
    %15 = vector.broadcast %6 : vector<1x1x128xf32> to vector<8x64x128xf32>
    %16 = arith.mulf %14, %15 : vector<8x64x128xf32>
    %cst = arith.constant dense<0.000000e+00> : vector<8x64xf32>
    %17 = vector.multi_reduction <add>, %16, %cst [2] : vector<8x64x128xf32> to vector<8x64xf32>
    %cst_7 = arith.constant dense<0xFF800000> : vector<8xf32>
    %18 = vector.multi_reduction <maximumf>, %17, %cst_7 [1] : vector<8x64xf32> to vector<8xf32>
    %19 = vector.shape_cast %18 : vector<8xf32> to vector<8x1xf32>
    %20 = vector.broadcast %19 : vector<8x1xf32> to vector<8x64xf32>
    %21 = arith.subf %17, %20 : vector<8x64xf32>
    %22 = math.exp %21 : vector<8x64xf32>
    %cst_8 = arith.constant dense<0.000000e+00> : vector<8xf32>
    %23 = vector.multi_reduction <add>, %22, %cst_8 [1] : vector<8x64xf32> to vector<8xf32>
    %24 = vector.shape_cast %23 : vector<8xf32> to vector<8x1xf32>
    %25 = tpu.reciprocal %24 {approx = true} : vector<8x1xf32> -> vector<8x1xf32>
    %26 = arith.truncf %22 : vector<8x64xf32> to vector<8x64xbf16>
    %27 = arith.index_cast %c0_i32_4 : i32 to index
    %c0_9 = arith.constant 0 : index
    %c0_10 = arith.constant 0 : index
    %28 = vector.load %arg2[%27, %c0_9, %c0_10] : memref<2x64x16xbf16, #tpu.memory_space<vmem>>, vector<1x64x16xbf16>
    %29 = vector.shape_cast %28 : vector<1x64x16xbf16> to vector<64x16xbf16>
    %cst_11 = arith.constant dense<0.000000e+00> : vector<8x16xf32>
    %30 = tpu.matmul %26, %29, %cst_11 {dimension_numbers = #tpu.dot_dimension_numbers<[1], [0], [0], [1], [0, 0, 1, 1], [], []>} : vector<8x64xbf16>, vector<64x16xbf16>, vector<8x16xf32> -> vector<8x16xf32>
    %31 = vector.broadcast %25 : vector<8x1xf32> to vector<8x16xf32>
    %32 = arith.mulf %30, %31 : vector<8x16xf32>
    %33 = arith.index_cast %c0_i32_4 : i32 to index
    %c0_12 = arith.constant 0 : index
    %c0_13 = arith.constant 0 : index
    %34 = vector.load %arg6[%33, %c0_12, %c0_13] : memref<2x8x16xf32, #tpu.memory_space<vmem>>, vector<1x8x16xf32>
    %35 = vector.shape_cast %34 : vector<1x8x16xf32> to vector<8x16xf32>
    %36 = vector.shape_cast %32 : vector<8x16xf32> to vector<1x8x16xf32>
    tpu.vector_store %arg6[%33, %c0_12, %c0_13], %36 {strides = array<i32>} : memref<2x8x16xf32, #tpu.memory_space<vmem>>, vector<1x8x16xf32>,
    %c1_i32 = arith.constant 1 : i32
    %37 = arith.index_cast %c1_i32 : i32 to index
    %c0_14 = arith.constant 0 : index
    %c0_15 = arith.constant 0 : index
    %38 = vector.load %arg7[%37, %c0_14, %c0_15] : memref<2x64x128xf32, #tpu.memory_space<vmem>>, vector<1x64x128xf32>
    %39 = vector.shape_cast %38 : vector<1x64x128xf32> to vector<64x128xf32>
    %40 = vector.shape_cast %39 : vector<64x128xf32> to vector<1x64x128xf32>
    %41 = vector.broadcast %40 : vector<1x64x128xf32> to vector<8x64x128xf32>
    %42 = vector.broadcast %4 : vector<8x1x128xf32> to vector<8x64x128xf32>
    %43 = arith.mulf %41, %42 : vector<8x64x128xf32>
    %44 = math.tanh %43 : vector<8x64x128xf32>
    %45 = vector.broadcast %6 : vector<1x1x128xf32> to vector<8x64x128xf32>
    %46 = arith.mulf %44, %45 : vector<8x64x128xf32>
    %cst_16 = arith.constant dense<0.000000e+00> : vector<8x64xf32>
    %47 = vector.multi_reduction <add>, %46, %cst_16 [2] : vector<8x64x128xf32> to vector<8x64xf32>
    %cst_17 = arith.constant dense<0xFF800000> : vector<8xf32>
    %48 = vector.multi_reduction <maximumf>, %47, %cst_17 [1] : vector<8x64xf32> to vector<8xf32>
    %49 = vector.shape_cast %48 : vector<8xf32> to vector<8x1xf32>
    %50 = vector.broadcast %49 : vector<8x1xf32> to vector<8x64xf32>
    %51 = arith.subf %47, %50 : vector<8x64xf32>
    %52 = math.exp %51 : vector<8x64xf32>
    %cst_18 = arith.constant dense<0.000000e+00> : vector<8xf32>
    %53 = vector.multi_reduction <add>, %52, %cst_18 [1] : vector<8x64xf32> to vector<8xf32>
    %54 = vector.shape_cast %53 : vector<8xf32> to vector<8x1xf32>
    %55 = tpu.reciprocal %54 {approx = true} : vector<8x1xf32> -> vector<8x1xf32>
    %56 = arith.truncf %52 : vector<8x64xf32> to vector<8x64xbf16>
    %57 = arith.index_cast %c1_i32 : i32 to index
    %c0_19 = arith.constant 0 : index
    %c0_20 = arith.constant 0 : index
    %58 = vector.load %arg2[%57, %c0_19, %c0_20] : memref<2x64x16xbf16, #tpu.memory_space<vmem>>, vector<1x64x16xbf16>
    %59 = vector.shape_cast %58 : vector<1x64x16xbf16> to vector<64x16xbf16>
    %cst_21 = arith.constant dense<0.000000e+00> : vector<8x16xf32>
    %60 = tpu.matmul %56, %59, %cst_21 {dimension_numbers = #tpu.dot_dimension_numbers<[1], [0], [0], [1], [0, 0, 1, 1], [], []>} : vector<8x64xbf16>, vector<64x16xbf16>, vector<8x16xf32> -> vector<8x16xf32>
    %61 = vector.broadcast %55 : vector<8x1xf32> to vector<8x16xf32>
    %62 = arith.mulf %60, %61 : vector<8x16xf32>
    %63 = arith.index_cast %c1_i32 : i32 to index
    %c0_22 = arith.constant 0 : index
    %c0_23 = arith.constant 0 : index
    %64 = vector.load %arg6[%63, %c0_22, %c0_23] : memref<2x8x16xf32, #tpu.memory_space<vmem>>, vector<1x8x16xf32>
    %65 = vector.shape_cast %64 : vector<1x8x16xf32> to vector<8x16xf32>
    %66 = vector.shape_cast %62 : vector<8x16xf32> to vector<1x8x16xf32>
    tpu.vector_store %arg6[%63, %c0_22, %c0_23], %66 {strides = array<i32>} : memref<2x8x16xf32, #tpu.memory_space<vmem>>, vector<1x8x16xf32>,
    %c2_i32 = arith.constant 2 : i32
    return
  }
  func.func @transform_0(%arg0: i32, %arg1: i32) -> (i32, i32, i32) {
    %c0_i32 = arith.constant 0 : i32
    %c0_i32_0 = arith.constant 0 : i32
    %c0_i32_1 = arith.constant 0 : i32
    return %arg0, %c0_i32, %c0_i32_0 : i32, i32, i32
  }
  func.func @transform_1(%arg0: i32, %arg1: i32) -> (i32, i32) {
    %c0_i32 = arith.constant 0 : i32
    %c0_i32_0 = arith.constant 0 : i32
    %c0_i32_1 = arith.constant 0 : i32
    return %c0_i32, %c0_i32_0 : i32, i32
  }
  func.func @transform_2(%arg0: i32, %arg1: i32) -> (i32, i32) {
    %c0_i32 = arith.constant 0 : i32
    %c0_i32_0 = arith.constant 0 : i32
    return %arg1, %c0_i32 : i32, i32
  }
  func.func @transform_3(%arg0: i32, %arg1: i32) -> (i32, i32) {
    %c0_i32 = arith.constant 0 : i32
    %c0_i32_0 = arith.constant 0 : i32
    %c0_i32_1 = arith.constant 0 : i32
    return %c0_i32, %c0_i32_0 : i32, i32
  }
  func.func @transform_4(%arg0: i32, %arg1: i32) -> (i32, i32, i32) {
    %c0_i32 = arith.constant 0 : i32
    %c0_i32_0 = arith.constant 0 : i32
    return %arg0, %arg1, %c0_i32 : i32, i32, i32
  }
}

</mosaic_0001>

<llo_original>
// kernel: tpu_custom_call.1
$region0: #{tpu_custom_call.1}
  #allocation0 [shape = 'u32[]', space=smem, size = 0x4, offset = 0x4, fixed_abs, tag = 'smem constant byte address 0x4 - core index']
  #allocation1 [shape = 'u32[144,128]{1,0:T(1,128)}', space=vmem, size = 0x12000, scoped, tag = 'internal scratch']
  #allocation2 [shape = 'f32[2,64,128]{2,1,0:T(8,128)}', space=vmem, size = 0x10000, scoped, tag = 'scratch operand']
  %s0 = inlined_call_operand.vmem [shape: bf16[4,64,16], index: 0, kind: input, shape index: {}]
  %s1 = inlined_call_operand.vmem [shape: bf16[16,128], index: 1, kind: input, shape index: {}]
  %s2 = inlined_call_operand.vmem [shape: f32[16,128], index: 2, kind: input, shape index: {}]
  %s3 = inlined_call_operand.vmem [shape: f32[1,128], index: 3, kind: input, shape index: {}]
  %s4 = inlined_call_operand.hbm [shape: f32[4,16,16], index: 4, kind: output, shape index: {}]
  %s5 = sld [smem:[#allocation0]]
  $region53: #{tpu_custom_call.1} parent=0
    _
  %s7 = ssub.s32 1, %s5
  %s8 = scalar_select 0, %s7, %s5
  $region1: #{tpu_custom_call.1} parent=0
    #allocation3 [shape = 'u8[16384]{0}', space=vmem, size = 0x4000, scoped, tag = 'output window, operand 0']
    #allocation4 [shape = 's32[2]{0}', space=sflag, size = 0x8, scoped, tag = 'scoped memory for tpu_custom_call.1']
    %9 = vsyncpa [#allocation4], 0
    %s10 = scalar_lea.sflag [#allocation4], 1
    %11 = vsyncpa %s10, 0
    loop: start=0, step=1, limit=6
    $region2: #{tpu_custom_call.1} parent=1 // loop_pre_header
      _
    $region3: #{tpu_custom_call.1} parent=1 // loop_header
      %s13 = sphi 0, %s17
      %p14 = scmp.ge.s32.totalorder %s13, 6
      %s20 = sphi 0, %s32
      %s21 = sphi 0, %s28
      %s22 = sphi 0, %s20
      %s23 = sphi 0, %s21
      %s24 = sphi 0, %s22
      %s25 = sphi 0, %s23
      %s35 = sphi 0, %s37
      %s38 = sphi 0, %s35
      %s39 = sphi 0, %s38
      %s55 = sphi 0, %s39
      %s59 = sphi 0, %s59
      %s61 = sphi 0, %s59
      %s62 = sphi 0, %s61
      %s76 = sphi 0, %s62
      %s82 = sphi 0, %s84
      %s85 = sphi 0, %s82
      %s86 = sphi 0, %s85
      %s102 = sphi 0, %s86
      %s106 = sphi 0, %s106
      %s108 = sphi 0, %s106
      %s109 = sphi 0, %s108
      %s123 = sphi 0, %s109
      %s131 = sphi 0, %s133
      %s134 = sphi 0, %s131
      %s135 = sphi 0, %s134
      %s151 = sphi 0, %s135
    $region4: #{tpu_custom_call.1} parent=1 // loop_header_branch
      %16 = sbr.rel (%p14) target = $region8
    $region5: #{tpu_custom_call.1} parent=1 // loop_body
      %s18 = ssub.s32 %s13, 1
      %s19 = ssub.s32 %s13, 2
      %s26 = sadd.s32 1, %s21
      %p27 = scmp.ge.s32.totalorder %s26, 2
      %s28 = scalar_select %p27, 0, %s26
      %s29 = sadd.s32 1, %s20
      %s30 = scalar_select %p27, %s29, %s20
      %p31 = scmp.ge.s32.totalorder %s30, 2
      %s32 = scalar_select %p31, 0, %s30
      %s33 = ssub.s32 %s20, %s32
      %p34 = scmp.eq.s32.totalorder %s33, 0
      %s36 = sadd.s32 %s35, 1
      %s37 = scalar_select %p34, %s35, %s36
      %p40 = pneg %p34
      %p41 = scmp.eq.s32.totalorder %s13, 3
      %p42 = por %p40, %p41
      %p43 = scmp.ne.s32.totalorder %s35, %s38
      %p44 = scmp.eq.s32.totalorder %s13, 0
      %p45 = por %p43, %p44
      %p46 = scmp.ne.s32.totalorder %s35, %s38
      %p47 = scmp.eq.s32.totalorder %s18, 3
      %p48 = por %p46, %p47
      %p49 = scmp.ne.s32.totalorder %s38, %s39
      %p50 = scmp.eq.s32.totalorder %s18, 0
      %p51 = por %p49, %p50
      %p52 = scmp.ne.s32.totalorder %s38, %s39
      %p53 = scmp.eq.s32.totalorder %s19, 3
      %p54 = por %p52, %p53
      %p56 = scmp.ne.s32.totalorder %s39, %s55
      %p57 = scmp.eq.s32.totalorder %s19, 0
      %p58 = por %p56, %p57
      %s60 = sadd.s32 %s59, 1
      %p63 = scmp.eq.s32.totalorder %s13, 3
      %p64 = scmp.ne.s32.totalorder %s59, %s61
      %p65 = scmp.eq.s32.totalorder %s13, 0
      %p66 = por %p64, %p65
      %p67 = scmp.ne.s32.totalorder %s59, %s61
      %p68 = scmp.eq.s32.totalorder %s18, 3
      %p69 = por %p67, %p68
      %p70 = scmp.ne.s32.totalorder %s61, %s62
      %p71 = scmp.eq.s32.totalorder %s18, 0
      %p72 = por %p70, %p71
      %p73 = scmp.ne.s32.totalorder %s61, %s62
      %p74 = scmp.eq.s32.totalorder %s19, 3
      %p75 = por %p73, %p74
      %p77 = scmp.ne.s32.totalorder %s62, %s76
      %p78 = scmp.eq.s32.totalorder %s19, 0
      %p79 = por %p77, %p78
      %s80 = ssub.s32 %s21, %s28
      %p81 = scmp.eq.s32.totalorder %s80, 0
      %s83 = sadd.s32 %s82, 1
      %s84 = scalar_select %p81, %s82, %s83
      %p87 = pneg %p81
      %p88 = scmp.eq.s32.totalorder %s13, 3
      %p89 = por %p87, %p88
      %p90 = scmp.ne.s32.totalorder %s82, %s85
      %p91 = scmp.eq.s32.totalorder %s13, 0
      %p92 = por %p90, %p91
      %p93 = scmp.ne.s32.totalorder %s82, %s85
      %p94 = scmp.eq.s32.totalorder %s18, 3
      %p95 = por %p93, %p94
      %p96 = scmp.ne.s32.totalorder %s85, %s86
      %p97 = scmp.eq.s32.totalorder %s18, 0
      %p98 = por %p96, %p97
      %p99 = scmp.ne.s32.totalorder %s85, %s86
      %p100 = scmp.eq.s32.totalorder %s19, 3
      %p101 = por %p99, %p100
      %p103 = scmp.ne.s32.totalorder %s86, %s102
      %p104 = scmp.eq.s32.totalorder %s19, 0
      %p105 = por %p103, %p104
      %s107 = sadd.s32 %s106, 1
      %p110 = scmp.eq.s32.totalorder %s13, 3
      %p111 = scmp.ne.s32.totalorder %s106, %s108
      %p112 = scmp.eq.s32.totalorder %s13, 0
      %p113 = por %p111, %p112
      %p114 = scmp.ne.s32.totalorder %s106, %s108
      %p115 = scmp.eq.s32.totalorder %s18, 3
      %p116 = por %p114, %p115
      %p117 = scmp.ne.s32.totalorder %s108, %s109
      %p118 = scmp.eq.s32.totalorder %s18, 0
      %p119 = por %p117, %p118
      %p120 = scmp.ne.s32.totalorder %s108, %s109
      %p121 = scmp.eq.s32.totalorder %s19, 3
      %p122 = por %p120, %p121
      %p124 = scmp.ne.s32.totalorder %s109, %s123
      %p125 = scmp.eq.s32.totalorder %s19, 0
      %p126 = por %p124, %p125
      %s127 = ssub.s32 %s20, %s32
      %s128 = ssub.s32 %s21, %s28
      %s129 = sor.u32 %s127, %s128
      %p130 = scmp.eq.s32.totalorder %s129, 0
      %s132 = sadd.s32 %s131, 1
      %s133 = scalar_select %p130, %s131, %s132
      %p136 = pneg %p130
      %p137 = scmp.eq.s32.totalorder %s13, 3
      %p138 = por %p136, %p137
      %p139 = scmp.ne.s32.totalorder %s131, %s134
      %p140 = scmp.eq.s32.totalorder %s13, 0
      %p141 = por %p139, %p140
      %p142 = scmp.ne.s32.totalorder %s131, %s134
      %p143 = scmp.eq.s32.totalorder %s18, 3
      %p144 = por %p142, %p143
      %p145 = scmp.ne.s32.totalorder %s134, %s135
      %p146 = scmp.eq.s32.totalorder %s18, 0
      %p147 = por %p145, %p146
      %p148 = scmp.ne.s32.totalorder %s134, %s135
      %p149 = scmp.eq.s32.totalorder %s19, 3
      %p150 = por %p148, %p149
      %p152 = scmp.ne.s32.totalorder %s135, %s151
      %p153 = scmp.eq.s32.totalorder %s19, 0
      %p154 = por %p152, %p153
      %p155 = scmp.le.s32.totalorder 1, %s13
      %p156 = scmp.lt.s32.totalorder %s13, 5
      %p157 = pnand %p155, %p156
      %p158 = pneg %p157
      // Predicated region
      $region9: #{tpu_custom_call.1} parent=5 // pred_check
        _
      $region10: #{tpu_custom_call.1} parent=5 // pred_check_branch
        %160 = sbr.rel (%p157) target = $region12
      $region11: #{tpu_custom_call.1} parent=5 // pred_region
        %s161 = ssub.s32 %s13, 1
        // Predicated region
        $region13: #{tpu_custom_call.1} parent=11 // pred_check
          %p162 = pneg %p72
        $region14: #{tpu_custom_call.1} parent=11 // pred_check_branch
          %164 = sbr.rel (%p162) target = $region16
        $region15: #{tpu_custom_call.1} parent=11 // pred_region
          _
        $region16: #{tpu_custom_call.1} parent=11 // pred_fallthru
          _
        // Predicated region
        $region17: #{tpu_custom_call.1} parent=11 // pred_check
          %p165 = pneg %p119
        $region18: #{tpu_custom_call.1} parent=11 // pred_check_branch
          %167 = sbr.rel (%p165) target = $region20
        $region19: #{tpu_custom_call.1} parent=11 // pred_region
          _
        $region20: #{tpu_custom_call.1} parent=11 // pred_fallthru
          _
      $region12: #{tpu_custom_call.1} parent=5 // pred_fallthru
        _
      %p168 = scmp.lt.s32.totalorder %s13, 4
      // Predicated region
      $region21: #{tpu_custom_call.1} parent=5 // pred_check
        %p169 = pneg %p168
      $region22: #{tpu_custom_call.1} parent=5 // pred_check_branch
        %171 = sbr.rel (%p169) target = $region24
      $region23: #{tpu_custom_call.1} parent=5 // pred_region
        // Predicated region
        $region25: #{tpu_custom_call.1} parent=23 // pred_check
          %p172 = pneg %p45
        $region26: #{tpu_custom_call.1} parent=23 // pred_check_branch
          %174 = sbr.rel (%p172) target = $region28
        $region27: #{tpu_custom_call.1} parent=23 // pred_region
          %s175 = smul.u32 2, %s20
          %p176 = scmp.lt.s32.totalorder %s175, 3
          %s177 = scalar_select %p176, %s175, 3
          %s178 = smul.addr %s177, 8
          %s179 = smul.addr %s178, 4
          %s180 = scalar_lea.vmem %s0, %s179
          %s181 = smul.u32 2, %s20
        $region28: #{tpu_custom_call.1} parent=23 // pred_fallthru
          _
        // Predicated region
        $region29: #{tpu_custom_call.1} parent=23 // pred_check
          %p182 = pneg %p92
        $region30: #{tpu_custom_call.1} parent=23 // pred_check_branch
          %184 = sbr.rel (%p182) target = $region32
        $region31: #{tpu_custom_call.1} parent=23 // pred_region
          %p185 = scmp.lt.s32.totalorder %s21, 1
          %s186 = scalar_select %p185, %s21, 1
          %s187 = smul.addr %s186, 8
          %s188 = scalar_lea.vmem %s2, %s187
        $region32: #{tpu_custom_call.1} parent=23 // pred_fallthru
          _
      $region24: #{tpu_custom_call.1} parent=5 // pred_fallthru
        _
      %p189 = scmp.le.s32.totalorder 1, %s13
      %p190 = scmp.lt.s32.totalorder %s13, 5
      %p191 = pnand %p189, %p190
      %p192 = pneg %p191
      // Predicated region
      $region33: #{tpu_custom_call.1} parent=5 // pred_check
        _
      $region34: #{tpu_custom_call.1} parent=5 // pred_check_branch
        %194 = sbr.rel (%p191) target = $region36
      $region35: #{tpu_custom_call.1} parent=5 // pred_region
        %s195 = ssub.s32 %s13, 1
        %s196 = smul.u32 2, %s22
        %p197 = scmp.lt.s32.totalorder %s196, 3
        %s198 = scalar_select %p197, %s196, 3
        %s199 = smul.addr %s198, 8
        %s200 = smul.addr %s199, 4
        %s201 = scalar_lea.vmem %s0, %s200
        %p202 = pneg %p51
        %p203 = pneg %p48
        %p204 = pneg %p72
        %p205 = pneg %p69
        %p206 = scmp.lt.s32.totalorder %s23, 1
        %s207 = scalar_select %p206, %s23, 1
        %s208 = smul.addr %s207, 8
        %s209 = scalar_lea.vmem %s2, %s208
        %p210 = pneg %p98
        %p211 = pneg %p95
        %p212 = pneg %p119
        %p213 = pneg %p116
        %p214 = pneg %p147
        %p215 = pneg %p144
        %s216 = sand.u32 %s134, 1
        %s217 = scalar_lea.sflag [#allocation4], %s216
        %s218 = sand.u32 %s134, 1
        %s219 = smul.addr %s218, 16
        %s220 = scalar_lea.vmem [#allocation3], %s219
        %s221 = smul.u32 2, %s22
        %p222 = scmp.lt.s32.totalorder %s221, 3
        %s223 = scalar_select %p222, %s221, 3
        %s224 = smul.addr %s223, 8
        %s225 = smul.addr %s224, 4
        %s226 = scalar_lea.vmem %s0, %s225
        %s227 = smul.u32 2, %s22
        %p228 = scmp.lt.s32.totalorder %s23, 1
        %s229 = scalar_select %p228, %s23, 1
        %s230 = smul.addr %s229, 8
        %s231 = scalar_lea.vmem %s2, %s230
        %s232 = smul.u32 2, %s22
        %p234 = scmp.eq.s32.totalorder %s23, 0
        // Predicated region
        $region37: #{tpu_custom_call.1} parent=35 // pred_check
          %p235 = pneg %p234
        $region38: #{tpu_custom_call.1} parent=35 // pred_check_branch
          %237 = sbr.rel (%p235) target = $region40
        $region39: #{tpu_custom_call.1} parent=35 // pred_region
          %v238 = vld [vmem:[%s1] sm:$0xf]
          %v239 = vld [vmem:[%s1 + $0x4] sm:$0xf]
          %v240 = vld [vmem:[%s226] sm:$0xf]
          %v241 = vld [vmem:[%s226 + $0x4] sm:$0xf]
          %v242 = vld [vmem:[%s226 + $0x8] sm:$0xf]
          %v243 = vld [vmem:[%s226 + $0xc] sm:$0xf]
          %v244 = vld [vmem:[%s226 + $0x10] sm:$0xf]
          %v245 = vld [vmem:[%s226 + $0x14] sm:$0xf]
          %v246 = vld [vmem:[%s226 + $0x18] sm:$0xf]
          %v247 = vld [vmem:[%s226 + $0x1c] sm:$0xf]
          %v256 = vunpack.c.l.b16 %v240
          %v257 = vunpack.c.l.b16 %v241
          %v258 = vunpack.c.l.b16 %v242
          %v259 = vunpack.c.l.b16 %v243
          %v260 = vunpack.c.l.b16 %v244
          %v261 = vunpack.c.l.b16 %v245
          %v262 = vunpack.c.l.b16 %v246
          %v263 = vunpack.c.l.b16 %v247
          %v264 = vpack.c.b16 %v257, %v256
          %v265 = vpack.c.b16 %v259, %v258
          %v266 = vpack.c.b16 %v261, %v260
          %v267 = vpack.c.b16 %v263, %v262
          %v270 = vunpack.c.l.b16 %v238
          %v271 = vunpack.c.l.b16 %v239
          %v272 = vpack.c.b16 %v271, %v270
          %vm274 = vcmask 130048
          %v276 = vsel %vm274, %v264, 0
          %v279 = vsel %vm274, %v265, 0
          %v282 = vsel %vm274, %v266, 0
          %v285 = vsel %vm274, %v267, 0
          %287 = vmatprep.subr.bf16.mxu0 0
          %288 = vmatpush1.bf16.msra.mxu0 %v272
          %289 = vmatprep.subr.bf16.mxu0 0
          %290 = vmatpush1.bf16.msra.mxu0 0
          %291 = vmatprep.subr.bf16.mxu0 0
          %292 = vmatpush1.bf16.msra.mxu0 0
          %293 = vmatprep.subr.bf16.mxu0 0
          %294 = vmatpush1.bf16.msra.mxu0 0
          %295 = vmatprep.subr.bf16.mxu0 0
          %296 = vmatpush1.bf16.msra.mxu0 0
          %297 = vmatprep.subr.bf16.mxu0 0
          %298 = vmatpush1.bf16.msra.mxu0 0
          %299 = vmatprep.subr.bf16.mxu0 0
          %300 = vmatpush1.bf16.msra.mxu0 0
          %301 = vmatprep.subr.bf16.mxu0 0
          %302 = vmatpush1.bf16.msra.mxu0 0
          %303 = vmatprep.subr.bf16.mxu0 0
          %304 = vmatpush1.bf16.msra.mxu0 0
          %305 = vmatprep.subr.bf16.mxu0 0
          %306 = vmatpush1.bf16.msra.mxu0 0
          %307 = vmatprep.subr.bf16.mxu0 0
          %308 = vmatpush1.bf16.msra.mxu0 0
          %309 = vmatprep.subr.bf16.mxu0 0
          %310 = vmatpush1.bf16.msra.mxu0 0
          %311 = vmatprep.subr.bf16.mxu0 0
          %312 = vmatpush1.bf16.msra.mxu0 0
          %313 = vmatprep.subr.bf16.mxu0 0
          %314 = vmatpush1.bf16.msra.mxu0 0
          %315 = vmatprep.subr.bf16.mxu0 0
          %316 = vmatpush1.bf16.msra.mxu0 0
          %317 = vmatprep.subr.bf16.mxu0 0
          %318 = vmatpush1.bf16.msra.mxu0 0
          %319 = vmatprep.mubr.bf16.mxu0 0
          %320 = vmatmul.mubr.bf16.gmra.mrb[0].mxu0 %v276
          %v321 = vpop.f32.mrb[0].mxu0
          %v322 = vadd.f32 0.0, %v321
          %v323 = vpop.f32.mrb[0].mxu0
          %v324 = vpop.f32.mrb[0].mxu0
          %v325 = vadd.f32 0.0, %v324
          %v326 = vpop.f32.mrb[0].mxu0
          %327 = vmatprep.mubr.bf16.mxu0 0
          %328 = vmatmul.mubr.bf16.gmra.mrb[0].mxu0 %v279
          %v329 = vpop.f32.mrb[0].mxu0
          %v330 = vadd.f32 0.0, %v329
          %v331 = vpop.f32.mrb[0].mxu0
          %v332 = vpop.f32.mrb[0].mxu0
          %v333 = vadd.f32 0.0, %v332
          %v334 = vpop.f32.mrb[0].mxu0
          %335 = vmatprep.mubr.bf16.mxu0 0
          %336 = vmatmul.mubr.bf16.gmra.mrb[0].mxu0 %v282
          %v337 = vpop.f32.mrb[0].mxu0
          %v338 = vadd.f32 0.0, %v337
          %v339 = vpop.f32.mrb[0].mxu0
          %v340 = vpop.f32.mrb[0].mxu0
          %v341 = vadd.f32 0.0, %v340
          %v342 = vpop.f32.mrb[0].mxu0
          %343 = vmatprep.mubr.bf16.mxu0 0
          %344 = vmatmul.mubr.bf16.gmra.mrb[0].mxu0 %v285
          %v345 = vpop.f32.mrb[0].mxu0
          %v346 = vadd.f32 0.0, %v345
          %v347 = vpop.f32.mrb[0].mxu0
          %v348 = vpop.f32.mrb[0].mxu0
          %v349 = vadd.f32 0.0, %v348
          %v350 = vpop.f32.mrb[0].mxu0
          %351 = vdwg.mxu0
          %352 = vst [vmem:[#allocation2] sm:$0xff] %v322
          %353 = vst [vmem:[#allocation2 + $0x8] sm:$0xff] %v325
          %354 = vst [vmem:[#allocation2 + $0x10] sm:$0xff] %v330
          %355 = vst [vmem:[#allocation2 + $0x18] sm:$0xff] %v333
          %356 = vst [vmem:[#allocation2 + $0x20] sm:$0xff] %v338
          %357 = vst [vmem:[#allocation2 + $0x28] sm:$0xff] %v341
          %358 = vst [vmem:[#allocation2 + $0x30] sm:$0xff] %v346
          %359 = vst [vmem:[#allocation2 + $0x38] sm:$0xff] %v349
          %s360 = scalar_lea.vmem %s226, 32
          %v361 = vld [vmem:[%s360] sm:$0xf]
          %v362 = vld [vmem:[%s360 + $0x4] sm:$0xf]
          %v363 = vld [vmem:[%s360 + $0x8] sm:$0xf]
          %v364 = vld [vmem:[%s360 + $0xc] sm:$0xf]
          %v365 = vld [vmem:[%s360 + $0x10] sm:$0xf]
          %v366 = vld [vmem:[%s360 + $0x14] sm:$0xf]
          %v367 = vld [vmem:[%s360 + $0x18] sm:$0xf]
          %v368 = vld [vmem:[%s360 + $0x1c] sm:$0xf]
          %v377 = vunpack.c.l.b16 %v361
          %v378 = vunpack.c.l.b16 %v362
          %v379 = vunpack.c.l.b16 %v363
          %v380 = vunpack.c.l.b16 %v364
          %v381 = vunpack.c.l.b16 %v365
          %v382 = vunpack.c.l.b16 %v366
          %v383 = vunpack.c.l.b16 %v367
          %v384 = vunpack.c.l.b16 %v368
          %v385 = vpack.c.b16 %v378, %v377
          %v386 = vpack.c.b16 %v380, %v379
          %v387 = vpack.c.b16 %v382, %v381
          %v388 = vpack.c.b16 %v384, %v383
          %v390 = vsel %vm274, %v385, 0
          %v393 = vsel %vm274, %v386, 0
          %v396 = vsel %vm274, %v387, 0
          %v399 = vsel %vm274, %v388, 0
          %401 = vmatprep.subr.bf16.mxu0 0
          %402 = vmatpush1.bf16.msra.mxu0 %v272
          %403 = vmatprep.subr.bf16.mxu0 0
          %404 = vmatpush1.bf16.msra.mxu0 0
          %405 = vmatprep.subr.bf16.mxu0 0
          %406 = vmatpush1.bf16.msra.mxu0 0
          %407 = vmatprep.subr.bf16.mxu0 0
          %408 = vmatpush1.bf16.msra.mxu0 0
          %409 = vmatprep.subr.bf16.mxu0 0
          %410 = vmatpush1.bf16.msra.mxu0 0
          %411 = vmatprep.subr.bf16.mxu0 0
          %412 = vmatpush1.bf16.msra.mxu0 0
          %413 = vmatprep.subr.bf16.mxu0 0
          %414 = vmatpush1.bf16.msra.mxu0 0
          %415 = vmatprep.subr.bf16.mxu0 0
          %416 = vmatpush1.bf16.msra.mxu0 0
          %417 = vmatprep.subr.bf16.mxu0 0
          %418 = vmatpush1.bf16.msra.mxu0 0
          %419 = vmatprep.subr.bf16.mxu0 0
          %420 = vmatpush1.bf16.msra.mxu0 0
          %421 = vmatprep.subr.bf16.mxu0 0
          %422 = vmatpush1.bf16.msra.mxu0 0
          %423 = vmatprep.subr.bf16.mxu0 0
          %424 = vmatpush1.bf16.msra.mxu0 0
          %425 = vmatprep.subr.bf16.mxu0 0
          %426 = vmatpush1.bf16.msra.mxu0 0
          %427 = vmatprep.subr.bf16.mxu0 0
          %428 = vmatpush1.bf16.msra.mxu0 0
          %429 = vmatprep.subr.bf16.mxu0 0
          %430 = vmatpush1.bf16.msra.mxu0 0
          %431 = vmatprep.subr.bf16.mxu0 0
          %432 = vmatpush1.bf16.msra.mxu0 0
          %433 = vmatprep.mubr.bf16.mxu0 0
          %434 = vmatmul.mubr.bf16.gmra.mrb[0].mxu0 %v390
          %v435 = vpop.f32.mrb[0].mxu0
          %v436 = vadd.f32 0.0, %v435
          %v437 = vpop.f32.mrb[0].mxu0
          %v438 = vpop.f32.mrb[0].mxu0
          %v439 = vadd.f32 0.0, %v438
          %v440 = vpop.f32.mrb[0].mxu0
          %441 = vmatprep.mubr.bf16.mxu0 0
          %442 = vmatmul.mubr.bf16.gmra.mrb[0].mxu0 %v393
          %v443 = vpop.f32.mrb[0].mxu0
          %v444 = vadd.f32 0.0, %v443
          %v445 = vpop.f32.mrb[0].mxu0
          %v446 = vpop.f32.mrb[0].mxu0
          %v447 = vadd.f32 0.0, %v446
          %v448 = vpop.f32.mrb[0].mxu0
          %449 = vmatprep.mubr.bf16.mxu0 0
          %450 = vmatmul.mubr.bf16.gmra.mrb[0].mxu0 %v396
          %v451 = vpop.f32.mrb[0].mxu0
          %v452 = vadd.f32 0.0, %v451
          %v453 = vpop.f32.mrb[0].mxu0
          %v454 = vpop.f32.mrb[0].mxu0
          %v455 = vadd.f32 0.0, %v454
          %v456 = vpop.f32.mrb[0].mxu0
          %457 = vmatprep.mubr.bf16.mxu0 0
          %458 = vmatmul.mubr.bf16.gmra.mrb[0].mxu0 %v399
          %v459 = vpop.f32.mrb[0].mxu0
          %v460 = vadd.f32 0.0, %v459
          %v461 = vpop.f32.mrb[0].mxu0
          %v462 = vpop.f32.mrb[0].mxu0
          %v463 = vadd.f32 0.0, %v462
          %v464 = vpop.f32.mrb[0].mxu0
          %465 = vdwg.mxu0
          %s466 = scalar_lea.vmem [#allocation2], 64
          %467 = vst [vmem:[%s466] sm:$0xff] %v436
          %468 = vst [vmem:[%s466 + $0x8] sm:$0xff] %v439
          %469 = vst [vmem:[%s466 + $0x10] sm:$0xff] %v444
          %470 = vst [vmem:[%s466 + $0x18] sm:$0xff] %v447
          %471 = vst [vmem:[%s466 + $0x20] sm:$0xff] %v452
          %472 = vst [vmem:[%s466 + $0x28] sm:$0xff] %v455
          %473 = vst [vmem:[%s466 + $0x30] sm:$0xff] %v460
          %474 = vst [vmem:[%s466 + $0x38] sm:$0xff] %v463
        $region40: #{tpu_custom_call.1} parent=35 // pred_fallthru
          _
        %v475 = vld [vmem:[%s231] sm:$0xff]
        %v477 = vcombine.high %v475, %v475
        %v479 = vunpack.c.l.s4 1966171168
        %v480 = vunpack.c.0.s8 %v479
        %v481 = vlaneseq
        %v482 = vshrl.u32 %v481, 7
        %v483 = vsub.s32 %v480, %v482
        %v484 = vrot.slane %v475, %v483
        %v486 = vunpack.c.l.s4 1966171168
        %v487 = vunpack.c.0.s8 %v486
        %v488 = vlaneseq
        %v489 = vshrl.u32 %v488, 7
        %v490 = vsub.s32 %v487, %v489
        %v491 = vrot.slane %v477, %v490
        %v492 = vcombine.high %v484, %v484
        %v493 = vcombine.high %v491, %v491
        %v495 = vunpack.c.l.s4 1966171168
        %v496 = vunpack.c.0.s8 %v495
        %v497 = vlaneseq
        %v498 = vshrl.u32 %v497, 7
        %v499 = vsub.s32 %v496, %v498
        %v500 = vrot.slane %v484, %v499
        %v502 = vunpack.c.l.s4 1966171168
        %v503 = vunpack.c.0.s8 %v502
        %v504 = vlaneseq
        %v505 = vshrl.u32 %v504, 7
        %v506 = vsub.s32 %v503, %v505
        %v507 = vrot.slane %v491, %v506
        %v509 = vunpack.c.l.s4 1966171168
        %v510 = vunpack.c.0.s8 %v509
        %v511 = vlaneseq
        %v512 = vshrl.u32 %v511, 7
        %v513 = vsub.s32 %v510, %v512
        %v514 = vrot.slane %v492, %v513
        %v516 = vunpack.c.l.s4 1966171168
        %v517 = vunpack.c.0.s8 %v516
        %v518 = vlaneseq
        %v519 = vshrl.u32 %v518, 7
        %v520 = vsub.s32 %v517, %v519
        %v521 = vrot.slane %v493, %v520
        %v522 = vcombine.high %v500, %v500
        %v523 = vcombine.high %v507, %v507
        %v524 = vcombine.high %v514, %v514
        %v525 = vcombine.high %v521, %v521
        %v526 = vld [vmem:[%s3] sm:$0x1]
        %v527 = vld [vmem:[#allocation2] sm:$0xff]
        %v528 = vld [vmem:[#allocation2 + $0x8] sm:$0xff]
        %v529 = vld [vmem:[#allocation2 + $0x10] sm:$0xff]
        %v530 = vld [vmem:[#allocation2 + $0x18] sm:$0xff]
        %v531 = vld [vmem:[#allocation2 + $0x20] sm:$0xff]
        %v532 = vld [vmem:[#allocation2 + $0x28] sm:$0xff]
        %v533 = vld [vmem:[#allocation2 + $0x30] sm:$0xff]
        %v534 = vld [vmem:[#allocation2 + $0x38] sm:$0xff]
        %v535 = vlaneseq
        %v536 = vshrl.u32 %v535, 7
        %v537 = vsub.s32 0, %v536
        %v538 = vrot.slane %v500, %v537
        %v539 = vlaneseq
        %v540 = vshrl.u32 %v539, 7
        %v541 = vsub.s32 0, %v540
        %v542 = vrot.slane %v514, %v541
        %v543 = vlaneseq
        %v544 = vshrl.u32 %v543, 7
        %v545 = vsub.s32 0, %v544
        %v546 = vrot.slane %v522, %v545
        %v547 = vlaneseq
        %v548 = vshrl.u32 %v547, 7
        %v549 = vsub.s32 0, %v548
        %v550 = vrot.slane %v524, %v549
        %v551 = vlaneseq
        %v552 = vshrl.u32 %v551, 7
        %v553 = vsub.s32 0, %v552
        %v554 = vrot.slane %v507, %v553
        %v555 = vlaneseq
        %v556 = vshrl.u32 %v555, 7
        %v557 = vsub.s32 0, %v556
        %v558 = vrot.slane %v521, %v557
        %v559 = vlaneseq
        %v560 = vshrl.u32 %v559, 7
        %v561 = vsub.s32 0, %v560
        %v562 = vrot.slane %v523, %v561
        %v563 = vlaneseq
        %v564 = vshrl.u32 %v563, 7
        %v565 = vsub.s32 0, %v564
        %v566 = vrot.slane %v525, %v565
        %v575 = vmul.f32 %v527, %v538
        %v576 = vmul.f32 %v528, %v538
        %v577 = vmul.f32 %v529, %v538
        %v578 = vmul.f32 %v530, %v538
        %v579 = vmul.f32 %v531, %v538
        %v580 = vmul.f32 %v532, %v538
        %v581 = vmul.f32 %v533, %v538
        %v582 = vmul.f32 %v534, %v538
        %v583 = vmul.f32 %v527, %v542
        %v584 = vmul.f32 %v528, %v542
        %v585 = vmul.f32 %v529, %v542
        %v586 = vmul.f32 %v530, %v542
        %v587 = vmul.f32 %v531, %v542
        %v588 = vmul.f32 %v532, %v542
        %v589 = vmul.f32 %v533, %v542
        %v590 = vmul.f32 %v534, %v542
        %v591 = vmul.f32 %v527, %v546
        %v592 = vmul.f32 %v528, %v546
        %v593 = vmul.f32 %v529, %v546
        %v594 = vmul.f32 %v530, %v546
        %v595 = vmul.f32 %v531, %v546
        %v596 = vmul.f32 %v532, %v546
        %v597 = vmul.f32 %v533, %v546
        %v598 = vmul.f32 %v534, %v546
        %v599 = vmul.f32 %v527, %v550
        %v600 = vmul.f32 %v528, %v550
        %v601 = vmul.f32 %v529, %v550
        %v602 = vmul.f32 %v530, %v550
        %v603 = vmul.f32 %v531, %v550
        %v604 = vmul.f32 %v532, %v550
        %v605 = vmul.f32 %v533, %v550
        %v606 = vmul.f32 %v534, %v550
        %v607 = vmul.f32 %v527, %v554
        %v608 = vmul.f32 %v528, %v554
        %v609 = vmul.f32 %v529, %v554
        %v610 = vmul.f32 %v530, %v554
        %v611 = vmul.f32 %v531, %v554
        %v612 = vmul.f32 %v532, %v554
        %v613 = vmul.f32 %v533, %v554
        %v614 = vmul.f32 %v534, %v554
        %v615 = vmul.f32 %v527, %v558
        %v616 = vmul.f32 %v528, %v558
        %v617 = vmul.f32 %v529, %v558
        %v618 = vmul.f32 %v530, %v558
        %v619 = vmul.f32 %v531, %v558
        %v620 = vmul.f32 %v532, %v558
        %v621 = vmul.f32 %v533, %v558
        %v622 = vmul.f32 %v534, %v558
        %v623 = vmul.f32 %v527, %v562
        %v624 = vmul.f32 %v528, %v562
        %v625 = vmul.f32 %v529, %v562
        %v626 = vmul.f32 %v530, %v562
        %v627 = vmul.f32 %v531, %v562
        %v628 = vmul.f32 %v532, %v562
        %v629 = vmul.f32 %v533, %v562
        %v630 = vmul.f32 %v534, %v562
        %v631 = vmul.f32 %v527, %v566
        %v632 = vmul.f32 %v528, %v566
        %v633 = vmul.f32 %v529, %v566
        %v634 = vmul.f32 %v530, %v566
        %v635 = vmul.f32 %v531, %v566
        %v636 = vmul.f32 %v532, %v566
        %v637 = vmul.f32 %v533, %v566
        %v638 = vmul.f32 %v534, %v566
        %v639 = vtanh.pop %v575
        %v640 = vtanh.pop %v576
        %v641 = vtanh.pop %v577
        %v642 = vtanh.pop %v578
        %v643 = vtanh.pop %v579
        %v644 = vtanh.pop %v580
        %v645 = vtanh.pop %v581
        %v646 = vtanh.pop %v582
        %v647 = vtanh.pop %v583
        %v648 = vtanh.pop %v584
        %v649 = vtanh.pop %v585
        %v650 = vtanh.pop %v586
        %v651 = vtanh.pop %v587
        %v652 = vtanh.pop %v588
        %v653 = vtanh.pop %v589
        %v654 = vtanh.pop %v590
        %v655 = vtanh.pop %v591
        %v656 = vtanh.pop %v592
        %v657 = vtanh.pop %v593
        %v658 = vtanh.pop %v594
        %v659 = vtanh.pop %v595
        %v660 = vtanh.pop %v596
        %v661 = vtanh.pop %v597
        %v662 = vtanh.pop %v598
        %v663 = vtanh.pop %v599
        %v664 = vtanh.pop %v600
        %v665 = vtanh.pop %v601
        %v666 = vtanh.pop %v602
        %v667 = vtanh.pop %v603
        %v668 = vtanh.pop %v604
        %v669 = vtanh.pop %v605
        %v670 = vtanh.pop %v606
        %v671 = vtanh.pop %v607
        %v672 = vtanh.pop %v608
        %v673 = vtanh.pop %v609
        %v674 = vtanh.pop %v610
        %v675 = vtanh.pop %v611
        %v676 = vtanh.pop %v612
        %v677 = vtanh.pop %v613
        %v678 = vtanh.pop %v614
        %v679 = vtanh.pop %v615
        %v680 = vtanh.pop %v616
        %v681 = vtanh.pop %v617
        %v682 = vtanh.pop %v618
        %v683 = vtanh.pop %v619
        %v684 = vtanh.pop %v620
        %v685 = vtanh.pop %v621
        %v686 = vtanh.pop %v622
        %v687 = vtanh.pop %v623
        %v688 = vtanh.pop %v624
        %v689 = vtanh.pop %v625
        %v690 = vtanh.pop %v626
        %v691 = vtanh.pop %v627
        %v692 = vtanh.pop %v628
        %v693 = vtanh.pop %v629
        %v694 = vtanh.pop %v630
        %v695 = vtanh.pop %v631
        %v696 = vtanh.pop %v632
        %v697 = vtanh.pop %v633
        %v698 = vtanh.pop %v634
        %v699 = vtanh.pop %v635
        %v700 = vtanh.pop %v636
        %v701 = vtanh.pop %v637
        %v702 = vtanh.pop %v638
        %v704 = vlaneseq
        %v705 = vshrl.u32 %v704, 7
        %v706 = vsub.s32 0, %v705
        %v707 = vrot.slane %v526, %v706
        %v709 = vmul.f32 %v639, %v707
        %v710 = vmul.f32 %v640, %v707
        %v711 = vmul.f32 %v641, %v707
        %v712 = vmul.f32 %v642, %v707
        %v713 = vmul.f32 %v643, %v707
        %v714 = vmul.f32 %v644, %v707
        %v715 = vmul.f32 %v645, %v707
        %v716 = vmul.f32 %v646, %v707
        %v717 = vmul.f32 %v647, %v707
        %v718 = vmul.f32 %v648, %v707
        %v719 = vmul.f32 %v649, %v707
        %v720 = vmul.f32 %v650, %v707
        %v721 = vmul.f32 %v651, %v707
        %v722 = vmul.f32 %v652, %v707
        %v723 = vmul.f32 %v653, %v707
        %v724 = vmul.f32 %v654, %v707
        %v725 = vmul.f32 %v655, %v707
        %v726 = vmul.f32 %v656, %v707
        %v727 = vmul.f32 %v657, %v707
        %v728 = vmul.f32 %v658, %v707
        %v729 = vmul.f32 %v659, %v707
        %v730 = vmul.f32 %v660, %v707
        %v731 = vmul.f32 %v661, %v707
        %v732 = vmul.f32 %v662, %v707
        %v733 = vmul.f32 %v663, %v707
        %v734 = vmul.f32 %v664, %v707
        %v735 = vmul.f32 %v665, %v707
        %v736 = vmul.f32 %v666, %v707
        %v737 = vmul.f32 %v667, %v707
        %v738 = vmul.f32 %v668, %v707
        %v739 = vmul.f32 %v669, %v707
        %v740 = vmul.f32 %v670, %v707
        %v741 = vmul.f32 %v671, %v707
        %v742 = vmul.f32 %v672, %v707
        %v743 = vmul.f32 %v673, %v707
        %v744 = vmul.f32 %v674, %v707
        %v745 = vmul.f32 %v675, %v707
        %v746 = vmul.f32 %v676, %v707
        %v747 = vmul.f32 %v677, %v707
        %v748 = vmul.f32 %v678, %v707
        %v749 = vmul.f32 %v679, %v707
        %v750 = vmul.f32 %v680, %v707
        %v751 = vmul.f32 %v681, %v707
        %v752 = vmul.f32 %v682, %v707
        %v753 = vmul.f32 %v683, %v707
        %v754 = vmul.f32 %v684, %v707
        %v755 = vmul.f32 %v685, %v707
        %v756 = vmul.f32 %v686, %v707
        %v757 = vmul.f32 %v687, %v707
        %v758 = vmul.f32 %v688, %v707
        %v759 = vmul.f32 %v689, %v707
        %v760 = vmul.f32 %v690, %v707
        %v761 = vmul.f32 %v691, %v707
        %v762 = vmul.f32 %v692, %v707
        %v763 = vmul.f32 %v693, %v707
        %v764 = vmul.f32 %v694, %v707
        %v765 = vmul.f32 %v695, %v707
        %v766 = vmul.f32 %v696, %v707
        %v767 = vmul.f32 %v697, %v707
        %v768 = vmul.f32 %v698, %v707
        %v769 = vmul.f32 %v699, %v707
        %v770 = vmul.f32 %v700, %v707
        %v771 = vmul.f32 %v701, %v707
        %v772 = vmul.f32 %v702, %v707
        %773 = vadd.xlane.f32.xlu0 %v709
        %v774 = vpop.xlane.xlu0 %773
        %775 = vadd.xlane.f32.xlu0 %v710
        %v776 = vpop.xlane.xlu0 %775
        %777 = vadd.xlane.f32.xlu0 %v711
        %v778 = vpop.xlane.xlu0 %777
        %779 = vadd.xlane.f32.xlu0 %v712
        %v780 = vpop.xlane.xlu0 %779
        %781 = vadd.xlane.f32.xlu0 %v713
        %v782 = vpop.xlane.xlu0 %781
        %783 = vadd.xlane.f32.xlu0 %v714
        %v784 = vpop.xlane.xlu0 %783
        %785 = vadd.xlane.f32.xlu0 %v715
        %v786 = vpop.xlane.xlu0 %785
        %787 = vadd.xlane.f32.xlu0 %v716
        %v788 = vpop.xlane.xlu0 %787
        %789 = vadd.xlane.f32.xlu0 %v717
        %v790 = vpop.xlane.xlu0 %789
        %791 = vadd.xlane.f32.xlu0 %v718
        %v792 = vpop.xlane.xlu0 %791
        %793 = vadd.xlane.f32.xlu0 %v719
        %v794 = vpop.xlane.xlu0 %793
        %795 = vadd.xlane.f32.xlu0 %v720
        %v796 = vpop.xlane.xlu0 %795
        %797 = vadd.xlane.f32.xlu0 %v721
        %v798 = vpop.xlane.xlu0 %797
        %799 = vadd.xlane.f32.xlu0 %v722
        %v800 = vpop.xlane.xlu0 %799
        %801 = vadd.xlane.f32.xlu0 %v723
        %v802 = vpop.xlane.xlu0 %801
        %803 = vadd.xlane.f32.xlu0 %v724
        %v804 = vpop.xlane.xlu0 %803
        %805 = vadd.xlane.f32.xlu0 %v725
        %v806 = vpop.xlane.xlu0 %805
        %807 = vadd.xlane.f32.xlu0 %v726
        %v808 = vpop.xlane.xlu0 %807
        %809 = vadd.xlane.f32.xlu0 %v727
        %v810 = vpop.xlane.xlu0 %809
        %811 = vadd.xlane.f32.xlu0 %v728
        %v812 = vpop.xlane.xlu0 %811
        %813 = vadd.xlane.f32.xlu0 %v729
        %v814 = vpop.xlane.xlu0 %813
        %815 = vadd.xlane.f32.xlu0 %v730
        %v816 = vpop.xlane.xlu0 %815
        %817 = vadd.xlane.f32.xlu0 %v731
        %v818 = vpop.xlane.xlu0 %817
        %819 = vadd.xlane.f32.xlu0 %v732
        %v820 = vpop.xlane.xlu0 %819
        %821 = vadd.xlane.f32.xlu0 %v733
        %v822 = vpop.xlane.xlu0 %821
        %823 = vadd.xlane.f32.xlu0 %v734
        %v824 = vpop.xlane.xlu0 %823
        %825 = vadd.xlane.f32.xlu0 %v735
        %v826 = vpop.xlane.xlu0 %825
        %827 = vadd.xlane.f32.xlu0 %v736
        %v828 = vpop.xlane.xlu0 %827
        %829 = vadd.xlane.f32.xlu0 %v737
        %v830 = vpop.xlane.xlu0 %829
        %831 = vadd.xlane.f32.xlu0 %v738
        %v832 = vpop.xlane.xlu0 %831
        %833 = vadd.xlane.f32.xlu0 %v739
        %v834 = vpop.xlane.xlu0 %833
        %835 = vadd.xlane.f32.xlu0 %v740
        %v836 = vpop.xlane.xlu0 %835
        %837 = vadd.xlane.f32.xlu0 %v741
        %v838 = vpop.xlane.xlu0 %837
        %839 = vadd.xlane.f32.xlu0 %v742
        %v840 = vpop.xlane.xlu0 %839
        %841 = vadd.xlane.f32.xlu0 %v743
        %v842 = vpop.xlane.xlu0 %841
        %843 = vadd.xlane.f32.xlu0 %v744
        %v844 = vpop.xlane.xlu0 %843
        %845 = vadd.xlane.f32.xlu0 %v745
        %v846 = vpop.xlane.xlu0 %845
        %847 = vadd.xlane.f32.xlu0 %v746
        %v848 = vpop.xlane.xlu0 %847
        %849 = vadd.xlane.f32.xlu0 %v747
        %v850 = vpop.xlane.xlu0 %849
        %851 = vadd.xlane.f32.xlu0 %v748
        %v852 = vpop.xlane.xlu0 %851
        %853 = vadd.xlane.f32.xlu0 %v749
        %v854 = vpop.xlane.xlu0 %853
        %855 = vadd.xlane.f32.xlu0 %v750
        %v856 = vpop.xlane.xlu0 %855
        %857 = vadd.xlane.f32.xlu0 %v751
        %v858 = vpop.xlane.xlu0 %857
        %859 = vadd.xlane.f32.xlu0 %v752
        %v860 = vpop.xlane.xlu0 %859
        %861 = vadd.xlane.f32.xlu0 %v753
        %v862 = vpop.xlane.xlu0 %861
        %863 = vadd.xlane.f32.xlu0 %v754
        %v864 = vpop.xlane.xlu0 %863
        %865 = vadd.xlane.f32.xlu0 %v755
        %v866 = vpop.xlane.xlu0 %865
        %867 = vadd.xlane.f32.xlu0 %v756
        %v868 = vpop.xlane.xlu0 %867
        %869 = vadd.xlane.f32.xlu0 %v757
        %v870 = vpop.xlane.xlu0 %869
        %871 = vadd.xlane.f32.xlu0 %v758
        %v872 = vpop.xlane.xlu0 %871
        %873 = vadd.xlane.f32.xlu0 %v759
        %v874 = vpop.xlane.xlu0 %873
        %875 = vadd.xlane.f32.xlu0 %v760
        %v876 = vpop.xlane.xlu0 %875
        %877 = vadd.xlane.f32.xlu0 %v761
        %v878 = vpop.xlane.xlu0 %877
        %879 = vadd.xlane.f32.xlu0 %v762
        %v880 = vpop.xlane.xlu0 %879
        %881 = vadd.xlane.f32.xlu0 %v763
        %v882 = vpop.xlane.xlu0 %881
        %883 = vadd.xlane.f32.xlu0 %v764
        %v884 = vpop.xlane.xlu0 %883
        %885 = vadd.xlane.f32.xlu0 %v765
        %v886 = vpop.xlane.xlu0 %885
        %887 = vadd.xlane.f32.xlu0 %v766
        %v888 = vpop.xlane.xlu0 %887
        %889 = vadd.xlane.f32.xlu0 %v767
        %v890 = vpop.xlane.xlu0 %889
        %891 = vadd.xlane.f32.xlu0 %v768
        %v892 = vpop.xlane.xlu0 %891
        %893 = vadd.xlane.f32.xlu0 %v769
        %v894 = vpop.xlane.xlu0 %893
        %895 = vadd.xlane.f32.xlu0 %v770
        %v896 = vpop.xlane.xlu0 %895
        %897 = vadd.xlane.f32.xlu0 %v771
        %v898 = vpop.xlane.xlu0 %897
        %899 = vadd.xlane.f32.xlu0 %v772
        %v900 = vpop.xlane.xlu0 %899
        %v965 = vlaneseq
        %v966 = vand.u32 %v965, 127
        %v967 = vlaneseq
        %v968 = vshrl.u32 %v967, 7
        %v969 = vsub.s32 %v966, %v968
        %v970 = vrot.slane %v774, %v969
        %v971 = vadd.s32 %v966, 4294967288
        %v972 = vlaneseq
        %v973 = vshrl.u32 %v972, 7
        %v974 = vsub.s32 %v971, %v973
        %v975 = vrot.slane %v776, %v974
        %vm976 = vcmask 130112
        %v977 = vsel %vm976, %v975, %v970
        %v978 = vadd.s32 %v966, 4294967280
        %v979 = vlaneseq
        %v980 = vshrl.u32 %v979, 7
        %v981 = vsub.s32 %v978, %v980
        %v982 = vrot.slane %v778, %v981
        %vm983 = vcmask 195712
        %v984 = vsel %vm983, %v982, %v977
        %v985 = vadd.s32 %v966, 4294967272
        %v986 = vlaneseq
        %v987 = vshrl.u32 %v986, 7
        %v988 = vsub.s32 %v985, %v987
        %v989 = vrot.slane %v780, %v988
        %vm990 = vcmask 261312
        %v991 = vsel %vm990, %v989, %v984
        %v992 = vadd.s32 %v966, 4294967264
        %v993 = vlaneseq
        %v994 = vshrl.u32 %v993, 7
        %v995 = vsub.s32 %v992, %v994
        %v996 = vrot.slane %v782, %v995
        %vm997 = vcmask 326912
        %v998 = vsel %vm997, %v996, %v991
        %v999 = vadd.s32 %v966, 4294967256
        %v1000 = vlaneseq
        %v1001 = vshrl.u32 %v1000, 7
        %v1002 = vsub.s32 %v999, %v1001
        %v1003 = vrot.slane %v784, %v1002
        %vm1004 = vcmask 392512
        %v1005 = vsel %vm1004, %v1003, %v998
        %v1006 = vadd.s32 %v966, 4294967248
        %v1007 = vlaneseq
        %v1008 = vshrl.u32 %v1007, 7
        %v1009 = vsub.s32 %v1006, %v1008
        %v1010 = vrot.slane %v786, %v1009
        %vm1011 = vcmask 458112
        %v1012 = vsel %vm1011, %v1010, %v1005
        %v1013 = vadd.s32 %v966, 4294967240
        %v1014 = vlaneseq
        %v1015 = vshrl.u32 %v1014, 7
        %v1016 = vsub.s32 %v1013, %v1015
        %v1017 = vrot.slane %v788, %v1016
        %vm1018 = vcmask 523712
        %v1019 = vsel %vm1018, %v1017, %v1012
        %v1020 = vlaneseq
        %v1021 = vshrl.u32 %v1020, 7
        %v1022 = vsub.s32 %v966, %v1021
        %v1023 = vrot.slane %v790, %v1022
        %v1024 = vlaneseq
        %v1025 = vshrl.u32 %v1024, 7
        %v1026 = vsub.s32 %v971, %v1025
        %v1027 = vrot.slane %v792, %v1026
        %v1028 = vsel %vm976, %v1027, %v1023
        %v1029 = vlaneseq
        %v1030 = vshrl.u32 %v1029, 7
        %v1031 = vsub.s32 %v978, %v1030
        %v1032 = vrot.slane %v794, %v1031
        %v1033 = vsel %vm983, %v1032, %v1028
        %v1034 = vlaneseq
        %v1035 = vshrl.u32 %v1034, 7
        %v1036 = vsub.s32 %v985, %v1035
        %v1037 = vrot.slane %v796, %v1036
        %v1038 = vsel %vm990, %v1037, %v1033
        %v1039 = vlaneseq
        %v1040 = vshrl.u32 %v1039, 7
        %v1041 = vsub.s32 %v992, %v1040
        %v1042 = vrot.slane %v798, %v1041
        %v1043 = vsel %vm997, %v1042, %v1038
        %v1044 = vlaneseq
        %v1045 = vshrl.u32 %v1044, 7
        %v1046 = vsub.s32 %v999, %v1045
        %v1047 = vrot.slane %v800, %v1046
        %v1048 = vsel %vm1004, %v1047, %v1043
        %v1049 = vlaneseq
        %v1050 = vshrl.u32 %v1049, 7
        %v1051 = vsub.s32 %v1006, %v1050
        %v1052 = vrot.slane %v802, %v1051
        %v1053 = vsel %vm1011, %v1052, %v1048
        %v1054 = vlaneseq
        %v1055 = vshrl.u32 %v1054, 7
        %v1056 = vsub.s32 %v1013, %v1055
        %v1057 = vrot.slane %v804, %v1056
        %v1058 = vsel %vm1018, %v1057, %v1053
        %v1059 = vlaneseq
        %v1060 = vshrl.u32 %v1059, 7
        %v1061 = vsub.s32 %v966, %v1060
        %v1062 = vrot.slane %v806, %v1061
        %v1063 = vlaneseq
        %v1064 = vshrl.u32 %v1063, 7
        %v1065 = vsub.s32 %v971, %v1064
        %v1066 = vrot.slane %v808, %v1065
        %v1067 = vsel %vm976, %v1066, %v1062
        %v1068 = vlaneseq
        %v1069 = vshrl.u32 %v1068, 7
        %v1070 = vsub.s32 %v978, %v1069
        %v1071 = vrot.slane %v810, %v1070
        %v1072 = vsel %vm983, %v1071, %v1067
        %v1073 = vlaneseq
        %v1074 = vshrl.u32 %v1073, 7
        %v1075 = vsub.s32 %v985, %v1074
        %v1076 = vrot.slane %v812, %v1075
        %v1077 = vsel %vm990, %v1076, %v1072
        %v1078 = vlaneseq
        %v1079 = vshrl.u32 %v1078, 7
        %v1080 = vsub.s32 %v992, %v1079
        %v1081 = vrot.slane %v814, %v1080
        %v1082 = vsel %vm997, %v1081, %v1077
        %v1083 = vlaneseq
        %v1084 = vshrl.u32 %v1083, 7
        %v1085 = vsub.s32 %v999, %v1084
        %v1086 = vrot.slane %v816, %v1085
        %v1087 = vsel %vm1004, %v1086, %v1082
        %v1088 = vlaneseq
        %v1089 = vshrl.u32 %v1088, 7
        %v1090 = vsub.s32 %v1006, %v1089
        %v1091 = vrot.slane %v818, %v1090
        %v1092 = vsel %vm1011, %v1091, %v1087
        %v1093 = vlaneseq
        %v1094 = vshrl.u32 %v1093, 7
        %v1095 = vsub.s32 %v1013, %v1094
        %v1096 = vrot.slane %v820, %v1095
        %v1097 = vsel %vm1018, %v1096, %v1092
        %v1098 = vlaneseq
        %v1099 = vshrl.u32 %v1098, 7
        %v1100 = vsub.s32 %v966, %v1099
        %v1101 = vrot.slane %v822, %v1100
        %v1102 = vlaneseq
        %v1103 = vshrl.u32 %v1102, 7
        %v1104 = vsub.s32 %v971, %v1103
        %v1105 = vrot.slane %v824, %v1104
        %v1106 = vsel %vm976, %v1105, %v1101
        %v1107 = vlaneseq
        %v1108 = vshrl.u32 %v1107, 7
        %v1109 = vsub.s32 %v978, %v1108
        %v1110 = vrot.slane %v826, %v1109
        %v1111 = vsel %vm983, %v1110, %v1106
        %v1112 = vlaneseq
        %v1113 = vshrl.u32 %v1112, 7
        %v1114 = vsub.s32 %v985, %v1113
        %v1115 = vrot.slane %v828, %v1114
        %v1116 = vsel %vm990, %v1115, %v1111
        %v1117 = vlaneseq
        %v1118 = vshrl.u32 %v1117, 7
        %v1119 = vsub.s32 %v992, %v1118
        %v1120 = vrot.slane %v830, %v1119
        %v1121 = vsel %vm997, %v1120, %v1116
        %v1122 = vlaneseq
        %v1123 = vshrl.u32 %v1122, 7
        %v1124 = vsub.s32 %v999, %v1123
        %v1125 = vrot.slane %v832, %v1124
        %v1126 = vsel %vm1004, %v1125, %v1121
        %v1127 = vlaneseq
        %v1128 = vshrl.u32 %v1127, 7
        %v1129 = vsub.s32 %v1006, %v1128
        %v1130 = vrot.slane %v834, %v1129
        %v1131 = vsel %vm1011, %v1130, %v1126
        %v1132 = vlaneseq
        %v1133 = vshrl.u32 %v1132, 7
        %v1134 = vsub.s32 %v1013, %v1133
        %v1135 = vrot.slane %v836, %v1134
        %v1136 = vsel %vm1018, %v1135, %v1131
        %v1137 = vlaneseq
        %v1138 = vshrl.u32 %v1137, 7
        %v1139 = vsub.s32 %v966, %v1138
        %v1140 = vrot.slane %v838, %v1139
        %v1141 = vlaneseq
        %v1142 = vshrl.u32 %v1141, 7
        %v1143 = vsub.s32 %v971, %v1142
        %v1144 = vrot.slane %v840, %v1143
        %v1145 = vsel %vm976, %v1144, %v1140
        %v1146 = vlaneseq
        %v1147 = vshrl.u32 %v1146, 7
        %v1148 = vsub.s32 %v978, %v1147
        %v1149 = vrot.slane %v842, %v1148
        %v1150 = vsel %vm983, %v1149, %v1145
        %v1151 = vlaneseq
        %v1152 = vshrl.u32 %v1151, 7
        %v1153 = vsub.s32 %v985, %v1152
        %v1154 = vrot.slane %v844, %v1153
        %v1155 = vsel %vm990, %v1154, %v1150
        %v1156 = vlaneseq
        %v1157 = vshrl.u32 %v1156, 7
        %v1158 = vsub.s32 %v992, %v1157
        %v1159 = vrot.slane %v846, %v1158
        %v1160 = vsel %vm997, %v1159, %v1155
        %v1161 = vlaneseq
        %v1162 = vshrl.u32 %v1161, 7
        %v1163 = vsub.s32 %v999, %v1162
        %v1164 = vrot.slane %v848, %v1163
        %v1165 = vsel %vm1004, %v1164, %v1160
        %v1166 = vlaneseq
        %v1167 = vshrl.u32 %v1166, 7
        %v1168 = vsub.s32 %v1006, %v1167
        %v1169 = vrot.slane %v850, %v1168
        %v1170 = vsel %vm1011, %v1169, %v1165
        %v1171 = vlaneseq
        %v1172 = vshrl.u32 %v1171, 7
        %v1173 = vsub.s32 %v1013, %v1172
        %v1174 = vrot.slane %v852, %v1173
        %v1175 = vsel %vm1018, %v1174, %v1170
        %v1176 = vlaneseq
        %v1177 = vshrl.u32 %v1176, 7
        %v1178 = vsub.s32 %v966, %v1177
        %v1179 = vrot.slane %v854, %v1178
        %v1180 = vlaneseq
        %v1181 = vshrl.u32 %v1180, 7
        %v1182 = vsub.s32 %v971, %v1181
        %v1183 = vrot.slane %v856, %v1182
        %v1184 = vsel %vm976, %v1183, %v1179
        %v1185 = vlaneseq
        %v1186 = vshrl.u32 %v1185, 7
        %v1187 = vsub.s32 %v978, %v1186
        %v1188 = vrot.slane %v858, %v1187
        %v1189 = vsel %vm983, %v1188, %v1184
        %v1190 = vlaneseq
        %v1191 = vshrl.u32 %v1190, 7
        %v1192 = vsub.s32 %v985, %v1191
        %v1193 = vrot.slane %v860, %v1192
        %v1194 = vsel %vm990, %v1193, %v1189
        %v1195 = vlaneseq
        %v1196 = vshrl.u32 %v1195, 7
        %v1197 = vsub.s32 %v992, %v1196
        %v1198 = vrot.slane %v862, %v1197
        %v1199 = vsel %vm997, %v1198, %v1194
        %v1200 = vlaneseq
        %v1201 = vshrl.u32 %v1200, 7
        %v1202 = vsub.s32 %v999, %v1201
        %v1203 = vrot.slane %v864, %v1202
        %v1204 = vsel %vm1004, %v1203, %v1199
        %v1205 = vlaneseq
        %v1206 = vshrl.u32 %v1205, 7
        %v1207 = vsub.s32 %v1006, %v1206
        %v1208 = vrot.slane %v866, %v1207
        %v1209 = vsel %vm1011, %v1208, %v1204
        %v1210 = vlaneseq
        %v1211 = vshrl.u32 %v1210, 7
        %v1212 = vsub.s32 %v1013, %v1211
        %v1213 = vrot.slane %v868, %v1212
        %v1214 = vsel %vm1018, %v1213, %v1209
        %v1215 = vlaneseq
        %v1216 = vshrl.u32 %v1215, 7
        %v1217 = vsub.s32 %v966, %v1216
        %v1218 = vrot.slane %v870, %v1217
        %v1219 = vlaneseq
        %v1220 = vshrl.u32 %v1219, 7
        %v1221 = vsub.s32 %v971, %v1220
        %v1222 = vrot.slane %v872, %v1221
        %v1223 = vsel %vm976, %v1222, %v1218
        %v1224 = vlaneseq
        %v1225 = vshrl.u32 %v1224, 7
        %v1226 = vsub.s32 %v978, %v1225
        %v1227 = vrot.slane %v874, %v1226
        %v1228 = vsel %vm983, %v1227, %v1223
        %v1229 = vlaneseq
        %v1230 = vshrl.u32 %v1229, 7
        %v1231 = vsub.s32 %v985, %v1230
        %v1232 = vrot.slane %v876, %v1231
        %v1233 = vsel %vm990, %v1232, %v1228
        %v1234 = vlaneseq
        %v1235 = vshrl.u32 %v1234, 7
        %v1236 = vsub.s32 %v992, %v1235
        %v1237 = vrot.slane %v878, %v1236
        %v1238 = vsel %vm997, %v1237, %v1233
        %v1239 = vlaneseq
        %v1240 = vshrl.u32 %v1239, 7
        %v1241 = vsub.s32 %v999, %v1240
        %v1242 = vrot.slane %v880, %v1241
        %v1243 = vsel %vm1004, %v1242, %v1238
        %v1244 = vlaneseq
        %v1245 = vshrl.u32 %v1244, 7
        %v1246 = vsub.s32 %v1006, %v1245
        %v1247 = vrot.slane %v882, %v1246
        %v1248 = vsel %vm1011, %v1247, %v1243
        %v1249 = vlaneseq
        %v1250 = vshrl.u32 %v1249, 7
        %v1251 = vsub.s32 %v1013, %v1250
        %v1252 = vrot.slane %v884, %v1251
        %v1253 = vsel %vm1018, %v1252, %v1248
        %v1254 = vlaneseq
        %v1255 = vshrl.u32 %v1254, 7
        %v1256 = vsub.s32 %v966, %v1255
        %v1257 = vrot.slane %v886, %v1256
        %v1258 = vlaneseq
        %v1259 = vshrl.u32 %v1258, 7
        %v1260 = vsub.s32 %v971, %v1259
        %v1261 = vrot.slane %v888, %v1260
        %v1262 = vsel %vm976, %v1261, %v1257
        %v1263 = vlaneseq
        %v1264 = vshrl.u32 %v1263, 7
        %v1265 = vsub.s32 %v978, %v1264
        %v1266 = vrot.slane %v890, %v1265
        %v1267 = vsel %vm983, %v1266, %v1262
        %v1268 = vlaneseq
        %v1269 = vshrl.u32 %v1268, 7
        %v1270 = vsub.s32 %v985, %v1269
        %v1271 = vrot.slane %v892, %v1270
        %v1272 = vsel %vm990, %v1271, %v1267
        %v1273 = vlaneseq
        %v1274 = vshrl.u32 %v1273, 7
        %v1275 = vsub.s32 %v992, %v1274
        %v1276 = vrot.slane %v894, %v1275
        %v1277 = vsel %vm997, %v1276, %v1272
        %v1278 = vlaneseq
        %v1279 = vshrl.u32 %v1278, 7
        %v1280 = vsub.s32 %v999, %v1279
        %v1281 = vrot.slane %v896, %v1280
        %v1282 = vsel %vm1004, %v1281, %v1277
        %v1283 = vlaneseq
        %v1284 = vshrl.u32 %v1283, 7
        %v1285 = vsub.s32 %v1006, %v1284
        %v1286 = vrot.slane %v898, %v1285
        %v1287 = vsel %vm1011, %v1286, %v1282
        %v1288 = vlaneseq
        %v1289 = vshrl.u32 %v1288, 7
        %v1290 = vsub.s32 %v1013, %v1289
        %v1291 = vrot.slane %v900, %v1290
        %v1292 = vsel %vm1018, %v1291, %v1287
        %vm1293 = vcmask 1041409
        %v1294 = vsel %vm1293, %v1058, %v1019
        %vm1295 = vcmask 1042434
        %v1296 = vsel %vm1295, %v1097, %v1294
        %vm1297 = vcmask 1043459
        %v1298 = vsel %vm1297, %v1136, %v1296
        %vm1299 = vcmask 1044484
        %v1300 = vsel %vm1299, %v1175, %v1298
        %vm1301 = vcmask 1045509
        %v1302 = vsel %vm1301, %v1214, %v1300
        %vm1303 = vcmask 1046534
        %v1304 = vsel %vm1303, %v1253, %v1302
        %vm1305 = vcmask 1047559
        %v1306 = vsel %vm1305, %v1292, %v1304
        %vm1308 = vcmask 523264
        %v1309 = vsel %vm1308, %v1306, -inf
        %1310 = vmax.xlane.f32.xlu0 %v1309
        %v1311 = vpop.xlane.xlu0 %1310
        %v1313 = vlaneseq
        %v1314 = vshrl.u32 %v1313, 7
        %v1315 = vsub.s32 0, %v1314
        %v1316 = vrot.slane %v1311, %v1315
        %v1317 = vlaneseq
        %v1318 = vshrl.u32 %v1317, 7
        %v1319 = vsub.s32 1, %v1318
        %v1320 = vrot.slane %v1311, %v1319
        %v1321 = vlaneseq
        %v1322 = vshrl.u32 %v1321, 7
        %v1323 = vsub.s32 2, %v1322
        %v1324 = vrot.slane %v1311, %v1323
        %v1325 = vlaneseq
        %v1326 = vshrl.u32 %v1325, 7
        %v1327 = vsub.s32 3, %v1326
        %v1328 = vrot.slane %v1311, %v1327
        %v1329 = vlaneseq
        %v1330 = vshrl.u32 %v1329, 7
        %v1331 = vsub.s32 4, %v1330
        %v1332 = vrot.slane %v1311, %v1331
        %v1333 = vlaneseq
        %v1334 = vshrl.u32 %v1333, 7
        %v1335 = vsub.s32 5, %v1334
        %v1336 = vrot.slane %v1311, %v1335
        %v1337 = vlaneseq
        %v1338 = vshrl.u32 %v1337, 7
        %v1339 = vsub.s32 6, %v1338
        %v1340 = vrot.slane %v1311, %v1339
        %v1341 = vlaneseq
        %v1342 = vshrl.u32 %v1341, 7
        %v1343 = vsub.s32 7, %v1342
        %v1344 = vrot.slane %v1311, %v1343
        %v1353 = vsub.f32 %v774, %v1316
        %v1354 = vsub.f32 %v776, %v1316
        %v1355 = vsub.f32 %v778, %v1316
        %v1356 = vsub.f32 %v780, %v1316
        %v1357 = vsub.f32 %v782, %v1316
        %v1358 = vsub.f32 %v784, %v1316
        %v1359 = vsub.f32 %v786, %v1316
        %v1360 = vsub.f32 %v788, %v1316
        %v1361 = vsub.f32 %v790, %v1320
        %v1362 = vsub.f32 %v792, %v1320
        %v1363 = vsub.f32 %v794, %v1320
        %v1364 = vsub.f32 %v796, %v1320
        %v1365 = vsub.f32 %v798, %v1320
        %v1366 = vsub.f32 %v800, %v1320
        %v1367 = vsub.f32 %v802, %v1320
        %v1368 = vsub.f32 %v804, %v1320
        %v1369 = vsub.f32 %v806, %v1324
        %v1370 = vsub.f32 %v808, %v1324
        %v1371 = vsub.f32 %v810, %v1324
        %v1372 = vsub.f32 %v812, %v1324
        %v1373 = vsub.f32 %v814, %v1324
        %v1374 = vsub.f32 %v816, %v1324
        %v1375 = vsub.f32 %v818, %v1324
        %v1376 = vsub.f32 %v820, %v1324
        %v1377 = vsub.f32 %v822, %v1328
        %v1378 = vsub.f32 %v824, %v1328
        %v1379 = vsub.f32 %v826, %v1328
        %v1380 = vsub.f32 %v828, %v1328
        %v1381 = vsub.f32 %v830, %v1328
        %v1382 = vsub.f32 %v832, %v1328
        %v1383 = vsub.f32 %v834, %v1328
        %v1384 = vsub.f32 %v836, %v1328
        %v1385 = vsub.f32 %v838, %v1332
        %v1386 = vsub.f32 %v840, %v1332
        %v1387 = vsub.f32 %v842, %v1332
        %v1388 = vsub.f32 %v844, %v1332
        %v1389 = vsub.f32 %v846, %v1332
        %v1390 = vsub.f32 %v848, %v1332
        %v1391 = vsub.f32 %v850, %v1332
        %v1392 = vsub.f32 %v852, %v1332
        %v1393 = vsub.f32 %v854, %v1336
        %v1394 = vsub.f32 %v856, %v1336
        %v1395 = vsub.f32 %v858, %v1336
        %v1396 = vsub.f32 %v860, %v1336
        %v1397 = vsub.f32 %v862, %v1336
        %v1398 = vsub.f32 %v864, %v1336
        %v1399 = vsub.f32 %v866, %v1336
        %v1400 = vsub.f32 %v868, %v1336
        %v1401 = vsub.f32 %v870, %v1340
        %v1402 = vsub.f32 %v872, %v1340
        %v1403 = vsub.f32 %v874, %v1340
        %v1404 = vsub.f32 %v876, %v1340
        %v1405 = vsub.f32 %v878, %v1340
        %v1406 = vsub.f32 %v880, %v1340
        %v1407 = vsub.f32 %v882, %v1340
        %v1408 = vsub.f32 %v884, %v1340
        %v1409 = vsub.f32 %v886, %v1344
        %v1410 = vsub.f32 %v888, %v1344
        %v1411 = vsub.f32 %v890, %v1344
        %v1412 = vsub.f32 %v892, %v1344
        %v1413 = vsub.f32 %v894, %v1344
        %v1414 = vsub.f32 %v896, %v1344
        %v1415 = vsub.f32 %v898, %v1344
        %v1416 = vsub.f32 %v900, %v1344
        %v1417 = vmul.f32 %v1353, 1.442695
        %v1418 = vpow.pop %v1417
        %v1419 = vmul.f32 %v1354, 1.442695
        %v1420 = vpow.pop %v1419
        %v1421 = vmul.f32 %v1355, 1.442695
        %v1422 = vpow.pop %v1421
        %v1423 = vmul.f32 %v1356, 1.442695
        %v1424 = vpow.pop %v1423
        %v1425 = vmul.f32 %v1357, 1.442695
        %v1426 = vpow.pop %v1425
        %v1427 = vmul.f32 %v1358, 1.442695
        %v1428 = vpow.pop %v1427
        %v1429 = vmul.f32 %v1359, 1.442695
        %v1430 = vpow.pop %v1429
        %v1431 = vmul.f32 %v1360, 1.442695
        %v1432 = vpow.pop %v1431
        %v1433 = vmul.f32 %v1361, 1.442695
        %v1434 = vpow.pop %v1433
        %v1435 = vmul.f32 %v1362, 1.442695
        %v1436 = vpow.pop %v1435
        %v1437 = vmul.f32 %v1363, 1.442695
        %v1438 = vpow.pop %v1437
        %v1439 = vmul.f32 %v1364, 1.442695
        %v1440 = vpow.pop %v1439
        %v1441 = vmul.f32 %v1365, 1.442695
        %v1442 = vpow.pop %v1441
        %v1443 = vmul.f32 %v1366, 1.442695
        %v1444 = vpow.pop %v1443
        %v1445 = vmul.f32 %v1367, 1.442695
        %v1446 = vpow.pop %v1445
        %v1447 = vmul.f32 %v1368, 1.442695
        %v1448 = vpow.pop %v1447
        %v1449 = vmul.f32 %v1369, 1.442695
        %v1450 = vpow.pop %v1449
        %v1451 = vmul.f32 %v1370, 1.442695
        %v1452 = vpow.pop %v1451
        %v1453 = vmul.f32 %v1371, 1.442695
        %v1454 = vpow.pop %v1453
        %v1455 = vmul.f32 %v1372, 1.442695
        %v1456 = vpow.pop %v1455
        %v1457 = vmul.f32 %v1373, 1.442695
        %v1458 = vpow.pop %v1457
        %v1459 = vmul.f32 %v1374, 1.442695
        %v1460 = vpow.pop %v1459
        %v1461 = vmul.f32 %v1375, 1.442695
        %v1462 = vpow.pop %v1461
        %v1463 = vmul.f32 %v1376, 1.442695
        %v1464 = vpow.pop %v1463
        %v1465 = vmul.f32 %v1377, 1.442695
        %v1466 = vpow.pop %v1465
        %v1467 = vmul.f32 %v1378, 1.442695
        %v1468 = vpow.pop %v1467
        %v1469 = vmul.f32 %v1379, 1.442695
        %v1470 = vpow.pop %v1469
        %v1471 = vmul.f32 %v1380, 1.442695
        %v1472 = vpow.pop %v1471
        %v1473 = vmul.f32 %v1381, 1.442695
        %v1474 = vpow.pop %v1473
        %v1475 = vmul.f32 %v1382, 1.442695
        %v1476 = vpow.pop %v1475
        %v1477 = vmul.f32 %v1383, 1.442695
        %v1478 = vpow.pop %v1477
        %v1479 = vmul.f32 %v1384, 1.442695
        %v1480 = vpow.pop %v1479
        %v1481 = vmul.f32 %v1385, 1.442695
        %v1482 = vpow.pop %v1481
        %v1483 = vmul.f32 %v1386, 1.442695
        %v1484 = vpow.pop %v1483
        %v1485 = vmul.f32 %v1387, 1.442695
        %v1486 = vpow.pop %v1485
        %v1487 = vmul.f32 %v1388, 1.442695
        %v1488 = vpow.pop %v1487
        %v1489 = vmul.f32 %v1389, 1.442695
        %v1490 = vpow.pop %v1489
        %v1491 = vmul.f32 %v1390, 1.442695
        %v1492 = vpow.pop %v1491
        %v1493 = vmul.f32 %v1391, 1.442695
        %v1494 = vpow.pop %v1493
        %v1495 = vmul.f32 %v1392, 1.442695
        %v1496 = vpow.pop %v1495
        %v1497 = vmul.f32 %v1393, 1.442695
        %v1498 = vpow.pop %v1497
        %v1499 = vmul.f32 %v1394, 1.442695
        %v1500 = vpow.pop %v1499
        %v1501 = vmul.f32 %v1395, 1.442695
        %v1502 = vpow.pop %v1501
        %v1503 = vmul.f32 %v1396, 1.442695
        %v1504 = vpow.pop %v1503
        %v1505 = vmul.f32 %v1397, 1.442695
        %v1506 = vpow.pop %v1505
        %v1507 = vmul.f32 %v1398, 1.442695
        %v1508 = vpow.pop %v1507
        %v1509 = vmul.f32 %v1399, 1.442695
        %v1510 = vpow.pop %v1509
        %v1511 = vmul.f32 %v1400, 1.442695
        %v1512 = vpow.pop %v1511
        %v1513 = vmul.f32 %v1401, 1.442695
        %v1514 = vpow.pop %v1513
        %v1515 = vmul.f32 %v1402, 1.442695
        %v1516 = vpow.pop %v1515
        %v1517 = vmul.f32 %v1403, 1.442695
        %v1518 = vpow.pop %v1517
        %v1519 = vmul.f32 %v1404, 1.442695
        %v1520 = vpow.pop %v1519
        %v1521 = vmul.f32 %v1405, 1.442695
        %v1522 = vpow.pop %v1521
        %v1523 = vmul.f32 %v1406, 1.442695
        %v1524 = vpow.pop %v1523
        %v1525 = vmul.f32 %v1407, 1.442695
        %v1526 = vpow.pop %v1525
        %v1527 = vmul.f32 %v1408, 1.442695
        %v1528 = vpow.pop %v1527
        %v1529 = vmul.f32 %v1409, 1.442695
        %v1530 = vpow.pop %v1529
        %v1531 = vmul.f32 %v1410, 1.442695
        %v1532 = vpow.pop %v1531
        %v1533 = vmul.f32 %v1411, 1.442695
        %v1534 = vpow.pop %v1533
        %v1535 = vmul.f32 %v1412, 1.442695
        %v1536 = vpow.pop %v1535
        %v1537 = vmul.f32 %v1413, 1.442695
        %v1538 = vpow.pop %v1537
        %v1539 = vmul.f32 %v1414, 1.442695
        %v1540 = vpow.pop %v1539
        %v1541 = vmul.f32 %v1415, 1.442695
        %v1542 = vpow.pop %v1541
        %v1543 = vmul.f32 %v1416, 1.442695
        %v1544 = vpow.pop %v1543
        %1609 = vset.pattern.permute.xlu0 0
        %1610 = vperm.xlu0 %1609, %v1418
        %v1611 = vpop.permute.xlu0 %1610
        %1612 = vset.pattern.permute.xlu0 0
        %1613 = vperm.xlu0 %1612, %v1420
        %v1614 = vpop.permute.xlu0 %1613
        %1615 = vset.pattern.permute.xlu0 0
        %1616 = vperm.xlu0 %1615, %v1422
        %v1617 = vpop.permute.xlu0 %1616
        %1618 = vset.pattern.permute.xlu0 0
        %1619 = vperm.xlu0 %1618, %v1424
        %v1620 = vpop.permute.xlu0 %1619
        %1621 = vset.pattern.permute.xlu0 0
        %1622 = vperm.xlu0 %1621, %v1426
        %v1623 = vpop.permute.xlu0 %1622
        %1624 = vset.pattern.permute.xlu0 0
        %1625 = vperm.xlu0 %1624, %v1428
        %v1626 = vpop.permute.xlu0 %1625
        %1627 = vset.pattern.permute.xlu0 0
        %1628 = vperm.xlu0 %1627, %v1430
        %v1629 = vpop.permute.xlu0 %1628
        %1630 = vset.pattern.permute.xlu0 0
        %1631 = vperm.xlu0 %1630, %v1432
        %v1632 = vpop.permute.xlu0 %1631
        %1633 = vset.pattern.permute.xlu0 0
        %1634 = vperm.xlu0 %1633, %v1434
        %v1635 = vpop.permute.xlu0 %1634
        %1636 = vset.pattern.permute.xlu0 0
        %1637 = vperm.xlu0 %1636, %v1436
        %v1638 = vpop.permute.xlu0 %1637
        %1639 = vset.pattern.permute.xlu0 0
        %1640 = vperm.xlu0 %1639, %v1438
        %v1641 = vpop.permute.xlu0 %1640
        %1642 = vset.pattern.permute.xlu0 0
        %1643 = vperm.xlu0 %1642, %v1440
        %v1644 = vpop.permute.xlu0 %1643
        %1645 = vset.pattern.permute.xlu0 0
        %1646 = vperm.xlu0 %1645, %v1442
        %v1647 = vpop.permute.xlu0 %1646
        %1648 = vset.pattern.permute.xlu0 0
        %1649 = vperm.xlu0 %1648, %v1444
        %v1650 = vpop.permute.xlu0 %1649
        %1651 = vset.pattern.permute.xlu0 0
        %1652 = vperm.xlu0 %1651, %v1446
        %v1653 = vpop.permute.xlu0 %1652
        %1654 = vset.pattern.permute.xlu0 0
        %1655 = vperm.xlu0 %1654, %v1448
        %v1656 = vpop.permute.xlu0 %1655
        %1657 = vset.pattern.permute.xlu0 0
        %1658 = vperm.xlu0 %1657, %v1450
        %v1659 = vpop.permute.xlu0 %1658
        %1660 = vset.pattern.permute.xlu0 0
        %1661 = vperm.xlu0 %1660, %v1452
        %v1662 = vpop.permute.xlu0 %1661
        %1663 = vset.pattern.permute.xlu0 0
        %1664 = vperm.xlu0 %1663, %v1454
        %v1665 = vpop.permute.xlu0 %1664
        %1666 = vset.pattern.permute.xlu0 0
        %1667 = vperm.xlu0 %1666, %v1456
        %v1668 = vpop.permute.xlu0 %1667
        %1669 = vset.pattern.permute.xlu0 0
        %1670 = vperm.xlu0 %1669, %v1458
        %v1671 = vpop.permute.xlu0 %1670
        %1672 = vset.pattern.permute.xlu0 0
        %1673 = vperm.xlu0 %1672, %v1460
        %v1674 = vpop.permute.xlu0 %1673
        %1675 = vset.pattern.permute.xlu0 0
        %1676 = vperm.xlu0 %1675, %v1462
        %v1677 = vpop.permute.xlu0 %1676
        %1678 = vset.pattern.permute.xlu0 0
        %1679 = vperm.xlu0 %1678, %v1464
        %v1680 = vpop.permute.xlu0 %1679
        %1681 = vset.pattern.permute.xlu0 0
        %1682 = vperm.xlu0 %1681, %v1466
        %v1683 = vpop.permute.xlu0 %1682
        %1684 = vset.pattern.permute.xlu0 0
        %1685 = vperm.xlu0 %1684, %v1468
        %v1686 = vpop.permute.xlu0 %1685
        %1687 = vset.pattern.permute.xlu0 0
        %1688 = vperm.xlu0 %1687, %v1470
        %v1689 = vpop.permute.xlu0 %1688
        %1690 = vset.pattern.permute.xlu0 0
        %1691 = vperm.xlu0 %1690, %v1472
        %v1692 = vpop.permute.xlu0 %1691
        %1693 = vset.pattern.permute.xlu0 0
        %1694 = vperm.xlu0 %1693, %v1474
        %v1695 = vpop.permute.xlu0 %1694
        %1696 = vset.pattern.permute.xlu0 0
        %1697 = vperm.xlu0 %1696, %v1476
        %v1698 = vpop.permute.xlu0 %1697
        %1699 = vset.pattern.permute.xlu0 0
        %1700 = vperm.xlu0 %1699, %v1478
        %v1701 = vpop.permute.xlu0 %1700
        %1702 = vset.pattern.permute.xlu0 0
        %1703 = vperm.xlu0 %1702, %v1480
        %v1704 = vpop.permute.xlu0 %1703
        %1705 = vset.pattern.permute.xlu0 0
        %1706 = vperm.xlu0 %1705, %v1482
        %v1707 = vpop.permute.xlu0 %1706
        %1708 = vset.pattern.permute.xlu0 0
        %1709 = vperm.xlu0 %1708, %v1484
        %v1710 = vpop.permute.xlu0 %1709
        %1711 = vset.pattern.permute.xlu0 0
        %1712 = vperm.xlu0 %1711, %v1486
        %v1713 = vpop.permute.xlu0 %1712
        %1714 = vset.pattern.permute.xlu0 0
        %1715 = vperm.xlu0 %1714, %v1488
        %v1716 = vpop.permute.xlu0 %1715
        %1717 = vset.pattern.permute.xlu0 0
        %1718 = vperm.xlu0 %1717, %v1490
        %v1719 = vpop.permute.xlu0 %1718
        %1720 = vset.pattern.permute.xlu0 0
        %1721 = vperm.xlu0 %1720, %v1492
        %v1722 = vpop.permute.xlu0 %1721
        %1723 = vset.pattern.permute.xlu0 0
        %1724 = vperm.xlu0 %1723, %v1494
        %v1725 = vpop.permute.xlu0 %1724
        %1726 = vset.pattern.permute.xlu0 0
        %1727 = vperm.xlu0 %1726, %v1496
        %v1728 = vpop.permute.xlu0 %1727
        %1729 = vset.pattern.permute.xlu0 0
        %1730 = vperm.xlu0 %1729, %v1498
        %v1731 = vpop.permute.xlu0 %1730
        %1732 = vset.pattern.permute.xlu0 0
        %1733 = vperm.xlu0 %1732, %v1500
        %v1734 = vpop.permute.xlu0 %1733
        %1735 = vset.pattern.permute.xlu0 0
        %1736 = vperm.xlu0 %1735, %v1502
        %v1737 = vpop.permute.xlu0 %1736
        %1738 = vset.pattern.permute.xlu0 0
        %1739 = vperm.xlu0 %1738, %v1504
        %v1740 = vpop.permute.xlu0 %1739
        %1741 = vset.pattern.permute.xlu0 0
        %1742 = vperm.xlu0 %1741, %v1506
        %v1743 = vpop.permute.xlu0 %1742
        %1744 = vset.pattern.permute.xlu0 0
        %1745 = vperm.xlu0 %1744, %v1508
        %v1746 = vpop.permute.xlu0 %1745
        %1747 = vset.pattern.permute.xlu0 0
        %1748 = vperm.xlu0 %1747, %v1510
        %v1749 = vpop.permute.xlu0 %1748
        %1750 = vset.pattern.permute.xlu0 0
        %1751 = vperm.xlu0 %1750, %v1512
        %v1752 = vpop.permute.xlu0 %1751
        %1753 = vset.pattern.permute.xlu0 0
        %1754 = vperm.xlu0 %1753, %v1514
        %v1755 = vpop.permute.xlu0 %1754
        %1756 = vset.pattern.permute.xlu0 0
        %1757 = vperm.xlu0 %1756, %v1516
        %v1758 = vpop.permute.xlu0 %1757
        %1759 = vset.pattern.permute.xlu0 0
        %1760 = vperm.xlu0 %1759, %v1518
        %v1761 = vpop.permute.xlu0 %1760
        %1762 = vset.pattern.permute.xlu0 0
        %1763 = vperm.xlu0 %1762, %v1520
        %v1764 = vpop.permute.xlu0 %1763
        %1765 = vset.pattern.permute.xlu0 0
        %1766 = vperm.xlu0 %1765, %v1522
        %v1767 = vpop.permute.xlu0 %1766
        %1768 = vset.pattern.permute.xlu0 0
        %1769 = vperm.xlu0 %1768, %v1524
        %v1770 = vpop.permute.xlu0 %1769
        %1771 = vset.pattern.permute.xlu0 0
        %1772 = vperm.xlu0 %1771, %v1526
        %v1773 = vpop.permute.xlu0 %1772
        %1774 = vset.pattern.permute.xlu0 0
        %1775 = vperm.xlu0 %1774, %v1528
        %v1776 = vpop.permute.xlu0 %1775
        %1777 = vset.pattern.permute.xlu0 0
        %1778 = vperm.xlu0 %1777, %v1530
        %v1779 = vpop.permute.xlu0 %1778
        %1780 = vset.pattern.permute.xlu0 0
        %1781 = vperm.xlu0 %1780, %v1532
        %v1782 = vpop.permute.xlu0 %1781
        %1783 = vset.pattern.permute.xlu0 0
        %1784 = vperm.xlu0 %1783, %v1534
        %v1785 = vpop.permute.xlu0 %1784
        %1786 = vset.pattern.permute.xlu0 0
        %1787 = vperm.xlu0 %1786, %v1536
        %v1788 = vpop.permute.xlu0 %1787
        %1789 = vset.pattern.permute.xlu0 0
        %1790 = vperm.xlu0 %1789, %v1538
        %v1791 = vpop.permute.xlu0 %1790
        %1792 = vset.pattern.permute.xlu0 0
        %1793 = vperm.xlu0 %1792, %v1540
        %v1794 = vpop.permute.xlu0 %1793
        %1795 = vset.pattern.permute.xlu0 0
        %1796 = vperm.xlu0 %1795, %v1542
        %v1797 = vpop.permute.xlu0 %1796
        %1798 = vset.pattern.permute.xlu0 0
        %1799 = vperm.xlu0 %1798, %v1544
        %v1800 = vpop.permute.xlu0 %1799
        %v1801 = vlaneseq
        %v1802 = vshrl.u32 %v1801, 7
        %v1803 = vsub.s32 %v966, %v1802
        %v1804 = vrot.slane %v1611, %v1803
        %v1805 = vlaneseq
        %v1806 = vshrl.u32 %v1805, 7
        %v1807 = vsub.s32 %v971, %v1806
        %v1808 = vrot.slane %v1614, %v1807
        %v1809 = vsel %vm976, %v1808, %v1804
        %v1810 = vlaneseq
        %v1811 = vshrl.u32 %v1810, 7
        %v1812 = vsub.s32 %v978, %v1811
        %v1813 = vrot.slane %v1617, %v1812
        %v1814 = vsel %vm983, %v1813, %v1809
        %v1815 = vlaneseq
        %v1816 = vshrl.u32 %v1815, 7
        %v1817 = vsub.s32 %v985, %v1816
        %v1818 = vrot.slane %v1620, %v1817
        %v1819 = vsel %vm990, %v1818, %v1814
        %v1820 = vlaneseq
        %v1821 = vshrl.u32 %v1820, 7
        %v1822 = vsub.s32 %v992, %v1821
        %v1823 = vrot.slane %v1623, %v1822
        %v1824 = vsel %vm997, %v1823, %v1819
        %v1825 = vlaneseq
        %v1826 = vshrl.u32 %v1825, 7
        %v1827 = vsub.s32 %v999, %v1826
        %v1828 = vrot.slane %v1626, %v1827
        %v1829 = vsel %vm1004, %v1828, %v1824
        %v1830 = vlaneseq
        %v1831 = vshrl.u32 %v1830, 7
        %v1832 = vsub.s32 %v1006, %v1831
        %v1833 = vrot.slane %v1629, %v1832
        %v1834 = vsel %vm1011, %v1833, %v1829
        %v1835 = vlaneseq
        %v1836 = vshrl.u32 %v1835, 7
        %v1837 = vsub.s32 %v1013, %v1836
        %v1838 = vrot.slane %v1632, %v1837
        %v1839 = vsel %vm1018, %v1838, %v1834
        %v1840 = vlaneseq
        %v1841 = vshrl.u32 %v1840, 7
        %v1842 = vsub.s32 %v966, %v1841
        %v1843 = vrot.slane %v1635, %v1842
        %v1844 = vlaneseq
        %v1845 = vshrl.u32 %v1844, 7
        %v1846 = vsub.s32 %v971, %v1845
        %v1847 = vrot.slane %v1638, %v1846
        %v1848 = vsel %vm976, %v1847, %v1843
        %v1849 = vlaneseq
        %v1850 = vshrl.u32 %v1849, 7
        %v1851 = vsub.s32 %v978, %v1850
        %v1852 = vrot.slane %v1641, %v1851
        %v1853 = vsel %vm983, %v1852, %v1848
        %v1854 = vlaneseq
        %v1855 = vshrl.u32 %v1854, 7
        %v1856 = vsub.s32 %v985, %v1855
        %v1857 = vrot.slane %v1644, %v1856
        %v1858 = vsel %vm990, %v1857, %v1853
        %v1859 = vlaneseq
        %v1860 = vshrl.u32 %v1859, 7
        %v1861 = vsub.s32 %v992, %v1860
        %v1862 = vrot.slane %v1647, %v1861
        %v1863 = vsel %vm997, %v1862, %v1858
        %v1864 = vlaneseq
        %v1865 = vshrl.u32 %v1864, 7
        %v1866 = vsub.s32 %v999, %v1865
        %v1867 = vrot.slane %v1650, %v1866
        %v1868 = vsel %vm1004, %v1867, %v1863
        %v1869 = vlaneseq
        %v1870 = vshrl.u32 %v1869, 7
        %v1871 = vsub.s32 %v1006, %v1870
        %v1872 = vrot.slane %v1653, %v1871
        %v1873 = vsel %vm1011, %v1872, %v1868
        %v1874 = vlaneseq
        %v1875 = vshrl.u32 %v1874, 7
        %v1876 = vsub.s32 %v1013, %v1875
        %v1877 = vrot.slane %v1656, %v1876
        %v1878 = vsel %vm1018, %v1877, %v1873
        %v1879 = vlaneseq
        %v1880 = vshrl.u32 %v1879, 7
        %v1881 = vsub.s32 %v966, %v1880
        %v1882 = vrot.slane %v1659, %v1881
        %v1883 = vlaneseq
        %v1884 = vshrl.u32 %v1883, 7
        %v1885 = vsub.s32 %v971, %v1884
        %v1886 = vrot.slane %v1662, %v1885
        %v1887 = vsel %vm976, %v1886, %v1882
        %v1888 = vlaneseq
        %v1889 = vshrl.u32 %v1888, 7
        %v1890 = vsub.s32 %v978, %v1889
        %v1891 = vrot.slane %v1665, %v1890
        %v1892 = vsel %vm983, %v1891, %v1887
        %v1893 = vlaneseq
        %v1894 = vshrl.u32 %v1893, 7
        %v1895 = vsub.s32 %v985, %v1894
        %v1896 = vrot.slane %v1668, %v1895
        %v1897 = vsel %vm990, %v1896, %v1892
        %v1898 = vlaneseq
        %v1899 = vshrl.u32 %v1898, 7
        %v1900 = vsub.s32 %v992, %v1899
        %v1901 = vrot.slane %v1671, %v1900
        %v1902 = vsel %vm997, %v1901, %v1897
        %v1903 = vlaneseq
        %v1904 = vshrl.u32 %v1903, 7
        %v1905 = vsub.s32 %v999, %v1904
        %v1906 = vrot.slane %v1674, %v1905
        %v1907 = vsel %vm1004, %v1906, %v1902
        %v1908 = vlaneseq
        %v1909 = vshrl.u32 %v1908, 7
        %v1910 = vsub.s32 %v1006, %v1909
        %v1911 = vrot.slane %v1677, %v1910
        %v1912 = vsel %vm1011, %v1911, %v1907
        %v1913 = vlaneseq
        %v1914 = vshrl.u32 %v1913, 7
        %v1915 = vsub.s32 %v1013, %v1914
        %v1916 = vrot.slane %v1680, %v1915
        %v1917 = vsel %vm1018, %v1916, %v1912
        %v1918 = vlaneseq
        %v1919 = vshrl.u32 %v1918, 7
        %v1920 = vsub.s32 %v966, %v1919
        %v1921 = vrot.slane %v1683, %v1920
        %v1922 = vlaneseq
        %v1923 = vshrl.u32 %v1922, 7
        %v1924 = vsub.s32 %v971, %v1923
        %v1925 = vrot.slane %v1686, %v1924
        %v1926 = vsel %vm976, %v1925, %v1921
        %v1927 = vlaneseq
        %v1928 = vshrl.u32 %v1927, 7
        %v1929 = vsub.s32 %v978, %v1928
        %v1930 = vrot.slane %v1689, %v1929
        %v1931 = vsel %vm983, %v1930, %v1926
        %v1932 = vlaneseq
        %v1933 = vshrl.u32 %v1932, 7
        %v1934 = vsub.s32 %v985, %v1933
        %v1935 = vrot.slane %v1692, %v1934
        %v1936 = vsel %vm990, %v1935, %v1931
        %v1937 = vlaneseq
        %v1938 = vshrl.u32 %v1937, 7
        %v1939 = vsub.s32 %v992, %v1938
        %v1940 = vrot.slane %v1695, %v1939
        %v1941 = vsel %vm997, %v1940, %v1936
        %v1942 = vlaneseq
        %v1943 = vshrl.u32 %v1942, 7
        %v1944 = vsub.s32 %v999, %v1943
        %v1945 = vrot.slane %v1698, %v1944
        %v1946 = vsel %vm1004, %v1945, %v1941
        %v1947 = vlaneseq
        %v1948 = vshrl.u32 %v1947, 7
        %v1949 = vsub.s32 %v1006, %v1948
        %v1950 = vrot.slane %v1701, %v1949
        %v1951 = vsel %vm1011, %v1950, %v1946
        %v1952 = vlaneseq
        %v1953 = vshrl.u32 %v1952, 7
        %v1954 = vsub.s32 %v1013, %v1953
        %v1955 = vrot.slane %v1704, %v1954
        %v1956 = vsel %vm1018, %v1955, %v1951
        %v1957 = vlaneseq
        %v1958 = vshrl.u32 %v1957, 7
        %v1959 = vsub.s32 %v966, %v1958
        %v1960 = vrot.slane %v1707, %v1959
        %v1961 = vlaneseq
        %v1962 = vshrl.u32 %v1961, 7
        %v1963 = vsub.s32 %v971, %v1962
        %v1964 = vrot.slane %v1710, %v1963
        %v1965 = vsel %vm976, %v1964, %v1960
        %v1966 = vlaneseq
        %v1967 = vshrl.u32 %v1966, 7
        %v1968 = vsub.s32 %v978, %v1967
        %v1969 = vrot.slane %v1713, %v1968
        %v1970 = vsel %vm983, %v1969, %v1965
        %v1971 = vlaneseq
        %v1972 = vshrl.u32 %v1971, 7
        %v1973 = vsub.s32 %v985, %v1972
        %v1974 = vrot.slane %v1716, %v1973
        %v1975 = vsel %vm990, %v1974, %v1970
        %v1976 = vlaneseq
        %v1977 = vshrl.u32 %v1976, 7
        %v1978 = vsub.s32 %v992, %v1977
        %v1979 = vrot.slane %v1719, %v1978
        %v1980 = vsel %vm997, %v1979, %v1975
        %v1981 = vlaneseq
        %v1982 = vshrl.u32 %v1981, 7
        %v1983 = vsub.s32 %v999, %v1982
        %v1984 = vrot.slane %v1722, %v1983
        %v1985 = vsel %vm1004, %v1984, %v1980
        %v1986 = vlaneseq
        %v1987 = vshrl.u32 %v1986, 7
        %v1988 = vsub.s32 %v1006, %v1987
        %v1989 = vrot.slane %v1725, %v1988
        %v1990 = vsel %vm1011, %v1989, %v1985
        %v1991 = vlaneseq
        %v1992 = vshrl.u32 %v1991, 7
        %v1993 = vsub.s32 %v1013, %v1992
        %v1994 = vrot.slane %v1728, %v1993
        %v1995 = vsel %vm1018, %v1994, %v1990
        %v1996 = vlaneseq
        %v1997 = vshrl.u32 %v1996, 7
        %v1998 = vsub.s32 %v966, %v1997
        %v1999 = vrot.slane %v1731, %v1998
        %v2000 = vlaneseq
        %v2001 = vshrl.u32 %v2000, 7
        %v2002 = vsub.s32 %v971, %v2001
        %v2003 = vrot.slane %v1734, %v2002
        %v2004 = vsel %vm976, %v2003, %v1999
        %v2005 = vlaneseq
        %v2006 = vshrl.u32 %v2005, 7
        %v2007 = vsub.s32 %v978, %v2006
        %v2008 = vrot.slane %v1737, %v2007
        %v2009 = vsel %vm983, %v2008, %v2004
        %v2010 = vlaneseq
        %v2011 = vshrl.u32 %v2010, 7
        %v2012 = vsub.s32 %v985, %v2011
        %v2013 = vrot.slane %v1740, %v2012
        %v2014 = vsel %vm990, %v2013, %v2009
        %v2015 = vlaneseq
        %v2016 = vshrl.u32 %v2015, 7
        %v2017 = vsub.s32 %v992, %v2016
        %v2018 = vrot.slane %v1743, %v2017
        %v2019 = vsel %vm997, %v2018, %v2014
        %v2020 = vlaneseq
        %v2021 = vshrl.u32 %v2020, 7
        %v2022 = vsub.s32 %v999, %v2021
        %v2023 = vrot.slane %v1746, %v2022
        %v2024 = vsel %vm1004, %v2023, %v2019
        %v2025 = vlaneseq
        %v2026 = vshrl.u32 %v2025, 7
        %v2027 = vsub.s32 %v1006, %v2026
        %v2028 = vrot.slane %v1749, %v2027
        %v2029 = vsel %vm1011, %v2028, %v2024
        %v2030 = vlaneseq
        %v2031 = vshrl.u32 %v2030, 7
        %v2032 = vsub.s32 %v1013, %v2031
        %v2033 = vrot.slane %v1752, %v2032
        %v2034 = vsel %vm1018, %v2033, %v2029
        %v2035 = vlaneseq
        %v2036 = vshrl.u32 %v2035, 7
        %v2037 = vsub.s32 %v966, %v2036
        %v2038 = vrot.slane %v1755, %v2037
        %v2039 = vlaneseq
        %v2040 = vshrl.u32 %v2039, 7
        %v2041 = vsub.s32 %v971, %v2040
        %v2042 = vrot.slane %v1758, %v2041
        %v2043 = vsel %vm976, %v2042, %v2038
        %v2044 = vlaneseq
        %v2045 = vshrl.u32 %v2044, 7
        %v2046 = vsub.s32 %v978, %v2045
        %v2047 = vrot.slane %v1761, %v2046
        %v2048 = vsel %vm983, %v2047, %v2043
        %v2049 = vlaneseq
        %v2050 = vshrl.u32 %v2049, 7
        %v2051 = vsub.s32 %v985, %v2050
        %v2052 = vrot.slane %v1764, %v2051
        %v2053 = vsel %vm990, %v2052, %v2048
        %v2054 = vlaneseq
        %v2055 = vshrl.u32 %v2054, 7
        %v2056 = vsub.s32 %v992, %v2055
        %v2057 = vrot.slane %v1767, %v2056
        %v2058 = vsel %vm997, %v2057, %v2053
        %v2059 = vlaneseq
        %v2060 = vshrl.u32 %v2059, 7
        %v2061 = vsub.s32 %v999, %v2060
        %v2062 = vrot.slane %v1770, %v2061
        %v2063 = vsel %vm1004, %v2062, %v2058
        %v2064 = vlaneseq
        %v2065 = vshrl.u32 %v2064, 7
        %v2066 = vsub.s32 %v1006, %v2065
        %v2067 = vrot.slane %v1773, %v2066
        %v2068 = vsel %vm1011, %v2067, %v2063
        %v2069 = vlaneseq
        %v2070 = vshrl.u32 %v2069, 7
        %v2071 = vsub.s32 %v1013, %v2070
        %v2072 = vrot.slane %v1776, %v2071
        %v2073 = vsel %vm1018, %v2072, %v2068
        %v2074 = vlaneseq
        %v2075 = vshrl.u32 %v2074, 7
        %v2076 = vsub.s32 %v966, %v2075
        %v2077 = vrot.slane %v1779, %v2076
        %v2078 = vlaneseq
        %v2079 = vshrl.u32 %v2078, 7
        %v2080 = vsub.s32 %v971, %v2079
        %v2081 = vrot.slane %v1782, %v2080
        %v2082 = vsel %vm976, %v2081, %v2077
        %v2083 = vlaneseq
        %v2084 = vshrl.u32 %v2083, 7
        %v2085 = vsub.s32 %v978, %v2084
        %v2086 = vrot.slane %v1785, %v2085
        %v2087 = vsel %vm983, %v2086, %v2082
        %v2088 = vlaneseq
        %v2089 = vshrl.u32 %v2088, 7
        %v2090 = vsub.s32 %v985, %v2089
        %v2091 = vrot.slane %v1788, %v2090
        %v2092 = vsel %vm990, %v2091, %v2087
        %v2093 = vlaneseq
        %v2094 = vshrl.u32 %v2093, 7
        %v2095 = vsub.s32 %v992, %v2094
        %v2096 = vrot.slane %v1791, %v2095
        %v2097 = vsel %vm997, %v2096, %v2092
        %v2098 = vlaneseq
        %v2099 = vshrl.u32 %v2098, 7
        %v2100 = vsub.s32 %v999, %v2099
        %v2101 = vrot.slane %v1794, %v2100
        %v2102 = vsel %vm1004, %v2101, %v2097
        %v2103 = vlaneseq
        %v2104 = vshrl.u32 %v2103, 7
        %v2105 = vsub.s32 %v1006, %v2104
        %v2106 = vrot.slane %v1797, %v2105
        %v2107 = vsel %vm1011, %v2106, %v2102
        %v2108 = vlaneseq
        %v2109 = vshrl.u32 %v2108, 7
        %v2110 = vsub.s32 %v1013, %v2109
        %v2111 = vrot.slane %v1800, %v2110
        %v2112 = vsel %vm1018, %v2111, %v2107
        %v2113 = vsel %vm1293, %v1878, %v1839
        %v2114 = vsel %vm1295, %v1917, %v2113
        %v2115 = vsel %vm1297, %v1956, %v2114
        %v2116 = vsel %vm1299, %v1995, %v2115
        %v2117 = vsel %vm1301, %v2034, %v2116
        %v2118 = vsel %vm1303, %v2073, %v2117
        %v2119 = vsel %vm1305, %v2112, %v2118
        %v2121 = vsel %vm1308, %v2119, 0.0
        %2122 = vadd.xlane.f32.xlu0 %v2121
        %v2123 = vpop.xlane.xlu0 %2122
        %v2124 = vrcp.pop %v2123
        %v2125 = vpack.c.bf16 %v1420, %v1418
        %v2126 = vpack.c.bf16 %v1424, %v1422
        %v2127 = vpack.c.bf16 %v1428, %v1426
        %v2128 = vpack.c.bf16 %v1432, %v1430
        %v2129 = vpack.c.bf16 %v1436, %v1434
        %v2130 = vpack.c.bf16 %v1440, %v1438
        %v2131 = vpack.c.bf16 %v1444, %v1442
        %v2132 = vpack.c.bf16 %v1448, %v1446
        %v2133 = vpack.c.bf16 %v1452, %v1450
        %v2134 = vpack.c.bf16 %v1456, %v1454
        %v2135 = vpack.c.bf16 %v1460, %v1458
        %v2136 = vpack.c.bf16 %v1464, %v1462
        %v2137 = vpack.c.bf16 %v1468, %v1466
        %v2138 = vpack.c.bf16 %v1472, %v1470
        %v2139 = vpack.c.bf16 %v1476, %v1474
        %v2140 = vpack.c.bf16 %v1480, %v1478
        %v2141 = vpack.c.bf16 %v1484, %v1482
        %v2142 = vpack.c.bf16 %v1488, %v1486
        %v2143 = vpack.c.bf16 %v1492, %v1490
        %v2144 = vpack.c.bf16 %v1496, %v1494
        %v2145 = vpack.c.bf16 %v1500, %v1498
        %v2146 = vpack.c.bf16 %v1504, %v1502
        %v2147 = vpack.c.bf16 %v1508, %v1506
        %v2148 = vpack.c.bf16 %v1512, %v1510
        %v2149 = vpack.c.bf16 %v1516, %v1514
        %v2150 = vpack.c.bf16 %v1520, %v1518
        %v2151 = vpack.c.bf16 %v1524, %v1522
        %v2152 = vpack.c.bf16 %v1528, %v1526
        %v2153 = vpack.c.bf16 %v1532, %v1530
        %v2154 = vpack.c.bf16 %v1536, %v1534
        %v2155 = vpack.c.bf16 %v1540, %v1538
        %v2156 = vpack.c.bf16 %v1544, %v1542
        %v2157 = vld [vmem:[%s226] sm:$0xf]
        %v2158 = vld [vmem:[%s226 + $0x4] sm:$0xf]
        %v2159 = vld [vmem:[%s226 + $0x8] sm:$0xf]
        %v2160 = vld [vmem:[%s226 + $0xc] sm:$0xf]
        %v2161 = vld [vmem:[%s226 + $0x10] sm:$0xf]
        %v2162 = vld [vmem:[%s226 + $0x14] sm:$0xf]
        %v2163 = vld [vmem:[%s226 + $0x18] sm:$0xf]
        %v2164 = vld [vmem:[%s226 + $0x1c] sm:$0xf]
        %v2197 = vunpack.c.l.b16 %v2125
        %v2198 = vunpack.c.h.b16 %v2125
        %v2199 = vunpack.c.l.b16 %v2126
        %v2200 = vunpack.c.h.b16 %v2126
        %v2201 = vunpack.c.l.b16 %v2127
        %v2202 = vunpack.c.h.b16 %v2127
        %v2203 = vunpack.c.l.b16 %v2128
        %v2204 = vunpack.c.h.b16 %v2128
        %v2205 = vunpack.c.l.b16 %v2129
        %v2206 = vunpack.c.h.b16 %v2129
        %v2207 = vunpack.c.l.b16 %v2130
        %v2208 = vunpack.c.h.b16 %v2130
        %v2209 = vunpack.c.l.b16 %v2131
        %v2210 = vunpack.c.h.b16 %v2131
        %v2211 = vunpack.c.l.b16 %v2132
        %v2212 = vunpack.c.h.b16 %v2132
        %v2213 = vunpack.c.l.b16 %v2133
        %v2214 = vunpack.c.h.b16 %v2133
        %v2215 = vunpack.c.l.b16 %v2134
        %v2216 = vunpack.c.h.b16 %v2134
        %v2217 = vunpack.c.l.b16 %v2135
        %v2218 = vunpack.c.h.b16 %v2135
        %v2219 = vunpack.c.l.b16 %v2136
        %v2220 = vunpack.c.h.b16 %v2136
        %v2221 = vunpack.c.l.b16 %v2137
        %v2222 = vunpack.c.h.b16 %v2137
        %v2223 = vunpack.c.l.b16 %v2138
        %v2224 = vunpack.c.h.b16 %v2138
        %v2225 = vunpack.c.l.b16 %v2139
        %v2226 = vunpack.c.h.b16 %v2139
        %v2227 = vunpack.c.l.b16 %v2140
        %v2228 = vunpack.c.h.b16 %v2140
        %v2229 = vunpack.c.l.b16 %v2141
        %v2230 = vunpack.c.h.b16 %v2141
        %v2231 = vunpack.c.l.b16 %v2142
        %v2232 = vunpack.c.h.b16 %v2142
        %v2233 = vunpack.c.l.b16 %v2143
        %v2234 = vunpack.c.h.b16 %v2143
        %v2235 = vunpack.c.l.b16 %v2144
        %v2236 = vunpack.c.h.b16 %v2144
        %v2237 = vunpack.c.l.b16 %v2145
        %v2238 = vunpack.c.h.b16 %v2145
        %v2239 = vunpack.c.l.b16 %v2146
        %v2240 = vunpack.c.h.b16 %v2146
        %v2241 = vunpack.c.l.b16 %v2147
        %v2242 = vunpack.c.h.b16 %v2147
        %v2243 = vunpack.c.l.b16 %v2148
        %v2244 = vunpack.c.h.b16 %v2148
        %v2245 = vunpack.c.l.b16 %v2149
        %v2246 = vunpack.c.h.b16 %v2149
        %v2247 = vunpack.c.l.b16 %v2150
        %v2248 = vunpack.c.h.b16 %v2150
        %v2249 = vunpack.c.l.b16 %v2151
        %v2250 = vunpack.c.h.b16 %v2151
        %v2251 = vunpack.c.l.b16 %v2152
        %v2252 = vunpack.c.h.b16 %v2152
        %v2253 = vunpack.c.l.b16 %v2153
        %v2254 = vunpack.c.h.b16 %v2153
        %v2255 = vunpack.c.l.b16 %v2154
        %v2256 = vunpack.c.h.b16 %v2154
        %v2257 = vunpack.c.l.b16 %v2155
        %v2258 = vunpack.c.h.b16 %v2155
        %v2259 = vunpack.c.l.b16 %v2156
        %v2260 = vunpack.c.h.b16 %v2156
        %2261 = vset.pattern.permute.xlu0 0
        %2262 = vperm.xlu0 %2261, %v2197
        %v2263 = vpop.permute.xlu0 %2262
        %2264 = vset.pattern.permute.xlu0 0
        %2265 = vperm.xlu0 %2264, %v2198
        %v2266 = vpop.permute.xlu0 %2265
        %2267 = vset.pattern.permute.xlu0 0
        %2268 = vperm.xlu0 %2267, %v2199
        %v2269 = vpop.permute.xlu0 %2268
        %2270 = vset.pattern.permute.xlu0 0
        %2271 = vperm.xlu0 %2270, %v2200
        %v2272 = vpop.permute.xlu0 %2271
        %2273 = vset.pattern.permute.xlu0 0
        %2274 = vperm.xlu0 %2273, %v2201
        %v2275 = vpop.permute.xlu0 %2274
        %2276 = vset.pattern.permute.xlu0 0
        %2277 = vperm.xlu0 %2276, %v2202
        %v2278 = vpop.permute.xlu0 %2277
        %2279 = vset.pattern.permute.xlu0 0
        %2280 = vperm.xlu0 %2279, %v2203
        %v2281 = vpop.permute.xlu0 %2280
        %2282 = vset.pattern.permute.xlu0 0
        %2283 = vperm.xlu0 %2282, %v2204
        %v2284 = vpop.permute.xlu0 %2283
        %2285 = vset.pattern.permute.xlu0 0
        %2286 = vperm.xlu0 %2285, %v2205
        %v2287 = vpop.permute.xlu0 %2286
        %2288 = vset.pattern.permute.xlu0 0
        %2289 = vperm.xlu0 %2288, %v2206
        %v2290 = vpop.permute.xlu0 %2289
        %2291 = vset.pattern.permute.xlu0 0
        %2292 = vperm.xlu0 %2291, %v2207
        %v2293 = vpop.permute.xlu0 %2292
        %2294 = vset.pattern.permute.xlu0 0
        %2295 = vperm.xlu0 %2294, %v2208
        %v2296 = vpop.permute.xlu0 %2295
        %2297 = vset.pattern.permute.xlu0 0
        %2298 = vperm.xlu0 %2297, %v2209
        %v2299 = vpop.permute.xlu0 %2298
        %2300 = vset.pattern.permute.xlu0 0
        %2301 = vperm.xlu0 %2300, %v2210
        %v2302 = vpop.permute.xlu0 %2301
        %2303 = vset.pattern.permute.xlu0 0
        %2304 = vperm.xlu0 %2303, %v2211
        %v2305 = vpop.permute.xlu0 %2304
        %2306 = vset.pattern.permute.xlu0 0
        %2307 = vperm.xlu0 %2306, %v2212
        %v2308 = vpop.permute.xlu0 %2307
        %2309 = vset.pattern.permute.xlu0 0
        %2310 = vperm.xlu0 %2309, %v2213
        %v2311 = vpop.permute.xlu0 %2310
        %2312 = vset.pattern.permute.xlu0 0
        %2313 = vperm.xlu0 %2312, %v2214
        %v2314 = vpop.permute.xlu0 %2313
        %2315 = vset.pattern.permute.xlu0 0
        %2316 = vperm.xlu0 %2315, %v2215
        %v2317 = vpop.permute.xlu0 %2316
        %2318 = vset.pattern.permute.xlu0 0
        %2319 = vperm.xlu0 %2318, %v2216
        %v2320 = vpop.permute.xlu0 %2319
        %2321 = vset.pattern.permute.xlu0 0
        %2322 = vperm.xlu0 %2321, %v2217
        %v2323 = vpop.permute.xlu0 %2322
        %2324 = vset.pattern.permute.xlu0 0
        %2325 = vperm.xlu0 %2324, %v2218
        %v2326 = vpop.permute.xlu0 %2325
        %2327 = vset.pattern.permute.xlu0 0
        %2328 = vperm.xlu0 %2327, %v2219
        %v2329 = vpop.permute.xlu0 %2328
        %2330 = vset.pattern.permute.xlu0 0
        %2331 = vperm.xlu0 %2330, %v2220
        %v2332 = vpop.permute.xlu0 %2331
        %2333 = vset.pattern.permute.xlu0 0
        %2334 = vperm.xlu0 %2333, %v2221
        %v2335 = vpop.permute.xlu0 %2334
        %2336 = vset.pattern.permute.xlu0 0
        %2337 = vperm.xlu0 %2336, %v2222
        %v2338 = vpop.permute.xlu0 %2337
        %2339 = vset.pattern.permute.xlu0 0
        %2340 = vperm.xlu0 %2339, %v2223
        %v2341 = vpop.permute.xlu0 %2340
        %2342 = vset.pattern.permute.xlu0 0
        %2343 = vperm.xlu0 %2342, %v2224
        %v2344 = vpop.permute.xlu0 %2343
        %2345 = vset.pattern.permute.xlu0 0
        %2346 = vperm.xlu0 %2345, %v2225
        %v2347 = vpop.permute.xlu0 %2346
        %2348 = vset.pattern.permute.xlu0 0
        %2349 = vperm.xlu0 %2348, %v2226
        %v2350 = vpop.permute.xlu0 %2349
        %2351 = vset.pattern.permute.xlu0 0
        %2352 = vperm.xlu0 %2351, %v2227
        %v2353 = vpop.permute.xlu0 %2352
        %2354 = vset.pattern.permute.xlu0 0
        %2355 = vperm.xlu0 %2354, %v2228
        %v2356 = vpop.permute.xlu0 %2355
        %2357 = vset.pattern.permute.xlu0 0
        %2358 = vperm.xlu0 %2357, %v2229
        %v2359 = vpop.permute.xlu0 %2358
        %2360 = vset.pattern.permute.xlu0 0
        %2361 = vperm.xlu0 %2360, %v2230
        %v2362 = vpop.permute.xlu0 %2361
        %2363 = vset.pattern.permute.xlu0 0
        %2364 = vperm.xlu0 %2363, %v2231
        %v2365 = vpop.permute.xlu0 %2364
        %2366 = vset.pattern.permute.xlu0 0
        %2367 = vperm.xlu0 %2366, %v2232
        %v2368 = vpop.permute.xlu0 %2367
        %2369 = vset.pattern.permute.xlu0 0
        %2370 = vperm.xlu0 %2369, %v2233
        %v2371 = vpop.permute.xlu0 %2370
        %2372 = vset.pattern.permute.xlu0 0
        %2373 = vperm.xlu0 %2372, %v2234
        %v2374 = vpop.permute.xlu0 %2373
        %2375 = vset.pattern.permute.xlu0 0
        %2376 = vperm.xlu0 %2375, %v2235
        %v2377 = vpop.permute.xlu0 %2376
        %2378 = vset.pattern.permute.xlu0 0
        %2379 = vperm.xlu0 %2378, %v2236
        %v2380 = vpop.permute.xlu0 %2379
        %2381 = vset.pattern.permute.xlu0 0
        %2382 = vperm.xlu0 %2381, %v2237
        %v2383 = vpop.permute.xlu0 %2382
        %2384 = vset.pattern.permute.xlu0 0
        %2385 = vperm.xlu0 %2384, %v2238
        %v2386 = vpop.permute.xlu0 %2385
        %2387 = vset.pattern.permute.xlu0 0
        %2388 = vperm.xlu0 %2387, %v2239
        %v2389 = vpop.permute.xlu0 %2388
        %2390 = vset.pattern.permute.xlu0 0
        %2391 = vperm.xlu0 %2390, %v2240
        %v2392 = vpop.permute.xlu0 %2391
        %2393 = vset.pattern.permute.xlu0 0
        %2394 = vperm.xlu0 %2393, %v2241
        %v2395 = vpop.permute.xlu0 %2394
        %2396 = vset.pattern.permute.xlu0 0
        %2397 = vperm.xlu0 %2396, %v2242
        %v2398 = vpop.permute.xlu0 %2397
        %2399 = vset.pattern.permute.xlu0 0
        %2400 = vperm.xlu0 %2399, %v2243
        %v2401 = vpop.permute.xlu0 %2400
        %2402 = vset.pattern.permute.xlu0 0
        %2403 = vperm.xlu0 %2402, %v2244
        %v2404 = vpop.permute.xlu0 %2403
        %2405 = vset.pattern.permute.xlu0 0
        %2406 = vperm.xlu0 %2405, %v2245
        %v2407 = vpop.permute.xlu0 %2406
        %2408 = vset.pattern.permute.xlu0 0
        %2409 = vperm.xlu0 %2408, %v2246
        %v2410 = vpop.permute.xlu0 %2409
        %2411 = vset.pattern.permute.xlu0 0
        %2412 = vperm.xlu0 %2411, %v2247
        %v2413 = vpop.permute.xlu0 %2412
        %2414 = vset.pattern.permute.xlu0 0
        %2415 = vperm.xlu0 %2414, %v2248
        %v2416 = vpop.permute.xlu0 %2415
        %2417 = vset.pattern.permute.xlu0 0
        %2418 = vperm.xlu0 %2417, %v2249
        %v2419 = vpop.permute.xlu0 %2418
        %2420 = vset.pattern.permute.xlu0 0
        %2421 = vperm.xlu0 %2420, %v2250
        %v2422 = vpop.permute.xlu0 %2421
        %2423 = vset.pattern.permute.xlu0 0
        %2424 = vperm.xlu0 %2423, %v2251
        %v2425 = vpop.permute.xlu0 %2424
        %2426 = vset.pattern.permute.xlu0 0
        %2427 = vperm.xlu0 %2426, %v2252
        %v2428 = vpop.permute.xlu0 %2427
        %2429 = vset.pattern.permute.xlu0 0
        %2430 = vperm.xlu0 %2429, %v2253
        %v2431 = vpop.permute.xlu0 %2430
        %2432 = vset.pattern.permute.xlu0 0
        %2433 = vperm.xlu0 %2432, %v2254
        %v2434 = vpop.permute.xlu0 %2433
        %2435 = vset.pattern.permute.xlu0 0
        %2436 = vperm.xlu0 %2435, %v2255
        %v2437 = vpop.permute.xlu0 %2436
        %2438 = vset.pattern.permute.xlu0 0
        %2439 = vperm.xlu0 %2438, %v2256
        %v2440 = vpop.permute.xlu0 %2439
        %2441 = vset.pattern.permute.xlu0 0
        %2442 = vperm.xlu0 %2441, %v2257
        %v2443 = vpop.permute.xlu0 %2442
        %2444 = vset.pattern.permute.xlu0 0
        %2445 = vperm.xlu0 %2444, %v2258
        %v2446 = vpop.permute.xlu0 %2445
        %2447 = vset.pattern.permute.xlu0 0
        %2448 = vperm.xlu0 %2447, %v2259
        %v2449 = vpop.permute.xlu0 %2448
        %2450 = vset.pattern.permute.xlu0 0
        %2451 = vperm.xlu0 %2450, %v2260
        %v2452 = vpop.permute.xlu0 %2451
        %v2453 = vlaneseq
        %v2454 = vshrl.u32 %v2453, 7
        %v2455 = vsub.s32 %v966, %v2454
        %v2456 = vrot.slane %v2263, %v2455
        %v2457 = vlaneseq
        %v2458 = vshrl.u32 %v2457, 7
        %v2459 = vsub.s32 %v971, %v2458
        %v2460 = vrot.slane %v2266, %v2459
        %v2461 = vsel %vm976, %v2460, %v2456
        %v2462 = vlaneseq
        %v2463 = vshrl.u32 %v2462, 7
        %v2464 = vsub.s32 %v978, %v2463
        %v2465 = vrot.slane %v2269, %v2464
        %v2466 = vsel %vm983, %v2465, %v2461
        %v2467 = vlaneseq
        %v2468 = vshrl.u32 %v2467, 7
        %v2469 = vsub.s32 %v985, %v2468
        %v2470 = vrot.slane %v2272, %v2469
        %v2471 = vsel %vm990, %v2470, %v2466
        %v2472 = vlaneseq
        %v2473 = vshrl.u32 %v2472, 7
        %v2474 = vsub.s32 %v992, %v2473
        %v2475 = vrot.slane %v2275, %v2474
        %v2476 = vsel %vm997, %v2475, %v2471
        %v2477 = vlaneseq
        %v2478 = vshrl.u32 %v2477, 7
        %v2479 = vsub.s32 %v999, %v2478
        %v2480 = vrot.slane %v2278, %v2479
        %v2481 = vsel %vm1004, %v2480, %v2476
        %v2482 = vlaneseq
        %v2483 = vshrl.u32 %v2482, 7
        %v2484 = vsub.s32 %v1006, %v2483
        %v2485 = vrot.slane %v2281, %v2484
        %v2486 = vsel %vm1011, %v2485, %v2481
        %v2487 = vlaneseq
        %v2488 = vshrl.u32 %v2487, 7
        %v2489 = vsub.s32 %v1013, %v2488
        %v2490 = vrot.slane %v2284, %v2489
        %v2491 = vsel %vm1018, %v2490, %v2486
        %v2492 = vlaneseq
        %v2493 = vshrl.u32 %v2492, 7
        %v2494 = vsub.s32 %v966, %v2493
        %v2495 = vrot.slane %v2287, %v2494
        %v2496 = vlaneseq
        %v2497 = vshrl.u32 %v2496, 7
        %v2498 = vsub.s32 %v971, %v2497
        %v2499 = vrot.slane %v2290, %v2498
        %v2500 = vsel %vm976, %v2499, %v2495
        %v2501 = vlaneseq
        %v2502 = vshrl.u32 %v2501, 7
        %v2503 = vsub.s32 %v978, %v2502
        %v2504 = vrot.slane %v2293, %v2503
        %v2505 = vsel %vm983, %v2504, %v2500
        %v2506 = vlaneseq
        %v2507 = vshrl.u32 %v2506, 7
        %v2508 = vsub.s32 %v985, %v2507
        %v2509 = vrot.slane %v2296, %v2508
        %v2510 = vsel %vm990, %v2509, %v2505
        %v2511 = vlaneseq
        %v2512 = vshrl.u32 %v2511, 7
        %v2513 = vsub.s32 %v992, %v2512
        %v2514 = vrot.slane %v2299, %v2513
        %v2515 = vsel %vm997, %v2514, %v2510
        %v2516 = vlaneseq
        %v2517 = vshrl.u32 %v2516, 7
        %v2518 = vsub.s32 %v999, %v2517
        %v2519 = vrot.slane %v2302, %v2518
        %v2520 = vsel %vm1004, %v2519, %v2515
        %v2521 = vlaneseq
        %v2522 = vshrl.u32 %v2521, 7
        %v2523 = vsub.s32 %v1006, %v2522
        %v2524 = vrot.slane %v2305, %v2523
        %v2525 = vsel %vm1011, %v2524, %v2520
        %v2526 = vlaneseq
        %v2527 = vshrl.u32 %v2526, 7
        %v2528 = vsub.s32 %v1013, %v2527
        %v2529 = vrot.slane %v2308, %v2528
        %v2530 = vsel %vm1018, %v2529, %v2525
        %v2531 = vlaneseq
        %v2532 = vshrl.u32 %v2531, 7
        %v2533 = vsub.s32 %v966, %v2532
        %v2534 = vrot.slane %v2311, %v2533
        %v2535 = vlaneseq
        %v2536 = vshrl.u32 %v2535, 7
        %v2537 = vsub.s32 %v971, %v2536
        %v2538 = vrot.slane %v2314, %v2537
        %v2539 = vsel %vm976, %v2538, %v2534
        %v2540 = vlaneseq
        %v2541 = vshrl.u32 %v2540, 7
        %v2542 = vsub.s32 %v978, %v2541
        %v2543 = vrot.slane %v2317, %v2542
        %v2544 = vsel %vm983, %v2543, %v2539
        %v2545 = vlaneseq
        %v2546 = vshrl.u32 %v2545, 7
        %v2547 = vsub.s32 %v985, %v2546
        %v2548 = vrot.slane %v2320, %v2547
        %v2549 = vsel %vm990, %v2548, %v2544
        %v2550 = vlaneseq
        %v2551 = vshrl.u32 %v2550, 7
        %v2552 = vsub.s32 %v992, %v2551
        %v2553 = vrot.slane %v2323, %v2552
        %v2554 = vsel %vm997, %v2553, %v2549
        %v2555 = vlaneseq
        %v2556 = vshrl.u32 %v2555, 7
        %v2557 = vsub.s32 %v999, %v2556
        %v2558 = vrot.slane %v2326, %v2557
        %v2559 = vsel %vm1004, %v2558, %v2554
        %v2560 = vlaneseq
        %v2561 = vshrl.u32 %v2560, 7
        %v2562 = vsub.s32 %v1006, %v2561
        %v2563 = vrot.slane %v2329, %v2562
        %v2564 = vsel %vm1011, %v2563, %v2559
        %v2565 = vlaneseq
        %v2566 = vshrl.u32 %v2565, 7
        %v2567 = vsub.s32 %v1013, %v2566
        %v2568 = vrot.slane %v2332, %v2567
        %v2569 = vsel %vm1018, %v2568, %v2564
        %v2570 = vlaneseq
        %v2571 = vshrl.u32 %v2570, 7
        %v2572 = vsub.s32 %v966, %v2571
        %v2573 = vrot.slane %v2335, %v2572
        %v2574 = vlaneseq
        %v2575 = vshrl.u32 %v2574, 7
        %v2576 = vsub.s32 %v971, %v2575
        %v2577 = vrot.slane %v2338, %v2576
        %v2578 = vsel %vm976, %v2577, %v2573
        %v2579 = vlaneseq
        %v2580 = vshrl.u32 %v2579, 7
        %v2581 = vsub.s32 %v978, %v2580
        %v2582 = vrot.slane %v2341, %v2581
        %v2583 = vsel %vm983, %v2582, %v2578
        %v2584 = vlaneseq
        %v2585 = vshrl.u32 %v2584, 7
        %v2586 = vsub.s32 %v985, %v2585
        %v2587 = vrot.slane %v2344, %v2586
        %v2588 = vsel %vm990, %v2587, %v2583
        %v2589 = vlaneseq
        %v2590 = vshrl.u32 %v2589, 7
        %v2591 = vsub.s32 %v992, %v2590
        %v2592 = vrot.slane %v2347, %v2591
        %v2593 = vsel %vm997, %v2592, %v2588
        %v2594 = vlaneseq
        %v2595 = vshrl.u32 %v2594, 7
        %v2596 = vsub.s32 %v999, %v2595
        %v2597 = vrot.slane %v2350, %v2596
        %v2598 = vsel %vm1004, %v2597, %v2593
        %v2599 = vlaneseq
        %v2600 = vshrl.u32 %v2599, 7
        %v2601 = vsub.s32 %v1006, %v2600
        %v2602 = vrot.slane %v2353, %v2601
        %v2603 = vsel %vm1011, %v2602, %v2598
        %v2604 = vlaneseq
        %v2605 = vshrl.u32 %v2604, 7
        %v2606 = vsub.s32 %v1013, %v2605
        %v2607 = vrot.slane %v2356, %v2606
        %v2608 = vsel %vm1018, %v2607, %v2603
        %v2609 = vlaneseq
        %v2610 = vshrl.u32 %v2609, 7
        %v2611 = vsub.s32 %v966, %v2610
        %v2612 = vrot.slane %v2359, %v2611
        %v2613 = vlaneseq
        %v2614 = vshrl.u32 %v2613, 7
        %v2615 = vsub.s32 %v971, %v2614
        %v2616 = vrot.slane %v2362, %v2615
        %v2617 = vsel %vm976, %v2616, %v2612
        %v2618 = vlaneseq
        %v2619 = vshrl.u32 %v2618, 7
        %v2620 = vsub.s32 %v978, %v2619
        %v2621 = vrot.slane %v2365, %v2620
        %v2622 = vsel %vm983, %v2621, %v2617
        %v2623 = vlaneseq
        %v2624 = vshrl.u32 %v2623, 7
        %v2625 = vsub.s32 %v985, %v2624
        %v2626 = vrot.slane %v2368, %v2625
        %v2627 = vsel %vm990, %v2626, %v2622
        %v2628 = vlaneseq
        %v2629 = vshrl.u32 %v2628, 7
        %v2630 = vsub.s32 %v992, %v2629
        %v2631 = vrot.slane %v2371, %v2630
        %v2632 = vsel %vm997, %v2631, %v2627
        %v2633 = vlaneseq
        %v2634 = vshrl.u32 %v2633, 7
        %v2635 = vsub.s32 %v999, %v2634
        %v2636 = vrot.slane %v2374, %v2635
        %v2637 = vsel %vm1004, %v2636, %v2632
        %v2638 = vlaneseq
        %v2639 = vshrl.u32 %v2638, 7
        %v2640 = vsub.s32 %v1006, %v2639
        %v2641 = vrot.slane %v2377, %v2640
        %v2642 = vsel %vm1011, %v2641, %v2637
        %v2643 = vlaneseq
        %v2644 = vshrl.u32 %v2643, 7
        %v2645 = vsub.s32 %v1013, %v2644
        %v2646 = vrot.slane %v2380, %v2645
        %v2647 = vsel %vm1018, %v2646, %v2642
        %v2648 = vlaneseq
        %v2649 = vshrl.u32 %v2648, 7
        %v2650 = vsub.s32 %v966, %v2649
        %v2651 = vrot.slane %v2383, %v2650
        %v2652 = vlaneseq
        %v2653 = vshrl.u32 %v2652, 7
        %v2654 = vsub.s32 %v971, %v2653
        %v2655 = vrot.slane %v2386, %v2654
        %v2656 = vsel %vm976, %v2655, %v2651
        %v2657 = vlaneseq
        %v2658 = vshrl.u32 %v2657, 7
        %v2659 = vsub.s32 %v978, %v2658
        %v2660 = vrot.slane %v2389, %v2659
        %v2661 = vsel %vm983, %v2660, %v2656
        %v2662 = vlaneseq
        %v2663 = vshrl.u32 %v2662, 7
        %v2664 = vsub.s32 %v985, %v2663
        %v2665 = vrot.slane %v2392, %v2664
        %v2666 = vsel %vm990, %v2665, %v2661
        %v2667 = vlaneseq
        %v2668 = vshrl.u32 %v2667, 7
        %v2669 = vsub.s32 %v992, %v2668
        %v2670 = vrot.slane %v2395, %v2669
        %v2671 = vsel %vm997, %v2670, %v2666
        %v2672 = vlaneseq
        %v2673 = vshrl.u32 %v2672, 7
        %v2674 = vsub.s32 %v999, %v2673
        %v2675 = vrot.slane %v2398, %v2674
        %v2676 = vsel %vm1004, %v2675, %v2671
        %v2677 = vlaneseq
        %v2678 = vshrl.u32 %v2677, 7
        %v2679 = vsub.s32 %v1006, %v2678
        %v2680 = vrot.slane %v2401, %v2679
        %v2681 = vsel %vm1011, %v2680, %v2676
        %v2682 = vlaneseq
        %v2683 = vshrl.u32 %v2682, 7
        %v2684 = vsub.s32 %v1013, %v2683
        %v2685 = vrot.slane %v2404, %v2684
        %v2686 = vsel %vm1018, %v2685, %v2681
        %v2687 = vlaneseq
        %v2688 = vshrl.u32 %v2687, 7
        %v2689 = vsub.s32 %v966, %v2688
        %v2690 = vrot.slane %v2407, %v2689
        %v2691 = vlaneseq
        %v2692 = vshrl.u32 %v2691, 7
        %v2693 = vsub.s32 %v971, %v2692
        %v2694 = vrot.slane %v2410, %v2693
        %v2695 = vsel %vm976, %v2694, %v2690
        %v2696 = vlaneseq
        %v2697 = vshrl.u32 %v2696, 7
        %v2698 = vsub.s32 %v978, %v2697
        %v2699 = vrot.slane %v2413, %v2698
        %v2700 = vsel %vm983, %v2699, %v2695
        %v2701 = vlaneseq
        %v2702 = vshrl.u32 %v2701, 7
        %v2703 = vsub.s32 %v985, %v2702
        %v2704 = vrot.slane %v2416, %v2703
        %v2705 = vsel %vm990, %v2704, %v2700
        %v2706 = vlaneseq
        %v2707 = vshrl.u32 %v2706, 7
        %v2708 = vsub.s32 %v992, %v2707
        %v2709 = vrot.slane %v2419, %v2708
        %v2710 = vsel %vm997, %v2709, %v2705
        %v2711 = vlaneseq
        %v2712 = vshrl.u32 %v2711, 7
        %v2713 = vsub.s32 %v999, %v2712
        %v2714 = vrot.slane %v2422, %v2713
        %v2715 = vsel %vm1004, %v2714, %v2710
        %v2716 = vlaneseq
        %v2717 = vshrl.u32 %v2716, 7
        %v2718 = vsub.s32 %v1006, %v2717
        %v2719 = vrot.slane %v2425, %v2718
        %v2720 = vsel %vm1011, %v2719, %v2715
        %v2721 = vlaneseq
        %v2722 = vshrl.u32 %v2721, 7
        %v2723 = vsub.s32 %v1013, %v2722
        %v2724 = vrot.slane %v2428, %v2723
        %v2725 = vsel %vm1018, %v2724, %v2720
        %v2726 = vlaneseq
        %v2727 = vshrl.u32 %v2726, 7
        %v2728 = vsub.s32 %v966, %v2727
        %v2729 = vrot.slane %v2431, %v2728
        %v2730 = vlaneseq
        %v2731 = vshrl.u32 %v2730, 7
        %v2732 = vsub.s32 %v971, %v2731
        %v2733 = vrot.slane %v2434, %v2732
        %v2734 = vsel %vm976, %v2733, %v2729
        %v2735 = vlaneseq
        %v2736 = vshrl.u32 %v2735, 7
        %v2737 = vsub.s32 %v978, %v2736
        %v2738 = vrot.slane %v2437, %v2737
        %v2739 = vsel %vm983, %v2738, %v2734
        %v2740 = vlaneseq
        %v2741 = vshrl.u32 %v2740, 7
        %v2742 = vsub.s32 %v985, %v2741
        %v2743 = vrot.slane %v2440, %v2742
        %v2744 = vsel %vm990, %v2743, %v2739
        %v2745 = vlaneseq
        %v2746 = vshrl.u32 %v2745, 7
        %v2747 = vsub.s32 %v992, %v2746
        %v2748 = vrot.slane %v2443, %v2747
        %v2749 = vsel %vm997, %v2748, %v2744
        %v2750 = vlaneseq
        %v2751 = vshrl.u32 %v2750, 7
        %v2752 = vsub.s32 %v999, %v2751
        %v2753 = vrot.slane %v2446, %v2752
        %v2754 = vsel %vm1004, %v2753, %v2749
        %v2755 = vlaneseq
        %v2756 = vshrl.u32 %v2755, 7
        %v2757 = vsub.s32 %v1006, %v2756
        %v2758 = vrot.slane %v2449, %v2757
        %v2759 = vsel %vm1011, %v2758, %v2754
        %v2760 = vlaneseq
        %v2761 = vshrl.u32 %v2760, 7
        %v2762 = vsub.s32 %v1013, %v2761
        %v2763 = vrot.slane %v2452, %v2762
        %v2764 = vsel %vm1018, %v2763, %v2759
        %v2765 = vsel %vm1293, %v2530, %v2491
        %v2766 = vsel %vm1295, %v2569, %v2765
        %v2767 = vsel %vm1297, %v2608, %v2766
        %v2768 = vsel %vm1299, %v2647, %v2767
        %v2769 = vsel %vm1301, %v2686, %v2768
        %v2770 = vsel %vm1303, %v2725, %v2769
        %v2771 = vsel %vm1305, %v2764, %v2770
        %v2772 = vpack.c.b16 %v2771, %v2771
        %v2781 = vunpack.c.l.b16 %v2157
        %v2782 = vunpack.c.l.b16 %v2158
        %v2783 = vunpack.c.l.b16 %v2159
        %v2784 = vunpack.c.l.b16 %v2160
        %v2785 = vunpack.c.l.b16 %v2161
        %v2786 = vunpack.c.l.b16 %v2162
        %v2787 = vunpack.c.l.b16 %v2163
        %v2788 = vunpack.c.l.b16 %v2164
        %v2789 = vpack.c.b16 %v2782, %v2781
        %v2790 = vpack.c.b16 %v2784, %v2783
        %v2791 = vpack.c.b16 %v2786, %v2785
        %v2792 = vpack.c.b16 %v2788, %v2787
        %v2798 = vsel %vm1308, %v2772, 0
        %2800 = vmatprep.subr.bf16.mxu0 0
        %2801 = vmatpush1.bf16.msra.mxu0 %v2789
        %2802 = vmatprep.subr.bf16.mxu0 0
        %2803 = vmatpush1.bf16.msra.mxu0 %v2790
        %2804 = vmatprep.subr.bf16.mxu0 0
        %2805 = vmatpush1.bf16.msra.mxu0 %v2791
        %2806 = vmatprep.subr.bf16.mxu0 0
        %2807 = vmatpush1.bf16.msra.mxu0 %v2792
        %2808 = vmatprep.subr.bf16.mxu0 0
        %2809 = vmatpush1.bf16.msra.mxu0 0
        %2810 = vmatprep.subr.bf16.mxu0 0
        %2811 = vmatpush1.bf16.msra.mxu0 0
        %2812 = vmatprep.subr.bf16.mxu0 0
        %2813 = vmatpush1.bf16.msra.mxu0 0
        %2814 = vmatprep.subr.bf16.mxu0 0
        %2815 = vmatpush1.bf16.msra.mxu0 0
        %2816 = vmatprep.subr.bf16.mxu0 0
        %2817 = vmatpush1.bf16.msra.mxu0 0
        %2818 = vmatprep.subr.bf16.mxu0 0
        %2819 = vmatpush1.bf16.msra.mxu0 0
        %2820 = vmatprep.subr.bf16.mxu0 0
        %2821 = vmatpush1.bf16.msra.mxu0 0
        %2822 = vmatprep.subr.bf16.mxu0 0
        %2823 = vmatpush1.bf16.msra.mxu0 0
        %2824 = vmatprep.subr.bf16.mxu0 0
        %2825 = vmatpush1.bf16.msra.mxu0 0
        %2826 = vmatprep.subr.bf16.mxu0 0
        %2827 = vmatpush1.bf16.msra.mxu0 0
        %2828 = vmatprep.subr.bf16.mxu0 0
        %2829 = vmatpush1.bf16.msra.mxu0 0
        %2830 = vmatprep.subr.bf16.mxu0 0
        %2831 = vmatpush1.bf16.msra.mxu0 0
        %2832 = vmatprep.mubr.bf16.mxu0 0
        %2833 = vmatmul.mubr.bf16.gmra.mrb[0].mxu0 %v2798
        %v2834 = vpop.f32.mrb[0].mxu0
        %v2835 = vadd.f32 0.0, %v2834
        %v2836 = vpop.f32.mrb[0].mxu0
        %v2837 = vpop.f32.mrb[0].mxu0
        %v2838 = vpop.f32.mrb[0].mxu0
        %2839 = vdwg.mxu0
        %v2840 = vmul.f32 %v2835, %v2124
        %vm2841 = vcmask 130048
        %2842 = vst.msk [vmem:[%s220] sm:$0xff] %vm2841, %v2840
        %s2843 = scalar_lea.vmem [#allocation2], 64
        %v2844 = vld [vmem:[%s2843] sm:$0xff]
        %v2845 = vld [vmem:[%s2843 + $0x8] sm:$0xff]
        %v2846 = vld [vmem:[%s2843 + $0x10] sm:$0xff]
        %v2847 = vld [vmem:[%s2843 + $0x18] sm:$0xff]
        %v2848 = vld [vmem:[%s2843 + $0x20] sm:$0xff]
        %v2849 = vld [vmem:[%s2843 + $0x28] sm:$0xff]
        %v2850 = vld [vmem:[%s2843 + $0x30] sm:$0xff]
        %v2851 = vld [vmem:[%s2843 + $0x38] sm:$0xff]
        %v2852 = vmul.f32 %v2844, %v538
        %v2853 = vmul.f32 %v2845, %v538
        %v2854 = vmul.f32 %v2846, %v538
        %v2855 = vmul.f32 %v2847, %v538
        %v2856 = vmul.f32 %v2848, %v538
        %v2857 = vmul.f32 %v2849, %v538
        %v2858 = vmul.f32 %v2850, %v538
        %v2859 = vmul.f32 %v2851, %v538
        %v2860 = vmul.f32 %v2844, %v542
        %v2861 = vmul.f32 %v2845, %v542
        %v2862 = vmul.f32 %v2846, %v542
        %v2863 = vmul.f32 %v2847, %v542
        %v2864 = vmul.f32 %v2848, %v542
        %v2865 = vmul.f32 %v2849, %v542
        %v2866 = vmul.f32 %v2850, %v542
        %v2867 = vmul.f32 %v2851, %v542
        %v2868 = vmul.f32 %v2844, %v546
        %v2869 = vmul.f32 %v2845, %v546
        %v2870 = vmul.f32 %v2846, %v546
        %v2871 = vmul.f32 %v2847, %v546
        %v2872 = vmul.f32 %v2848, %v546
        %v2873 = vmul.f32 %v2849, %v546
        %v2874 = vmul.f32 %v2850, %v546
        %v2875 = vmul.f32 %v2851, %v546
        %v2876 = vmul.f32 %v2844, %v550
        %v2877 = vmul.f32 %v2845, %v550
        %v2878 = vmul.f32 %v2846, %v550
        %v2879 = vmul.f32 %v2847, %v550
        %v2880 = vmul.f32 %v2848, %v550
        %v2881 = vmul.f32 %v2849, %v550
        %v2882 = vmul.f32 %v2850, %v550
        %v2883 = vmul.f32 %v2851, %v550
        %v2884 = vmul.f32 %v2844, %v554
        %v2885 = vmul.f32 %v2845, %v554
        %v2886 = vmul.f32 %v2846, %v554
        %v2887 = vmul.f32 %v2847, %v554
        %v2888 = vmul.f32 %v2848, %v554
        %v2889 = vmul.f32 %v2849, %v554
        %v2890 = vmul.f32 %v2850, %v554
        %v2891 = vmul.f32 %v2851, %v554
        %v2892 = vmul.f32 %v2844, %v558
        %v2893 = vmul.f32 %v2845, %v558
        %v2894 = vmul.f32 %v2846, %v558
        %v2895 = vmul.f32 %v2847, %v558
        %v2896 = vmul.f32 %v2848, %v558
        %v2897 = vmul.f32 %v2849, %v558
        %v2898 = vmul.f32 %v2850, %v558
        %v2899 = vmul.f32 %v2851, %v558
        %v2900 = vmul.f32 %v2844, %v562
        %v2901 = vmul.f32 %v2845, %v562
        %v2902 = vmul.f32 %v2846, %v562
        %v2903 = vmul.f32 %v2847, %v562
        %v2904 = vmul.f32 %v2848, %v562
        %v2905 = vmul.f32 %v2849, %v562
        %v2906 = vmul.f32 %v2850, %v562
        %v2907 = vmul.f32 %v2851, %v562
        %v2908 = vmul.f32 %v2844, %v566
        %v2909 = vmul.f32 %v2845, %v566
        %v2910 = vmul.f32 %v2846, %v566
        %v2911 = vmul.f32 %v2847, %v566
        %v2912 = vmul.f32 %v2848, %v566
        %v2913 = vmul.f32 %v2849, %v566
        %v2914 = vmul.f32 %v2850, %v566
        %v2915 = vmul.f32 %v2851, %v566
        %v2916 = vtanh.pop %v2852
        %v2917 = vtanh.pop %v2853
        %v2918 = vtanh.pop %v2854
        %v2919 = vtanh.pop %v2855
        %v2920 = vtanh.pop %v2856
        %v2921 = vtanh.pop %v2857
        %v2922 = vtanh.pop %v2858
        %v2923 = vtanh.pop %v2859
        %v2924 = vtanh.pop %v2860
        %v2925 = vtanh.pop %v2861
        %v2926 = vtanh.pop %v2862
        %v2927 = vtanh.pop %v2863
        %v2928 = vtanh.pop %v2864
        %v2929 = vtanh.pop %v2865
        %v2930 = vtanh.pop %v2866
        %v2931 = vtanh.pop %v2867
        %v2932 = vtanh.pop %v2868
        %v2933 = vtanh.pop %v2869
        %v2934 = vtanh.pop %v2870
        %v2935 = vtanh.pop %v2871
        %v2936 = vtanh.pop %v2872
        %v2937 = vtanh.pop %v2873
        %v2938 = vtanh.pop %v2874
        %v2939 = vtanh.pop %v2875
        %v2940 = vtanh.pop %v2876
        %v2941 = vtanh.pop %v2877
        %v2942 = vtanh.pop %v2878
        %v2943 = vtanh.pop %v2879
        %v2944 = vtanh.pop %v2880
        %v2945 = vtanh.pop %v2881
        %v2946 = vtanh.pop %v2882
        %v2947 = vtanh.pop %v2883
        %v2948 = vtanh.pop %v2884
        %v2949 = vtanh.pop %v2885
        %v2950 = vtanh.pop %v2886
        %v2951 = vtanh.pop %v2887
        %v2952 = vtanh.pop %v2888
        %v2953 = vtanh.pop %v2889
        %v2954 = vtanh.pop %v2890
        %v2955 = vtanh.pop %v2891
        %v2956 = vtanh.pop %v2892
        %v2957 = vtanh.pop %v2893
        %v2958 = vtanh.pop %v2894
        %v2959 = vtanh.pop %v2895
        %v2960 = vtanh.pop %v2896
        %v2961 = vtanh.pop %v2897
        %v2962 = vtanh.pop %v2898
        %v2963 = vtanh.pop %v2899
        %v2964 = vtanh.pop %v2900
        %v2965 = vtanh.pop %v2901
        %v2966 = vtanh.pop %v2902
        %v2967 = vtanh.pop %v2903
        %v2968 = vtanh.pop %v2904
        %v2969 = vtanh.pop %v2905
        %v2970 = vtanh.pop %v2906
        %v2971 = vtanh.pop %v2907
        %v2972 = vtanh.pop %v2908
        %v2973 = vtanh.pop %v2909
        %v2974 = vtanh.pop %v2910
        %v2975 = vtanh.pop %v2911
        %v2976 = vtanh.pop %v2912
        %v2977 = vtanh.pop %v2913
        %v2978 = vtanh.pop %v2914
        %v2979 = vtanh.pop %v2915
        %v2980 = vmul.f32 %v2916, %v707
        %v2981 = vmul.f32 %v2917, %v707
        %v2982 = vmul.f32 %v2918, %v707
        %v2983 = vmul.f32 %v2919, %v707
        %v2984 = vmul.f32 %v2920, %v707
        %v2985 = vmul.f32 %v2921, %v707
        %v2986 = vmul.f32 %v2922, %v707
        %v2987 = vmul.f32 %v2923, %v707
        %v2988 = vmul.f32 %v2924, %v707
        %v2989 = vmul.f32 %v2925, %v707
        %v2990 = vmul.f32 %v2926, %v707
        %v2991 = vmul.f32 %v2927, %v707
        %v2992 = vmul.f32 %v2928, %v707
        %v2993 = vmul.f32 %v2929, %v707
        %v2994 = vmul.f32 %v2930, %v707
        %v2995 = vmul.f32 %v2931, %v707
        %v2996 = vmul.f32 %v2932, %v707
        %v2997 = vmul.f32 %v2933, %v707
        %v2998 = vmul.f32 %v2934, %v707
        %v2999 = vmul.f32 %v2935, %v707
        %v3000 = vmul.f32 %v2936, %v707
        %v3001 = vmul.f32 %v2937, %v707
        %v3002 = vmul.f32 %v2938, %v707
        %v3003 = vmul.f32 %v2939, %v707
        %v3004 = vmul.f32 %v2940, %v707
        %v3005 = vmul.f32 %v2941, %v707
        %v3006 = vmul.f32 %v2942, %v707
        %v3007 = vmul.f32 %v2943, %v707
        %v3008 = vmul.f32 %v2944, %v707
        %v3009 = vmul.f32 %v2945, %v707
        %v3010 = vmul.f32 %v2946, %v707
        %v3011 = vmul.f32 %v2947, %v707
        %v3012 = vmul.f32 %v2948, %v707
        %v3013 = vmul.f32 %v2949, %v707
        %v3014 = vmul.f32 %v2950, %v707
        %v3015 = vmul.f32 %v2951, %v707
        %v3016 = vmul.f32 %v2952, %v707
        %v3017 = vmul.f32 %v2953, %v707
        %v3018 = vmul.f32 %v2954, %v707
        %v3019 = vmul.f32 %v2955, %v707
        %v3020 = vmul.f32 %v2956, %v707
        %v3021 = vmul.f32 %v2957, %v707
        %v3022 = vmul.f32 %v2958, %v707
        %v3023 = vmul.f32 %v2959, %v707
        %v3024 = vmul.f32 %v2960, %v707
        %v3025 = vmul.f32 %v2961, %v707
        %v3026 = vmul.f32 %v2962, %v707
        %v3027 = vmul.f32 %v2963, %v707
        %v3028 = vmul.f32 %v2964, %v707
        %v3029 = vmul.f32 %v2965, %v707
        %v3030 = vmul.f32 %v2966, %v707
        %v3031 = vmul.f32 %v2967, %v707
        %v3032 = vmul.f32 %v2968, %v707
        %v3033 = vmul.f32 %v2969, %v707
        %v3034 = vmul.f32 %v2970, %v707
        %v3035 = vmul.f32 %v2971, %v707
        %v3036 = vmul.f32 %v2972, %v707
        %v3037 = vmul.f32 %v2973, %v707
        %v3038 = vmul.f32 %v2974, %v707
        %v3039 = vmul.f32 %v2975, %v707
        %v3040 = vmul.f32 %v2976, %v707
        %v3041 = vmul.f32 %v2977, %v707
        %v3042 = vmul.f32 %v2978, %v707
        %v3043 = vmul.f32 %v2979, %v707
        %3044 = vadd.xlane.f32.xlu0 %v2980
        %v3045 = vpop.xlane.xlu0 %3044
        %3046 = vadd.xlane.f32.xlu0 %v2981
        %v3047 = vpop.xlane.xlu0 %3046
        %3048 = vadd.xlane.f32.xlu0 %v2982
        %v3049 = vpop.xlane.xlu0 %3048
        %3050 = vadd.xlane.f32.xlu0 %v2983
        %v3051 = vpop.xlane.xlu0 %3050
        %3052 = vadd.xlane.f32.xlu0 %v2984
        %v3053 = vpop.xlane.xlu0 %3052
        %3054 = vadd.xlane.f32.xlu0 %v2985
        %v3055 = vpop.xlane.xlu0 %3054
        %3056 = vadd.xlane.f32.xlu0 %v2986
        %v3057 = vpop.xlane.xlu0 %3056
        %3058 = vadd.xlane.f32.xlu0 %v2987
        %v3059 = vpop.xlane.xlu0 %3058
        %3060 = vadd.xlane.f32.xlu0 %v2988
        %v3061 = vpop.xlane.xlu0 %3060
        %3062 = vadd.xlane.f32.xlu0 %v2989
        %v3063 = vpop.xlane.xlu0 %3062
        %3064 = vadd.xlane.f32.xlu0 %v2990
        %v3065 = vpop.xlane.xlu0 %3064
        %3066 = vadd.xlane.f32.xlu0 %v2991
        %v3067 = vpop.xlane.xlu0 %3066
        %3068 = vadd.xlane.f32.xlu0 %v2992
        %v3069 = vpop.xlane.xlu0 %3068
        %3070 = vadd.xlane.f32.xlu0 %v2993
        %v3071 = vpop.xlane.xlu0 %3070
        %3072 = vadd.xlane.f32.xlu0 %v2994
        %v3073 = vpop.xlane.xlu0 %3072
        %3074 = vadd.xlane.f32.xlu0 %v2995
        %v3075 = vpop.xlane.xlu0 %3074
        %3076 = vadd.xlane.f32.xlu0 %v2996
        %v3077 = vpop.xlane.xlu0 %3076
        %3078 = vadd.xlane.f32.xlu0 %v2997
        %v3079 = vpop.xlane.xlu0 %3078
        %3080 = vadd.xlane.f32.xlu0 %v2998
        %v3081 = vpop.xlane.xlu0 %3080
        %3082 = vadd.xlane.f32.xlu0 %v2999
        %v3083 = vpop.xlane.xlu0 %3082
        %3084 = vadd.xlane.f32.xlu0 %v3000
        %v3085 = vpop.xlane.xlu0 %3084
        %3086 = vadd.xlane.f32.xlu0 %v3001
        %v3087 = vpop.xlane.xlu0 %3086
        %3088 = vadd.xlane.f32.xlu0 %v3002
        %v3089 = vpop.xlane.xlu0 %3088
        %3090 = vadd.xlane.f32.xlu0 %v3003
        %v3091 = vpop.xlane.xlu0 %3090
        %3092 = vadd.xlane.f32.xlu0 %v3004
        %v3093 = vpop.xlane.xlu0 %3092
        %3094 = vadd.xlane.f32.xlu0 %v3005
        %v3095 = vpop.xlane.xlu0 %3094
        %3096 = vadd.xlane.f32.xlu0 %v3006
        %v3097 = vpop.xlane.xlu0 %3096
        %3098 = vadd.xlane.f32.xlu0 %v3007
        %v3099 = vpop.xlane.xlu0 %3098
        %3100 = vadd.xlane.f32.xlu0 %v3008
        %v3101 = vpop.xlane.xlu0 %3100
        %3102 = vadd.xlane.f32.xlu0 %v3009
        %v3103 = vpop.xlane.xlu0 %3102
        %3104 = vadd.xlane.f32.xlu0 %v3010
        %v3105 = vpop.xlane.xlu0 %3104
        %3106 = vadd.xlane.f32.xlu0 %v3011
        %v3107 = vpop.xlane.xlu0 %3106
        %3108 = vadd.xlane.f32.xlu0 %v3012
        %v3109 = vpop.xlane.xlu0 %3108
        %3110 = vadd.xlane.f32.xlu0 %v3013
        %v3111 = vpop.xlane.xlu0 %3110
        %3112 = vadd.xlane.f32.xlu0 %v3014
        %v3113 = vpop.xlane.xlu0 %3112
        %3114 = vadd.xlane.f32.xlu0 %v3015
        %v3115 = vpop.xlane.xlu0 %3114
        %3116 = vadd.xlane.f32.xlu0 %v3016
        %v3117 = vpop.xlane.xlu0 %3116
        %3118 = vadd.xlane.f32.xlu0 %v3017
        %v3119 = vpop.xlane.xlu0 %3118
        %3120 = vadd.xlane.f32.xlu0 %v3018
        %v3121 = vpop.xlane.xlu0 %3120
        %3122 = vadd.xlane.f32.xlu0 %v3019
        %v3123 = vpop.xlane.xlu0 %3122
        %3124 = vadd.xlane.f32.xlu0 %v3020
        %v3125 = vpop.xlane.xlu0 %3124
        %3126 = vadd.xlane.f32.xlu0 %v3021
        %v3127 = vpop.xlane.xlu0 %3126
        %3128 = vadd.xlane.f32.xlu0 %v3022
        %v3129 = vpop.xlane.xlu0 %3128
        %3130 = vadd.xlane.f32.xlu0 %v3023
        %v3131 = vpop.xlane.xlu0 %3130
        %3132 = vadd.xlane.f32.xlu0 %v3024
        %v3133 = vpop.xlane.xlu0 %3132
        %3134 = vadd.xlane.f32.xlu0 %v3025
        %v3135 = vpop.xlane.xlu0 %3134
        %3136 = vadd.xlane.f32.xlu0 %v3026
        %v3137 = vpop.xlane.xlu0 %3136
        %3138 = vadd.xlane.f32.xlu0 %v3027
        %v3139 = vpop.xlane.xlu0 %3138
        %3140 = vadd.xlane.f32.xlu0 %v3028
        %v3141 = vpop.xlane.xlu0 %3140
        %3142 = vadd.xlane.f32.xlu0 %v3029
        %v3143 = vpop.xlane.xlu0 %3142
        %3144 = vadd.xlane.f32.xlu0 %v3030
        %v3145 = vpop.xlane.xlu0 %3144
        %3146 = vadd.xlane.f32.xlu0 %v3031
        %v3147 = vpop.xlane.xlu0 %3146
        %3148 = vadd.xlane.f32.xlu0 %v3032
        %v3149 = vpop.xlane.xlu0 %3148
        %3150 = vadd.xlane.f32.xlu0 %v3033
        %v3151 = vpop.xlane.xlu0 %3150
        %3152 = vadd.xlane.f32.xlu0 %v3034
        %v3153 = vpop.xlane.xlu0 %3152
        %3154 = vadd.xlane.f32.xlu0 %v3035
        %v3155 = vpop.xlane.xlu0 %3154
        %3156 = vadd.xlane.f32.xlu0 %v3036
        %v3157 = vpop.xlane.xlu0 %3156
        %3158 = vadd.xlane.f32.xlu0 %v3037
        %v3159 = vpop.xlane.xlu0 %3158
        %3160 = vadd.xlane.f32.xlu0 %v3038
        %v3161 = vpop.xlane.xlu0 %3160
        %3162 = vadd.xlane.f32.xlu0 %v3039
        %v3163 = vpop.xlane.xlu0 %3162
        %3164 = vadd.xlane.f32.xlu0 %v3040
        %v3165 = vpop.xlane.xlu0 %3164
        %3166 = vadd.xlane.f32.xlu0 %v3041
        %v3167 = vpop.xlane.xlu0 %3166
        %3168 = vadd.xlane.f32.xlu0 %v3042
        %v3169 = vpop.xlane.xlu0 %3168
        %3170 = vadd.xlane.f32.xlu0 %v3043
        %v3171 = vpop.xlane.xlu0 %3170
        %v3236 = vlaneseq
        %v3237 = vshrl.u32 %v3236, 7
        %v3238 = vsub.s32 %v966, %v3237
        %v3239 = vrot.slane %v3045, %v3238
        %v3240 = vlaneseq
        %v3241 = vshrl.u32 %v3240, 7
        %v3242 = vsub.s32 %v971, %v3241
        %v3243 = vrot.slane %v3047, %v3242
        %v3244 = vsel %vm976, %v3243, %v3239
        %v3245 = vlaneseq
        %v3246 = vshrl.u32 %v3245, 7
        %v3247 = vsub.s32 %v978, %v3246
        %v3248 = vrot.slane %v3049, %v3247
        %v3249 = vsel %vm983, %v3248, %v3244
        %v3250 = vlaneseq
        %v3251 = vshrl.u32 %v3250, 7
        %v3252 = vsub.s32 %v985, %v3251
        %v3253 = vrot.slane %v3051, %v3252
        %v3254 = vsel %vm990, %v3253, %v3249
        %v3255 = vlaneseq
        %v3256 = vshrl.u32 %v3255, 7
        %v3257 = vsub.s32 %v992, %v3256
        %v3258 = vrot.slane %v3053, %v3257
        %v3259 = vsel %vm997, %v3258, %v3254
        %v3260 = vlaneseq
        %v3261 = vshrl.u32 %v3260, 7
        %v3262 = vsub.s32 %v999, %v3261
        %v3263 = vrot.slane %v3055, %v3262
        %v3264 = vsel %vm1004, %v3263, %v3259
        %v3265 = vlaneseq
        %v3266 = vshrl.u32 %v3265, 7
        %v3267 = vsub.s32 %v1006, %v3266
        %v3268 = vrot.slane %v3057, %v3267
        %v3269 = vsel %vm1011, %v3268, %v3264
        %v3270 = vlaneseq
        %v3271 = vshrl.u32 %v3270, 7
        %v3272 = vsub.s32 %v1013, %v3271
        %v3273 = vrot.slane %v3059, %v3272
        %v3274 = vsel %vm1018, %v3273, %v3269
        %v3275 = vlaneseq
        %v3276 = vshrl.u32 %v3275, 7
        %v3277 = vsub.s32 %v966, %v3276
        %v3278 = vrot.slane %v3061, %v3277
        %v3279 = vlaneseq
        %v3280 = vshrl.u32 %v3279, 7
        %v3281 = vsub.s32 %v971, %v3280
        %v3282 = vrot.slane %v3063, %v3281
        %v3283 = vsel %vm976, %v3282, %v3278
        %v3284 = vlaneseq
        %v3285 = vshrl.u32 %v3284, 7
        %v3286 = vsub.s32 %v978, %v3285
        %v3287 = vrot.slane %v3065, %v3286
        %v3288 = vsel %vm983, %v3287, %v3283
        %v3289 = vlaneseq
        %v3290 = vshrl.u32 %v3289, 7
        %v3291 = vsub.s32 %v985, %v3290
        %v3292 = vrot.slane %v3067, %v3291
        %v3293 = vsel %vm990, %v3292, %v3288
        %v3294 = vlaneseq
        %v3295 = vshrl.u32 %v3294, 7
        %v3296 = vsub.s32 %v992, %v3295
        %v3297 = vrot.slane %v3069, %v3296
        %v3298 = vsel %vm997, %v3297, %v3293
        %v3299 = vlaneseq
        %v3300 = vshrl.u32 %v3299, 7
        %v3301 = vsub.s32 %v999, %v3300
        %v3302 = vrot.slane %v3071, %v3301
        %v3303 = vsel %vm1004, %v3302, %v3298
        %v3304 = vlaneseq
        %v3305 = vshrl.u32 %v3304, 7
        %v3306 = vsub.s32 %v1006, %v3305
        %v3307 = vrot.slane %v3073, %v3306
        %v3308 = vsel %vm1011, %v3307, %v3303
        %v3309 = vlaneseq
        %v3310 = vshrl.u32 %v3309, 7
        %v3311 = vsub.s32 %v1013, %v3310
        %v3312 = vrot.slane %v3075, %v3311
        %v3313 = vsel %vm1018, %v3312, %v3308
        %v3314 = vlaneseq
        %v3315 = vshrl.u32 %v3314, 7
        %v3316 = vsub.s32 %v966, %v3315
        %v3317 = vrot.slane %v3077, %v3316
        %v3318 = vlaneseq
        %v3319 = vshrl.u32 %v3318, 7
        %v3320 = vsub.s32 %v971, %v3319
        %v3321 = vrot.slane %v3079, %v3320
        %v3322 = vsel %vm976, %v3321, %v3317
        %v3323 = vlaneseq
        %v3324 = vshrl.u32 %v3323, 7
        %v3325 = vsub.s32 %v978, %v3324
        %v3326 = vrot.slane %v3081, %v3325
        %v3327 = vsel %vm983, %v3326, %v3322
        %v3328 = vlaneseq
        %v3329 = vshrl.u32 %v3328, 7
        %v3330 = vsub.s32 %v985, %v3329
        %v3331 = vrot.slane %v3083, %v3330
        %v3332 = vsel %vm990, %v3331, %v3327
        %v3333 = vlaneseq
        %v3334 = vshrl.u32 %v3333, 7
        %v3335 = vsub.s32 %v992, %v3334
        %v3336 = vrot.slane %v3085, %v3335
        %v3337 = vsel %vm997, %v3336, %v3332
        %v3338 = vlaneseq
        %v3339 = vshrl.u32 %v3338, 7
        %v3340 = vsub.s32 %v999, %v3339
        %v3341 = vrot.slane %v3087, %v3340
        %v3342 = vsel %vm1004, %v3341, %v3337
        %v3343 = vlaneseq
        %v3344 = vshrl.u32 %v3343, 7
        %v3345 = vsub.s32 %v1006, %v3344
        %v3346 = vrot.slane %v3089, %v3345
        %v3347 = vsel %vm1011, %v3346, %v3342
        %v3348 = vlaneseq
        %v3349 = vshrl.u32 %v3348, 7
        %v3350 = vsub.s32 %v1013, %v3349
        %v3351 = vrot.slane %v3091, %v3350
        %v3352 = vsel %vm1018, %v3351, %v3347
        %v3353 = vlaneseq
        %v3354 = vshrl.u32 %v3353, 7
        %v3355 = vsub.s32 %v966, %v3354
        %v3356 = vrot.slane %v3093, %v3355
        %v3357 = vlaneseq
        %v3358 = vshrl.u32 %v3357, 7
        %v3359 = vsub.s32 %v971, %v3358
        %v3360 = vrot.slane %v3095, %v3359
        %v3361 = vsel %vm976, %v3360, %v3356
        %v3362 = vlaneseq
        %v3363 = vshrl.u32 %v3362, 7
        %v3364 = vsub.s32 %v978, %v3363
        %v3365 = vrot.slane %v3097, %v3364
        %v3366 = vsel %vm983, %v3365, %v3361
        %v3367 = vlaneseq
        %v3368 = vshrl.u32 %v3367, 7
        %v3369 = vsub.s32 %v985, %v3368
        %v3370 = vrot.slane %v3099, %v3369
        %v3371 = vsel %vm990, %v3370, %v3366
        %v3372 = vlaneseq
        %v3373 = vshrl.u32 %v3372, 7
        %v3374 = vsub.s32 %v992, %v3373
        %v3375 = vrot.slane %v3101, %v3374
        %v3376 = vsel %vm997, %v3375, %v3371
        %v3377 = vlaneseq
        %v3378 = vshrl.u32 %v3377, 7
        %v3379 = vsub.s32 %v999, %v3378
        %v3380 = vrot.slane %v3103, %v3379
        %v3381 = vsel %vm1004, %v3380, %v3376
        %v3382 = vlaneseq
        %v3383 = vshrl.u32 %v3382, 7
        %v3384 = vsub.s32 %v1006, %v3383
        %v3385 = vrot.slane %v3105, %v3384
        %v3386 = vsel %vm1011, %v3385, %v3381
        %v3387 = vlaneseq
        %v3388 = vshrl.u32 %v3387, 7
        %v3389 = vsub.s32 %v1013, %v3388
        %v3390 = vrot.slane %v3107, %v3389
        %v3391 = vsel %vm1018, %v3390, %v3386
        %v3392 = vlaneseq
        %v3393 = vshrl.u32 %v3392, 7
        %v3394 = vsub.s32 %v966, %v3393
        %v3395 = vrot.slane %v3109, %v3394
        %v3396 = vlaneseq
        %v3397 = vshrl.u32 %v3396, 7
        %v3398 = vsub.s32 %v971, %v3397
        %v3399 = vrot.slane %v3111, %v3398
        %v3400 = vsel %vm976, %v3399, %v3395
        %v3401 = vlaneseq
        %v3402 = vshrl.u32 %v3401, 7
        %v3403 = vsub.s32 %v978, %v3402
        %v3404 = vrot.slane %v3113, %v3403
        %v3405 = vsel %vm983, %v3404, %v3400
        %v3406 = vlaneseq
        %v3407 = vshrl.u32 %v3406, 7
        %v3408 = vsub.s32 %v985, %v3407
        %v3409 = vrot.slane %v3115, %v3408
        %v3410 = vsel %vm990, %v3409, %v3405
        %v3411 = vlaneseq
        %v3412 = vshrl.u32 %v3411, 7
        %v3413 = vsub.s32 %v992, %v3412
        %v3414 = vrot.slane %v3117, %v3413
        %v3415 = vsel %vm997, %v3414, %v3410
        %v3416 = vlaneseq
        %v3417 = vshrl.u32 %v3416, 7
        %v3418 = vsub.s32 %v999, %v3417
        %v3419 = vrot.slane %v3119, %v3418
        %v3420 = vsel %vm1004, %v3419, %v3415
        %v3421 = vlaneseq
        %v3422 = vshrl.u32 %v3421, 7
        %v3423 = vsub.s32 %v1006, %v3422
        %v3424 = vrot.slane %v3121, %v3423
        %v3425 = vsel %vm1011, %v3424, %v3420
        %v3426 = vlaneseq
        %v3427 = vshrl.u32 %v3426, 7
        %v3428 = vsub.s32 %v1013, %v3427
        %v3429 = vrot.slane %v3123, %v3428
        %v3430 = vsel %vm1018, %v3429, %v3425
        %v3431 = vlaneseq
        %v3432 = vshrl.u32 %v3431, 7
        %v3433 = vsub.s32 %v966, %v3432
        %v3434 = vrot.slane %v3125, %v3433
        %v3435 = vlaneseq
        %v3436 = vshrl.u32 %v3435, 7
        %v3437 = vsub.s32 %v971, %v3436
        %v3438 = vrot.slane %v3127, %v3437
        %v3439 = vsel %vm976, %v3438, %v3434
        %v3440 = vlaneseq
        %v3441 = vshrl.u32 %v3440, 7
        %v3442 = vsub.s32 %v978, %v3441
        %v3443 = vrot.slane %v3129, %v3442
        %v3444 = vsel %vm983, %v3443, %v3439
        %v3445 = vlaneseq
        %v3446 = vshrl.u32 %v3445, 7
        %v3447 = vsub.s32 %v985, %v3446
        %v3448 = vrot.slane %v3131, %v3447
        %v3449 = vsel %vm990, %v3448, %v3444
        %v3450 = vlaneseq
        %v3451 = vshrl.u32 %v3450, 7
        %v3452 = vsub.s32 %v992, %v3451
        %v3453 = vrot.slane %v3133, %v3452
        %v3454 = vsel %vm997, %v3453, %v3449
        %v3455 = vlaneseq
        %v3456 = vshrl.u32 %v3455, 7
        %v3457 = vsub.s32 %v999, %v3456
        %v3458 = vrot.slane %v3135, %v3457
        %v3459 = vsel %vm1004, %v3458, %v3454
        %v3460 = vlaneseq
        %v3461 = vshrl.u32 %v3460, 7
        %v3462 = vsub.s32 %v1006, %v3461
        %v3463 = vrot.slane %v3137, %v3462
        %v3464 = vsel %vm1011, %v3463, %v3459
        %v3465 = vlaneseq
        %v3466 = vshrl.u32 %v3465, 7
        %v3467 = vsub.s32 %v1013, %v3466
        %v3468 = vrot.slane %v3139, %v3467
        %v3469 = vsel %vm1018, %v3468, %v3464
        %v3470 = vlaneseq
        %v3471 = vshrl.u32 %v3470, 7
        %v3472 = vsub.s32 %v966, %v3471
        %v3473 = vrot.slane %v3141, %v3472
        %v3474 = vlaneseq
        %v3475 = vshrl.u32 %v3474, 7
        %v3476 = vsub.s32 %v971, %v3475
        %v3477 = vrot.slane %v3143, %v3476
        %v3478 = vsel %vm976, %v3477, %v3473
        %v3479 = vlaneseq
        %v3480 = vshrl.u32 %v3479, 7
        %v3481 = vsub.s32 %v978, %v3480
        %v3482 = vrot.slane %v3145, %v3481
        %v3483 = vsel %vm983, %v3482, %v3478
        %v3484 = vlaneseq
        %v3485 = vshrl.u32 %v3484, 7
        %v3486 = vsub.s32 %v985, %v3485
        %v3487 = vrot.slane %v3147, %v3486
        %v3488 = vsel %vm990, %v3487, %v3483
        %v3489 = vlaneseq
        %v3490 = vshrl.u32 %v3489, 7
        %v3491 = vsub.s32 %v992, %v3490
        %v3492 = vrot.slane %v3149, %v3491
        %v3493 = vsel %vm997, %v3492, %v3488
        %v3494 = vlaneseq
        %v3495 = vshrl.u32 %v3494, 7
        %v3496 = vsub.s32 %v999, %v3495
        %v3497 = vrot.slane %v3151, %v3496
        %v3498 = vsel %vm1004, %v3497, %v3493
        %v3499 = vlaneseq
        %v3500 = vshrl.u32 %v3499, 7
        %v3501 = vsub.s32 %v1006, %v3500
        %v3502 = vrot.slane %v3153, %v3501
        %v3503 = vsel %vm1011, %v3502, %v3498
        %v3504 = vlaneseq
        %v3505 = vshrl.u32 %v3504, 7
        %v3506 = vsub.s32 %v1013, %v3505
        %v3507 = vrot.slane %v3155, %v3506
        %v3508 = vsel %vm1018, %v3507, %v3503
        %v3509 = vlaneseq
        %v3510 = vshrl.u32 %v3509, 7
        %v3511 = vsub.s32 %v966, %v3510
        %v3512 = vrot.slane %v3157, %v3511
        %v3513 = vlaneseq
        %v3514 = vshrl.u32 %v3513, 7
        %v3515 = vsub.s32 %v971, %v3514
        %v3516 = vrot.slane %v3159, %v3515
        %v3517 = vsel %vm976, %v3516, %v3512
        %v3518 = vlaneseq
        %v3519 = vshrl.u32 %v3518, 7
        %v3520 = vsub.s32 %v978, %v3519
        %v3521 = vrot.slane %v3161, %v3520
        %v3522 = vsel %vm983, %v3521, %v3517
        %v3523 = vlaneseq
        %v3524 = vshrl.u32 %v3523, 7
        %v3525 = vsub.s32 %v985, %v3524
        %v3526 = vrot.slane %v3163, %v3525
        %v3527 = vsel %vm990, %v3526, %v3522
        %v3528 = vlaneseq
        %v3529 = vshrl.u32 %v3528, 7
        %v3530 = vsub.s32 %v992, %v3529
        %v3531 = vrot.slane %v3165, %v3530
        %v3532 = vsel %vm997, %v3531, %v3527
        %v3533 = vlaneseq
        %v3534 = vshrl.u32 %v3533, 7
        %v3535 = vsub.s32 %v999, %v3534
        %v3536 = vrot.slane %v3167, %v3535
        %v3537 = vsel %vm1004, %v3536, %v3532
        %v3538 = vlaneseq
        %v3539 = vshrl.u32 %v3538, 7
        %v3540 = vsub.s32 %v1006, %v3539
        %v3541 = vrot.slane %v3169, %v3540
        %v3542 = vsel %vm1011, %v3541, %v3537
        %v3543 = vlaneseq
        %v3544 = vshrl.u32 %v3543, 7
        %v3545 = vsub.s32 %v1013, %v3544
        %v3546 = vrot.slane %v3171, %v3545
        %v3547 = vsel %vm1018, %v3546, %v3542
        %v3548 = vsel %vm1293, %v3313, %v3274
        %v3549 = vsel %vm1295, %v3352, %v3548
        %v3550 = vsel %vm1297, %v3391, %v3549
        %v3551 = vsel %vm1299, %v3430, %v3550
        %v3552 = vsel %vm1301, %v3469, %v3551
        %v3553 = vsel %vm1303, %v3508, %v3552
        %v3554 = vsel %vm1305, %v3547, %v3553
        %v3556 = vsel %vm1308, %v3554, -inf
        %3557 = vmax.xlane.f32.xlu0 %v3556
        %v3558 = vpop.xlane.xlu0 %3557
        %v3560 = vlaneseq
        %v3561 = vshrl.u32 %v3560, 7
        %v3562 = vsub.s32 0, %v3561
        %v3563 = vrot.slane %v3558, %v3562
        %v3564 = vlaneseq
        %v3565 = vshrl.u32 %v3564, 7
        %v3566 = vsub.s32 1, %v3565
        %v3567 = vrot.slane %v3558, %v3566
        %v3568 = vlaneseq
        %v3569 = vshrl.u32 %v3568, 7
        %v3570 = vsub.s32 2, %v3569
        %v3571 = vrot.slane %v3558, %v3570
        %v3572 = vlaneseq
        %v3573 = vshrl.u32 %v3572, 7
        %v3574 = vsub.s32 3, %v3573
        %v3575 = vrot.slane %v3558, %v3574
        %v3576 = vlaneseq
        %v3577 = vshrl.u32 %v3576, 7
        %v3578 = vsub.s32 4, %v3577
        %v3579 = vrot.slane %v3558, %v3578
        %v3580 = vlaneseq
        %v3581 = vshrl.u32 %v3580, 7
        %v3582 = vsub.s32 5, %v3581
        %v3583 = vrot.slane %v3558, %v3582
        %v3584 = vlaneseq
        %v3585 = vshrl.u32 %v3584, 7
        %v3586 = vsub.s32 6, %v3585
        %v3587 = vrot.slane %v3558, %v3586
        %v3588 = vlaneseq
        %v3589 = vshrl.u32 %v3588, 7
        %v3590 = vsub.s32 7, %v3589
        %v3591 = vrot.slane %v3558, %v3590
        %v3600 = vsub.f32 %v3045, %v3563
        %v3601 = vsub.f32 %v3047, %v3563
        %v3602 = vsub.f32 %v3049, %v3563
        %v3603 = vsub.f32 %v3051, %v3563
        %v3604 = vsub.f32 %v3053, %v3563
        %v3605 = vsub.f32 %v3055, %v3563
        %v3606 = vsub.f32 %v3057, %v3563
        %v3607 = vsub.f32 %v3059, %v3563
        %v3608 = vsub.f32 %v3061, %v3567
        %v3609 = vsub.f32 %v3063, %v3567
        %v3610 = vsub.f32 %v3065, %v3567
        %v3611 = vsub.f32 %v3067, %v3567
        %v3612 = vsub.f32 %v3069, %v3567
        %v3613 = vsub.f32 %v3071, %v3567
        %v3614 = vsub.f32 %v3073, %v3567
        %v3615 = vsub.f32 %v3075, %v3567
        %v3616 = vsub.f32 %v3077, %v3571
        %v3617 = vsub.f32 %v3079, %v3571
        %v3618 = vsub.f32 %v3081, %v3571
        %v3619 = vsub.f32 %v3083, %v3571
        %v3620 = vsub.f32 %v3085, %v3571
        %v3621 = vsub.f32 %v3087, %v3571
        %v3622 = vsub.f32 %v3089, %v3571
        %v3623 = vsub.f32 %v3091, %v3571
        %v3624 = vsub.f32 %v3093, %v3575
        %v3625 = vsub.f32 %v3095, %v3575
        %v3626 = vsub.f32 %v3097, %v3575
        %v3627 = vsub.f32 %v3099, %v3575
        %v3628 = vsub.f32 %v3101, %v3575
        %v3629 = vsub.f32 %v3103, %v3575
        %v3630 = vsub.f32 %v3105, %v3575
        %v3631 = vsub.f32 %v3107, %v3575
        %v3632 = vsub.f32 %v3109, %v3579
        %v3633 = vsub.f32 %v3111, %v3579
        %v3634 = vsub.f32 %v3113, %v3579
        %v3635 = vsub.f32 %v3115, %v3579
        %v3636 = vsub.f32 %v3117, %v3579
        %v3637 = vsub.f32 %v3119, %v3579
        %v3638 = vsub.f32 %v3121, %v3579
        %v3639 = vsub.f32 %v3123, %v3579
        %v3640 = vsub.f32 %v3125, %v3583
        %v3641 = vsub.f32 %v3127, %v3583
        %v3642 = vsub.f32 %v3129, %v3583
        %v3643 = vsub.f32 %v3131, %v3583
        %v3644 = vsub.f32 %v3133, %v3583
        %v3645 = vsub.f32 %v3135, %v3583
        %v3646 = vsub.f32 %v3137, %v3583
        %v3647 = vsub.f32 %v3139, %v3583
        %v3648 = vsub.f32 %v3141, %v3587
        %v3649 = vsub.f32 %v3143, %v3587
        %v3650 = vsub.f32 %v3145, %v3587
        %v3651 = vsub.f32 %v3147, %v3587
        %v3652 = vsub.f32 %v3149, %v3587
        %v3653 = vsub.f32 %v3151, %v3587
        %v3654 = vsub.f32 %v3153, %v3587
        %v3655 = vsub.f32 %v3155, %v3587
        %v3656 = vsub.f32 %v3157, %v3591
        %v3657 = vsub.f32 %v3159, %v3591
        %v3658 = vsub.f32 %v3161, %v3591
        %v3659 = vsub.f32 %v3163, %v3591
        %v3660 = vsub.f32 %v3165, %v3591
        %v3661 = vsub.f32 %v3167, %v3591
        %v3662 = vsub.f32 %v3169, %v3591
        %v3663 = vsub.f32 %v3171, %v3591
        %v3664 = vmul.f32 %v3600, 1.442695
        %v3665 = vpow.pop %v3664
        %v3666 = vmul.f32 %v3601, 1.442695
        %v3667 = vpow.pop %v3666
        %v3668 = vmul.f32 %v3602, 1.442695
        %v3669 = vpow.pop %v3668
        %v3670 = vmul.f32 %v3603, 1.442695
        %v3671 = vpow.pop %v3670
        %v3672 = vmul.f32 %v3604, 1.442695
        %v3673 = vpow.pop %v3672
        %v3674 = vmul.f32 %v3605, 1.442695
        %v3675 = vpow.pop %v3674
        %v3676 = vmul.f32 %v3606, 1.442695
        %v3677 = vpow.pop %v3676
        %v3678 = vmul.f32 %v3607, 1.442695
        %v3679 = vpow.pop %v3678
        %v3680 = vmul.f32 %v3608, 1.442695
        %v3681 = vpow.pop %v3680
        %v3682 = vmul.f32 %v3609, 1.442695
        %v3683 = vpow.pop %v3682
        %v3684 = vmul.f32 %v3610, 1.442695
        %v3685 = vpow.pop %v3684
        %v3686 = vmul.f32 %v3611, 1.442695
        %v3687 = vpow.pop %v3686
        %v3688 = vmul.f32 %v3612, 1.442695
        %v3689 = vpow.pop %v3688
        %v3690 = vmul.f32 %v3613, 1.442695
        %v3691 = vpow.pop %v3690
        %v3692 = vmul.f32 %v3614, 1.442695
        %v3693 = vpow.pop %v3692
        %v3694 = vmul.f32 %v3615, 1.442695
        %v3695 = vpow.pop %v3694
        %v3696 = vmul.f32 %v3616, 1.442695
        %v3697 = vpow.pop %v3696
        %v3698 = vmul.f32 %v3617, 1.442695
        %v3699 = vpow.pop %v3698
        %v3700 = vmul.f32 %v3618, 1.442695
        %v3701 = vpow.pop %v3700
        %v3702 = vmul.f32 %v3619, 1.442695
        %v3703 = vpow.pop %v3702
        %v3704 = vmul.f32 %v3620, 1.442695
        %v3705 = vpow.pop %v3704
        %v3706 = vmul.f32 %v3621, 1.442695
        %v3707 = vpow.pop %v3706
        %v3708 = vmul.f32 %v3622, 1.442695
        %v3709 = vpow.pop %v3708
        %v3710 = vmul.f32 %v3623, 1.442695
        %v3711 = vpow.pop %v3710
        %v3712 = vmul.f32 %v3624, 1.442695
        %v3713 = vpow.pop %v3712
        %v3714 = vmul.f32 %v3625, 1.442695
        %v3715 = vpow.pop %v3714
        %v3716 = vmul.f32 %v3626, 1.442695
        %v3717 = vpow.pop %v3716
        %v3718 = vmul.f32 %v3627, 1.442695
        %v3719 = vpow.pop %v3718
        %v3720 = vmul.f32 %v3628, 1.442695
        %v3721 = vpow.pop %v3720
        %v3722 = vmul.f32 %v3629, 1.442695
        %v3723 = vpow.pop %v3722
        %v3724 = vmul.f32 %v3630, 1.442695
        %v3725 = vpow.pop %v3724
        %v3726 = vmul.f32 %v3631, 1.442695
        %v3727 = vpow.pop %v3726
        %v3728 = vmul.f32 %v3632, 1.442695
        %v3729 = vpow.pop %v3728
        %v3730 = vmul.f32 %v3633, 1.442695
        %v3731 = vpow.pop %v3730
        %v3732 = vmul.f32 %v3634, 1.442695
        %v3733 = vpow.pop %v3732
        %v3734 = vmul.f32 %v3635, 1.442695
        %v3735 = vpow.pop %v3734
        %v3736 = vmul.f32 %v3636, 1.442695
        %v3737 = vpow.pop %v3736
        %v3738 = vmul.f32 %v3637, 1.442695
        %v3739 = vpow.pop %v3738
        %v3740 = vmul.f32 %v3638, 1.442695
        %v3741 = vpow.pop %v3740
        %v3742 = vmul.f32 %v3639, 1.442695
        %v3743 = vpow.pop %v3742
        %v3744 = vmul.f32 %v3640, 1.442695
        %v3745 = vpow.pop %v3744
        %v3746 = vmul.f32 %v3641, 1.442695
        %v3747 = vpow.pop %v3746
        %v3748 = vmul.f32 %v3642, 1.442695
        %v3749 = vpow.pop %v3748
        %v3750 = vmul.f32 %v3643, 1.442695
        %v3751 = vpow.pop %v3750
        %v3752 = vmul.f32 %v3644, 1.442695
        %v3753 = vpow.pop %v3752
        %v3754 = vmul.f32 %v3645, 1.442695
        %v3755 = vpow.pop %v3754
        %v3756 = vmul.f32 %v3646, 1.442695
        %v3757 = vpow.pop %v3756
        %v3758 = vmul.f32 %v3647, 1.442695
        %v3759 = vpow.pop %v3758
        %v3760 = vmul.f32 %v3648, 1.442695
        %v3761 = vpow.pop %v3760
        %v3762 = vmul.f32 %v3649, 1.442695
        %v3763 = vpow.pop %v3762
        %v3764 = vmul.f32 %v3650, 1.442695
        %v3765 = vpow.pop %v3764
        %v3766 = vmul.f32 %v3651, 1.442695
        %v3767 = vpow.pop %v3766
        %v3768 = vmul.f32 %v3652, 1.442695
        %v3769 = vpow.pop %v3768
        %v3770 = vmul.f32 %v3653, 1.442695
        %v3771 = vpow.pop %v3770
        %v3772 = vmul.f32 %v3654, 1.442695
        %v3773 = vpow.pop %v3772
        %v3774 = vmul.f32 %v3655, 1.442695
        %v3775 = vpow.pop %v3774
        %v3776 = vmul.f32 %v3656, 1.442695
        %v3777 = vpow.pop %v3776
        %v3778 = vmul.f32 %v3657, 1.442695
        %v3779 = vpow.pop %v3778
        %v3780 = vmul.f32 %v3658, 1.442695
        %v3781 = vpow.pop %v3780
        %v3782 = vmul.f32 %v3659, 1.442695
        %v3783 = vpow.pop %v3782
        %v3784 = vmul.f32 %v3660, 1.442695
        %v3785 = vpow.pop %v3784
        %v3786 = vmul.f32 %v3661, 1.442695
        %v3787 = vpow.pop %v3786
        %v3788 = vmul.f32 %v3662, 1.442695
        %v3789 = vpow.pop %v3788
        %v3790 = vmul.f32 %v3663, 1.442695
        %v3791 = vpow.pop %v3790
        %3856 = vset.pattern.permute.xlu0 0
        %3857 = vperm.xlu0 %3856, %v3665
        %v3858 = vpop.permute.xlu0 %3857
        %3859 = vset.pattern.permute.xlu0 0
        %3860 = vperm.xlu0 %3859, %v3667
        %v3861 = vpop.permute.xlu0 %3860
        %3862 = vset.pattern.permute.xlu0 0
        %3863 = vperm.xlu0 %3862, %v3669
        %v3864 = vpop.permute.xlu0 %3863
        %3865 = vset.pattern.permute.xlu0 0
        %3866 = vperm.xlu0 %3865, %v3671
        %v3867 = vpop.permute.xlu0 %3866
        %3868 = vset.pattern.permute.xlu0 0
        %3869 = vperm.xlu0 %3868, %v3673
        %v3870 = vpop.permute.xlu0 %3869
        %3871 = vset.pattern.permute.xlu0 0
        %3872 = vperm.xlu0 %3871, %v3675
        %v3873 = vpop.permute.xlu0 %3872
        %3874 = vset.pattern.permute.xlu0 0
        %3875 = vperm.xlu0 %3874, %v3677
        %v3876 = vpop.permute.xlu0 %3875
        %3877 = vset.pattern.permute.xlu0 0
        %3878 = vperm.xlu0 %3877, %v3679
        %v3879 = vpop.permute.xlu0 %3878
        %3880 = vset.pattern.permute.xlu0 0
        %3881 = vperm.xlu0 %3880, %v3681
        %v3882 = vpop.permute.xlu0 %3881
        %3883 = vset.pattern.permute.xlu0 0
        %3884 = vperm.xlu0 %3883, %v3683
        %v3885 = vpop.permute.xlu0 %3884
        %3886 = vset.pattern.permute.xlu0 0
        %3887 = vperm.xlu0 %3886, %v3685
        %v3888 = vpop.permute.xlu0 %3887
        %3889 = vset.pattern.permute.xlu0 0
        %3890 = vperm.xlu0 %3889, %v3687
        %v3891 = vpop.permute.xlu0 %3890
        %3892 = vset.pattern.permute.xlu0 0
        %3893 = vperm.xlu0 %3892, %v3689
        %v3894 = vpop.permute.xlu0 %3893
        %3895 = vset.pattern.permute.xlu0 0
        %3896 = vperm.xlu0 %3895, %v3691
        %v3897 = vpop.permute.xlu0 %3896
        %3898 = vset.pattern.permute.xlu0 0
        %3899 = vperm.xlu0 %3898, %v3693
        %v3900 = vpop.permute.xlu0 %3899
        %3901 = vset.pattern.permute.xlu0 0
        %3902 = vperm.xlu0 %3901, %v3695
        %v3903 = vpop.permute.xlu0 %3902
        %3904 = vset.pattern.permute.xlu0 0
        %3905 = vperm.xlu0 %3904, %v3697
        %v3906 = vpop.permute.xlu0 %3905
        %3907 = vset.pattern.permute.xlu0 0
        %3908 = vperm.xlu0 %3907, %v3699
        %v3909 = vpop.permute.xlu0 %3908
        %3910 = vset.pattern.permute.xlu0 0
        %3911 = vperm.xlu0 %3910, %v3701
        %v3912 = vpop.permute.xlu0 %3911
        %3913 = vset.pattern.permute.xlu0 0
        %3914 = vperm.xlu0 %3913, %v3703
        %v3915 = vpop.permute.xlu0 %3914
        %3916 = vset.pattern.permute.xlu0 0
        %3917 = vperm.xlu0 %3916, %v3705
        %v3918 = vpop.permute.xlu0 %3917
        %3919 = vset.pattern.permute.xlu0 0
        %3920 = vperm.xlu0 %3919, %v3707
        %v3921 = vpop.permute.xlu0 %3920
        %3922 = vset.pattern.permute.xlu0 0
        %3923 = vperm.xlu0 %3922, %v3709
        %v3924 = vpop.permute.xlu0 %3923
        %3925 = vset.pattern.permute.xlu0 0
        %3926 = vperm.xlu0 %3925, %v3711
        %v3927 = vpop.permute.xlu0 %3926
        %3928 = vset.pattern.permute.xlu0 0
        %3929 = vperm.xlu0 %3928, %v3713
        %v3930 = vpop.permute.xlu0 %3929
        %3931 = vset.pattern.permute.xlu0 0
        %3932 = vperm.xlu0 %3931, %v3715
        %v3933 = vpop.permute.xlu0 %3932
        %3934 = vset.pattern.permute.xlu0 0
        %3935 = vperm.xlu0 %3934, %v3717
        %v3936 = vpop.permute.xlu0 %3935
        %3937 = vset.pattern.permute.xlu0 0
        %3938 = vperm.xlu0 %3937, %v3719
        %v3939 = vpop.permute.xlu0 %3938
        %3940 = vset.pattern.permute.xlu0 0
        %3941 = vperm.xlu0 %3940, %v3721
        %v3942 = vpop.permute.xlu0 %3941
        %3943 = vset.pattern.permute.xlu0 0
        %3944 = vperm.xlu0 %3943, %v3723
        %v3945 = vpop.permute.xlu0 %3944
        %3946 = vset.pattern.permute.xlu0 0
        %3947 = vperm.xlu0 %3946, %v3725
        %v3948 = vpop.permute.xlu0 %3947
        %3949 = vset.pattern.permute.xlu0 0
        %3950 = vperm.xlu0 %3949, %v3727
        %v3951 = vpop.permute.xlu0 %3950
        %3952 = vset.pattern.permute.xlu0 0
        %3953 = vperm.xlu0 %3952, %v3729
        %v3954 = vpop.permute.xlu0 %3953
        %3955 = vset.pattern.permute.xlu0 0
        %3956 = vperm.xlu0 %3955, %v3731
        %v3957 = vpop.permute.xlu0 %3956
        %3958 = vset.pattern.permute.xlu0 0
        %3959 = vperm.xlu0 %3958, %v3733
        %v3960 = vpop.permute.xlu0 %3959
        %3961 = vset.pattern.permute.xlu0 0
        %3962 = vperm.xlu0 %3961, %v3735
        %v3963 = vpop.permute.xlu0 %3962
        %3964 = vset.pattern.permute.xlu0 0
        %3965 = vperm.xlu0 %3964, %v3737
        %v3966 = vpop.permute.xlu0 %3965
        %3967 = vset.pattern.permute.xlu0 0
        %3968 = vperm.xlu0 %3967, %v3739
        %v3969 = vpop.permute.xlu0 %3968
        %3970 = vset.pattern.permute.xlu0 0
        %3971 = vperm.xlu0 %3970, %v3741
        %v3972 = vpop.permute.xlu0 %3971
        %3973 = vset.pattern.permute.xlu0 0
        %3974 = vperm.xlu0 %3973, %v3743
        %v3975 = vpop.permute.xlu0 %3974
        %3976 = vset.pattern.permute.xlu0 0
        %3977 = vperm.xlu0 %3976, %v3745
        %v3978 = vpop.permute.xlu0 %3977
        %3979 = vset.pattern.permute.xlu0 0
        %3980 = vperm.xlu0 %3979, %v3747
        %v3981 = vpop.permute.xlu0 %3980
        %3982 = vset.pattern.permute.xlu0 0
        %3983 = vperm.xlu0 %3982, %v3749
        %v3984 = vpop.permute.xlu0 %3983
        %3985 = vset.pattern.permute.xlu0 0
        %3986 = vperm.xlu0 %3985, %v3751
        %v3987 = vpop.permute.xlu0 %3986
        %3988 = vset.pattern.permute.xlu0 0
        %3989 = vperm.xlu0 %3988, %v3753
        %v3990 = vpop.permute.xlu0 %3989
        %3991 = vset.pattern.permute.xlu0 0
        %3992 = vperm.xlu0 %3991, %v3755
        %v3993 = vpop.permute.xlu0 %3992
        %3994 = vset.pattern.permute.xlu0 0
        %3995 = vperm.xlu0 %3994, %v3757
        %v3996 = vpop.permute.xlu0 %3995
        %3997 = vset.pattern.permute.xlu0 0
        %3998 = vperm.xlu0 %3997, %v3759
        %v3999 = vpop.permute.xlu0 %3998
        %4000 = vset.pattern.permute.xlu0 0
        %4001 = vperm.xlu0 %4000, %v3761
        %v4002 = vpop.permute.xlu0 %4001
        %4003 = vset.pattern.permute.xlu0 0
        %4004 = vperm.xlu0 %4003, %v3763
        %v4005 = vpop.permute.xlu0 %4004
        %4006 = vset.pattern.permute.xlu0 0
        %4007 = vperm.xlu0 %4006, %v3765
        %v4008 = vpop.permute.xlu0 %4007
        %4009 = vset.pattern.permute.xlu0 0
        %4010 = vperm.xlu0 %4009, %v3767
        %v4011 = vpop.permute.xlu0 %4010
        %4012 = vset.pattern.permute.xlu0 0
        %4013 = vperm.xlu0 %4012, %v3769
        %v4014 = vpop.permute.xlu0 %4013
        %4015 = vset.pattern.permute.xlu0 0
        %4016 = vperm.xlu0 %4015, %v3771
        %v4017 = vpop.permute.xlu0 %4016
        %4018 = vset.pattern.permute.xlu0 0
        %4019 = vperm.xlu0 %4018, %v3773
        %v4020 = vpop.permute.xlu0 %4019
        %4021 = vset.pattern.permute.xlu0 0
        %4022 = vperm.xlu0 %4021, %v3775
        %v4023 = vpop.permute.xlu0 %4022
        %4024 = vset.pattern.permute.xlu0 0
        %4025 = vperm.xlu0 %4024, %v3777
        %v4026 = vpop.permute.xlu0 %4025
        %4027 = vset.pattern.permute.xlu0 0
        %4028 = vperm.xlu0 %4027, %v3779
        %v4029 = vpop.permute.xlu0 %4028
        %4030 = vset.pattern.permute.xlu0 0
        %4031 = vperm.xlu0 %4030, %v3781
        %v4032 = vpop.permute.xlu0 %4031
        %4033 = vset.pattern.permute.xlu0 0
        %4034 = vperm.xlu0 %4033, %v3783
        %v4035 = vpop.permute.xlu0 %4034
        %4036 = vset.pattern.permute.xlu0 0
        %4037 = vperm.xlu0 %4036, %v3785
        %v4038 = vpop.permute.xlu0 %4037
        %4039 = vset.pattern.permute.xlu0 0
        %4040 = vperm.xlu0 %4039, %v3787
        %v4041 = vpop.permute.xlu0 %4040
        %4042 = vset.pattern.permute.xlu0 0
        %4043 = vperm.xlu0 %4042, %v3789
        %v4044 = vpop.permute.xlu0 %4043
        %4045 = vset.pattern.permute.xlu0 0
        %4046 = vperm.xlu0 %4045, %v3791
        %v4047 = vpop.permute.xlu0 %4046
        %v4048 = vlaneseq
        %v4049 = vshrl.u32 %v4048, 7
        %v4050 = vsub.s32 %v966, %v4049
        %v4051 = vrot.slane %v3858, %v4050
        %v4052 = vlaneseq
        %v4053 = vshrl.u32 %v4052, 7
        %v4054 = vsub.s32 %v971, %v4053
        %v4055 = vrot.slane %v3861, %v4054
        %v4056 = vsel %vm976, %v4055, %v4051
        %v4057 = vlaneseq
        %v4058 = vshrl.u32 %v4057, 7
        %v4059 = vsub.s32 %v978, %v4058
        %v4060 = vrot.slane %v3864, %v4059
        %v4061 = vsel %vm983, %v4060, %v4056
        %v4062 = vlaneseq
        %v4063 = vshrl.u32 %v4062, 7
        %v4064 = vsub.s32 %v985, %v4063
        %v4065 = vrot.slane %v3867, %v4064
        %v4066 = vsel %vm990, %v4065, %v4061
        %v4067 = vlaneseq
        %v4068 = vshrl.u32 %v4067, 7
        %v4069 = vsub.s32 %v992, %v4068
        %v4070 = vrot.slane %v3870, %v4069
        %v4071 = vsel %vm997, %v4070, %v4066
        %v4072 = vlaneseq
        %v4073 = vshrl.u32 %v4072, 7
        %v4074 = vsub.s32 %v999, %v4073
        %v4075 = vrot.slane %v3873, %v4074
        %v4076 = vsel %vm1004, %v4075, %v4071
        %v4077 = vlaneseq
        %v4078 = vshrl.u32 %v4077, 7
        %v4079 = vsub.s32 %v1006, %v4078
        %v4080 = vrot.slane %v3876, %v4079
        %v4081 = vsel %vm1011, %v4080, %v4076
        %v4082 = vlaneseq
        %v4083 = vshrl.u32 %v4082, 7
        %v4084 = vsub.s32 %v1013, %v4083
        %v4085 = vrot.slane %v3879, %v4084
        %v4086 = vsel %vm1018, %v4085, %v4081
        %v4087 = vlaneseq
        %v4088 = vshrl.u32 %v4087, 7
        %v4089 = vsub.s32 %v966, %v4088
        %v4090 = vrot.slane %v3882, %v4089
        %v4091 = vlaneseq
        %v4092 = vshrl.u32 %v4091, 7
        %v4093 = vsub.s32 %v971, %v4092
        %v4094 = vrot.slane %v3885, %v4093
        %v4095 = vsel %vm976, %v4094, %v4090
        %v4096 = vlaneseq
        %v4097 = vshrl.u32 %v4096, 7
        %v4098 = vsub.s32 %v978, %v4097
        %v4099 = vrot.slane %v3888, %v4098
        %v4100 = vsel %vm983, %v4099, %v4095
        %v4101 = vlaneseq
        %v4102 = vshrl.u32 %v4101, 7
        %v4103 = vsub.s32 %v985, %v4102
        %v4104 = vrot.slane %v3891, %v4103
        %v4105 = vsel %vm990, %v4104, %v4100
        %v4106 = vlaneseq
        %v4107 = vshrl.u32 %v4106, 7
        %v4108 = vsub.s32 %v992, %v4107
        %v4109 = vrot.slane %v3894, %v4108
        %v4110 = vsel %vm997, %v4109, %v4105
        %v4111 = vlaneseq
        %v4112 = vshrl.u32 %v4111, 7
        %v4113 = vsub.s32 %v999, %v4112
        %v4114 = vrot.slane %v3897, %v4113
        %v4115 = vsel %vm1004, %v4114, %v4110
        %v4116 = vlaneseq
        %v4117 = vshrl.u32 %v4116, 7
        %v4118 = vsub.s32 %v1006, %v4117
        %v4119 = vrot.slane %v3900, %v4118
        %v4120 = vsel %vm1011, %v4119, %v4115
        %v4121 = vlaneseq
        %v4122 = vshrl.u32 %v4121, 7
        %v4123 = vsub.s32 %v1013, %v4122
        %v4124 = vrot.slane %v3903, %v4123
        %v4125 = vsel %vm1018, %v4124, %v4120
        %v4126 = vlaneseq
        %v4127 = vshrl.u32 %v4126, 7
        %v4128 = vsub.s32 %v966, %v4127
        %v4129 = vrot.slane %v3906, %v4128
        %v4130 = vlaneseq
        %v4131 = vshrl.u32 %v4130, 7
        %v4132 = vsub.s32 %v971, %v4131
        %v4133 = vrot.slane %v3909, %v4132
        %v4134 = vsel %vm976, %v4133, %v4129
        %v4135 = vlaneseq
        %v4136 = vshrl.u32 %v4135, 7
        %v4137 = vsub.s32 %v978, %v4136
        %v4138 = vrot.slane %v3912, %v4137
        %v4139 = vsel %vm983, %v4138, %v4134
        %v4140 = vlaneseq
        %v4141 = vshrl.u32 %v4140, 7
        %v4142 = vsub.s32 %v985, %v4141
        %v4143 = vrot.slane %v3915, %v4142
        %v4144 = vsel %vm990, %v4143, %v4139
        %v4145 = vlaneseq
        %v4146 = vshrl.u32 %v4145, 7
        %v4147 = vsub.s32 %v992, %v4146
        %v4148 = vrot.slane %v3918, %v4147
        %v4149 = vsel %vm997, %v4148, %v4144
        %v4150 = vlaneseq
        %v4151 = vshrl.u32 %v4150, 7
        %v4152 = vsub.s32 %v999, %v4151
        %v4153 = vrot.slane %v3921, %v4152
        %v4154 = vsel %vm1004, %v4153, %v4149
        %v4155 = vlaneseq
        %v4156 = vshrl.u32 %v4155, 7
        %v4157 = vsub.s32 %v1006, %v4156
        %v4158 = vrot.slane %v3924, %v4157
        %v4159 = vsel %vm1011, %v4158, %v4154
        %v4160 = vlaneseq
        %v4161 = vshrl.u32 %v4160, 7
        %v4162 = vsub.s32 %v1013, %v4161
        %v4163 = vrot.slane %v3927, %v4162
        %v4164 = vsel %vm1018, %v4163, %v4159
        %v4165 = vlaneseq
        %v4166 = vshrl.u32 %v4165, 7
        %v4167 = vsub.s32 %v966, %v4166
        %v4168 = vrot.slane %v3930, %v4167
        %v4169 = vlaneseq
        %v4170 = vshrl.u32 %v4169, 7
        %v4171 = vsub.s32 %v971, %v4170
        %v4172 = vrot.slane %v3933, %v4171
        %v4173 = vsel %vm976, %v4172, %v4168
        %v4174 = vlaneseq
        %v4175 = vshrl.u32 %v4174, 7
        %v4176 = vsub.s32 %v978, %v4175
        %v4177 = vrot.slane %v3936, %v4176
        %v4178 = vsel %vm983, %v4177, %v4173
        %v4179 = vlaneseq
        %v4180 = vshrl.u32 %v4179, 7
        %v4181 = vsub.s32 %v985, %v4180
        %v4182 = vrot.slane %v3939, %v4181
        %v4183 = vsel %vm990, %v4182, %v4178
        %v4184 = vlaneseq
        %v4185 = vshrl.u32 %v4184, 7
        %v4186 = vsub.s32 %v992, %v4185
        %v4187 = vrot.slane %v3942, %v4186
        %v4188 = vsel %vm997, %v4187, %v4183
        %v4189 = vlaneseq
        %v4190 = vshrl.u32 %v4189, 7
        %v4191 = vsub.s32 %v999, %v4190
        %v4192 = vrot.slane %v3945, %v4191
        %v4193 = vsel %vm1004, %v4192, %v4188
        %v4194 = vlaneseq
        %v4195 = vshrl.u32 %v4194, 7
        %v4196 = vsub.s32 %v1006, %v4195
        %v4197 = vrot.slane %v3948, %v4196
        %v4198 = vsel %vm1011, %v4197, %v4193
        %v4199 = vlaneseq
        %v4200 = vshrl.u32 %v4199, 7
        %v4201 = vsub.s32 %v1013, %v4200
        %v4202 = vrot.slane %v3951, %v4201
        %v4203 = vsel %vm1018, %v4202, %v4198
        %v4204 = vlaneseq
        %v4205 = vshrl.u32 %v4204, 7
        %v4206 = vsub.s32 %v966, %v4205
        %v4207 = vrot.slane %v3954, %v4206
        %v4208 = vlaneseq
        %v4209 = vshrl.u32 %v4208, 7
        %v4210 = vsub.s32 %v971, %v4209
        %v4211 = vrot.slane %v3957, %v4210
        %v4212 = vsel %vm976, %v4211, %v4207
        %v4213 = vlaneseq
        %v4214 = vshrl.u32 %v4213, 7
        %v4215 = vsub.s32 %v978, %v4214
        %v4216 = vrot.slane %v3960, %v4215
        %v4217 = vsel %vm983, %v4216, %v4212
        %v4218 = vlaneseq
        %v4219 = vshrl.u32 %v4218, 7
        %v4220 = vsub.s32 %v985, %v4219
        %v4221 = vrot.slane %v3963, %v4220
        %v4222 = vsel %vm990, %v4221, %v4217
        %v4223 = vlaneseq
        %v4224 = vshrl.u32 %v4223, 7
        %v4225 = vsub.s32 %v992, %v4224
        %v4226 = vrot.slane %v3966, %v4225
        %v4227 = vsel %vm997, %v4226, %v4222
        %v4228 = vlaneseq
        %v4229 = vshrl.u32 %v4228, 7
        %v4230 = vsub.s32 %v999, %v4229
        %v4231 = vrot.slane %v3969, %v4230
        %v4232 = vsel %vm1004, %v4231, %v4227
        %v4233 = vlaneseq
        %v4234 = vshrl.u32 %v4233, 7
        %v4235 = vsub.s32 %v1006, %v4234
        %v4236 = vrot.slane %v3972, %v4235
        %v4237 = vsel %vm1011, %v4236, %v4232
        %v4238 = vlaneseq
        %v4239 = vshrl.u32 %v4238, 7
        %v4240 = vsub.s32 %v1013, %v4239
        %v4241 = vrot.slane %v3975, %v4240
        %v4242 = vsel %vm1018, %v4241, %v4237
        %v4243 = vlaneseq
        %v4244 = vshrl.u32 %v4243, 7
        %v4245 = vsub.s32 %v966, %v4244
        %v4246 = vrot.slane %v3978, %v4245
        %v4247 = vlaneseq
        %v4248 = vshrl.u32 %v4247, 7
        %v4249 = vsub.s32 %v971, %v4248
        %v4250 = vrot.slane %v3981, %v4249
        %v4251 = vsel %vm976, %v4250, %v4246
        %v4252 = vlaneseq
        %v4253 = vshrl.u32 %v4252, 7
        %v4254 = vsub.s32 %v978, %v4253
        %v4255 = vrot.slane %v3984, %v4254
        %v4256 = vsel %vm983, %v4255, %v4251
        %v4257 = vlaneseq
        %v4258 = vshrl.u32 %v4257, 7
        %v4259 = vsub.s32 %v985, %v4258
        %v4260 = vrot.slane %v3987, %v4259
        %v4261 = vsel %vm990, %v4260, %v4256
        %v4262 = vlaneseq
        %v4263 = vshrl.u32 %v4262, 7
        %v4264 = vsub.s32 %v992, %v4263
        %v4265 = vrot.slane %v3990, %v4264
        %v4266 = vsel %vm997, %v4265, %v4261
        %v4267 = vlaneseq
        %v4268 = vshrl.u32 %v4267, 7
        %v4269 = vsub.s32 %v999, %v4268
        %v4270 = vrot.slane %v3993, %v4269
        %v4271 = vsel %vm1004, %v4270, %v4266
        %v4272 = vlaneseq
        %v4273 = vshrl.u32 %v4272, 7
        %v4274 = vsub.s32 %v1006, %v4273
        %v4275 = vrot.slane %v3996, %v4274
        %v4276 = vsel %vm1011, %v4275, %v4271
        %v4277 = vlaneseq
        %v4278 = vshrl.u32 %v4277, 7
        %v4279 = vsub.s32 %v1013, %v4278
        %v4280 = vrot.slane %v3999, %v4279
        %v4281 = vsel %vm1018, %v4280, %v4276
        %v4282 = vlaneseq
        %v4283 = vshrl.u32 %v4282, 7
        %v4284 = vsub.s32 %v966, %v4283
        %v4285 = vrot.slane %v4002, %v4284
        %v4286 = vlaneseq
        %v4287 = vshrl.u32 %v4286, 7
        %v4288 = vsub.s32 %v971, %v4287
        %v4289 = vrot.slane %v4005, %v4288
        %v4290 = vsel %vm976, %v4289, %v4285
        %v4291 = vlaneseq
        %v4292 = vshrl.u32 %v4291, 7
        %v4293 = vsub.s32 %v978, %v4292
        %v4294 = vrot.slane %v4008, %v4293
        %v4295 = vsel %vm983, %v4294, %v4290
        %v4296 = vlaneseq
        %v4297 = vshrl.u32 %v4296, 7
        %v4298 = vsub.s32 %v985, %v4297
        %v4299 = vrot.slane %v4011, %v4298
        %v4300 = vsel %vm990, %v4299, %v4295
        %v4301 = vlaneseq
        %v4302 = vshrl.u32 %v4301, 7
        %v4303 = vsub.s32 %v992, %v4302
        %v4304 = vrot.slane %v4014, %v4303
        %v4305 = vsel %vm997, %v4304, %v4300
        %v4306 = vlaneseq
        %v4307 = vshrl.u32 %v4306, 7
        %v4308 = vsub.s32 %v999, %v4307
        %v4309 = vrot.slane %v4017, %v4308
        %v4310 = vsel %vm1004, %v4309, %v4305
        %v4311 = vlaneseq
        %v4312 = vshrl.u32 %v4311, 7
        %v4313 = vsub.s32 %v1006, %v4312
        %v4314 = vrot.slane %v4020, %v4313
        %v4315 = vsel %vm1011, %v4314, %v4310
        %v4316 = vlaneseq
        %v4317 = vshrl.u32 %v4316, 7
        %v4318 = vsub.s32 %v1013, %v4317
        %v4319 = vrot.slane %v4023, %v4318
        %v4320 = vsel %vm1018, %v4319, %v4315
        %v4321 = vlaneseq
        %v4322 = vshrl.u32 %v4321, 7
        %v4323 = vsub.s32 %v966, %v4322
        %v4324 = vrot.slane %v4026, %v4323
        %v4325 = vlaneseq
        %v4326 = vshrl.u32 %v4325, 7
        %v4327 = vsub.s32 %v971, %v4326
        %v4328 = vrot.slane %v4029, %v4327
        %v4329 = vsel %vm976, %v4328, %v4324
        %v4330 = vlaneseq
        %v4331 = vshrl.u32 %v4330, 7
        %v4332 = vsub.s32 %v978, %v4331
        %v4333 = vrot.slane %v4032, %v4332
        %v4334 = vsel %vm983, %v4333, %v4329
        %v4335 = vlaneseq
        %v4336 = vshrl.u32 %v4335, 7
        %v4337 = vsub.s32 %v985, %v4336
        %v4338 = vrot.slane %v4035, %v4337
        %v4339 = vsel %vm990, %v4338, %v4334
        %v4340 = vlaneseq
        %v4341 = vshrl.u32 %v4340, 7
        %v4342 = vsub.s32 %v992, %v4341
        %v4343 = vrot.slane %v4038, %v4342
        %v4344 = vsel %vm997, %v4343, %v4339
        %v4345 = vlaneseq
        %v4346 = vshrl.u32 %v4345, 7
        %v4347 = vsub.s32 %v999, %v4346
        %v4348 = vrot.slane %v4041, %v4347
        %v4349 = vsel %vm1004, %v4348, %v4344
        %v4350 = vlaneseq
        %v4351 = vshrl.u32 %v4350, 7
        %v4352 = vsub.s32 %v1006, %v4351
        %v4353 = vrot.slane %v4044, %v4352
        %v4354 = vsel %vm1011, %v4353, %v4349
        %v4355 = vlaneseq
        %v4356 = vshrl.u32 %v4355, 7
        %v4357 = vsub.s32 %v1013, %v4356
        %v4358 = vrot.slane %v4047, %v4357
        %v4359 = vsel %vm1018, %v4358, %v4354
        %v4360 = vsel %vm1293, %v4125, %v4086
        %v4361 = vsel %vm1295, %v4164, %v4360
        %v4362 = vsel %vm1297, %v4203, %v4361
        %v4363 = vsel %vm1299, %v4242, %v4362
        %v4364 = vsel %vm1301, %v4281, %v4363
        %v4365 = vsel %vm1303, %v4320, %v4364
        %v4366 = vsel %vm1305, %v4359, %v4365
        %v4368 = vsel %vm1308, %v4366, 0.0
        %4369 = vadd.xlane.f32.xlu0 %v4368
        %v4370 = vpop.xlane.xlu0 %4369
        %v4371 = vrcp.pop %v4370
        %v4372 = vpack.c.bf16 %v3667, %v3665
        %v4373 = vpack.c.bf16 %v3671, %v3669
        %v4374 = vpack.c.bf16 %v3675, %v3673
        %v4375 = vpack.c.bf16 %v3679, %v3677
        %v4376 = vpack.c.bf16 %v3683, %v3681
        %v4377 = vpack.c.bf16 %v3687, %v3685
        %v4378 = vpack.c.bf16 %v3691, %v3689
        %v4379 = vpack.c.bf16 %v3695, %v3693
        %v4380 = vpack.c.bf16 %v3699, %v3697
        %v4381 = vpack.c.bf16 %v3703, %v3701
        %v4382 = vpack.c.bf16 %v3707, %v3705
        %v4383 = vpack.c.bf16 %v3711, %v3709
        %v4384 = vpack.c.bf16 %v3715, %v3713
        %v4385 = vpack.c.bf16 %v3719, %v3717
        %v4386 = vpack.c.bf16 %v3723, %v3721
        %v4387 = vpack.c.bf16 %v3727, %v3725
        %v4388 = vpack.c.bf16 %v3731, %v3729
        %v4389 = vpack.c.bf16 %v3735, %v3733
        %v4390 = vpack.c.bf16 %v3739, %v3737
        %v4391 = vpack.c.bf16 %v3743, %v3741
        %v4392 = vpack.c.bf16 %v3747, %v3745
        %v4393 = vpack.c.bf16 %v3751, %v3749
        %v4394 = vpack.c.bf16 %v3755, %v3753
        %v4395 = vpack.c.bf16 %v3759, %v3757
        %v4396 = vpack.c.bf16 %v3763, %v3761
        %v4397 = vpack.c.bf16 %v3767, %v3765
        %v4398 = vpack.c.bf16 %v3771, %v3769
        %v4399 = vpack.c.bf16 %v3775, %v3773
        %v4400 = vpack.c.bf16 %v3779, %v3777
        %v4401 = vpack.c.bf16 %v3783, %v3781
        %v4402 = vpack.c.bf16 %v3787, %v3785
        %v4403 = vpack.c.bf16 %v3791, %v3789
        %s4404 = scalar_lea.vmem %s226, 32
        %v4405 = vld [vmem:[%s4404] sm:$0xf]
        %v4406 = vld [vmem:[%s4404 + $0x4] sm:$0xf]
        %v4407 = vld [vmem:[%s4404 + $0x8] sm:$0xf]
        %v4408 = vld [vmem:[%s4404 + $0xc] sm:$0xf]
        %v4409 = vld [vmem:[%s4404 + $0x10] sm:$0xf]
        %v4410 = vld [vmem:[%s4404 + $0x14] sm:$0xf]
        %v4411 = vld [vmem:[%s4404 + $0x18] sm:$0xf]
        %v4412 = vld [vmem:[%s4404 + $0x1c] sm:$0xf]
        %v4445 = vunpack.c.l.b16 %v4372
        %v4446 = vunpack.c.h.b16 %v4372
        %v4447 = vunpack.c.l.b16 %v4373
        %v4448 = vunpack.c.h.b16 %v4373
        %v4449 = vunpack.c.l.b16 %v4374
        %v4450 = vunpack.c.h.b16 %v4374
        %v4451 = vunpack.c.l.b16 %v4375
        %v4452 = vunpack.c.h.b16 %v4375
        %v4453 = vunpack.c.l.b16 %v4376
        %v4454 = vunpack.c.h.b16 %v4376
        %v4455 = vunpack.c.l.b16 %v4377
        %v4456 = vunpack.c.h.b16 %v4377
        %v4457 = vunpack.c.l.b16 %v4378
        %v4458 = vunpack.c.h.b16 %v4378
        %v4459 = vunpack.c.l.b16 %v4379
        %v4460 = vunpack.c.h.b16 %v4379
        %v4461 = vunpack.c.l.b16 %v4380
        %v4462 = vunpack.c.h.b16 %v4380
        %v4463 = vunpack.c.l.b16 %v4381
        %v4464 = vunpack.c.h.b16 %v4381
        %v4465 = vunpack.c.l.b16 %v4382
        %v4466 = vunpack.c.h.b16 %v4382
        %v4467 = vunpack.c.l.b16 %v4383
        %v4468 = vunpack.c.h.b16 %v4383
        %v4469 = vunpack.c.l.b16 %v4384
        %v4470 = vunpack.c.h.b16 %v4384
        %v4471 = vunpack.c.l.b16 %v4385
        %v4472 = vunpack.c.h.b16 %v4385
        %v4473 = vunpack.c.l.b16 %v4386
        %v4474 = vunpack.c.h.b16 %v4386
        %v4475 = vunpack.c.l.b16 %v4387
        %v4476 = vunpack.c.h.b16 %v4387
        %v4477 = vunpack.c.l.b16 %v4388
        %v4478 = vunpack.c.h.b16 %v4388
        %v4479 = vunpack.c.l.b16 %v4389
        %v4480 = vunpack.c.h.b16 %v4389
        %v4481 = vunpack.c.l.b16 %v4390
        %v4482 = vunpack.c.h.b16 %v4390
        %v4483 = vunpack.c.l.b16 %v4391
        %v4484 = vunpack.c.h.b16 %v4391
        %v4485 = vunpack.c.l.b16 %v4392
        %v4486 = vunpack.c.h.b16 %v4392
        %v4487 = vunpack.c.l.b16 %v4393
        %v4488 = vunpack.c.h.b16 %v4393
        %v4489 = vunpack.c.l.b16 %v4394
        %v4490 = vunpack.c.h.b16 %v4394
        %v4491 = vunpack.c.l.b16 %v4395
        %v4492 = vunpack.c.h.b16 %v4395
        %v4493 = vunpack.c.l.b16 %v4396
        %v4494 = vunpack.c.h.b16 %v4396
        %v4495 = vunpack.c.l.b16 %v4397
        %v4496 = vunpack.c.h.b16 %v4397
        %v4497 = vunpack.c.l.b16 %v4398
        %v4498 = vunpack.c.h.b16 %v4398
        %v4499 = vunpack.c.l.b16 %v4399
        %v4500 = vunpack.c.h.b16 %v4399
        %v4501 = vunpack.c.l.b16 %v4400
        %v4502 = vunpack.c.h.b16 %v4400
        %v4503 = vunpack.c.l.b16 %v4401
        %v4504 = vunpack.c.h.b16 %v4401
        %v4505 = vunpack.c.l.b16 %v4402
        %v4506 = vunpack.c.h.b16 %v4402
        %v4507 = vunpack.c.l.b16 %v4403
        %v4508 = vunpack.c.h.b16 %v4403
        %4509 = vset.pattern.permute.xlu0 0
        %4510 = vperm.xlu0 %4509, %v4445
        %v4511 = vpop.permute.xlu0 %4510
        %4512 = vset.pattern.permute.xlu0 0
        %4513 = vperm.xlu0 %4512, %v4446
        %v4514 = vpop.permute.xlu0 %4513
        %4515 = vset.pattern.permute.xlu0 0
        %4516 = vperm.xlu0 %4515, %v4447
        %v4517 = vpop.permute.xlu0 %4516
        %4518 = vset.pattern.permute.xlu0 0
        %4519 = vperm.xlu0 %4518, %v4448
        %v4520 = vpop.permute.xlu0 %4519
        %4521 = vset.pattern.permute.xlu0 0
        %4522 = vperm.xlu0 %4521, %v4449
        %v4523 = vpop.permute.xlu0 %4522
        %4524 = vset.pattern.permute.xlu0 0
        %4525 = vperm.xlu0 %4524, %v4450
        %v4526 = vpop.permute.xlu0 %4525
        %4527 = vset.pattern.permute.xlu0 0
        %4528 = vperm.xlu0 %4527, %v4451
        %v4529 = vpop.permute.xlu0 %4528
        %4530 = vset.pattern.permute.xlu0 0
        %4531 = vperm.xlu0 %4530, %v4452
        %v4532 = vpop.permute.xlu0 %4531
        %4533 = vset.pattern.permute.xlu0 0
        %4534 = vperm.xlu0 %4533, %v4453
        %v4535 = vpop.permute.xlu0 %4534
        %4536 = vset.pattern.permute.xlu0 0
        %4537 = vperm.xlu0 %4536, %v4454
        %v4538 = vpop.permute.xlu0 %4537
        %4539 = vset.pattern.permute.xlu0 0
        %4540 = vperm.xlu0 %4539, %v4455
        %v4541 = vpop.permute.xlu0 %4540
        %4542 = vset.pattern.permute.xlu0 0
        %4543 = vperm.xlu0 %4542, %v4456
        %v4544 = vpop.permute.xlu0 %4543
        %4545 = vset.pattern.permute.xlu0 0
        %4546 = vperm.xlu0 %4545, %v4457
        %v4547 = vpop.permute.xlu0 %4546
        %4548 = vset.pattern.permute.xlu0 0
        %4549 = vperm.xlu0 %4548, %v4458
        %v4550 = vpop.permute.xlu0 %4549
        %4551 = vset.pattern.permute.xlu0 0
        %4552 = vperm.xlu0 %4551, %v4459
        %v4553 = vpop.permute.xlu0 %4552
        %4554 = vset.pattern.permute.xlu0 0
        %4555 = vperm.xlu0 %4554, %v4460
        %v4556 = vpop.permute.xlu0 %4555
        %4557 = vset.pattern.permute.xlu0 0
        %4558 = vperm.xlu0 %4557, %v4461
        %v4559 = vpop.permute.xlu0 %4558
        %4560 = vset.pattern.permute.xlu0 0
        %4561 = vperm.xlu0 %4560, %v4462
        %v4562 = vpop.permute.xlu0 %4561
        %4563 = vset.pattern.permute.xlu0 0
        %4564 = vperm.xlu0 %4563, %v4463
        %v4565 = vpop.permute.xlu0 %4564
        %4566 = vset.pattern.permute.xlu0 0
        %4567 = vperm.xlu0 %4566, %v4464
        %v4568 = vpop.permute.xlu0 %4567
        %4569 = vset.pattern.permute.xlu0 0
        %4570 = vperm.xlu0 %4569, %v4465
        %v4571 = vpop.permute.xlu0 %4570
        %4572 = vset.pattern.permute.xlu0 0
        %4573 = vperm.xlu0 %4572, %v4466
        %v4574 = vpop.permute.xlu0 %4573
        %4575 = vset.pattern.permute.xlu0 0
        %4576 = vperm.xlu0 %4575, %v4467
        %v4577 = vpop.permute.xlu0 %4576
        %4578 = vset.pattern.permute.xlu0 0
        %4579 = vperm.xlu0 %4578, %v4468
        %v4580 = vpop.permute.xlu0 %4579
        %4581 = vset.pattern.permute.xlu0 0
        %4582 = vperm.xlu0 %4581, %v4469
        %v4583 = vpop.permute.xlu0 %4582
        %4584 = vset.pattern.permute.xlu0 0
        %4585 = vperm.xlu0 %4584, %v4470
        %v4586 = vpop.permute.xlu0 %4585
        %4587 = vset.pattern.permute.xlu0 0
        %4588 = vperm.xlu0 %4587, %v4471
        %v4589 = vpop.permute.xlu0 %4588
        %4590 = vset.pattern.permute.xlu0 0
        %4591 = vperm.xlu0 %4590, %v4472
        %v4592 = vpop.permute.xlu0 %4591
        %4593 = vset.pattern.permute.xlu0 0
        %4594 = vperm.xlu0 %4593, %v4473
        %v4595 = vpop.permute.xlu0 %4594
        %4596 = vset.pattern.permute.xlu0 0
        %4597 = vperm.xlu0 %4596, %v4474
        %v4598 = vpop.permute.xlu0 %4597
        %4599 = vset.pattern.permute.xlu0 0
        %4600 = vperm.xlu0 %4599, %v4475
        %v4601 = vpop.permute.xlu0 %4600
        %4602 = vset.pattern.permute.xlu0 0
        %4603 = vperm.xlu0 %4602, %v4476
        %v4604 = vpop.permute.xlu0 %4603
        %4605 = vset.pattern.permute.xlu0 0
        %4606 = vperm.xlu0 %4605, %v4477
        %v4607 = vpop.permute.xlu0 %4606
        %4608 = vset.pattern.permute.xlu0 0
        %4609 = vperm.xlu0 %4608, %v4478
        %v4610 = vpop.permute.xlu0 %4609
        %4611 = vset.pattern.permute.xlu0 0
        %4612 = vperm.xlu0 %4611, %v4479
        %v4613 = vpop.permute.xlu0 %4612
        %4614 = vset.pattern.permute.xlu0 0
        %4615 = vperm.xlu0 %4614, %v4480
        %v4616 = vpop.permute.xlu0 %4615
        %4617 = vset.pattern.permute.xlu0 0
        %4618 = vperm.xlu0 %4617, %v4481
        %v4619 = vpop.permute.xlu0 %4618
        %4620 = vset.pattern.permute.xlu0 0
        %4621 = vperm.xlu0 %4620, %v4482
        %v4622 = vpop.permute.xlu0 %4621
        %4623 = vset.pattern.permute.xlu0 0
        %4624 = vperm.xlu0 %4623, %v4483
        %v4625 = vpop.permute.xlu0 %4624
        %4626 = vset.pattern.permute.xlu0 0
        %4627 = vperm.xlu0 %4626, %v4484
        %v4628 = vpop.permute.xlu0 %4627
        %4629 = vset.pattern.permute.xlu0 0
        %4630 = vperm.xlu0 %4629, %v4485
        %v4631 = vpop.permute.xlu0 %4630
        %4632 = vset.pattern.permute.xlu0 0
        %4633 = vperm.xlu0 %4632, %v4486
        %v4634 = vpop.permute.xlu0 %4633
        %4635 = vset.pattern.permute.xlu0 0
        %4636 = vperm.xlu0 %4635, %v4487
        %v4637 = vpop.permute.xlu0 %4636
        %4638 = vset.pattern.permute.xlu0 0
        %4639 = vperm.xlu0 %4638, %v4488
        %v4640 = vpop.permute.xlu0 %4639
        %4641 = vset.pattern.permute.xlu0 0
        %4642 = vperm.xlu0 %4641, %v4489
        %v4643 = vpop.permute.xlu0 %4642
        %4644 = vset.pattern.permute.xlu0 0
        %4645 = vperm.xlu0 %4644, %v4490
        %v4646 = vpop.permute.xlu0 %4645
        %4647 = vset.pattern.permute.xlu0 0
        %4648 = vperm.xlu0 %4647, %v4491
        %v4649 = vpop.permute.xlu0 %4648
        %4650 = vset.pattern.permute.xlu0 0
        %4651 = vperm.xlu0 %4650, %v4492
        %v4652 = vpop.permute.xlu0 %4651
        %4653 = vset.pattern.permute.xlu0 0
        %4654 = vperm.xlu0 %4653, %v4493
        %v4655 = vpop.permute.xlu0 %4654
        %4656 = vset.pattern.permute.xlu0 0
        %4657 = vperm.xlu0 %4656, %v4494
        %v4658 = vpop.permute.xlu0 %4657
        %4659 = vset.pattern.permute.xlu0 0
        %4660 = vperm.xlu0 %4659, %v4495
        %v4661 = vpop.permute.xlu0 %4660
        %4662 = vset.pattern.permute.xlu0 0
        %4663 = vperm.xlu0 %4662, %v4496
        %v4664 = vpop.permute.xlu0 %4663
        %4665 = vset.pattern.permute.xlu0 0
        %4666 = vperm.xlu0 %4665, %v4497
        %v4667 = vpop.permute.xlu0 %4666
        %4668 = vset.pattern.permute.xlu0 0
        %4669 = vperm.xlu0 %4668, %v4498
        %v4670 = vpop.permute.xlu0 %4669
        %4671 = vset.pattern.permute.xlu0 0
        %4672 = vperm.xlu0 %4671, %v4499
        %v4673 = vpop.permute.xlu0 %4672
        %4674 = vset.pattern.permute.xlu0 0
        %4675 = vperm.xlu0 %4674, %v4500
        %v4676 = vpop.permute.xlu0 %4675
        %4677 = vset.pattern.permute.xlu0 0
        %4678 = vperm.xlu0 %4677, %v4501
        %v4679 = vpop.permute.xlu0 %4678
        %4680 = vset.pattern.permute.xlu0 0
        %4681 = vperm.xlu0 %4680, %v4502
        %v4682 = vpop.permute.xlu0 %4681
        %4683 = vset.pattern.permute.xlu0 0
        %4684 = vperm.xlu0 %4683, %v4503
        %v4685 = vpop.permute.xlu0 %4684
        %4686 = vset.pattern.permute.xlu0 0
        %4687 = vperm.xlu0 %4686, %v4504
        %v4688 = vpop.permute.xlu0 %4687
        %4689 = vset.pattern.permute.xlu0 0
        %4690 = vperm.xlu0 %4689, %v4505
        %v4691 = vpop.permute.xlu0 %4690
        %4692 = vset.pattern.permute.xlu0 0
        %4693 = vperm.xlu0 %4692, %v4506
        %v4694 = vpop.permute.xlu0 %4693
        %4695 = vset.pattern.permute.xlu0 0
        %4696 = vperm.xlu0 %4695, %v4507
        %v4697 = vpop.permute.xlu0 %4696
        %4698 = vset.pattern.permute.xlu0 0
        %4699 = vperm.xlu0 %4698, %v4508
        %v4700 = vpop.permute.xlu0 %4699
        %v4701 = vlaneseq
        %v4702 = vshrl.u32 %v4701, 7
        %v4703 = vsub.s32 %v966, %v4702
        %v4704 = vrot.slane %v4511, %v4703
        %v4705 = vlaneseq
        %v4706 = vshrl.u32 %v4705, 7
        %v4707 = vsub.s32 %v971, %v4706
        %v4708 = vrot.slane %v4514, %v4707
        %v4709 = vsel %vm976, %v4708, %v4704
        %v4710 = vlaneseq
        %v4711 = vshrl.u32 %v4710, 7
        %v4712 = vsub.s32 %v978, %v4711
        %v4713 = vrot.slane %v4517, %v4712
        %v4714 = vsel %vm983, %v4713, %v4709
        %v4715 = vlaneseq
        %v4716 = vshrl.u32 %v4715, 7
        %v4717 = vsub.s32 %v985, %v4716
        %v4718 = vrot.slane %v4520, %v4717
        %v4719 = vsel %vm990, %v4718, %v4714
        %v4720 = vlaneseq
        %v4721 = vshrl.u32 %v4720, 7
        %v4722 = vsub.s32 %v992, %v4721
        %v4723 = vrot.slane %v4523, %v4722
        %v4724 = vsel %vm997, %v4723, %v4719
        %v4725 = vlaneseq
        %v4726 = vshrl.u32 %v4725, 7
        %v4727 = vsub.s32 %v999, %v4726
        %v4728 = vrot.slane %v4526, %v4727
        %v4729 = vsel %vm1004, %v4728, %v4724
        %v4730 = vlaneseq
        %v4731 = vshrl.u32 %v4730, 7
        %v4732 = vsub.s32 %v1006, %v4731
        %v4733 = vrot.slane %v4529, %v4732
        %v4734 = vsel %vm1011, %v4733, %v4729
        %v4735 = vlaneseq
        %v4736 = vshrl.u32 %v4735, 7
        %v4737 = vsub.s32 %v1013, %v4736
        %v4738 = vrot.slane %v4532, %v4737
        %v4739 = vsel %vm1018, %v4738, %v4734
        %v4740 = vlaneseq
        %v4741 = vshrl.u32 %v4740, 7
        %v4742 = vsub.s32 %v966, %v4741
        %v4743 = vrot.slane %v4535, %v4742
        %v4744 = vlaneseq
        %v4745 = vshrl.u32 %v4744, 7
        %v4746 = vsub.s32 %v971, %v4745
        %v4747 = vrot.slane %v4538, %v4746
        %v4748 = vsel %vm976, %v4747, %v4743
        %v4749 = vlaneseq
        %v4750 = vshrl.u32 %v4749, 7
        %v4751 = vsub.s32 %v978, %v4750
        %v4752 = vrot.slane %v4541, %v4751
        %v4753 = vsel %vm983, %v4752, %v4748
        %v4754 = vlaneseq
        %v4755 = vshrl.u32 %v4754, 7
        %v4756 = vsub.s32 %v985, %v4755
        %v4757 = vrot.slane %v4544, %v4756
        %v4758 = vsel %vm990, %v4757, %v4753
        %v4759 = vlaneseq
        %v4760 = vshrl.u32 %v4759, 7
        %v4761 = vsub.s32 %v992, %v4760
        %v4762 = vrot.slane %v4547, %v4761
        %v4763 = vsel %vm997, %v4762, %v4758
        %v4764 = vlaneseq
        %v4765 = vshrl.u32 %v4764, 7
        %v4766 = vsub.s32 %v999, %v4765
        %v4767 = vrot.slane %v4550, %v4766
        %v4768 = vsel %vm1004, %v4767, %v4763
        %v4769 = vlaneseq
        %v4770 = vshrl.u32 %v4769, 7
        %v4771 = vsub.s32 %v1006, %v4770
        %v4772 = vrot.slane %v4553, %v4771
        %v4773 = vsel %vm1011, %v4772, %v4768
        %v4774 = vlaneseq
        %v4775 = vshrl.u32 %v4774, 7
        %v4776 = vsub.s32 %v1013, %v4775
        %v4777 = vrot.slane %v4556, %v4776
        %v4778 = vsel %vm1018, %v4777, %v4773
        %v4779 = vlaneseq
        %v4780 = vshrl.u32 %v4779, 7
        %v4781 = vsub.s32 %v966, %v4780
        %v4782 = vrot.slane %v4559, %v4781
        %v4783 = vlaneseq
        %v4784 = vshrl.u32 %v4783, 7
        %v4785 = vsub.s32 %v971, %v4784
        %v4786 = vrot.slane %v4562, %v4785
        %v4787 = vsel %vm976, %v4786, %v4782
        %v4788 = vlaneseq
        %v4789 = vshrl.u32 %v4788, 7
        %v4790 = vsub.s32 %v978, %v4789
        %v4791 = vrot.slane %v4565, %v4790
        %v4792 = vsel %vm983, %v4791, %v4787
        %v4793 = vlaneseq
        %v4794 = vshrl.u32 %v4793, 7
        %v4795 = vsub.s32 %v985, %v4794
        %v4796 = vrot.slane %v4568, %v4795
        %v4797 = vsel %vm990, %v4796, %v4792
        %v4798 = vlaneseq
        %v4799 = vshrl.u32 %v4798, 7
        %v4800 = vsub.s32 %v992, %v4799
        %v4801 = vrot.slane %v4571, %v4800
        %v4802 = vsel %vm997, %v4801, %v4797
        %v4803 = vlaneseq
        %v4804 = vshrl.u32 %v4803, 7
        %v4805 = vsub.s32 %v999, %v4804
        %v4806 = vrot.slane %v4574, %v4805
        %v4807 = vsel %vm1004, %v4806, %v4802
        %v4808 = vlaneseq
        %v4809 = vshrl.u32 %v4808, 7
        %v4810 = vsub.s32 %v1006, %v4809
        %v4811 = vrot.slane %v4577, %v4810
        %v4812 = vsel %vm1011, %v4811, %v4807
        %v4813 = vlaneseq
        %v4814 = vshrl.u32 %v4813, 7
        %v4815 = vsub.s32 %v1013, %v4814
        %v4816 = vrot.slane %v4580, %v4815
        %v4817 = vsel %vm1018, %v4816, %v4812
        %v4818 = vlaneseq
        %v4819 = vshrl.u32 %v4818, 7
        %v4820 = vsub.s32 %v966, %v4819
        %v4821 = vrot.slane %v4583, %v4820
        %v4822 = vlaneseq
        %v4823 = vshrl.u32 %v4822, 7
        %v4824 = vsub.s32 %v971, %v4823
        %v4825 = vrot.slane %v4586, %v4824
        %v4826 = vsel %vm976, %v4825, %v4821
        %v4827 = vlaneseq
        %v4828 = vshrl.u32 %v4827, 7
        %v4829 = vsub.s32 %v978, %v4828
        %v4830 = vrot.slane %v4589, %v4829
        %v4831 = vsel %vm983, %v4830, %v4826
        %v4832 = vlaneseq
        %v4833 = vshrl.u32 %v4832, 7
        %v4834 = vsub.s32 %v985, %v4833
        %v4835 = vrot.slane %v4592, %v4834
        %v4836 = vsel %vm990, %v4835, %v4831
        %v4837 = vlaneseq
        %v4838 = vshrl.u32 %v4837, 7
        %v4839 = vsub.s32 %v992, %v4838
        %v4840 = vrot.slane %v4595, %v4839
        %v4841 = vsel %vm997, %v4840, %v4836
        %v4842 = vlaneseq
        %v4843 = vshrl.u32 %v4842, 7
        %v4844 = vsub.s32 %v999, %v4843
        %v4845 = vrot.slane %v4598, %v4844
        %v4846 = vsel %vm1004, %v4845, %v4841
        %v4847 = vlaneseq
        %v4848 = vshrl.u32 %v4847, 7
        %v4849 = vsub.s32 %v1006, %v4848
        %v4850 = vrot.slane %v4601, %v4849
        %v4851 = vsel %vm1011, %v4850, %v4846
        %v4852 = vlaneseq
        %v4853 = vshrl.u32 %v4852, 7
        %v4854 = vsub.s32 %v1013, %v4853
        %v4855 = vrot.slane %v4604, %v4854
        %v4856 = vsel %vm1018, %v4855, %v4851
        %v4857 = vlaneseq
        %v4858 = vshrl.u32 %v4857, 7
        %v4859 = vsub.s32 %v966, %v4858
        %v4860 = vrot.slane %v4607, %v4859
        %v4861 = vlaneseq
        %v4862 = vshrl.u32 %v4861, 7
        %v4863 = vsub.s32 %v971, %v4862
        %v4864 = vrot.slane %v4610, %v4863
        %v4865 = vsel %vm976, %v4864, %v4860
        %v4866 = vlaneseq
        %v4867 = vshrl.u32 %v4866, 7
        %v4868 = vsub.s32 %v978, %v4867
        %v4869 = vrot.slane %v4613, %v4868
        %v4870 = vsel %vm983, %v4869, %v4865
        %v4871 = vlaneseq
        %v4872 = vshrl.u32 %v4871, 7
        %v4873 = vsub.s32 %v985, %v4872
        %v4874 = vrot.slane %v4616, %v4873
        %v4875 = vsel %vm990, %v4874, %v4870
        %v4876 = vlaneseq
        %v4877 = vshrl.u32 %v4876, 7
        %v4878 = vsub.s32 %v992, %v4877
        %v4879 = vrot.slane %v4619, %v4878
        %v4880 = vsel %vm997, %v4879, %v4875
        %v4881 = vlaneseq
        %v4882 = vshrl.u32 %v4881, 7
        %v4883 = vsub.s32 %v999, %v4882
        %v4884 = vrot.slane %v4622, %v4883
        %v4885 = vsel %vm1004, %v4884, %v4880
        %v4886 = vlaneseq
        %v4887 = vshrl.u32 %v4886, 7
        %v4888 = vsub.s32 %v1006, %v4887
        %v4889 = vrot.slane %v4625, %v4888
        %v4890 = vsel %vm1011, %v4889, %v4885
        %v4891 = vlaneseq
        %v4892 = vshrl.u32 %v4891, 7
        %v4893 = vsub.s32 %v1013, %v4892
        %v4894 = vrot.slane %v4628, %v4893
        %v4895 = vsel %vm1018, %v4894, %v4890
        %v4896 = vlaneseq
        %v4897 = vshrl.u32 %v4896, 7
        %v4898 = vsub.s32 %v966, %v4897
        %v4899 = vrot.slane %v4631, %v4898
        %v4900 = vlaneseq
        %v4901 = vshrl.u32 %v4900, 7
        %v4902 = vsub.s32 %v971, %v4901
        %v4903 = vrot.slane %v4634, %v4902
        %v4904 = vsel %vm976, %v4903, %v4899
        %v4905 = vlaneseq
        %v4906 = vshrl.u32 %v4905, 7
        %v4907 = vsub.s32 %v978, %v4906
        %v4908 = vrot.slane %v4637, %v4907
        %v4909 = vsel %vm983, %v4908, %v4904
        %v4910 = vlaneseq
        %v4911 = vshrl.u32 %v4910, 7
        %v4912 = vsub.s32 %v985, %v4911
        %v4913 = vrot.slane %v4640, %v4912
        %v4914 = vsel %vm990, %v4913, %v4909
        %v4915 = vlaneseq
        %v4916 = vshrl.u32 %v4915, 7
        %v4917 = vsub.s32 %v992, %v4916
        %v4918 = vrot.slane %v4643, %v4917
        %v4919 = vsel %vm997, %v4918, %v4914
        %v4920 = vlaneseq
        %v4921 = vshrl.u32 %v4920, 7
        %v4922 = vsub.s32 %v999, %v4921
        %v4923 = vrot.slane %v4646, %v4922
        %v4924 = vsel %vm1004, %v4923, %v4919
        %v4925 = vlaneseq
        %v4926 = vshrl.u32 %v4925, 7
        %v4927 = vsub.s32 %v1006, %v4926
        %v4928 = vrot.slane %v4649, %v4927
        %v4929 = vsel %vm1011, %v4928, %v4924
        %v4930 = vlaneseq
        %v4931 = vshrl.u32 %v4930, 7
        %v4932 = vsub.s32 %v1013, %v4931
        %v4933 = vrot.slane %v4652, %v4932
        %v4934 = vsel %vm1018, %v4933, %v4929
        %v4935 = vlaneseq
        %v4936 = vshrl.u32 %v4935, 7
        %v4937 = vsub.s32 %v966, %v4936
        %v4938 = vrot.slane %v4655, %v4937
        %v4939 = vlaneseq
        %v4940 = vshrl.u32 %v4939, 7
        %v4941 = vsub.s32 %v971, %v4940
        %v4942 = vrot.slane %v4658, %v4941
        %v4943 = vsel %vm976, %v4942, %v4938
        %v4944 = vlaneseq
        %v4945 = vshrl.u32 %v4944, 7
        %v4946 = vsub.s32 %v978, %v4945
        %v4947 = vrot.slane %v4661, %v4946
        %v4948 = vsel %vm983, %v4947, %v4943
        %v4949 = vlaneseq
        %v4950 = vshrl.u32 %v4949, 7
        %v4951 = vsub.s32 %v985, %v4950
        %v4952 = vrot.slane %v4664, %v4951
        %v4953 = vsel %vm990, %v4952, %v4948
        %v4954 = vlaneseq
        %v4955 = vshrl.u32 %v4954, 7
        %v4956 = vsub.s32 %v992, %v4955
        %v4957 = vrot.slane %v4667, %v4956
        %v4958 = vsel %vm997, %v4957, %v4953
        %v4959 = vlaneseq
        %v4960 = vshrl.u32 %v4959, 7
        %v4961 = vsub.s32 %v999, %v4960
        %v4962 = vrot.slane %v4670, %v4961
        %v4963 = vsel %vm1004, %v4962, %v4958
        %v4964 = vlaneseq
        %v4965 = vshrl.u32 %v4964, 7
        %v4966 = vsub.s32 %v1006, %v4965
        %v4967 = vrot.slane %v4673, %v4966
        %v4968 = vsel %vm1011, %v4967, %v4963
        %v4969 = vlaneseq
        %v4970 = vshrl.u32 %v4969, 7
        %v4971 = vsub.s32 %v1013, %v4970
        %v4972 = vrot.slane %v4676, %v4971
        %v4973 = vsel %vm1018, %v4972, %v4968
        %v4974 = vlaneseq
        %v4975 = vshrl.u32 %v4974, 7
        %v4976 = vsub.s32 %v966, %v4975
        %v4977 = vrot.slane %v4679, %v4976
        %v4978 = vlaneseq
        %v4979 = vshrl.u32 %v4978, 7
        %v4980 = vsub.s32 %v971, %v4979
        %v4981 = vrot.slane %v4682, %v4980
        %v4982 = vsel %vm976, %v4981, %v4977
        %v4983 = vlaneseq
        %v4984 = vshrl.u32 %v4983, 7
        %v4985 = vsub.s32 %v978, %v4984
        %v4986 = vrot.slane %v4685, %v4985
        %v4987 = vsel %vm983, %v4986, %v4982
        %v4988 = vlaneseq
        %v4989 = vshrl.u32 %v4988, 7
        %v4990 = vsub.s32 %v985, %v4989
        %v4991 = vrot.slane %v4688, %v4990
        %v4992 = vsel %vm990, %v4991, %v4987
        %v4993 = vlaneseq
        %v4994 = vshrl.u32 %v4993, 7
        %v4995 = vsub.s32 %v992, %v4994
        %v4996 = vrot.slane %v4691, %v4995
        %v4997 = vsel %vm997, %v4996, %v4992
        %v4998 = vlaneseq
        %v4999 = vshrl.u32 %v4998, 7
        %v5000 = vsub.s32 %v999, %v4999
        %v5001 = vrot.slane %v4694, %v5000
        %v5002 = vsel %vm1004, %v5001, %v4997
        %v5003 = vlaneseq
        %v5004 = vshrl.u32 %v5003, 7
        %v5005 = vsub.s32 %v1006, %v5004
        %v5006 = vrot.slane %v4697, %v5005
        %v5007 = vsel %vm1011, %v5006, %v5002
        %v5008 = vlaneseq
        %v5009 = vshrl.u32 %v5008, 7
        %v5010 = vsub.s32 %v1013, %v5009
        %v5011 = vrot.slane %v4700, %v5010
        %v5012 = vsel %vm1018, %v5011, %v5007
        %v5013 = vsel %vm1293, %v4778, %v4739
        %v5014 = vsel %vm1295, %v4817, %v5013
        %v5015 = vsel %vm1297, %v4856, %v5014
        %v5016 = vsel %vm1299, %v4895, %v5015
        %v5017 = vsel %vm1301, %v4934, %v5016
        %v5018 = vsel %vm1303, %v4973, %v5017
        %v5019 = vsel %vm1305, %v5012, %v5018
        %v5020 = vpack.c.b16 %v5019, %v5019
        %v5029 = vunpack.c.l.b16 %v4405
        %v5030 = vunpack.c.l.b16 %v4406
        %v5031 = vunpack.c.l.b16 %v4407
        %v5032 = vunpack.c.l.b16 %v4408
        %v5033 = vunpack.c.l.b16 %v4409
        %v5034 = vunpack.c.l.b16 %v4410
        %v5035 = vunpack.c.l.b16 %v4411
        %v5036 = vunpack.c.l.b16 %v4412
        %v5037 = vpack.c.b16 %v5030, %v5029
        %v5038 = vpack.c.b16 %v5032, %v5031
        %v5039 = vpack.c.b16 %v5034, %v5033
        %v5040 = vpack.c.b16 %v5036, %v5035
        %v5046 = vsel %vm1308, %v5020, 0
        %5048 = vmatprep.subr.bf16.mxu0 0
        %5049 = vmatpush1.bf16.msra.mxu0 %v5037
        %5050 = vmatprep.subr.bf16.mxu0 0
        %5051 = vmatpush1.bf16.msra.mxu0 %v5038
        %5052 = vmatprep.subr.bf16.mxu0 0
        %5053 = vmatpush1.bf16.msra.mxu0 %v5039
        %5054 = vmatprep.subr.bf16.mxu0 0
        %5055 = vmatpush1.bf16.msra.mxu0 %v5040
        %5056 = vmatprep.subr.bf16.mxu0 0
        %5057 = vmatpush1.bf16.msra.mxu0 0
        %5058 = vmatprep.subr.bf16.mxu0 0
        %5059 = vmatpush1.bf16.msra.mxu0 0
        %5060 = vmatprep.subr.bf16.mxu0 0
        %5061 = vmatpush1.bf16.msra.mxu0 0
        %5062 = vmatprep.subr.bf16.mxu0 0
        %5063 = vmatpush1.bf16.msra.mxu0 0
        %5064 = vmatprep.subr.bf16.mxu0 0
        %5065 = vmatpush1.bf16.msra.mxu0 0
        %5066 = vmatprep.subr.bf16.mxu0 0
        %5067 = vmatpush1.bf16.msra.mxu0 0
        %5068 = vmatprep.subr.bf16.mxu0 0
        %5069 = vmatpush1.bf16.msra.mxu0 0
        %5070 = vmatprep.subr.bf16.mxu0 0
        %5071 = vmatpush1.bf16.msra.mxu0 0
        %5072 = vmatprep.subr.bf16.mxu0 0
        %5073 = vmatpush1.bf16.msra.mxu0 0
        %5074 = vmatprep.subr.bf16.mxu0 0
        %5075 = vmatpush1.bf16.msra.mxu0 0
        %5076 = vmatprep.subr.bf16.mxu0 0
        %5077 = vmatpush1.bf16.msra.mxu0 0
        %5078 = vmatprep.subr.bf16.mxu0 0
        %5079 = vmatpush1.bf16.msra.mxu0 0
        %5080 = vmatprep.mubr.bf16.mxu0 0
        %5081 = vmatmul.mubr.bf16.gmra.mrb[0].mxu0 %v5046
        %v5082 = vpop.f32.mrb[0].mxu0
        %v5083 = vadd.f32 0.0, %v5082
        %v5084 = vpop.f32.mrb[0].mxu0
        %v5085 = vpop.f32.mrb[0].mxu0
        %v5086 = vpop.f32.mrb[0].mxu0
        %5087 = vdwg.mxu0
        %v5088 = vmul.f32 %v5083, %v4371
        %s5089 = scalar_lea.vmem %s220, 8 [#allocation3]
        %5090 = vst.msk [vmem:[%s5089] sm:$0xff] %vm2841, %v5088
        %s5091 = sand.u32 %s134, 1
        %s5092 = scalar_lea.sflag [#allocation4], %s5091
        %s5093 = sand.u32 %s134, 1
        %s5094 = smul.addr %s5093, 16
        %s5095 = scalar_lea.vmem [#allocation3], %s5094
        // Predicated region
        $region41: #{tpu_custom_call.1} parent=35 // pred_check
          %p5096 = pneg %p144
        $region42: #{tpu_custom_call.1} parent=35 // pred_check_branch
          %5098 = sbr.rel (%p5096) target = $region44
        $region43: #{tpu_custom_call.1} parent=35 // pred_region
          %s5099 = smul.u32 2, %s22
          %s5101 = ssub.s32 256, 256
          %5102 = vsyncadd %s5092, %s5101
          %s5103 = smul.addr %s5099, 2
          %s5104 = sadd.s32 %s23, %s5103
          %s5105 = smul.addr %s5104, 128
          %s5106 = scalar_lea.hbm %s4, %s5105
          %s5107 = sshll.u32 %s5095, 4
          %s5108 = int_to_ptr.vmem [resolvable:$true] %s5107
          %5113 = dma.vmem_to_hbm [thread:$0]  %s5108, 256, %s5106, %s5092, 128, 256, 8
        $region44: #{tpu_custom_call.1} parent=35 // pred_fallthru
          _
      $region36: #{tpu_custom_call.1} parent=5 // pred_fallthru
        _
      %p5114 = scmp.le.s32.totalorder 2, %s13
      // Predicated region
      $region45: #{tpu_custom_call.1} parent=5 // pred_check
        %p5115 = pneg %p5114
      $region46: #{tpu_custom_call.1} parent=5 // pred_check_branch
        %5117 = sbr.rel (%p5115) target = $region48
      $region47: #{tpu_custom_call.1} parent=5 // pred_region
        %s5118 = ssub.s32 %s13, 2
        // Predicated region
        $region49: #{tpu_custom_call.1} parent=47 // pred_check
          %p5119 = pneg %p150
        $region50: #{tpu_custom_call.1} parent=47 // pred_check_branch
          %5121 = sbr.rel (%p5119) target = $region52
        $region51: #{tpu_custom_call.1} parent=47 // pred_region
          %s5122 = sand.u32 %s135, 1
          %s5123 = scalar_lea.sflag [#allocation4], %s5122
          %s5124 = sand.u32 %s135, 1
          %s5125 = smul.addr %s5124, 16
          %s5126 = scalar_lea.vmem [#allocation3], %s5125
          %5127 = dma.done %s5123, 256
        $region52: #{tpu_custom_call.1} parent=47 // pred_fallthru
          _
      $region48: #{tpu_custom_call.1} parent=5 // pred_fallthru
        _
    $region6: #{tpu_custom_call.1} parent=1 // loop_footer
      %s17 = sadd.s32 1, %s13
    $region7: #{tpu_custom_call.1} parent=1 // loop_footer_branch
      %12 = sbr.rel target = $region3
    $region8: #{tpu_custom_call.1} parent=1 // loop_exit
      _
    %5128 = vsyncpa [#allocation4], 1
    %s5129 = scalar_lea.sflag [#allocation4], 1
    %5130 = vsyncpa %s5129, 1

// kernel: tpu_custom_call.1
$region0: #{tpu_custom_call.1}
  #allocation0 [shape = 'u32[]', space=smem, size = 0x4, offset = 0x4, fixed_abs, tag = 'smem constant byte address 0x4 - core index']
  #allocation1 [shape = 'u32[144,128]{1,0:T(1,128)}', space=vmem, size = 0x12000, scoped, tag = 'internal scratch']
  #allocation2 [shape = 'f32[2,64,128]{2,1,0:T(8,128)}', space=vmem, size = 0x10000, scoped, tag = 'scratch operand']
  %s0 = inlined_call_operand.vmem [shape: bf16[4,64,16], index: 0, kind: input, shape index: {}]
  %s1 = inlined_call_operand.vmem [shape: bf16[16,128], index: 1, kind: input, shape index: {}]
  %s2 = inlined_call_operand.vmem [shape: f32[16,128], index: 2, kind: input, shape index: {}]
  %s3 = inlined_call_operand.vmem [shape: f32[1,128], index: 3, kind: input, shape index: {}]
  %s4 = inlined_call_operand.hbm [shape: f32[4,16,16], index: 4, kind: output, shape index: {}]
  %s5 = sld [smem:[#allocation0]]
  $region53: #{tpu_custom_call.1} parent=0
    _
  %s7 = ssub.s32 1, %s5
  %s8 = scalar_select 0, %s7, %s5
  $region1: #{tpu_custom_call.1} parent=0
    #allocation3 [shape = 'u8[16384]{0}', space=vmem, size = 0x4000, scoped, tag = 'output window, operand 0']
    #allocation4 [shape = 's32[2]{0}', space=sflag, size = 0x8, scoped, tag = 'scoped memory for tpu_custom_call.1']
    %9 = vsyncpa [#allocation4], 0
    %s10 = scalar_lea.sflag [#allocation4], 1
    %11 = vsyncpa %s10, 0
    loop: start=0, step=1, limit=6
    $region2: #{tpu_custom_call.1} parent=1 // loop_pre_header
      _
    $region3: #{tpu_custom_call.1} parent=1 // loop_header
      %s13 = sphi 0, %s17
      %p14 = scmp.ge.s32.totalorder %s13, 6
      %s20 = sphi 0, %s32
      %s21 = sphi 0, %s28
      %s22 = sphi 0, %s20
      %s23 = sphi 0, %s21
      %s24 = sphi 0, %s22
      %s25 = sphi 0, %s23
      %s35 = sphi 0, %s37
      %s38 = sphi 0, %s35
      %s39 = sphi 0, %s38
      %s55 = sphi 0, %s39
      %s59 = sphi 0, %s59
      %s61 = sphi 0, %s59
      %s62 = sphi 0, %s61
      %s76 = sphi 0, %s62
      %s82 = sphi 0, %s84
      %s85 = sphi 0, %s82
      %s86 = sphi 0, %s85
      %s102 = sphi 0, %s86
      %s106 = sphi 0, %s106
      %s108 = sphi 0, %s106
      %s109 = sphi 0, %s108
      %s123 = sphi 0, %s109
      %s131 = sphi 0, %s133
      %s134 = sphi 0, %s131
      %s135 = sphi 0, %s134
      %s151 = sphi 0, %s135
    $region4: #{tpu_custom_call.1} parent=1 // loop_header_branch
      %16 = sbr.rel (%p14) target = $region8
    $region5: #{tpu_custom_call.1} parent=1 // loop_body
      %s18 = ssub.s32 %s13, 1
      %s19 = ssub.s32 %s13, 2
      %s26 = sadd.s32 1, %s21
      %p27 = scmp.ge.s32.totalorder %s26, 2
      %s28 = scalar_select %p27, 0, %s26
      %s29 = sadd.s32 1, %s20
      %s30 = scalar_select %p27, %s29, %s20
      %p31 = scmp.ge.s32.totalorder %s30, 2
      %s32 = scalar_select %p31, 0, %s30
      %s33 = ssub.s32 %s20, %s32
      %p34 = scmp.eq.s32.totalorder %s33, 0
      %s36 = sadd.s32 %s35, 1
      %s37 = scalar_select %p34, %s35, %s36
      %p40 = pneg %p34
      %p41 = scmp.eq.s32.totalorder %s13, 3
      %p42 = por %p40, %p41
      %p43 = scmp.ne.s32.totalorder %s35, %s38
      %p44 = scmp.eq.s32.totalorder %s13, 0
      %p45 = por %p43, %p44
      %p46 = scmp.ne.s32.totalorder %s35, %s38
      %p47 = scmp.eq.s32.totalorder %s18, 3
      %p48 = por %p46, %p47
      %p49 = scmp.ne.s32.totalorder %s38, %s39
      %p50 = scmp.eq.s32.totalorder %s18, 0
      %p51 = por %p49, %p50
      %p52 = scmp.ne.s32.totalorder %s38, %s39
      %p53 = scmp.eq.s32.totalorder %s19, 3
      %p54 = por %p52, %p53
      %p56 = scmp.ne.s32.totalorder %s39, %s55
      %p57 = scmp.eq.s32.totalorder %s19, 0
      %p58 = por %p56, %p57
      %s60 = sadd.s32 %s59, 1
      %p63 = scmp.eq.s32.totalorder %s13, 3
      %p64 = scmp.ne.s32.totalorder %s59, %s61
      %p65 = scmp.eq.s32.totalorder %s13, 0
      %p66 = por %p64, %p65
      %p67 = scmp.ne.s32.totalorder %s59, %s61
      %p68 = scmp.eq.s32.totalorder %s18, 3
      %p69 = por %p67, %p68
      %p70 = scmp.ne.s32.totalorder %s61, %s62
      %p71 = scmp.eq.s32.totalorder %s18, 0
      %p72 = por %p70, %p71
      %p73 = scmp.ne.s32.totalorder %s61, %s62
      %p74 = scmp.eq.s32.totalorder %s19, 3
      %p75 = por %p73, %p74
      %p77 = scmp.ne.s32.totalorder %s62, %s76
      %p78 = scmp.eq.s32.totalorder %s19, 0
      %p79 = por %p77, %p78
      %s80 = ssub.s32 %s21, %s28
      %p81 = scmp.eq.s32.totalorder %s80, 0
      %s83 = sadd.s32 %s82, 1
      %s84 = scalar_select %p81, %s82, %s83
      %p87 = pneg %p81
      %p88 = scmp.eq.s32.totalorder %s13, 3
      %p89 = por %p87, %p88
      %p90 = scmp.ne.s32.totalorder %s82, %s85
      %p91 = scmp.eq.s32.totalorder %s13, 0
      %p92 = por %p90, %p91
      %p93 = scmp.ne.s32.totalorder %s82, %s85
      %p94 = scmp.eq.s32.totalorder %s18, 3
      %p95 = por %p93, %p94
      %p96 = scmp.ne.s32.totalorder %s85, %s86
      %p97 = scmp.eq.s32.totalorder %s18, 0
      %p98 = por %p96, %p97
      %p99 = scmp.ne.s32.totalorder %s85, %s86
      %p100 = scmp.eq.s32.totalorder %s19, 3
      %p101 = por %p99, %p100
      %p103 = scmp.ne.s32.totalorder %s86, %s102
      %p104 = scmp.eq.s32.totalorder %s19, 0
      %p105 = por %p103, %p104
      %s107 = sadd.s32 %s106, 1
      %p110 = scmp.eq.s32.totalorder %s13, 3
      %p111 = scmp.ne.s32.totalorder %s106, %s108
      %p112 = scmp.eq.s32.totalorder %s13, 0
      %p113 = por %p111, %p112
      %p114 = scmp.ne.s32.totalorder %s106, %s108
      %p115 = scmp.eq.s32.totalorder %s18, 3
      %p116 = por %p114, %p115
      %p117 = scmp.ne.s32.totalorder %s108, %s109
      %p118 = scmp.eq.s32.totalorder %s18, 0
      %p119 = por %p117, %p118
      %p120 = scmp.ne.s32.totalorder %s108, %s109
      %p121 = scmp.eq.s32.totalorder %s19, 3
      %p122 = por %p120, %p121
      %p124 = scmp.ne.s32.totalorder %s109, %s123
      %p125 = scmp.eq.s32.totalorder %s19, 0
      %p126 = por %p124, %p125
      %s127 = ssub.s32 %s20, %s32
      %s128 = ssub.s32 %s21, %s28
      %s129 = sor.u32 %s127, %s128
      %p130 = scmp.eq.s32.totalorder %s129, 0
      %s132 = sadd.s32 %s131, 1
      %s133 = scalar_select %p130, %s131, %s132
      %p136 = pneg %p130
      %p137 = scmp.eq.s32.totalorder %s13, 3
      %p138 = por %p136, %p137
      %p139 = scmp.ne.s32.totalorder %s131, %s134
      %p140 = scmp.eq.s32.totalorder %s13, 0
      %p141 = por %p139, %p140
      %p142 = scmp.ne.s32.totalorder %s131, %s134
      %p143 = scmp.eq.s32.totalorder %s18, 3
      %p144 = por %p142, %p143
      %p145 = scmp.ne.s32.totalorder %s134, %s135
      %p146 = scmp.eq.s32.totalorder %s18, 0
      %p147 = por %p145, %p146
      %p148 = scmp.ne.s32.totalorder %s134, %s135
      %p149 = scmp.eq.s32.totalorder %s19, 3
      %p150 = por %p148, %p149
      %p152 = scmp.ne.s32.totalorder %s135, %s151
      %p153 = scmp.eq.s32.totalorder %s19, 0
      %p154 = por %p152, %p153
      %p155 = scmp.le.s32.totalorder 1, %s13
      %p156 = scmp.lt.s32.totalorder %s13, 5
      %p157 = pnand %p155, %p156
      %p158 = pneg %p157
      // Predicated region
      $region9: #{tpu_custom_call.1} parent=5 // pred_check
        _
      $region10: #{tpu_custom_call.1} parent=5 // pred_check_branch
        %160 = sbr.rel (%p157) target = $region12
      $region11: #{tpu_custom_call.1} parent=5 // pred_region
        %s161 = ssub.s32 %s13, 1
        // Predicated region
        $region13: #{tpu_custom_call.1} parent=11 // pred_check
          %p162 = pneg %p72
        $region14: #{tpu_custom_call.1} parent=11 // pred_check_branch
          %164 = sbr.rel (%p162) target = $region16
        $region15: #{tpu_custom_call.1} parent=11 // pred_region
          _
        $region16: #{tpu_custom_call.1} parent=11 // pred_fallthru
          _
        // Predicated region
        $region17: #{tpu_custom_call.1} parent=11 // pred_check
          %p165 = pneg %p119
        $region18: #{tpu_custom_call.1} parent=11 // pred_check_branch
          %167 = sbr.rel (%p165) target = $region20
        $region19: #{tpu_custom_call.1} parent=11 // pred_region
          _
        $region20: #{tpu_custom_call.1} parent=11 // pred_fallthru
          _
      $region12: #{tpu_custom_call.1} parent=5 // pred_fallthru
        _
      %p168 = scmp.lt.s32.totalorder %s13, 4
      // Predicated region
      $region21: #{tpu_custom_call.1} parent=5 // pred_check
        %p169 = pneg %p168
      $region22: #{tpu_custom_call.1} parent=5 // pred_check_branch
        %171 = sbr.rel (%p169) target = $region24
      $region23: #{tpu_custom_call.1} parent=5 // pred_region
        // Predicated region
        $region25: #{tpu_custom_call.1} parent=23 // pred_check
          %p172 = pneg %p45
        $region26: #{tpu_custom_call.1} parent=23 // pred_check_branch
          %174 = sbr.rel (%p172) target = $region28
        $region27: #{tpu_custom_call.1} parent=23 // pred_region
          %s175 = smul.u32 2, %s20
          %p176 = scmp.lt.s32.totalorder %s175, 3
          %s177 = scalar_select %p176, %s175, 3
          %s178 = smul.addr %s177, 8
          %s179 = smul.addr %s178, 4
          %s180 = scalar_lea.vmem %s0, %s179
          %s181 = smul.u32 2, %s20
        $region28: #{tpu_custom_call.1} parent=23 // pred_fallthru
          _
        // Predicated region
        $region29: #{tpu_custom_call.1} parent=23 // pred_check
          %p182 = pneg %p92
        $region30: #{tpu_custom_call.1} parent=23 // pred_check_branch
          %184 = sbr.rel (%p182) target = $region32
        $region31: #{tpu_custom_call.1} parent=23 // pred_region
          %p185 = scmp.lt.s32.totalorder %s21, 1
          %s186 = scalar_select %p185, %s21, 1
          %s187 = smul.addr %s186, 8
          %s188 = scalar_lea.vmem %s2, %s187
        $region32: #{tpu_custom_call.1} parent=23 // pred_fallthru
          _
      $region24: #{tpu_custom_call.1} parent=5 // pred_fallthru
        _
      %p189 = scmp.le.s32.totalorder 1, %s13
      %p190 = scmp.lt.s32.totalorder %s13, 5
      %p191 = pnand %p189, %p190
      %p192 = pneg %p191
      // Predicated region
      $region33: #{tpu_custom_call.1} parent=5 // pred_check
        _
      $region34: #{tpu_custom_call.1} parent=5 // pred_check_branch
        %194 = sbr.rel (%p191) target = $region36
      $region35: #{tpu_custom_call.1} parent=5 // pred_region
        %s195 = ssub.s32 %s13, 1
        %s196 = smul.u32 2, %s22
        %p197 = scmp.lt.s32.totalorder %s196, 3
        %s198 = scalar_select %p197, %s196, 3
        %s199 = smul.addr %s198, 8
        %s200 = smul.addr %s199, 4
        %s201 = scalar_lea.vmem %s0, %s200
        %p202 = pneg %p51
        %p203 = pneg %p48
        %p204 = pneg %p72
        %p205 = pneg %p69
        %p206 = scmp.lt.s32.totalorder %s23, 1
        %s207 = scalar_select %p206, %s23, 1
        %s208 = smul.addr %s207, 8
        %s209 = scalar_lea.vmem %s2, %s208
        %p210 = pneg %p98
        %p211 = pneg %p95
        %p212 = pneg %p119
        %p213 = pneg %p116
        %p214 = pneg %p147
        %p215 = pneg %p144
        %s216 = sand.u32 %s134, 1
        %s217 = scalar_lea.sflag [#allocation4], %s216
        %s218 = sand.u32 %s134, 1
        %s219 = smul.addr %s218, 16
        %s220 = scalar_lea.vmem [#allocation3], %s219
        %s221 = smul.u32 2, %s22
        %p222 = scmp.lt.s32.totalorder %s221, 3
        %s223 = scalar_select %p222, %s221, 3
        %s224 = smul.addr %s223, 8
        %s225 = smul.addr %s224, 4
        %s226 = scalar_lea.vmem %s0, %s225
        %s227 = smul.u32 2, %s22
        %p228 = scmp.lt.s32.totalorder %s23, 1
        %s229 = scalar_select %p228, %s23, 1
        %s230 = smul.addr %s229, 8
        %s231 = scalar_lea.vmem %s2, %s230
        %s232 = smul.u32 2, %s22
        %p234 = scmp.eq.s32.totalorder %s23, 0
        // Predicated region
        $region37: #{tpu_custom_call.1} parent=35 // pred_check
          %p235 = pneg %p234
        $region38: #{tpu_custom_call.1} parent=35 // pred_check_branch
          %237 = sbr.rel (%p235) target = $region40
        $region39: #{tpu_custom_call.1} parent=35 // pred_region
          %v238 = vld [vmem:[%s1] sm:$0xf]
          %v239 = vld [vmem:[%s1 + $0x4] sm:$0xf]
          %v240 = vld [vmem:[%s226] sm:$0xf]
          %v241 = vld [vmem:[%s226 + $0x4] sm:$0xf]
          %v242 = vld [vmem:[%s226 + $0x8] sm:$0xf]
          %v243 = vld [vmem:[%s226 + $0xc] sm:$0xf]
          %v244 = vld [vmem:[%s226 + $0x10] sm:$0xf]
          %v245 = vld [vmem:[%s226 + $0x14] sm:$0xf]
          %v246 = vld [vmem:[%s226 + $0x18] sm:$0xf]
          %v247 = vld [vmem:[%s226 + $0x1c] sm:$0xf]
          %v256 = vunpack.c.l.b16 %v240
          %v257 = vunpack.c.l.b16 %v241
          %v258 = vunpack.c.l.b16 %v242
          %v259 = vunpack.c.l.b16 %v243
          %v260 = vunpack.c.l.b16 %v244
          %v261 = vunpack.c.l.b16 %v245
          %v262 = vunpack.c.l.b16 %v246
          %v263 = vunpack.c.l.b16 %v247
          %v264 = vpack.c.b16 %v257, %v256
          %v265 = vpack.c.b16 %v259, %v258
          %v266 = vpack.c.b16 %v261, %v260
          %v267 = vpack.c.b16 %v263, %v262
          %v270 = vunpack.c.l.b16 %v238
          %v271 = vunpack.c.l.b16 %v239
          %v272 = vpack.c.b16 %v271, %v270
          %vm274 = vcmask 130048
          %v276 = vsel %vm274, %v264, 0
          %v279 = vsel %vm274, %v265, 0
          %v282 = vsel %vm274, %v266, 0
          %v285 = vsel %vm274, %v267, 0
          %287 = vmatprep.subr.bf16.mxu0 0
          %288 = vmatpush1.bf16.msra.mxu0 %v272
          %289 = vmatprep.subr.bf16.mxu0 0
          %290 = vmatpush1.bf16.msra.mxu0 0
          %291 = vmatprep.subr.bf16.mxu0 0
          %292 = vmatpush1.bf16.msra.mxu0 0
          %293 = vmatprep.subr.bf16.mxu0 0
          %294 = vmatpush1.bf16.msra.mxu0 0
          %295 = vmatprep.subr.bf16.mxu0 0
          %296 = vmatpush1.bf16.msra.mxu0 0
          %297 = vmatprep.subr.bf16.mxu0 0
          %298 = vmatpush1.bf16.msra.mxu0 0
          %299 = vmatprep.subr.bf16.mxu0 0
          %300 = vmatpush1.bf16.msra.mxu0 0
          %301 = vmatprep.subr.bf16.mxu0 0
          %302 = vmatpush1.bf16.msra.mxu0 0
          %303 = vmatprep.subr.bf16.mxu0 0
          %304 = vmatpush1.bf16.msra.mxu0 0
          %305 = vmatprep.subr.bf16.mxu0 0
          %306 = vmatpush1.bf16.msra.mxu0 0
          %307 = vmatprep.subr.bf16.mxu0 0
          %308 = vmatpush1.bf16.msra.mxu0 0
          %309 = vmatprep.subr.bf16.mxu0 0
          %310 = vmatpush1.bf16.msra.mxu0 0
          %311 = vmatprep.subr.bf16.mxu0 0
          %312 = vmatpush1.bf16.msra.mxu0 0
          %313 = vmatprep.subr.bf16.mxu0 0
          %314 = vmatpush1.bf16.msra.mxu0 0
          %315 = vmatprep.subr.bf16.mxu0 0
          %316 = vmatpush1.bf16.msra.mxu0 0
          %317 = vmatprep.subr.bf16.mxu0 0
          %318 = vmatpush1.bf16.msra.mxu0 0
          %319 = vmatprep.mubr.bf16.mxu0 0
          %320 = vmatmul.mubr.bf16.gmra.mrb[0].mxu0 %v276
          %v321 = vpop.f32.mrb[0].mxu0
          %v322 = vadd.f32 0.0, %v321
          %v323 = vpop.f32.mrb[0].mxu0
          %v324 = vpop.f32.mrb[0].mxu0
          %v325 = vadd.f32 0.0, %v324
          %v326 = vpop.f32.mrb[0].mxu0
          %327 = vmatprep.mubr.bf16.mxu0 0
          %328 = vmatmul.mubr.bf16.gmra.mrb[0].mxu0 %v279
          %v329 = vpop.f32.mrb[0].mxu0
          %v330 = vadd.f32 0.0, %v329
          %v331 = vpop.f32.mrb[0].mxu0
          %v332 = vpop.f32.mrb[0].mxu0
          %v333 = vadd.f32 0.0, %v332
          %v334 = vpop.f32.mrb[0].mxu0
          %335 = vmatprep.mubr.bf16.mxu0 0
          %336 = vmatmul.mubr.bf16.gmra.mrb[0].mxu0 %v282
          %v337 = vpop.f32.mrb[0].mxu0
          %v338 = vadd.f32 0.0, %v337
          %v339 = vpop.f32.mrb[0].mxu0
          %v340 = vpop.f32.mrb[0].mxu0
          %v341 = vadd.f32 0.0, %v340
          %v342 = vpop.f32.mrb[0].mxu0
          %343 = vmatprep.mubr.bf16.mxu0 0
          %344 = vmatmul.mubr.bf16.gmra.mrb[0].mxu0 %v285
          %v345 = vpop.f32.mrb[0].mxu0
          %v346 = vadd.f32 0.0, %v345
          %v347 = vpop.f32.mrb[0].mxu0
          %v348 = vpop.f32.mrb[0].mxu0
          %v349 = vadd.f32 0.0, %v348
          %v350 = vpop.f32.mrb[0].mxu0
          %351 = vdwg.mxu0
          %352 = vst [vmem:[#allocation2] sm:$0xff] %v322
          %353 = vst [vmem:[#allocation2 + $0x8] sm:$0xff] %v325
          %354 = vst [vmem:[#allocation2 + $0x10] sm:$0xff] %v330
          %355 = vst [vmem:[#allocation2 + $0x18] sm:$0xff] %v333
          %356 = vst [vmem:[#allocation2 + $0x20] sm:$0xff] %v338
          %357 = vst [vmem:[#allocation2 + $0x28] sm:$0xff] %v341
          %358 = vst [vmem:[#allocation2 + $0x30] sm:$0xff] %v346
          %359 = vst [vmem:[#allocation2 + $0x38] sm:$0xff] %v349
          %s360 = scalar_lea.vmem %s226, 32
          %v361 = vld [vmem:[%s360] sm:$0xf]
          %v362 = vld [vmem:[%s360 + $0x4] sm:$0xf]
          %v363 = vld [vmem:[%s360 + $0x8] sm:$0xf]
          %v364 = vld [vmem:[%s360 + $0xc] sm:$0xf]
          %v365 = vld [vmem:[%s360 + $0x10] sm:$0xf]
          %v366 = vld [vmem:[%s360 + $0x14] sm:$0xf]
          %v367 = vld [vmem:[%s360 + $0x18] sm:$0xf]
          %v368 = vld [vmem:[%s360 + $0x1c] sm:$0xf]
          %v377 = vunpack.c.l.b16 %v361
          %v378 = vunpack.c.l.b16 %v362
          %v379 = vunpack.c.l.b16 %v363
          %v380 = vunpack.c.l.b16 %v364
          %v381 = vunpack.c.l.b16 %v365
          %v382 = vunpack.c.l.b16 %v366
          %v383 = vunpack.c.l.b16 %v367
          %v384 = vunpack.c.l.b16 %v368
          %v385 = vpack.c.b16 %v378, %v377
          %v386 = vpack.c.b16 %v380, %v379
          %v387 = vpack.c.b16 %v382, %v381
          %v388 = vpack.c.b16 %v384, %v383
          %v390 = vsel %vm274, %v385, 0
          %v393 = vsel %vm274, %v386, 0
          %v396 = vsel %vm274, %v387, 0
          %v399 = vsel %vm274, %v388, 0
          %401 = vmatprep.subr.bf16.mxu0 0
          %402 = vmatpush1.bf16.msra.mxu0 %v272
          %403 = vmatprep.subr.bf16.mxu0 0
          %404 = vmatpush1.bf16.msra.mxu0 0
          %405 = vmatprep.subr.bf16.mxu0 0
          %406 = vmatpush1.bf16.msra.mxu0 0
          %407 = vmatprep.subr.bf16.mxu0 0
          %408 = vmatpush1.bf16.msra.mxu0 0
          %409 = vmatprep.subr.bf16.mxu0 0
          %410 = vmatpush1.bf16.msra.mxu0 0
          %411 = vmatprep.subr.bf16.mxu0 0
          %412 = vmatpush1.bf16.msra.mxu0 0
          %413 = vmatprep.subr.bf16.mxu0 0
          %414 = vmatpush1.bf16.msra.mxu0 0
          %415 = vmatprep.subr.bf16.mxu0 0
          %416 = vmatpush1.bf16.msra.mxu0 0
          %417 = vmatprep.subr.bf16.mxu0 0
          %418 = vmatpush1.bf16.msra.mxu0 0
          %419 = vmatprep.subr.bf16.mxu0 0
          %420 = vmatpush1.bf16.msra.mxu0 0
          %421 = vmatprep.subr.bf16.mxu0 0
          %422 = vmatpush1.bf16.msra.mxu0 0
          %423 = vmatprep.subr.bf16.mxu0 0
          %424 = vmatpush1.bf16.msra.mxu0 0
          %425 = vmatprep.subr.bf16.mxu0 0
          %426 = vmatpush1.bf16.msra.mxu0 0
          %427 = vmatprep.subr.bf16.mxu0 0
          %428 = vmatpush1.bf16.msra.mxu0 0
          %429 = vmatprep.subr.bf16.mxu0 0
          %430 = vmatpush1.bf16.msra.mxu0 0
          %431 = vmatprep.subr.bf16.mxu0 0
          %432 = vmatpush1.bf16.msra.mxu0 0
          %433 = vmatprep.mubr.bf16.mxu0 0
          %434 = vmatmul.mubr.bf16.gmra.mrb[0].mxu0 %v390
          %v435 = vpop.f32.mrb[0].mxu0
          %v436 = vadd.f32 0.0, %v435
          %v437 = vpop.f32.mrb[0].mxu0
          %v438 = vpop.f32.mrb[0].mxu0
          %v439 = vadd.f32 0.0, %v438
          %v440 = vpop.f32.mrb[0].mxu0
          %441 = vmatprep.mubr.bf16.mxu0 0
          %442 = vmatmul.mubr.bf16.gmra.mrb[0].mxu0 %v393
          %v443 = vpop.f32.mrb[0].mxu0
          %v444 = vadd.f32 0.0, %v443
          %v445 = vpop.f32.mrb[0].mxu0
          %v446 = vpop.f32.mrb[0].mxu0
          %v447 = vadd.f32 0.0, %v446
          %v448 = vpop.f32.mrb[0].mxu0
          %449 = vmatprep.mubr.bf16.mxu0 0
          %450 = vmatmul.mubr.bf16.gmra.mrb[0].mxu0 %v396
          %v451 = vpop.f32.mrb[0].mxu0
          %v452 = vadd.f32 0.0, %v451
          %v453 = vpop.f32.mrb[0].mxu0
          %v454 = vpop.f32.mrb[0].mxu0
          %v455 = vadd.f32 0.0, %v454
          %v456 = vpop.f32.mrb[0].mxu0
          %457 = vmatprep.mubr.bf16.mxu0 0
          %458 = vmatmul.mubr.bf16.gmra.mrb[0].mxu0 %v399
          %v459 = vpop.f32.mrb[0].mxu0
          %v460 = vadd.f32 0.0, %v459
          %v461 = vpop.f32.mrb[0].mxu0
          %v462 = vpop.f32.mrb[0].mxu0
          %v463 = vadd.f32 0.0, %v462
          %v464 = vpop.f32.mrb[0].mxu0
          %465 = vdwg.mxu0
          %s466 = scalar_lea.vmem [#allocation2], 64
          %467 = vst [vmem:[%s466] sm:$0xff] %v436
          %468 = vst [vmem:[%s466 + $0x8] sm:$0xff] %v439
          %469 = vst [vmem:[%s466 + $0x10] sm:$0xff] %v444
          %470 = vst [vmem:[%s466 + $0x18] sm:$0xff] %v447
          %471 = vst [vmem:[%s466 + $0x20] sm:$0xff] %v452
          %472 = vst [vmem:[%s466 + $0x28] sm:$0xff] %v455
          %473 = vst [vmem:[%s466 + $0x30] sm:$0xff] %v460
          %474 = vst [vmem:[%s466 + $0x38] sm:$0xff] %v463
        $region40: #{tpu_custom_call.1} parent=35 // pred_fallthru
          _
        %v475 = vld [vmem:[%s231] sm:$0xff]
        %v477 = vcombine.high %v475, %v475
        %v479 = vunpack.c.l.s4 1966171168
        %v480 = vunpack.c.0.s8 %v479
        %v481 = vlaneseq
        %v482 = vshrl.u32 %v481, 7
        %v483 = vsub.s32 %v480, %v482
        %v484 = vrot.slane %v475, %v483
        %v486 = vunpack.c.l.s4 1966171168
        %v487 = vunpack.c.0.s8 %v486
        %v488 = vlaneseq
        %v489 = vshrl.u32 %v488, 7
        %v490 = vsub.s32 %v487, %v489
        %v491 = vrot.slane %v477, %v490
        %v492 = vcombine.high %v484, %v484
        %v493 = vcombine.high %v491, %v491
        %v495 = vunpack.c.l.s4 1966171168
        %v496 = vunpack.c.0.s8 %v495
        %v497 = vlaneseq
        %v498 = vshrl.u32 %v497, 7
        %v499 = vsub.s32 %v496, %v498
        %v500 = vrot.slane %v484, %v499
        %v502 = vunpack.c.l.s4 1966171168
        %v503 = vunpack.c.0.s8 %v502
        %v504 = vlaneseq
        %v505 = vshrl.u32 %v504, 7
        %v506 = vsub.s32 %v503, %v505
        %v507 = vrot.slane %v491, %v506
        %v509 = vunpack.c.l.s4 1966171168
        %v510 = vunpack.c.0.s8 %v509
        %v511 = vlaneseq
        %v512 = vshrl.u32 %v511, 7
        %v513 = vsub.s32 %v510, %v512
        %v514 = vrot.slane %v492, %v513
        %v516 = vunpack.c.l.s4 1966171168
        %v517 = vunpack.c.0.s8 %v516
        %v518 = vlaneseq
        %v519 = vshrl.u32 %v518, 7
        %v520 = vsub.s32 %v517, %v519
        %v521 = vrot.slane %v493, %v520
        %v522 = vcombine.high %v500, %v500
        %v523 = vcombine.high %v507, %v507
        %v524 = vcombine.high %v514, %v514
        %v525 = vcombine.high %v521, %v521
        %v526 = vld [vmem:[%s3] sm:$0x1]
        %v527 = vld [vmem:[#allocation2] sm:$0xff]
        %v528 = vld [vmem:[#allocation2 + $0x8] sm:$0xff]
        %v529 = vld [vmem:[#allocation2 + $0x10] sm:$0xff]
        %v530 = vld [vmem:[#allocation2 + $0x18] sm:$0xff]
        %v531 = vld [vmem:[#allocation2 + $0x20] sm:$0xff]
        %v532 = vld [vmem:[#allocation2 + $0x28] sm:$0xff]
        %v533 = vld [vmem:[#allocation2 + $0x30] sm:$0xff]
        %v534 = vld [vmem:[#allocation2 + $0x38] sm:$0xff]
        %v535 = vlaneseq
        %v536 = vshrl.u32 %v535, 7
        %v537 = vsub.s32 0, %v536
        %v538 = vrot.slane %v500, %v537
        %v539 = vlaneseq
        %v540 = vshrl.u32 %v539, 7
        %v541 = vsub.s32 0, %v540
        %v542 = vrot.slane %v514, %v541
        %v543 = vlaneseq
        %v544 = vshrl.u32 %v543, 7
        %v545 = vsub.s32 0, %v544
        %v546 = vrot.slane %v522, %v545
        %v547 = vlaneseq
        %v548 = vshrl.u32 %v547, 7
        %v549 = vsub.s32 0, %v548
        %v550 = vrot.slane %v524, %v549
        %v551 = vlaneseq
        %v552 = vshrl.u32 %v551, 7
        %v553 = vsub.s32 0, %v552
        %v554 = vrot.slane %v507, %v553
        %v555 = vlaneseq
        %v556 = vshrl.u32 %v555, 7
        %v557 = vsub.s32 0, %v556
        %v558 = vrot.slane %v521, %v557
        %v559 = vlaneseq
        %v560 = vshrl.u32 %v559, 7
        %v561 = vsub.s32 0, %v560
        %v562 = vrot.slane %v523, %v561
        %v563 = vlaneseq
        %v564 = vshrl.u32 %v563, 7
        %v565 = vsub.s32 0, %v564
        %v566 = vrot.slane %v525, %v565
        %v575 = vmul.f32 %v527, %v538
        %v576 = vmul.f32 %v528, %v538
        %v577 = vmul.f32 %v529, %v538
        %v578 = vmul.f32 %v530, %v538
        %v579 = vmul.f32 %v531, %v538
        %v580 = vmul.f32 %v532, %v538
        %v581 = vmul.f32 %v533, %v538
        %v582 = vmul.f32 %v534, %v538
        %v583 = vmul.f32 %v527, %v542
        %v584 = vmul.f32 %v528, %v542
        %v585 = vmul.f32 %v529, %v542
        %v586 = vmul.f32 %v530, %v542
        %v587 = vmul.f32 %v531, %v542
        %v588 = vmul.f32 %v532, %v542
        %v589 = vmul.f32 %v533, %v542
        %v590 = vmul.f32 %v534, %v542
        %v591 = vmul.f32 %v527, %v546
        %v592 = vmul.f32 %v528, %v546
        %v593 = vmul.f32 %v529, %v546
        %v594 = vmul.f32 %v530, %v546
        %v595 = vmul.f32 %v531, %v546
        %v596 = vmul.f32 %v532, %v546
        %v597 = vmul.f32 %v533, %v546
        %v598 = vmul.f32 %v534, %v546
        %v599 = vmul.f32 %v527, %v550
        %v600 = vmul.f32 %v528, %v550
        %v601 = vmul.f32 %v529, %v550
        %v602 = vmul.f32 %v530, %v550
        %v603 = vmul.f32 %v531, %v550
        %v604 = vmul.f32 %v532, %v550
        %v605 = vmul.f32 %v533, %v550
        %v606 = vmul.f32 %v534, %v550
        %v607 = vmul.f32 %v527, %v554
        %v608 = vmul.f32 %v528, %v554
        %v609 = vmul.f32 %v529, %v554
        %v610 = vmul.f32 %v530, %v554
        %v611 = vmul.f32 %v531, %v554
        %v612 = vmul.f32 %v532, %v554
        %v613 = vmul.f32 %v533, %v554
        %v614 = vmul.f32 %v534, %v554
        %v615 = vmul.f32 %v527, %v558
        %v616 = vmul.f32 %v528, %v558
        %v617 = vmul.f32 %v529, %v558
        %v618 = vmul.f32 %v530, %v558
        %v619 = vmul.f32 %v531, %v558
        %v620 = vmul.f32 %v532, %v558
        %v621 = vmul.f32 %v533, %v558
        %v622 = vmul.f32 %v534, %v558
        %v623 = vmul.f32 %v527, %v562
        %v624 = vmul.f32 %v528, %v562
        %v625 = vmul.f32 %v529, %v562
        %v626 = vmul.f32 %v530, %v562
        %v627 = vmul.f32 %v531, %v562
        %v628 = vmul.f32 %v532, %v562
        %v629 = vmul.f32 %v533, %v562
        %v630 = vmul.f32 %v534, %v562
        %v631 = vmul.f32 %v527, %v566
        %v632 = vmul.f32 %v528, %v566
        %v633 = vmul.f32 %v529, %v566
        %v634 = vmul.f32 %v530, %v566
        %v635 = vmul.f32 %v531, %v566
        %v636 = vmul.f32 %v532, %v566
        %v637 = vmul.f32 %v533, %v566
        %v638 = vmul.f32 %v534, %v566
        %v639 = vtanh.pop %v575
        %v640 = vtanh.pop %v576
        %v641 = vtanh.pop %v577
        %v642 = vtanh.pop %v578
        %v643 = vtanh.pop %v579
        %v644 = vtanh.pop %v580
        %v645 = vtanh.pop %v581
        %v646 = vtanh.pop %v582
        %v647 = vtanh.pop %v583
        %v648 = vtanh.pop %v584
        %v649 = vtanh.pop %v585
        %v650 = vtanh.pop %v586
        %v651 = vtanh.pop %v587
        %v652 = vtanh.pop %v588
        %v653 = vtanh.pop %v589
        %v654 = vtanh.pop %v590
        %v655 = vtanh.pop %v591
        %v656 = vtanh.pop %v592
        %v657 = vtanh.pop %v593
        %v658 = vtanh.pop %v594
        %v659 = vtanh.pop %v595
        %v660 = vtanh.pop %v596
        %v661 = vtanh.pop %v597
        %v662 = vtanh.pop %v598
        %v663 = vtanh.pop %v599
        %v664 = vtanh.pop %v600
        %v665 = vtanh.pop %v601
        %v666 = vtanh.pop %v602
        %v667 = vtanh.pop %v603
        %v668 = vtanh.pop %v604
        %v669 = vtanh.pop %v605
        %v670 = vtanh.pop %v606
        %v671 = vtanh.pop %v607
        %v672 = vtanh.pop %v608
        %v673 = vtanh.pop %v609
        %v674 = vtanh.pop %v610
        %v675 = vtanh.pop %v611
        %v676 = vtanh.pop %v612
        %v677 = vtanh.pop %v613
        %v678 = vtanh.pop %v614
        %v679 = vtanh.pop %v615
        %v680 = vtanh.pop %v616
        %v681 = vtanh.pop %v617
        %v682 = vtanh.pop %v618
        %v683 = vtanh.pop %v619
        %v684 = vtanh.pop %v620
        %v685 = vtanh.pop %v621
        %v686 = vtanh.pop %v622
        %v687 = vtanh.pop %v623
        %v688 = vtanh.pop %v624
        %v689 = vtanh.pop %v625
        %v690 = vtanh.pop %v626
        %v691 = vtanh.pop %v627
        %v692 = vtanh.pop %v628
        %v693 = vtanh.pop %v629
        %v694 = vtanh.pop %v630
        %v695 = vtanh.pop %v631
        %v696 = vtanh.pop %v632
        %v697 = vtanh.pop %v633
        %v698 = vtanh.pop %v634
        %v699 = vtanh.pop %v635
        %v700 = vtanh.pop %v636
        %v701 = vtanh.pop %v637
        %v702 = vtanh.pop %v638
        %v704 = vlaneseq
        %v705 = vshrl.u32 %v704, 7
        %v706 = vsub.s32 0, %v705
        %v707 = vrot.slane %v526, %v706
        %v709 = vmul.f32 %v639, %v707
        %v710 = vmul.f32 %v640, %v707
        %v711 = vmul.f32 %v641, %v707
        %v712 = vmul.f32 %v642, %v707
        %v713 = vmul.f32 %v643, %v707
        %v714 = vmul.f32 %v644, %v707
        %v715 = vmul.f32 %v645, %v707
        %v716 = vmul.f32 %v646, %v707
        %v717 = vmul.f32 %v647, %v707
        %v718 = vmul.f32 %v648, %v707
        %v719 = vmul.f32 %v649, %v707
        %v720 = vmul.f32 %v650, %v707
        %v721 = vmul.f32 %v651, %v707
        %v722 = vmul.f32 %v652, %v707
        %v723 = vmul.f32 %v653, %v707
        %v724 = vmul.f32 %v654, %v707
        %v725 = vmul.f32 %v655, %v707
        %v726 = vmul.f32 %v656, %v707
        %v727 = vmul.f32 %v657, %v707
        %v728 = vmul.f32 %v658, %v707
        %v729 = vmul.f32 %v659, %v707
        %v730 = vmul.f32 %v660, %v707
        %v731 = vmul.f32 %v661, %v707
        %v732 = vmul.f32 %v662, %v707
        %v733 = vmul.f32 %v663, %v707
        %v734 = vmul.f32 %v664, %v707
        %v735 = vmul.f32 %v665, %v707
        %v736 = vmul.f32 %v666, %v707
        %v737 = vmul.f32 %v667, %v707
        %v738 = vmul.f32 %v668, %v707
        %v739 = vmul.f32 %v669, %v707
        %v740 = vmul.f32 %v670, %v707
        %v741 = vmul.f32 %v671, %v707
        %v742 = vmul.f32 %v672, %v707
        %v743 = vmul.f32 %v673, %v707
        %v744 = vmul.f32 %v674, %v707
        %v745 = vmul.f32 %v675, %v707
        %v746 = vmul.f32 %v676, %v707
        %v747 = vmul.f32 %v677, %v707
        %v748 = vmul.f32 %v678, %v707
        %v749 = vmul.f32 %v679, %v707
        %v750 = vmul.f32 %v680, %v707
        %v751 = vmul.f32 %v681, %v707
        %v752 = vmul.f32 %v682, %v707
        %v753 = vmul.f32 %v683, %v707
        %v754 = vmul.f32 %v684, %v707
        %v755 = vmul.f32 %v685, %v707
        %v756 = vmul.f32 %v686, %v707
        %v757 = vmul.f32 %v687, %v707
        %v758 = vmul.f32 %v688, %v707
        %v759 = vmul.f32 %v689, %v707
        %v760 = vmul.f32 %v690, %v707
        %v761 = vmul.f32 %v691, %v707
        %v762 = vmul.f32 %v692, %v707
        %v763 = vmul.f32 %v693, %v707
        %v764 = vmul.f32 %v694, %v707
        %v765 = vmul.f32 %v695, %v707
        %v766 = vmul.f32 %v696, %v707
        %v767 = vmul.f32 %v697, %v707
        %v768 = vmul.f32 %v698, %v707
        %v769 = vmul.f32 %v699, %v707
        %v770 = vmul.f32 %v700, %v707
        %v771 = vmul.f32 %v701, %v707
        %v772 = vmul.f32 %v702, %v707
        %773 = vadd.xlane.f32.xlu0 %v709
        %v774 = vpop.xlane.xlu0 %773
        %775 = vadd.xlane.f32.xlu0 %v710
        %v776 = vpop.xlane.xlu0 %775
        %777 = vadd.xlane.f32.xlu0 %v711
        %v778 = vpop.xlane.xlu0 %777
        %779 = vadd.xlane.f32.xlu0 %v712
        %v780 = vpop.xlane.xlu0 %779
        %781 = vadd.xlane.f32.xlu0 %v713
        %v782 = vpop.xlane.xlu0 %781
        %783 = vadd.xlane.f32.xlu0 %v714
        %v784 = vpop.xlane.xlu0 %783
        %785 = vadd.xlane.f32.xlu0 %v715
        %v786 = vpop.xlane.xlu0 %785
        %787 = vadd.xlane.f32.xlu0 %v716
        %v788 = vpop.xlane.xlu0 %787
        %789 = vadd.xlane.f32.xlu0 %v717
        %v790 = vpop.xlane.xlu0 %789
        %791 = vadd.xlane.f32.xlu0 %v718
        %v792 = vpop.xlane.xlu0 %791
        %793 = vadd.xlane.f32.xlu0 %v719
        %v794 = vpop.xlane.xlu0 %793
        %795 = vadd.xlane.f32.xlu0 %v720
        %v796 = vpop.xlane.xlu0 %795
        %797 = vadd.xlane.f32.xlu0 %v721
        %v798 = vpop.xlane.xlu0 %797
        %799 = vadd.xlane.f32.xlu0 %v722
        %v800 = vpop.xlane.xlu0 %799
        %801 = vadd.xlane.f32.xlu0 %v723
        %v802 = vpop.xlane.xlu0 %801
        %803 = vadd.xlane.f32.xlu0 %v724
        %v804 = vpop.xlane.xlu0 %803
        %805 = vadd.xlane.f32.xlu0 %v725
        %v806 = vpop.xlane.xlu0 %805
        %807 = vadd.xlane.f32.xlu0 %v726
        %v808 = vpop.xlane.xlu0 %807
        %809 = vadd.xlane.f32.xlu0 %v727
        %v810 = vpop.xlane.xlu0 %809
        %811 = vadd.xlane.f32.xlu0 %v728
        %v812 = vpop.xlane.xlu0 %811
        %813 = vadd.xlane.f32.xlu0 %v729
        %v814 = vpop.xlane.xlu0 %813
        %815 = vadd.xlane.f32.xlu0 %v730
        %v816 = vpop.xlane.xlu0 %815
        %817 = vadd.xlane.f32.xlu0 %v731
        %v818 = vpop.xlane.xlu0 %817
        %819 = vadd.xlane.f32.xlu0 %v732
        %v820 = vpop.xlane.xlu0 %819
        %821 = vadd.xlane.f32.xlu0 %v733
        %v822 = vpop.xlane.xlu0 %821
        %823 = vadd.xlane.f32.xlu0 %v734
        %v824 = vpop.xlane.xlu0 %823
        %825 = vadd.xlane.f32.xlu0 %v735
        %v826 = vpop.xlane.xlu0 %825
        %827 = vadd.xlane.f32.xlu0 %v736
        %v828 = vpop.xlane.xlu0 %827
        %829 = vadd.xlane.f32.xlu0 %v737
        %v830 = vpop.xlane.xlu0 %829
        %831 = vadd.xlane.f32.xlu0 %v738
        %v832 = vpop.xlane.xlu0 %831
        %833 = vadd.xlane.f32.xlu0 %v739
        %v834 = vpop.xlane.xlu0 %833
        %835 = vadd.xlane.f32.xlu0 %v740
        %v836 = vpop.xlane.xlu0 %835
        %837 = vadd.xlane.f32.xlu0 %v741
        %v838 = vpop.xlane.xlu0 %837
        %839 = vadd.xlane.f32.xlu0 %v742
        %v840 = vpop.xlane.xlu0 %839
        %841 = vadd.xlane.f32.xlu0 %v743
        %v842 = vpop.xlane.xlu0 %841
        %843 = vadd.xlane.f32.xlu0 %v744
        %v844 = vpop.xlane.xlu0 %843
        %845 = vadd.xlane.f32.xlu0 %v745
        %v846 = vpop.xlane.xlu0 %845
        %847 = vadd.xlane.f32.xlu0 %v746
        %v848 = vpop.xlane.xlu0 %847
        %849 = vadd.xlane.f32.xlu0 %v747
        %v850 = vpop.xlane.xlu0 %849
        %851 = vadd.xlane.f32.xlu0 %v748
        %v852 = vpop.xlane.xlu0 %851
        %853 = vadd.xlane.f32.xlu0 %v749
        %v854 = vpop.xlane.xlu0 %853
        %855 = vadd.xlane.f32.xlu0 %v750
        %v856 = vpop.xlane.xlu0 %855
        %857 = vadd.xlane.f32.xlu0 %v751
        %v858 = vpop.xlane.xlu0 %857
        %859 = vadd.xlane.f32.xlu0 %v752
        %v860 = vpop.xlane.xlu0 %859
        %861 = vadd.xlane.f32.xlu0 %v753
        %v862 = vpop.xlane.xlu0 %861
        %863 = vadd.xlane.f32.xlu0 %v754
        %v864 = vpop.xlane.xlu0 %863
        %865 = vadd.xlane.f32.xlu0 %v755
        %v866 = vpop.xlane.xlu0 %865
        %867 = vadd.xlane.f32.xlu0 %v756
        %v868 = vpop.xlane.xlu0 %867
        %869 = vadd.xlane.f32.xlu0 %v757
        %v870 = vpop.xlane.xlu0 %869
        %871 = vadd.xlane.f32.xlu0 %v758
        %v872 = vpop.xlane.xlu0 %871
        %873 = vadd.xlane.f32.xlu0 %v759
        %v874 = vpop.xlane.xlu0 %873
        %875 = vadd.xlane.f32.xlu0 %v760
        %v876 = vpop.xlane.xlu0 %875
        %877 = vadd.xlane.f32.xlu0 %v761
        %v878 = vpop.xlane.xlu0 %877
        %879 = vadd.xlane.f32.xlu0 %v762
        %v880 = vpop.xlane.xlu0 %879
        %881 = vadd.xlane.f32.xlu0 %v763
        %v882 = vpop.xlane.xlu0 %881
        %883 = vadd.xlane.f32.xlu0 %v764
        %v884 = vpop.xlane.xlu0 %883
        %885 = vadd.xlane.f32.xlu0 %v765
        %v886 = vpop.xlane.xlu0 %885
        %887 = vadd.xlane.f32.xlu0 %v766
        %v888 = vpop.xlane.xlu0 %887
        %889 = vadd.xlane.f32.xlu0 %v767
        %v890 = vpop.xlane.xlu0 %889
        %891 = vadd.xlane.f32.xlu0 %v768
        %v892 = vpop.xlane.xlu0 %891
        %893 = vadd.xlane.f32.xlu0 %v769
        %v894 = vpop.xlane.xlu0 %893
        %895 = vadd.xlane.f32.xlu0 %v770
        %v896 = vpop.xlane.xlu0 %895
        %897 = vadd.xlane.f32.xlu0 %v771
        %v898 = vpop.xlane.xlu0 %897
        %899 = vadd.xlane.f32.xlu0 %v772
        %v900 = vpop.xlane.xlu0 %899
        %v965 = vlaneseq
        %v966 = vand.u32 %v965, 127
        %v967 = vlaneseq
        %v968 = vshrl.u32 %v967, 7
        %v969 = vsub.s32 %v966, %v968
        %v970 = vrot.slane %v774, %v969
        %v971 = vadd.s32 %v966, 4294967288
        %v972 = vlaneseq
        %v973 = vshrl.u32 %v972, 7
        %v974 = vsub.s32 %v971, %v973
        %v975 = vrot.slane %v776, %v974
        %vm976 = vcmask 130112
        %v977 = vsel %vm976, %v975, %v970
        %v978 = vadd.s32 %v966, 4294967280
        %v979 = vlaneseq
        %v980 = vshrl.u32 %v979, 7
        %v981 = vsub.s32 %v978, %v980
        %v982 = vrot.slane %v778, %v981
        %vm983 = vcmask 195712
        %v984 = vsel %vm983, %v982, %v977
        %v985 = vadd.s32 %v966, 4294967272
        %v986 = vlaneseq
        %v987 = vshrl.u32 %v986, 7
        %v988 = vsub.s32 %v985, %v987
        %v989 = vrot.slane %v780, %v988
        %vm990 = vcmask 261312
        %v991 = vsel %vm990, %v989, %v984
        %v992 = vadd.s32 %v966, 4294967264
        %v993 = vlaneseq
        %v994 = vshrl.u32 %v993, 7
        %v995 = vsub.s32 %v992, %v994
        %v996 = vrot.slane %v782, %v995
        %vm997 = vcmask 326912
        %v998 = vsel %vm997, %v996, %v991
        %v999 = vadd.s32 %v966, 4294967256
        %v1000 = vlaneseq
        %v1001 = vshrl.u32 %v1000, 7
        %v1002 = vsub.s32 %v999, %v1001
        %v1003 = vrot.slane %v784, %v1002
        %vm1004 = vcmask 392512
        %v1005 = vsel %vm1004, %v1003, %v998
        %v1006 = vadd.s32 %v966, 4294967248
        %v1007 = vlaneseq
        %v1008 = vshrl.u32 %v1007, 7
        %v1009 = vsub.s32 %v1006, %v1008
        %v1010 = vrot.slane %v786, %v1009
        %vm1011 = vcmask 458112
        %v1012 = vsel %vm1011, %v1010, %v1005
        %v1013 = vadd.s32 %v966, 4294967240
        %v1014 = vlaneseq
        %v1015 = vshrl.u32 %v1014, 7
        %v1016 = vsub.s32 %v1013, %v1015
        %v1017 = vrot.slane %v788, %v1016
        %vm1018 = vcmask 523712
        %v1019 = vsel %vm1018, %v1017, %v1012
        %v1020 = vlaneseq
        %v1021 = vshrl.u32 %v1020, 7
        %v1022 = vsub.s32 %v966, %v1021
        %v1023 = vrot.slane %v790, %v1022
        %v1024 = vlaneseq
        %v1025 = vshrl.u32 %v1024, 7
        %v1026 = vsub.s32 %v971, %v1025
        %v1027 = vrot.slane %v792, %v1026
        %v1028 = vsel %vm976, %v1027, %v1023
        %v1029 = vlaneseq
        %v1030 = vshrl.u32 %v1029, 7
        %v1031 = vsub.s32 %v978, %v1030
        %v1032 = vrot.slane %v794, %v1031
        %v1033 = vsel %vm983, %v1032, %v1028
        %v1034 = vlaneseq
        %v1035 = vshrl.u32 %v1034, 7
        %v1036 = vsub.s32 %v985, %v1035
        %v1037 = vrot.slane %v796, %v1036
        %v1038 = vsel %vm990, %v1037, %v1033
        %v1039 = vlaneseq
        %v1040 = vshrl.u32 %v1039, 7
        %v1041 = vsub.s32 %v992, %v1040
        %v1042 = vrot.slane %v798, %v1041
        %v1043 = vsel %vm997, %v1042, %v1038
        %v1044 = vlaneseq
        %v1045 = vshrl.u32 %v1044, 7
        %v1046 = vsub.s32 %v999, %v1045
        %v1047 = vrot.slane %v800, %v1046
        %v1048 = vsel %vm1004, %v1047, %v1043
        %v1049 = vlaneseq
        %v1050 = vshrl.u32 %v1049, 7
        %v1051 = vsub.s32 %v1006, %v1050
        %v1052 = vrot.slane %v802, %v1051
        %v1053 = vsel %vm1011, %v1052, %v1048
        %v1054 = vlaneseq
        %v1055 = vshrl.u32 %v1054, 7
        %v1056 = vsub.s32 %v1013, %v1055
        %v1057 = vrot.slane %v804, %v1056
        %v1058 = vsel %vm1018, %v1057, %v1053
        %v1059 = vlaneseq
        %v1060 = vshrl.u32 %v1059, 7
        %v1061 = vsub.s32 %v966, %v1060
        %v1062 = vrot.slane %v806, %v1061
        %v1063 = vlaneseq
        %v1064 = vshrl.u32 %v1063, 7
        %v1065 = vsub.s32 %v971, %v1064
        %v1066 = vrot.slane %v808, %v1065
        %v1067 = vsel %vm976, %v1066, %v1062
        %v1068 = vlaneseq
        %v1069 = vshrl.u32 %v1068, 7
        %v1070 = vsub.s32 %v978, %v1069
        %v1071 = vrot.slane %v810, %v1070
        %v1072 = vsel %vm983, %v1071, %v1067
        %v1073 = vlaneseq
        %v1074 = vshrl.u32 %v1073, 7
        %v1075 = vsub.s32 %v985, %v1074
        %v1076 = vrot.slane %v812, %v1075
        %v1077 = vsel %vm990, %v1076, %v1072
        %v1078 = vlaneseq
        %v1079 = vshrl.u32 %v1078, 7
        %v1080 = vsub.s32 %v992, %v1079
        %v1081 = vrot.slane %v814, %v1080
        %v1082 = vsel %vm997, %v1081, %v1077
        %v1083 = vlaneseq
        %v1084 = vshrl.u32 %v1083, 7
        %v1085 = vsub.s32 %v999, %v1084
        %v1086 = vrot.slane %v816, %v1085
        %v1087 = vsel %vm1004, %v1086, %v1082
        %v1088 = vlaneseq
        %v1089 = vshrl.u32 %v1088, 7
        %v1090 = vsub.s32 %v1006, %v1089
        %v1091 = vrot.slane %v818, %v1090
        %v1092 = vsel %vm1011, %v1091, %v1087
        %v1093 = vlaneseq
        %v1094 = vshrl.u32 %v1093, 7
        %v1095 = vsub.s32 %v1013, %v1094
        %v1096 = vrot.slane %v820, %v1095
        %v1097 = vsel %vm1018, %v1096, %v1092
        %v1098 = vlaneseq
        %v1099 = vshrl.u32 %v1098, 7
        %v1100 = vsub.s32 %v966, %v1099
        %v1101 = vrot.slane %v822, %v1100
        %v1102 = vlaneseq
        %v1103 = vshrl.u32 %v1102, 7
        %v1104 = vsub.s32 %v971, %v1103
        %v1105 = vrot.slane %v824, %v1104
        %v1106 = vsel %vm976, %v1105, %v1101
        %v1107 = vlaneseq
        %v1108 = vshrl.u32 %v1107, 7
        %v1109 = vsub.s32 %v978, %v1108
        %v1110 = vrot.slane %v826, %v1109
        %v1111 = vsel %vm983, %v1110, %v1106
        %v1112 = vlaneseq
        %v1113 = vshrl.u32 %v1112, 7
        %v1114 = vsub.s32 %v985, %v1113
        %v1115 = vrot.slane %v828, %v1114
        %v1116 = vsel %vm990, %v1115, %v1111
        %v1117 = vlaneseq
        %v1118 = vshrl.u32 %v1117, 7
        %v1119 = vsub.s32 %v992, %v1118
        %v1120 = vrot.slane %v830, %v1119
        %v1121 = vsel %vm997, %v1120, %v1116
        %v1122 = vlaneseq
        %v1123 = vshrl.u32 %v1122, 7
        %v1124 = vsub.s32 %v999, %v1123
        %v1125 = vrot.slane %v832, %v1124
        %v1126 = vsel %vm1004, %v1125, %v1121
        %v1127 = vlaneseq
        %v1128 = vshrl.u32 %v1127, 7
        %v1129 = vsub.s32 %v1006, %v1128
        %v1130 = vrot.slane %v834, %v1129
        %v1131 = vsel %vm1011, %v1130, %v1126
        %v1132 = vlaneseq
        %v1133 = vshrl.u32 %v1132, 7
        %v1134 = vsub.s32 %v1013, %v1133
        %v1135 = vrot.slane %v836, %v1134
        %v1136 = vsel %vm1018, %v1135, %v1131
        %v1137 = vlaneseq
        %v1138 = vshrl.u32 %v1137, 7
        %v1139 = vsub.s32 %v966, %v1138
        %v1140 = vrot.slane %v838, %v1139
        %v1141 = vlaneseq
        %v1142 = vshrl.u32 %v1141, 7
        %v1143 = vsub.s32 %v971, %v1142
        %v1144 = vrot.slane %v840, %v1143
        %v1145 = vsel %vm976, %v1144, %v1140
        %v1146 = vlaneseq
        %v1147 = vshrl.u32 %v1146, 7
        %v1148 = vsub.s32 %v978, %v1147
        %v1149 = vrot.slane %v842, %v1148
        %v1150 = vsel %vm983, %v1149, %v1145
        %v1151 = vlaneseq
        %v1152 = vshrl.u32 %v1151, 7
        %v1153 = vsub.s32 %v985, %v1152
        %v1154 = vrot.slane %v844, %v1153
        %v1155 = vsel %vm990, %v1154, %v1150
        %v1156 = vlaneseq
        %v1157 = vshrl.u32 %v1156, 7
        %v1158 = vsub.s32 %v992, %v1157
        %v1159 = vrot.slane %v846, %v1158
        %v1160 = vsel %vm997, %v1159, %v1155
        %v1161 = vlaneseq
        %v1162 = vshrl.u32 %v1161, 7
        %v1163 = vsub.s32 %v999, %v1162
        %v1164 = vrot.slane %v848, %v1163
        %v1165 = vsel %vm1004, %v1164, %v1160
        %v1166 = vlaneseq
        %v1167 = vshrl.u32 %v1166, 7
        %v1168 = vsub.s32 %v1006, %v1167
        %v1169 = vrot.slane %v850, %v1168
        %v1170 = vsel %vm1011, %v1169, %v1165
        %v1171 = vlaneseq
        %v1172 = vshrl.u32 %v1171, 7
        %v1173 = vsub.s32 %v1013, %v1172
        %v1174 = vrot.slane %v852, %v1173
        %v1175 = vsel %vm1018, %v1174, %v1170
        %v1176 = vlaneseq
        %v1177 = vshrl.u32 %v1176, 7
        %v1178 = vsub.s32 %v966, %v1177
        %v1179 = vrot.slane %v854, %v1178
        %v1180 = vlaneseq
        %v1181 = vshrl.u32 %v1180, 7
        %v1182 = vsub.s32 %v971, %v1181
        %v1183 = vrot.slane %v856, %v1182
        %v1184 = vsel %vm976, %v1183, %v1179
        %v1185 = vlaneseq
        %v1186 = vshrl.u32 %v1185, 7
        %v1187 = vsub.s32 %v978, %v1186
        %v1188 = vrot.slane %v858, %v1187
        %v1189 = vsel %vm983, %v1188, %v1184
        %v1190 = vlaneseq
        %v1191 = vshrl.u32 %v1190, 7
        %v1192 = vsub.s32 %v985, %v1191
        %v1193 = vrot.slane %v860, %v1192
        %v1194 = vsel %vm990, %v1193, %v1189
        %v1195 = vlaneseq
        %v1196 = vshrl.u32 %v1195, 7
        %v1197 = vsub.s32 %v992, %v1196
        %v1198 = vrot.slane %v862, %v1197
        %v1199 = vsel %vm997, %v1198, %v1194
        %v1200 = vlaneseq
        %v1201 = vshrl.u32 %v1200, 7
        %v1202 = vsub.s32 %v999, %v1201
        %v1203 = vrot.slane %v864, %v1202
        %v1204 = vsel %vm1004, %v1203, %v1199
        %v1205 = vlaneseq
        %v1206 = vshrl.u32 %v1205, 7
        %v1207 = vsub.s32 %v1006, %v1206
        %v1208 = vrot.slane %v866, %v1207
        %v1209 = vsel %vm1011, %v1208, %v1204
        %v1210 = vlaneseq
        %v1211 = vshrl.u32 %v1210, 7
        %v1212 = vsub.s32 %v1013, %v1211
        %v1213 = vrot.slane %v868, %v1212
        %v1214 = vsel %vm1018, %v1213, %v1209
        %v1215 = vlaneseq
        %v1216 = vshrl.u32 %v1215, 7
        %v1217 = vsub.s32 %v966, %v1216
        %v1218 = vrot.slane %v870, %v1217
        %v1219 = vlaneseq
        %v1220 = vshrl.u32 %v1219, 7
        %v1221 = vsub.s32 %v971, %v1220
        %v1222 = vrot.slane %v872, %v1221
        %v1223 = vsel %vm976, %v1222, %v1218
        %v1224 = vlaneseq
        %v1225 = vshrl.u32 %v1224, 7
        %v1226 = vsub.s32 %v978, %v1225
        %v1227 = vrot.slane %v874, %v1226
        %v1228 = vsel %vm983, %v1227, %v1223
        %v1229 = vlaneseq
        %v1230 = vshrl.u32 %v1229, 7
        %v1231 = vsub.s32 %v985, %v1230
        %v1232 = vrot.slane %v876, %v1231
        %v1233 = vsel %vm990, %v1232, %v1228
        %v1234 = vlaneseq
        %v1235 = vshrl.u32 %v1234, 7
        %v1236 = vsub.s32 %v992, %v1235
        %v1237 = vrot.slane %v878, %v1236
        %v1238 = vsel %vm997, %v1237, %v1233
        %v1239 = vlaneseq
        %v1240 = vshrl.u32 %v1239, 7
        %v1241 = vsub.s32 %v999, %v1240
        %v1242 = vrot.slane %v880, %v1241
        %v1243 = vsel %vm1004, %v1242, %v1238
        %v1244 = vlaneseq
        %v1245 = vshrl.u32 %v1244, 7
        %v1246 = vsub.s32 %v1006, %v1245
        %v1247 = vrot.slane %v882, %v1246
        %v1248 = vsel %vm1011, %v1247, %v1243
        %v1249 = vlaneseq
        %v1250 = vshrl.u32 %v1249, 7
        %v1251 = vsub.s32 %v1013, %v1250
        %v1252 = vrot.slane %v884, %v1251
        %v1253 = vsel %vm1018, %v1252, %v1248
        %v1254 = vlaneseq
        %v1255 = vshrl.u32 %v1254, 7
        %v1256 = vsub.s32 %v966, %v1255
        %v1257 = vrot.slane %v886, %v1256
        %v1258 = vlaneseq
        %v1259 = vshrl.u32 %v1258, 7
        %v1260 = vsub.s32 %v971, %v1259
        %v1261 = vrot.slane %v888, %v1260
        %v1262 = vsel %vm976, %v1261, %v1257
        %v1263 = vlaneseq
        %v1264 = vshrl.u32 %v1263, 7
        %v1265 = vsub.s32 %v978, %v1264
        %v1266 = vrot.slane %v890, %v1265
        %v1267 = vsel %vm983, %v1266, %v1262
        %v1268 = vlaneseq
        %v1269 = vshrl.u32 %v1268, 7
        %v1270 = vsub.s32 %v985, %v1269
        %v1271 = vrot.slane %v892, %v1270
        %v1272 = vsel %vm990, %v1271, %v1267
        %v1273 = vlaneseq
        %v1274 = vshrl.u32 %v1273, 7
        %v1275 = vsub.s32 %v992, %v1274
        %v1276 = vrot.slane %v894, %v1275
        %v1277 = vsel %vm997, %v1276, %v1272
        %v1278 = vlaneseq
        %v1279 = vshrl.u32 %v1278, 7
        %v1280 = vsub.s32 %v999, %v1279
        %v1281 = vrot.slane %v896, %v1280
        %v1282 = vsel %vm1004, %v1281, %v1277
        %v1283 = vlaneseq
        %v1284 = vshrl.u32 %v1283, 7
        %v1285 = vsub.s32 %v1006, %v1284
        %v1286 = vrot.slane %v898, %v1285
        %v1287 = vsel %vm1011, %v1286, %v1282
        %v1288 = vlaneseq
        %v1289 = vshrl.u32 %v1288, 7
        %v1290 = vsub.s32 %v1013, %v1289
        %v1291 = vrot.slane %v900, %v1290
        %v1292 = vsel %vm1018, %v1291, %v1287
        %vm1293 = vcmask 1041409
        %v1294 = vsel %vm1293, %v1058, %v1019
        %vm1295 = vcmask 1042434
        %v1296 = vsel %vm1295, %v1097, %v1294
        %vm1297 = vcmask 1043459
        %v1298 = vsel %vm1297, %v1136, %v1296
        %vm1299 = vcmask 1044484
        %v1300 = vsel %vm1299, %v1175, %v1298
        %vm1301 = vcmask 1045509
        %v1302 = vsel %vm1301, %v1214, %v1300
        %vm1303 = vcmask 1046534
        %v1304 = vsel %vm1303, %v1253, %v1302
        %vm1305 = vcmask 1047559
        %v1306 = vsel %vm1305, %v1292, %v1304
        %vm1308 = vcmask 523264
        %v1309 = vsel %vm1308, %v1306, -inf
        %1310 = vmax.xlane.f32.xlu0 %v1309
        %v1311 = vpop.xlane.xlu0 %1310
        %v1313 = vlaneseq
        %v1314 = vshrl.u32 %v1313, 7
        %v1315 = vsub.s32 0, %v1314
        %v1316 = vrot.slane %v1311, %v1315
        %v1317 = vlaneseq
        %v1318 = vshrl.u32 %v1317, 7
        %v1319 = vsub.s32 1, %v1318
        %v1320 = vrot.slane %v1311, %v1319
        %v1321 = vlaneseq
        %v1322 = vshrl.u32 %v1321, 7
        %v1323 = vsub.s32 2, %v1322
        %v1324 = vrot.slane %v1311, %v1323
        %v1325 = vlaneseq
        %v1326 = vshrl.u32 %v1325, 7
        %v1327 = vsub.s32 3, %v1326
        %v1328 = vrot.slane %v1311, %v1327
        %v1329 = vlaneseq
        %v1330 = vshrl.u32 %v1329, 7
        %v1331 = vsub.s32 4, %v1330
        %v1332 = vrot.slane %v1311, %v1331
        %v1333 = vlaneseq
        %v1334 = vshrl.u32 %v1333, 7
        %v1335 = vsub.s32 5, %v1334
        %v1336 = vrot.slane %v1311, %v1335
        %v1337 = vlaneseq
        %v1338 = vshrl.u32 %v1337, 7
        %v1339 = vsub.s32 6, %v1338
        %v1340 = vrot.slane %v1311, %v1339
        %v1341 = vlaneseq
        %v1342 = vshrl.u32 %v1341, 7
        %v1343 = vsub.s32 7, %v1342
        %v1344 = vrot.slane %v1311, %v1343
        %v1353 = vsub.f32 %v774, %v1316
        %v1354 = vsub.f32 %v776, %v1316
        %v1355 = vsub.f32 %v778, %v1316
        %v1356 = vsub.f32 %v780, %v1316
        %v1357 = vsub.f32 %v782, %v1316
        %v1358 = vsub.f32 %v784, %v1316
        %v1359 = vsub.f32 %v786, %v1316
        %v1360 = vsub.f32 %v788, %v1316
        %v1361 = vsub.f32 %v790, %v1320
        %v1362 = vsub.f32 %v792, %v1320
        %v1363 = vsub.f32 %v794, %v1320
        %v1364 = vsub.f32 %v796, %v1320
        %v1365 = vsub.f32 %v798, %v1320
        %v1366 = vsub.f32 %v800, %v1320
        %v1367 = vsub.f32 %v802, %v1320
        %v1368 = vsub.f32 %v804, %v1320
        %v1369 = vsub.f32 %v806, %v1324
        %v1370 = vsub.f32 %v808, %v1324
        %v1371 = vsub.f32 %v810, %v1324
        %v1372 = vsub.f32 %v812, %v1324
        %v1373 = vsub.f32 %v814, %v1324
        %v1374 = vsub.f32 %v816, %v1324
        %v1375 = vsub.f32 %v818, %v1324
        %v1376 = vsub.f32 %v820, %v1324
        %v1377 = vsub.f32 %v822, %v1328
        %v1378 = vsub.f32 %v824, %v1328
        %v1379 = vsub.f32 %v826, %v1328
        %v1380 = vsub.f32 %v828, %v1328
        %v1381 = vsub.f32 %v830, %v1328
        %v1382 = vsub.f32 %v832, %v1328
        %v1383 = vsub.f32 %v834, %v1328
        %v1384 = vsub.f32 %v836, %v1328
        %v1385 = vsub.f32 %v838, %v1332
        %v1386 = vsub.f32 %v840, %v1332
        %v1387 = vsub.f32 %v842, %v1332
        %v1388 = vsub.f32 %v844, %v1332
        %v1389 = vsub.f32 %v846, %v1332
        %v1390 = vsub.f32 %v848, %v1332
        %v1391 = vsub.f32 %v850, %v1332
        %v1392 = vsub.f32 %v852, %v1332
        %v1393 = vsub.f32 %v854, %v1336
        %v1394 = vsub.f32 %v856, %v1336
        %v1395 = vsub.f32 %v858, %v1336
        %v1396 = vsub.f32 %v860, %v1336
        %v1397 = vsub.f32 %v862, %v1336
        %v1398 = vsub.f32 %v864, %v1336
        %v1399 = vsub.f32 %v866, %v1336
        %v1400 = vsub.f32 %v868, %v1336
        %v1401 = vsub.f32 %v870, %v1340
        %v1402 = vsub.f32 %v872, %v1340
        %v1403 = vsub.f32 %v874, %v1340
        %v1404 = vsub.f32 %v876, %v1340
        %v1405 = vsub.f32 %v878, %v1340
        %v1406 = vsub.f32 %v880, %v1340
        %v1407 = vsub.f32 %v882, %v1340
        %v1408 = vsub.f32 %v884, %v1340
        %v1409 = vsub.f32 %v886, %v1344
        %v1410 = vsub.f32 %v888, %v1344
        %v1411 = vsub.f32 %v890, %v1344
        %v1412 = vsub.f32 %v892, %v1344
        %v1413 = vsub.f32 %v894, %v1344
        %v1414 = vsub.f32 %v896, %v1344
        %v1415 = vsub.f32 %v898, %v1344
        %v1416 = vsub.f32 %v900, %v1344
        %v1417 = vmul.f32 %v1353, 1.442695
        %v1418 = vpow.pop %v1417
        %v1419 = vmul.f32 %v1354, 1.442695
        %v1420 = vpow.pop %v1419
        %v1421 = vmul.f32 %v1355, 1.442695
        %v1422 = vpow.pop %v1421
        %v1423 = vmul.f32 %v1356, 1.442695
        %v1424 = vpow.pop %v1423
        %v1425 = vmul.f32 %v1357, 1.442695
        %v1426 = vpow.pop %v1425
        %v1427 = vmul.f32 %v1358, 1.442695
        %v1428 = vpow.pop %v1427
        %v1429 = vmul.f32 %v1359, 1.442695
        %v1430 = vpow.pop %v1429
        %v1431 = vmul.f32 %v1360, 1.442695
        %v1432 = vpow.pop %v1431
        %v1433 = vmul.f32 %v1361, 1.442695
        %v1434 = vpow.pop %v1433
        %v1435 = vmul.f32 %v1362, 1.442695
        %v1436 = vpow.pop %v1435
        %v1437 = vmul.f32 %v1363, 1.442695
        %v1438 = vpow.pop %v1437
        %v1439 = vmul.f32 %v1364, 1.442695
        %v1440 = vpow.pop %v1439
        %v1441 = vmul.f32 %v1365, 1.442695
        %v1442 = vpow.pop %v1441
        %v1443 = vmul.f32 %v1366, 1.442695
        %v1444 = vpow.pop %v1443
        %v1445 = vmul.f32 %v1367, 1.442695
        %v1446 = vpow.pop %v1445
        %v1447 = vmul.f32 %v1368, 1.442695
        %v1448 = vpow.pop %v1447
        %v1449 = vmul.f32 %v1369, 1.442695
        %v1450 = vpow.pop %v1449
        %v1451 = vmul.f32 %v1370, 1.442695
        %v1452 = vpow.pop %v1451
        %v1453 = vmul.f32 %v1371, 1.442695
        %v1454 = vpow.pop %v1453
        %v1455 = vmul.f32 %v1372, 1.442695
        %v1456 = vpow.pop %v1455
        %v1457 = vmul.f32 %v1373, 1.442695
        %v1458 = vpow.pop %v1457
        %v1459 = vmul.f32 %v1374, 1.442695
        %v1460 = vpow.pop %v1459
        %v1461 = vmul.f32 %v1375, 1.442695
        %v1462 = vpow.pop %v1461
        %v1463 = vmul.f32 %v1376, 1.442695
        %v1464 = vpow.pop %v1463
        %v1465 = vmul.f32 %v1377, 1.442695
        %v1466 = vpow.pop %v1465
        %v1467 = vmul.f32 %v1378, 1.442695
        %v1468 = vpow.pop %v1467
        %v1469 = vmul.f32 %v1379, 1.442695
        %v1470 = vpow.pop %v1469
        %v1471 = vmul.f32 %v1380, 1.442695
        %v1472 = vpow.pop %v1471
        %v1473 = vmul.f32 %v1381, 1.442695
        %v1474 = vpow.pop %v1473
        %v1475 = vmul.f32 %v1382, 1.442695
        %v1476 = vpow.pop %v1475
        %v1477 = vmul.f32 %v1383, 1.442695
        %v1478 = vpow.pop %v1477
        %v1479 = vmul.f32 %v1384, 1.442695
        %v1480 = vpow.pop %v1479
        %v1481 = vmul.f32 %v1385, 1.442695
        %v1482 = vpow.pop %v1481
        %v1483 = vmul.f32 %v1386, 1.442695
        %v1484 = vpow.pop %v1483
        %v1485 = vmul.f32 %v1387, 1.442695
        %v1486 = vpow.pop %v1485
        %v1487 = vmul.f32 %v1388, 1.442695
        %v1488 = vpow.pop %v1487
        %v1489 = vmul.f32 %v1389, 1.442695
        %v1490 = vpow.pop %v1489
        %v1491 = vmul.f32 %v1390, 1.442695
        %v1492 = vpow.pop %v1491
        %v1493 = vmul.f32 %v1391, 1.442695
        %v1494 = vpow.pop %v1493
        %v1495 = vmul.f32 %v1392, 1.442695
        %v1496 = vpow.pop %v1495
        %v1497 = vmul.f32 %v1393, 1.442695
        %v1498 = vpow.pop %v1497
        %v1499 = vmul.f32 %v1394, 1.442695
        %v1500 = vpow.pop %v1499
        %v1501 = vmul.f32 %v1395, 1.442695
        %v1502 = vpow.pop %v1501
        %v1503 = vmul.f32 %v1396, 1.442695
        %v1504 = vpow.pop %v1503
        %v1505 = vmul.f32 %v1397, 1.442695
        %v1506 = vpow.pop %v1505
        %v1507 = vmul.f32 %v1398, 1.442695
        %v1508 = vpow.pop %v1507
        %v1509 = vmul.f32 %v1399, 1.442695
        %v1510 = vpow.pop %v1509
        %v1511 = vmul.f32 %v1400, 1.442695
        %v1512 = vpow.pop %v1511
        %v1513 = vmul.f32 %v1401, 1.442695
        %v1514 = vpow.pop %v1513
        %v1515 = vmul.f32 %v1402, 1.442695
        %v1516 = vpow.pop %v1515
        %v1517 = vmul.f32 %v1403, 1.442695
        %v1518 = vpow.pop %v1517
        %v1519 = vmul.f32 %v1404, 1.442695
        %v1520 = vpow.pop %v1519
        %v1521 = vmul.f32 %v1405, 1.442695
        %v1522 = vpow.pop %v1521
        %v1523 = vmul.f32 %v1406, 1.442695
        %v1524 = vpow.pop %v1523
        %v1525 = vmul.f32 %v1407, 1.442695
        %v1526 = vpow.pop %v1525
        %v1527 = vmul.f32 %v1408, 1.442695
        %v1528 = vpow.pop %v1527
        %v1529 = vmul.f32 %v1409, 1.442695
        %v1530 = vpow.pop %v1529
        %v1531 = vmul.f32 %v1410, 1.442695
        %v1532 = vpow.pop %v1531
        %v1533 = vmul.f32 %v1411, 1.442695
        %v1534 = vpow.pop %v1533
        %v1535 = vmul.f32 %v1412, 1.442695
        %v1536 = vpow.pop %v1535
        %v1537 = vmul.f32 %v1413, 1.442695
        %v1538 = vpow.pop %v1537
        %v1539 = vmul.f32 %v1414, 1.442695
        %v1540 = vpow.pop %v1539
        %v1541 = vmul.f32 %v1415, 1.442695
        %v1542 = vpow.pop %v1541
        %v1543 = vmul.f32 %v1416, 1.442695
        %v1544 = vpow.pop %v1543
        %1609 = vset.pattern.permute.xlu0 0
        %1610 = vperm.xlu0 %1609, %v1418
        %v1611 = vpop.permute.xlu0 %1610
        %1612 = vset.pattern.permute.xlu0 0
        %1613 = vperm.xlu0 %1612, %v1420
        %v1614 = vpop.permute.xlu0 %1613
        %1615 = vset.pattern.permute.xlu0 0
        %1616 = vperm.xlu0 %1615, %v1422
        %v1617 = vpop.permute.xlu0 %1616
        %1618 = vset.pattern.permute.xlu0 0
        %1619 = vperm.xlu0 %1618, %v1424
        %v1620 = vpop.permute.xlu0 %1619
        %1621 = vset.pattern.permute.xlu0 0
        %1622 = vperm.xlu0 %1621, %v1426
        %v1623 = vpop.permute.xlu0 %1622
        %1624 = vset.pattern.permute.xlu0 0
        %1625 = vperm.xlu0 %1624, %v1428
        %v1626 = vpop.permute.xlu0 %1625
        %1627 = vset.pattern.permute.xlu0 0
        %1628 = vperm.xlu0 %1627, %v1430
        %v1629 = vpop.permute.xlu0 %1628
        %1630 = vset.pattern.permute.xlu0 0
        %1631 = vperm.xlu0 %1630, %v1432
        %v1632 = vpop.permute.xlu0 %1631
        %1633 = vset.pattern.permute.xlu0 0
        %1634 = vperm.xlu0 %1633, %v1434
        %v1635 = vpop.permute.xlu0 %1634
        %1636 = vset.pattern.permute.xlu0 0
        %1637 = vperm.xlu0 %1636, %v1436
        %v1638 = vpop.permute.xlu0 %1637
        %1639 = vset.pattern.permute.xlu0 0
        %1640 = vperm.xlu0 %1639, %v1438
        %v1641 = vpop.permute.xlu0 %1640
        %1642 = vset.pattern.permute.xlu0 0
        %1643 = vperm.xlu0 %1642, %v1440
        %v1644 = vpop.permute.xlu0 %1643
        %1645 = vset.pattern.permute.xlu0 0
        %1646 = vperm.xlu0 %1645, %v1442
        %v1647 = vpop.permute.xlu0 %1646
        %1648 = vset.pattern.permute.xlu0 0
        %1649 = vperm.xlu0 %1648, %v1444
        %v1650 = vpop.permute.xlu0 %1649
        %1651 = vset.pattern.permute.xlu0 0
        %1652 = vperm.xlu0 %1651, %v1446
        %v1653 = vpop.permute.xlu0 %1652
        %1654 = vset.pattern.permute.xlu0 0
        %1655 = vperm.xlu0 %1654, %v1448
        %v1656 = vpop.permute.xlu0 %1655
        %1657 = vset.pattern.permute.xlu0 0
        %1658 = vperm.xlu0 %1657, %v1450
        %v1659 = vpop.permute.xlu0 %1658
        %1660 = vset.pattern.permute.xlu0 0
        %1661 = vperm.xlu0 %1660, %v1452
        %v1662 = vpop.permute.xlu0 %1661
        %1663 = vset.pattern.permute.xlu0 0
        %1664 = vperm.xlu0 %1663, %v1454
        %v1665 = vpop.permute.xlu0 %1664
        %1666 = vset.pattern.permute.xlu0 0
        %1667 = vperm.xlu0 %1666, %v1456
        %v1668 = vpop.permute.xlu0 %1667
        %1669 = vset.pattern.permute.xlu0 0
        %1670 = vperm.xlu0 %1669, %v1458
        %v1671 = vpop.permute.xlu0 %1670
        %1672 = vset.pattern.permute.xlu0 0
        %1673 = vperm.xlu0 %1672, %v1460
        %v1674 = vpop.permute.xlu0 %1673
        %1675 = vset.pattern.permute.xlu0 0
        %1676 = vperm.xlu0 %1675, %v1462
        %v1677 = vpop.permute.xlu0 %1676
        %1678 = vset.pattern.permute.xlu0 0
        %1679 = vperm.xlu0 %1678, %v1464
        %v1680 = vpop.permute.xlu0 %1679
        %1681 = vset.pattern.permute.xlu0 0
        %1682 = vperm.xlu0 %1681, %v1466
        %v1683 = vpop.permute.xlu0 %1682
        %1684 = vset.pattern.permute.xlu0 0
        %1685 = vperm.xlu0 %1684, %v1468
        %v1686 = vpop.permute.xlu0 %1685
        %1687 = vset.pattern.permute.xlu0 0
        %1688 = vperm.xlu0 %1687, %v1470
        %v1689 = vpop.permute.xlu0 %1688
        %1690 = vset.pattern.permute.xlu0 0
        %1691 = vperm.xlu0 %1690, %v1472
        %v1692 = vpop.permute.xlu0 %1691
        %1693 = vset.pattern.permute.xlu0 0
        %1694 = vperm.xlu0 %1693, %v1474
        %v1695 = vpop.permute.xlu0 %1694
        %1696 = vset.pattern.permute.xlu0 0
        %1697 = vperm.xlu0 %1696, %v1476
        %v1698 = vpop.permute.xlu0 %1697
        %1699 = vset.pattern.permute.xlu0 0
        %1700 = vperm.xlu0 %1699, %v1478
        %v1701 = vpop.permute.xlu0 %1700
        %1702 = vset.pattern.permute.xlu0 0
        %1703 = vperm.xlu0 %1702, %v1480
        %v1704 = vpop.permute.xlu0 %1703
        %1705 = vset.pattern.permute.xlu0 0
        %1706 = vperm.xlu0 %1705, %v1482
        %v1707 = vpop.permute.xlu0 %1706
        %1708 = vset.pattern.permute.xlu0 0
        %1709 = vperm.xlu0 %1708, %v1484
        %v1710 = vpop.permute.xlu0 %1709
        %1711 = vset.pattern.permute.xlu0 0
        %1712 = vperm.xlu0 %1711, %v1486
        %v1713 = vpop.permute.xlu0 %1712
        %1714 = vset.pattern.permute.xlu0 0
        %1715 = vperm.xlu0 %1714, %v1488
        %v1716 = vpop.permute.xlu0 %1715
        %1717 = vset.pattern.permute.xlu0 0
        %1718 = vperm.xlu0 %1717, %v1490
        %v1719 = vpop.permute.xlu0 %1718
        %1720 = vset.pattern.permute.xlu0 0
        %1721 = vperm.xlu0 %1720, %v1492
        %v1722 = vpop.permute.xlu0 %1721
        %1723 = vset.pattern.permute.xlu0 0
        %1724 = vperm.xlu0 %1723, %v1494
        %v1725 = vpop.permute.xlu0 %1724
        %1726 = vset.pattern.permute.xlu0 0
        %1727 = vperm.xlu0 %1726, %v1496
        %v1728 = vpop.permute.xlu0 %1727
        %1729 = vset.pattern.permute.xlu0 0
        %1730 = vperm.xlu0 %1729, %v1498
        %v1731 = vpop.permute.xlu0 %1730
        %1732 = vset.pattern.permute.xlu0 0
        %1733 = vperm.xlu0 %1732, %v1500
        %v1734 = vpop.permute.xlu0 %1733
        %1735 = vset.pattern.permute.xlu0 0
        %1736 = vperm.xlu0 %1735, %v1502
        %v1737 = vpop.permute.xlu0 %1736
        %1738 = vset.pattern.permute.xlu0 0
        %1739 = vperm.xlu0 %1738, %v1504
        %v1740 = vpop.permute.xlu0 %1739
        %1741 = vset.pattern.permute.xlu0 0
        %1742 = vperm.xlu0 %1741, %v1506
        %v1743 = vpop.permute.xlu0 %1742
        %1744 = vset.pattern.permute.xlu0 0
        %1745 = vperm.xlu0 %1744, %v1508
        %v1746 = vpop.permute.xlu0 %1745
        %1747 = vset.pattern.permute.xlu0 0
        %1748 = vperm.xlu0 %1747, %v1510
        %v1749 = vpop.permute.xlu0 %1748
        %1750 = vset.pattern.permute.xlu0 0
        %1751 = vperm.xlu0 %1750, %v1512
        %v1752 = vpop.permute.xlu0 %1751
        %1753 = vset.pattern.permute.xlu0 0
        %1754 = vperm.xlu0 %1753, %v1514
        %v1755 = vpop.permute.xlu0 %1754
        %1756 = vset.pattern.permute.xlu0 0
        %1757 = vperm.xlu0 %1756, %v1516
        %v1758 = vpop.permute.xlu0 %1757
        %1759 = vset.pattern.permute.xlu0 0
        %1760 = vperm.xlu0 %1759, %v1518
        %v1761 = vpop.permute.xlu0 %1760
        %1762 = vset.pattern.permute.xlu0 0
        %1763 = vperm.xlu0 %1762, %v1520
        %v1764 = vpop.permute.xlu0 %1763
        %1765 = vset.pattern.permute.xlu0 0
        %1766 = vperm.xlu0 %1765, %v1522
        %v1767 = vpop.permute.xlu0 %1766
        %1768 = vset.pattern.permute.xlu0 0
        %1769 = vperm.xlu0 %1768, %v1524
        %v1770 = vpop.permute.xlu0 %1769
        %1771 = vset.pattern.permute.xlu0 0
        %1772 = vperm.xlu0 %1771, %v1526
        %v1773 = vpop.permute.xlu0 %1772
        %1774 = vset.pattern.permute.xlu0 0
        %1775 = vperm.xlu0 %1774, %v1528
        %v1776 = vpop.permute.xlu0 %1775
        %1777 = vset.pattern.permute.xlu0 0
        %1778 = vperm.xlu0 %1777, %v1530
        %v1779 = vpop.permute.xlu0 %1778
        %1780 = vset.pattern.permute.xlu0 0
        %1781 = vperm.xlu0 %1780, %v1532
        %v1782 = vpop.permute.xlu0 %1781
        %1783 = vset.pattern.permute.xlu0 0
        %1784 = vperm.xlu0 %1783, %v1534
        %v1785 = vpop.permute.xlu0 %1784
        %1786 = vset.pattern.permute.xlu0 0
        %1787 = vperm.xlu0 %1786, %v1536
        %v1788 = vpop.permute.xlu0 %1787
        %1789 = vset.pattern.permute.xlu0 0
        %1790 = vperm.xlu0 %1789, %v1538
        %v1791 = vpop.permute.xlu0 %1790
        %1792 = vset.pattern.permute.xlu0 0
        %1793 = vperm.xlu0 %1792, %v1540
        %v1794 = vpop.permute.xlu0 %1793
        %1795 = vset.pattern.permute.xlu0 0
        %1796 = vperm.xlu0 %1795, %v1542
        %v1797 = vpop.permute.xlu0 %1796
        %1798 = vset.pattern.permute.xlu0 0
        %1799 = vperm.xlu0 %1798, %v1544
        %v1800 = vpop.permute.xlu0 %1799
        %v1801 = vlaneseq
        %v1802 = vshrl.u32 %v1801, 7
        %v1803 = vsub.s32 %v966, %v1802
        %v1804 = vrot.slane %v1611, %v1803
        %v1805 = vlaneseq
        %v1806 = vshrl.u32 %v1805, 7
        %v1807 = vsub.s32 %v971, %v1806
        %v1808 = vrot.slane %v1614, %v1807
        %v1809 = vsel %vm976, %v1808, %v1804
        %v1810 = vlaneseq
        %v1811 = vshrl.u32 %v1810, 7
        %v1812 = vsub.s32 %v978, %v1811
        %v1813 = vrot.slane %v1617, %v1812
        %v1814 = vsel %vm983, %v1813, %v1809
        %v1815 = vlaneseq
        %v1816 = vshrl.u32 %v1815, 7
        %v1817 = vsub.s32 %v985, %v1816
        %v1818 = vrot.slane %v1620, %v1817
        %v1819 = vsel %vm990, %v1818, %v1814
        %v1820 = vlaneseq
        %v1821 = vshrl.u32 %v1820, 7
        %v1822 = vsub.s32 %v992, %v1821
        %v1823 = vrot.slane %v1623, %v1822
        %v1824 = vsel %vm997, %v1823, %v1819
        %v1825 = vlaneseq
        %v1826 = vshrl.u32 %v1825, 7
        %v1827 = vsub.s32 %v999, %v1826
        %v1828 = vrot.slane %v1626, %v1827
        %v1829 = vsel %vm1004, %v1828, %v1824
        %v1830 = vlaneseq
        %v1831 = vshrl.u32 %v1830, 7
        %v1832 = vsub.s32 %v1006, %v1831
        %v1833 = vrot.slane %v1629, %v1832
        %v1834 = vsel %vm1011, %v1833, %v1829
        %v1835 = vlaneseq
        %v1836 = vshrl.u32 %v1835, 7
        %v1837 = vsub.s32 %v1013, %v1836
        %v1838 = vrot.slane %v1632, %v1837
        %v1839 = vsel %vm1018, %v1838, %v1834
        %v1840 = vlaneseq
        %v1841 = vshrl.u32 %v1840, 7
        %v1842 = vsub.s32 %v966, %v1841
        %v1843 = vrot.slane %v1635, %v1842
        %v1844 = vlaneseq
        %v1845 = vshrl.u32 %v1844, 7
        %v1846 = vsub.s32 %v971, %v1845
        %v1847 = vrot.slane %v1638, %v1846
        %v1848 = vsel %vm976, %v1847, %v1843
        %v1849 = vlaneseq
        %v1850 = vshrl.u32 %v1849, 7
        %v1851 = vsub.s32 %v978, %v1850
        %v1852 = vrot.slane %v1641, %v1851
        %v1853 = vsel %vm983, %v1852, %v1848
        %v1854 = vlaneseq
        %v1855 = vshrl.u32 %v1854, 7
        %v1856 = vsub.s32 %v985, %v1855
        %v1857 = vrot.slane %v1644, %v1856
        %v1858 = vsel %vm990, %v1857, %v1853
        %v1859 = vlaneseq
        %v1860 = vshrl.u32 %v1859, 7
        %v1861 = vsub.s32 %v992, %v1860
        %v1862 = vrot.slane %v1647, %v1861
        %v1863 = vsel %vm997, %v1862, %v1858
        %v1864 = vlaneseq
        %v1865 = vshrl.u32 %v1864, 7
        %v1866 = vsub.s32 %v999, %v1865
        %v1867 = vrot.slane %v1650, %v1866
        %v1868 = vsel %vm1004, %v1867, %v1863
        %v1869 = vlaneseq
        %v1870 = vshrl.u32 %v1869, 7
        %v1871 = vsub.s32 %v1006, %v1870
        %v1872 = vrot.slane %v1653, %v1871
        %v1873 = vsel %vm1011, %v1872, %v1868
        %v1874 = vlaneseq
        %v1875 = vshrl.u32 %v1874, 7
        %v1876 = vsub.s32 %v1013, %v1875
        %v1877 = vrot.slane %v1656, %v1876
        %v1878 = vsel %vm1018, %v1877, %v1873
        %v1879 = vlaneseq
        %v1880 = vshrl.u32 %v1879, 7
        %v1881 = vsub.s32 %v966, %v1880
        %v1882 = vrot.slane %v1659, %v1881
        %v1883 = vlaneseq
        %v1884 = vshrl.u32 %v1883, 7
        %v1885 = vsub.s32 %v971, %v1884
        %v1886 = vrot.slane %v1662, %v1885
        %v1887 = vsel %vm976, %v1886, %v1882
        %v1888 = vlaneseq
        %v1889 = vshrl.u32 %v1888, 7
        %v1890 = vsub.s32 %v978, %v1889
        %v1891 = vrot.slane %v1665, %v1890
        %v1892 = vsel %vm983, %v1891, %v1887
        %v1893 = vlaneseq
        %v1894 = vshrl.u32 %v1893, 7
        %v1895 = vsub.s32 %v985, %v1894
        %v1896 = vrot.slane %v1668, %v1895
        %v1897 = vsel %vm990, %v1896, %v1892
        %v1898 = vlaneseq
        %v1899 = vshrl.u32 %v1898, 7
        %v1900 = vsub.s32 %v992, %v1899
        %v1901 = vrot.slane %v1671, %v1900
        %v1902 = vsel %vm997, %v1901, %v1897
        %v1903 = vlaneseq
        %v1904 = vshrl.u32 %v1903, 7
        %v1905 = vsub.s32 %v999, %v1904
        %v1906 = vrot.slane %v1674, %v1905
        %v1907 = vsel %vm1004, %v1906, %v1902
        %v1908 = vlaneseq
        %v1909 = vshrl.u32 %v1908, 7
        %v1910 = vsub.s32 %v1006, %v1909
        %v1911 = vrot.slane %v1677, %v1910
        %v1912 = vsel %vm1011, %v1911, %v1907
        %v1913 = vlaneseq
        %v1914 = vshrl.u32 %v1913, 7
        %v1915 = vsub.s32 %v1013, %v1914
        %v1916 = vrot.slane %v1680, %v1915
        %v1917 = vsel %vm1018, %v1916, %v1912
        %v1918 = vlaneseq
        %v1919 = vshrl.u32 %v1918, 7
        %v1920 = vsub.s32 %v966, %v1919
        %v1921 = vrot.slane %v1683, %v1920
        %v1922 = vlaneseq
        %v1923 = vshrl.u32 %v1922, 7
        %v1924 = vsub.s32 %v971, %v1923
        %v1925 = vrot.slane %v1686, %v1924
        %v1926 = vsel %vm976, %v1925, %v1921
        %v1927 = vlaneseq
        %v1928 = vshrl.u32 %v1927, 7
        %v1929 = vsub.s32 %v978, %v1928
        %v1930 = vrot.slane %v1689, %v1929
        %v1931 = vsel %vm983, %v1930, %v1926
        %v1932 = vlaneseq
        %v1933 = vshrl.u32 %v1932, 7
        %v1934 = vsub.s32 %v985, %v1933
        %v1935 = vrot.slane %v1692, %v1934
        %v1936 = vsel %vm990, %v1935, %v1931
        %v1937 = vlaneseq
        %v1938 = vshrl.u32 %v1937, 7
        %v1939 = vsub.s32 %v992, %v1938
        %v1940 = vrot.slane %v1695, %v1939
        %v1941 = vsel %vm997, %v1940, %v1936
        %v1942 = vlaneseq
        %v1943 = vshrl.u32 %v1942, 7
        %v1944 = vsub.s32 %v999, %v1943
        %v1945 = vrot.slane %v1698, %v1944
        %v1946 = vsel %vm1004, %v1945, %v1941
        %v1947 = vlaneseq
        %v1948 = vshrl.u32 %v1947, 7
        %v1949 = vsub.s32 %v1006, %v1948
        %v1950 = vrot.slane %v1701, %v1949
        %v1951 = vsel %vm1011, %v1950, %v1946
        %v1952 = vlaneseq
        %v1953 = vshrl.u32 %v1952, 7
        %v1954 = vsub.s32 %v1013, %v1953
        %v1955 = vrot.slane %v1704, %v1954
        %v1956 = vsel %vm1018, %v1955, %v1951
        %v1957 = vlaneseq
        %v1958 = vshrl.u32 %v1957, 7
        %v1959 = vsub.s32 %v966, %v1958
        %v1960 = vrot.slane %v1707, %v1959
        %v1961 = vlaneseq
        %v1962 = vshrl.u32 %v1961, 7
        %v1963 = vsub.s32 %v971, %v1962
        %v1964 = vrot.slane %v1710, %v1963
        %v1965 = vsel %vm976, %v1964, %v1960
        %v1966 = vlaneseq
        %v1967 = vshrl.u32 %v1966, 7
        %v1968 = vsub.s32 %v978, %v1967
        %v1969 = vrot.slane %v1713, %v1968
        %v1970 = vsel %vm983, %v1969, %v1965
        %v1971 = vlaneseq
        %v1972 = vshrl.u32 %v1971, 7
        %v1973 = vsub.s32 %v985, %v1972
        %v1974 = vrot.slane %v1716, %v1973
        %v1975 = vsel %vm990, %v1974, %v1970
        %v1976 = vlaneseq
        %v1977 = vshrl.u32 %v1976, 7
        %v1978 = vsub.s32 %v992, %v1977
        %v1979 = vrot.slane %v1719, %v1978
        %v1980 = vsel %vm997, %v1979, %v1975
        %v1981 = vlaneseq
        %v1982 = vshrl.u32 %v1981, 7
        %v1983 = vsub.s32 %v999, %v1982
        %v1984 = vrot.slane %v1722, %v1983
        %v1985 = vsel %vm1004, %v1984, %v1980
        %v1986 = vlaneseq
        %v1987 = vshrl.u32 %v1986, 7
        %v1988 = vsub.s32 %v1006, %v1987
        %v1989 = vrot.slane %v1725, %v1988
        %v1990 = vsel %vm1011, %v1989, %v1985
        %v1991 = vlaneseq
        %v1992 = vshrl.u32 %v1991, 7
        %v1993 = vsub.s32 %v1013, %v1992
        %v1994 = vrot.slane %v1728, %v1993
        %v1995 = vsel %vm1018, %v1994, %v1990
        %v1996 = vlaneseq
        %v1997 = vshrl.u32 %v1996, 7
        %v1998 = vsub.s32 %v966, %v1997
        %v1999 = vrot.slane %v1731, %v1998
        %v2000 = vlaneseq
        %v2001 = vshrl.u32 %v2000, 7
        %v2002 = vsub.s32 %v971, %v2001
        %v2003 = vrot.slane %v1734, %v2002
        %v2004 = vsel %vm976, %v2003, %v1999
        %v2005 = vlaneseq
        %v2006 = vshrl.u32 %v2005, 7
        %v2007 = vsub.s32 %v978, %v2006
        %v2008 = vrot.slane %v1737, %v2007
        %v2009 = vsel %vm983, %v2008, %v2004
        %v2010 = vlaneseq
        %v2011 = vshrl.u32 %v2010, 7
        %v2012 = vsub.s32 %v985, %v2011
        %v2013 = vrot.slane %v1740, %v2012
        %v2014 = vsel %vm990, %v2013, %v2009
        %v2015 = vlaneseq
        %v2016 = vshrl.u32 %v2015, 7
        %v2017 = vsub.s32 %v992, %v2016
        %v2018 = vrot.slane %v1743, %v2017
        %v2019 = vsel %vm997, %v2018, %v2014
        %v2020 = vlaneseq
        %v2021 = vshrl.u32 %v2020, 7
        %v2022 = vsub.s32 %v999, %v2021
        %v2023 = vrot.slane %v1746, %v2022
        %v2024 = vsel %vm1004, %v2023, %v2019
        %v2025 = vlaneseq
        %v2026 = vshrl.u32 %v2025, 7
        %v2027 = vsub.s32 %v1006, %v2026
        %v2028 = vrot.slane %v1749, %v2027
        %v2029 = vsel %vm1011, %v2028, %v2024
        %v2030 = vlaneseq
        %v2031 = vshrl.u32 %v2030, 7
        %v2032 = vsub.s32 %v1013, %v2031
        %v2033 = vrot.slane %v1752, %v2032
        %v2034 = vsel %vm1018, %v2033, %v2029
        %v2035 = vlaneseq
        %v2036 = vshrl.u32 %v2035, 7
        %v2037 = vsub.s32 %v966, %v2036
        %v2038 = vrot.slane %v1755, %v2037
        %v2039 = vlaneseq
        %v2040 = vshrl.u32 %v2039, 7
        %v2041 = vsub.s32 %v971, %v2040
        %v2042 = vrot.slane %v1758, %v2041
        %v2043 = vsel %vm976, %v2042, %v2038
        %v2044 = vlaneseq
        %v2045 = vshrl.u32 %v2044, 7
        %v2046 = vsub.s32 %v978, %v2045
        %v2047 = vrot.slane %v1761, %v2046
        %v2048 = vsel %vm983, %v2047, %v2043
        %v2049 = vlaneseq
        %v2050 = vshrl.u32 %v2049, 7
        %v2051 = vsub.s32 %v985, %v2050
        %v2052 = vrot.slane %v1764, %v2051
        %v2053 = vsel %vm990, %v2052, %v2048
        %v2054 = vlaneseq
        %v2055 = vshrl.u32 %v2054, 7
        %v2056 = vsub.s32 %v992, %v2055
        %v2057 = vrot.slane %v1767, %v2056
        %v2058 = vsel %vm997, %v2057, %v2053
        %v2059 = vlaneseq
        %v2060 = vshrl.u32 %v2059, 7
        %v2061 = vsub.s32 %v999, %v2060
        %v2062 = vrot.slane %v1770, %v2061
        %v2063 = vsel %vm1004, %v2062, %v2058
        %v2064 = vlaneseq
        %v2065 = vshrl.u32 %v2064, 7
        %v2066 = vsub.s32 %v1006, %v2065
        %v2067 = vrot.slane %v1773, %v2066
        %v2068 = vsel %vm1011, %v2067, %v2063
        %v2069 = vlaneseq
        %v2070 = vshrl.u32 %v2069, 7
        %v2071 = vsub.s32 %v1013, %v2070
        %v2072 = vrot.slane %v1776, %v2071
        %v2073 = vsel %vm1018, %v2072, %v2068
        %v2074 = vlaneseq
        %v2075 = vshrl.u32 %v2074, 7
        %v2076 = vsub.s32 %v966, %v2075
        %v2077 = vrot.slane %v1779, %v2076
        %v2078 = vlaneseq
        %v2079 = vshrl.u32 %v2078, 7
        %v2080 = vsub.s32 %v971, %v2079
        %v2081 = vrot.slane %v1782, %v2080
        %v2082 = vsel %vm976, %v2081, %v2077
        %v2083 = vlaneseq
        %v2084 = vshrl.u32 %v2083, 7
        %v2085 = vsub.s32 %v978, %v2084
        %v2086 = vrot.slane %v1785, %v2085
        %v2087 = vsel %vm983, %v2086, %v2082
        %v2088 = vlaneseq
        %v2089 = vshrl.u32 %v2088, 7
        %v2090 = vsub.s32 %v985, %v2089
        %v2091 = vrot.slane %v1788, %v2090
        %v2092 = vsel %vm990, %v2091, %v2087
        %v2093 = vlaneseq
        %v2094 = vshrl.u32 %v2093, 7
        %v2095 = vsub.s32 %v992, %v2094
        %v2096 = vrot.slane %v1791, %v2095
        %v2097 = vsel %vm997, %v2096, %v2092
        %v2098 = vlaneseq
        %v2099 = vshrl.u32 %v2098, 7
        %v2100 = vsub.s32 %v999, %v2099
        %v2101 = vrot.slane %v1794, %v2100
        %v2102 = vsel %vm1004, %v2101, %v2097
        %v2103 = vlaneseq
        %v2104 = vshrl.u32 %v2103, 7
        %v2105 = vsub.s32 %v1006, %v2104
        %v2106 = vrot.slane %v1797, %v2105
        %v2107 = vsel %vm1011, %v2106, %v2102
        %v2108 = vlaneseq
        %v2109 = vshrl.u32 %v2108, 7
        %v2110 = vsub.s32 %v1013, %v2109
        %v2111 = vrot.slane %v1800, %v2110
        %v2112 = vsel %vm1018, %v2111, %v2107
        %v2113 = vsel %vm1293, %v1878, %v1839
        %v2114 = vsel %vm1295, %v1917, %v2113
        %v2115 = vsel %vm1297, %v1956, %v2114
        %v2116 = vsel %vm1299, %v1995, %v2115
        %v2117 = vsel %vm1301, %v2034, %v2116
        %v2118 = vsel %vm1303, %v2073, %v2117
        %v2119 = vsel %vm1305, %v2112, %v2118
        %v2121 = vsel %vm1308, %v2119, 0.0
        %2122 = vadd.xlane.f32.xlu0 %v2121
        %v2123 = vpop.xlane.xlu0 %2122
        %v2124 = vrcp.pop %v2123
        %v2125 = vpack.c.bf16 %v1420, %v1418
        %v2126 = vpack.c.bf16 %v1424, %v1422
        %v2127 = vpack.c.bf16 %v1428, %v1426
        %v2128 = vpack.c.bf16 %v1432, %v1430
        %v2129 = vpack.c.bf16 %v1436, %v1434
        %v2130 = vpack.c.bf16 %v1440, %v1438
        %v2131 = vpack.c.bf16 %v1444, %v1442
        %v2132 = vpack.c.bf16 %v1448, %v1446
        %v2133 = vpack.c.bf16 %v1452, %v1450
        %v2134 = vpack.c.bf16 %v1456, %v1454
        %v2135 = vpack.c.bf16 %v1460, %v1458
        %v2136 = vpack.c.bf16 %v1464, %v1462
        %v2137 = vpack.c.bf16 %v1468, %v1466
        %v2138 = vpack.c.bf16 %v1472, %v1470
        %v2139 = vpack.c.bf16 %v1476, %v1474
        %v2140 = vpack.c.bf16 %v1480, %v1478
        %v2141 = vpack.c.bf16 %v1484, %v1482
        %v2142 = vpack.c.bf16 %v1488, %v1486
        %v2143 = vpack.c.bf16 %v1492, %v1490
        %v2144 = vpack.c.bf16 %v1496, %v1494
        %v2145 = vpack.c.bf16 %v1500, %v1498
        %v2146 = vpack.c.bf16 %v1504, %v1502
        %v2147 = vpack.c.bf16 %v1508, %v1506
        %v2148 = vpack.c.bf16 %v1512, %v1510
        %v2149 = vpack.c.bf16 %v1516, %v1514
        %v2150 = vpack.c.bf16 %v1520, %v1518
        %v2151 = vpack.c.bf16 %v1524, %v1522
        %v2152 = vpack.c.bf16 %v1528, %v1526
        %v2153 = vpack.c.bf16 %v1532, %v1530
        %v2154 = vpack.c.bf16 %v1536, %v1534
        %v2155 = vpack.c.bf16 %v1540, %v1538
        %v2156 = vpack.c.bf16 %v1544, %v1542
        %v2157 = vld [vmem:[%s226] sm:$0xf]
        %v2158 = vld [vmem:[%s226 + $0x4] sm:$0xf]
        %v2159 = vld [vmem:[%s226 + $0x8] sm:$0xf]
        %v2160 = vld [vmem:[%s226 + $0xc] sm:$0xf]
        %v2161 = vld [vmem:[%s226 + $0x10] sm:$0xf]
        %v2162 = vld [vmem:[%s226 + $0x14] sm:$0xf]
        %v2163 = vld [vmem:[%s226 + $0x18] sm:$0xf]
        %v2164 = vld [vmem:[%s226 + $0x1c] sm:$0xf]
        %v2197 = vunpack.c.l.b16 %v2125
        %v2198 = vunpack.c.h.b16 %v2125
        %v2199 = vunpack.c.l.b16 %v2126
        %v2200 = vunpack.c.h.b16 %v2126
        %v2201 = vunpack.c.l.b16 %v2127
        %v2202 = vunpack.c.h.b16 %v2127
        %v2203 = vunpack.c.l.b16 %v2128
        %v2204 = vunpack.c.h.b16 %v2128
        %v2205 = vunpack.c.l.b16 %v2129
        %v2206 = vunpack.c.h.b16 %v2129
        %v2207 = vunpack.c.l.b16 %v2130
        %v2208 = vunpack.c.h.b16 %v2130
        %v2209 = vunpack.c.l.b16 %v2131
        %v2210 = vunpack.c.h.b16 %v2131
        %v2211 = vunpack.c.l.b16 %v2132
        %v2212 = vunpack.c.h.b16 %v2132
        %v2213 = vunpack.c.l.b16 %v2133
        %v2214 = vunpack.c.h.b16 %v2133
        %v2215 = vunpack.c.l.b16 %v2134
        %v2216 = vunpack.c.h.b16 %v2134
        %v2217 = vunpack.c.l.b16 %v2135
        %v2218 = vunpack.c.h.b16 %v2135
        %v2219 = vunpack.c.l.b16 %v2136
        %v2220 = vunpack.c.h.b16 %v2136
        %v2221 = vunpack.c.l.b16 %v2137
        %v2222 = vunpack.c.h.b16 %v2137
        %v2223 = vunpack.c.l.b16 %v2138
        %v2224 = vunpack.c.h.b16 %v2138
        %v2225 = vunpack.c.l.b16 %v2139
        %v2226 = vunpack.c.h.b16 %v2139
        %v2227 = vunpack.c.l.b16 %v2140
        %v2228 = vunpack.c.h.b16 %v2140
        %v2229 = vunpack.c.l.b16 %v2141
        %v2230 = vunpack.c.h.b16 %v2141
        %v2231 = vunpack.c.l.b16 %v2142
        %v2232 = vunpack.c.h.b16 %v2142
        %v2233 = vunpack.c.l.b16 %v2143
        %v2234 = vunpack.c.h.b16 %v2143
        %v2235 = vunpack.c.l.b16 %v2144
        %v2236 = vunpack.c.h.b16 %v2144
        %v2237 = vunpack.c.l.b16 %v2145
        %v2238 = vunpack.c.h.b16 %v2145
        %v2239 = vunpack.c.l.b16 %v2146
        %v2240 = vunpack.c.h.b16 %v2146
        %v2241 = vunpack.c.l.b16 %v2147
        %v2242 = vunpack.c.h.b16 %v2147
        %v2243 = vunpack.c.l.b16 %v2148
        %v2244 = vunpack.c.h.b16 %v2148
        %v2245 = vunpack.c.l.b16 %v2149
        %v2246 = vunpack.c.h.b16 %v2149
        %v2247 = vunpack.c.l.b16 %v2150
        %v2248 = vunpack.c.h.b16 %v2150
        %v2249 = vunpack.c.l.b16 %v2151
        %v2250 = vunpack.c.h.b16 %v2151
        %v2251 = vunpack.c.l.b16 %v2152
        %v2252 = vunpack.c.h.b16 %v2152
        %v2253 = vunpack.c.l.b16 %v2153
        %v2254 = vunpack.c.h.b16 %v2153
        %v2255 = vunpack.c.l.b16 %v2154
        %v2256 = vunpack.c.h.b16 %v2154
        %v2257 = vunpack.c.l.b16 %v2155
        %v2258 = vunpack.c.h.b16 %v2155
        %v2259 = vunpack.c.l.b16 %v2156
        %v2260 = vunpack.c.h.b16 %v2156
        %2261 = vset.pattern.permute.xlu0 0
        %2262 = vperm.xlu0 %2261, %v2197
        %v2263 = vpop.permute.xlu0 %2262
        %2264 = vset.pattern.permute.xlu0 0
        %2265 = vperm.xlu0 %2264, %v2198
        %v2266 = vpop.permute.xlu0 %2265
        %2267 = vset.pattern.permute.xlu0 0
        %2268 = vperm.xlu0 %2267, %v2199
        %v2269 = vpop.permute.xlu0 %2268
        %2270 = vset.pattern.permute.xlu0 0
        %2271 = vperm.xlu0 %2270, %v2200
        %v2272 = vpop.permute.xlu0 %2271
        %2273 = vset.pattern.permute.xlu0 0
        %2274 = vperm.xlu0 %2273, %v2201
        %v2275 = vpop.permute.xlu0 %2274
        %2276 = vset.pattern.permute.xlu0 0
        %2277 = vperm.xlu0 %2276, %v2202
        %v2278 = vpop.permute.xlu0 %2277
        %2279 = vset.pattern.permute.xlu0 0
        %2280 = vperm.xlu0 %2279, %v2203
        %v2281 = vpop.permute.xlu0 %2280
        %2282 = vset.pattern.permute.xlu0 0
        %2283 = vperm.xlu0 %2282, %v2204
        %v2284 = vpop.permute.xlu0 %2283
        %2285 = vset.pattern.permute.xlu0 0
        %2286 = vperm.xlu0 %2285, %v2205
        %v2287 = vpop.permute.xlu0 %2286
        %2288 = vset.pattern.permute.xlu0 0
        %2289 = vperm.xlu0 %2288, %v2206
        %v2290 = vpop.permute.xlu0 %2289
        %2291 = vset.pattern.permute.xlu0 0
        %2292 = vperm.xlu0 %2291, %v2207
        %v2293 = vpop.permute.xlu0 %2292
        %2294 = vset.pattern.permute.xlu0 0
        %2295 = vperm.xlu0 %2294, %v2208
        %v2296 = vpop.permute.xlu0 %2295
        %2297 = vset.pattern.permute.xlu0 0
        %2298 = vperm.xlu0 %2297, %v2209
        %v2299 = vpop.permute.xlu0 %2298
        %2300 = vset.pattern.permute.xlu0 0
        %2301 = vperm.xlu0 %2300, %v2210
        %v2302 = vpop.permute.xlu0 %2301
        %2303 = vset.pattern.permute.xlu0 0
        %2304 = vperm.xlu0 %2303, %v2211
        %v2305 = vpop.permute.xlu0 %2304
        %2306 = vset.pattern.permute.xlu0 0
        %2307 = vperm.xlu0 %2306, %v2212
        %v2308 = vpop.permute.xlu0 %2307
        %2309 = vset.pattern.permute.xlu0 0
        %2310 = vperm.xlu0 %2309, %v2213
        %v2311 = vpop.permute.xlu0 %2310
        %2312 = vset.pattern.permute.xlu0 0
        %2313 = vperm.xlu0 %2312, %v2214
        %v2314 = vpop.permute.xlu0 %2313
        %2315 = vset.pattern.permute.xlu0 0
        %2316 = vperm.xlu0 %2315, %v2215
        %v2317 = vpop.permute.xlu0 %2316
        %2318 = vset.pattern.permute.xlu0 0
        %2319 = vperm.xlu0 %2318, %v2216
        %v2320 = vpop.permute.xlu0 %2319
        %2321 = vset.pattern.permute.xlu0 0
        %2322 = vperm.xlu0 %2321, %v2217
        %v2323 = vpop.permute.xlu0 %2322
        %2324 = vset.pattern.permute.xlu0 0
        %2325 = vperm.xlu0 %2324, %v2218
        %v2326 = vpop.permute.xlu0 %2325
        %2327 = vset.pattern.permute.xlu0 0
        %2328 = vperm.xlu0 %2327, %v2219
        %v2329 = vpop.permute.xlu0 %2328
        %2330 = vset.pattern.permute.xlu0 0
        %2331 = vperm.xlu0 %2330, %v2220
        %v2332 = vpop.permute.xlu0 %2331
        %2333 = vset.pattern.permute.xlu0 0
        %2334 = vperm.xlu0 %2333, %v2221
        %v2335 = vpop.permute.xlu0 %2334
        %2336 = vset.pattern.permute.xlu0 0
        %2337 = vperm.xlu0 %2336, %v2222
        %v2338 = vpop.permute.xlu0 %2337
        %2339 = vset.pattern.permute.xlu0 0
        %2340 = vperm.xlu0 %2339, %v2223
        %v2341 = vpop.permute.xlu0 %2340
        %2342 = vset.pattern.permute.xlu0 0
        %2343 = vperm.xlu0 %2342, %v2224
        %v2344 = vpop.permute.xlu0 %2343
        %2345 = vset.pattern.permute.xlu0 0
        %2346 = vperm.xlu0 %2345, %v2225
        %v2347 = vpop.permute.xlu0 %2346
        %2348 = vset.pattern.permute.xlu0 0
        %2349 = vperm.xlu0 %2348, %v2226
        %v2350 = vpop.permute.xlu0 %2349
        %2351 = vset.pattern.permute.xlu0 0
        %2352 = vperm.xlu0 %2351, %v2227
        %v2353 = vpop.permute.xlu0 %2352
        %2354 = vset.pattern.permute.xlu0 0
        %2355 = vperm.xlu0 %2354, %v2228
        %v2356 = vpop.permute.xlu0 %2355
        %2357 = vset.pattern.permute.xlu0 0
        %2358 = vperm.xlu0 %2357, %v2229
        %v2359 = vpop.permute.xlu0 %2358
        %2360 = vset.pattern.permute.xlu0 0
        %2361 = vperm.xlu0 %2360, %v2230
        %v2362 = vpop.permute.xlu0 %2361
        %2363 = vset.pattern.permute.xlu0 0
        %2364 = vperm.xlu0 %2363, %v2231
        %v2365 = vpop.permute.xlu0 %2364
        %2366 = vset.pattern.permute.xlu0 0
        %2367 = vperm.xlu0 %2366, %v2232
        %v2368 = vpop.permute.xlu0 %2367
        %2369 = vset.pattern.permute.xlu0 0
        %2370 = vperm.xlu0 %2369, %v2233
        %v2371 = vpop.permute.xlu0 %2370
        %2372 = vset.pattern.permute.xlu0 0
        %2373 = vperm.xlu0 %2372, %v2234
        %v2374 = vpop.permute.xlu0 %2373
        %2375 = vset.pattern.permute.xlu0 0
        %2376 = vperm.xlu0 %2375, %v2235
        %v2377 = vpop.permute.xlu0 %2376
        %2378 = vset.pattern.permute.xlu0 0
        %2379 = vperm.xlu0 %2378, %v2236
        %v2380 = vpop.permute.xlu0 %2379
        %2381 = vset.pattern.permute.xlu0 0
        %2382 = vperm.xlu0 %2381, %v2237
        %v2383 = vpop.permute.xlu0 %2382
        %2384 = vset.pattern.permute.xlu0 0
        %2385 = vperm.xlu0 %2384, %v2238
        %v2386 = vpop.permute.xlu0 %2385
        %2387 = vset.pattern.permute.xlu0 0
        %2388 = vperm.xlu0 %2387, %v2239
        %v2389 = vpop.permute.xlu0 %2388
        %2390 = vset.pattern.permute.xlu0 0
        %2391 = vperm.xlu0 %2390, %v2240
        %v2392 = vpop.permute.xlu0 %2391
        %2393 = vset.pattern.permute.xlu0 0
        %2394 = vperm.xlu0 %2393, %v2241
        %v2395 = vpop.permute.xlu0 %2394
        %2396 = vset.pattern.permute.xlu0 0
        %2397 = vperm.xlu0 %2396, %v2242
        %v2398 = vpop.permute.xlu0 %2397
        %2399 = vset.pattern.permute.xlu0 0
        %2400 = vperm.xlu0 %2399, %v2243
        %v2401 = vpop.permute.xlu0 %2400
        %2402 = vset.pattern.permute.xlu0 0
        %2403 = vperm.xlu0 %2402, %v2244
        %v2404 = vpop.permute.xlu0 %2403
        %2405 = vset.pattern.permute.xlu0 0
        %2406 = vperm.xlu0 %2405, %v2245
        %v2407 = vpop.permute.xlu0 %2406
        %2408 = vset.pattern.permute.xlu0 0
        %2409 = vperm.xlu0 %2408, %v2246
        %v2410 = vpop.permute.xlu0 %2409
        %2411 = vset.pattern.permute.xlu0 0
        %2412 = vperm.xlu0 %2411, %v2247
        %v2413 = vpop.permute.xlu0 %2412
        %2414 = vset.pattern.permute.xlu0 0
        %2415 = vperm.xlu0 %2414, %v2248
        %v2416 = vpop.permute.xlu0 %2415
        %2417 = vset.pattern.permute.xlu0 0
        %2418 = vperm.xlu0 %2417, %v2249
        %v2419 = vpop.permute.xlu0 %2418
        %2420 = vset.pattern.permute.xlu0 0
        %2421 = vperm.xlu0 %2420, %v2250
        %v2422 = vpop.permute.xlu0 %2421
        %2423 = vset.pattern.permute.xlu0 0
        %2424 = vperm.xlu0 %2423, %v2251
        %v2425 = vpop.permute.xlu0 %2424
        %2426 = vset.pattern.permute.xlu0 0
        %2427 = vperm.xlu0 %2426, %v2252
        %v2428 = vpop.permute.xlu0 %2427
        %2429 = vset.pattern.permute.xlu0 0
        %2430 = vperm.xlu0 %2429, %v2253
        %v2431 = vpop.permute.xlu0 %2430
        %2432 = vset.pattern.permute.xlu0 0
        %2433 = vperm.xlu0 %2432, %v2254
        %v2434 = vpop.permute.xlu0 %2433
        %2435 = vset.pattern.permute.xlu0 0
        %2436 = vperm.xlu0 %2435, %v2255
        %v2437 = vpop.permute.xlu0 %2436
        %2438 = vset.pattern.permute.xlu0 0
        %2439 = vperm.xlu0 %2438, %v2256
        %v2440 = vpop.permute.xlu0 %2439
        %2441 = vset.pattern.permute.xlu0 0
        %2442 = vperm.xlu0 %2441, %v2257
        %v2443 = vpop.permute.xlu0 %2442
        %2444 = vset.pattern.permute.xlu0 0
        %2445 = vperm.xlu0 %2444, %v2258
        %v2446 = vpop.permute.xlu0 %2445
        %2447 = vset.pattern.permute.xlu0 0
        %2448 = vperm.xlu0 %2447, %v2259
        %v2449 = vpop.permute.xlu0 %2448
        %2450 = vset.pattern.permute.xlu0 0
        %2451 = vperm.xlu0 %2450, %v2260
        %v2452 = vpop.permute.xlu0 %2451
        %v2453 = vlaneseq
        %v2454 = vshrl.u32 %v2453, 7
        %v2455 = vsub.s32 %v966, %v2454
        %v2456 = vrot.slane %v2263, %v2455
        %v2457 = vlaneseq
        %v2458 = vshrl.u32 %v2457, 7
        %v2459 = vsub.s32 %v971, %v2458
        %v2460 = vrot.slane %v2266, %v2459
        %v2461 = vsel %vm976, %v2460, %v2456
        %v2462 = vlaneseq
        %v2463 = vshrl.u32 %v2462, 7
        %v2464 = vsub.s32 %v978, %v2463
        %v2465 = vrot.slane %v2269, %v2464
        %v2466 = vsel %vm983, %v2465, %v2461
        %v2467 = vlaneseq
        %v2468 = vshrl.u32 %v2467, 7
        %v2469 = vsub.s32 %v985, %v2468
        %v2470 = vrot.slane %v2272, %v2469
        %v2471 = vsel %vm990, %v2470, %v2466
        %v2472 = vlaneseq
        %v2473 = vshrl.u32 %v2472, 7
        %v2474 = vsub.s32 %v992, %v2473
        %v2475 = vrot.slane %v2275, %v2474
        %v2476 = vsel %vm997, %v2475, %v2471
        %v2477 = vlaneseq
        %v2478 = vshrl.u32 %v2477, 7
        %v2479 = vsub.s32 %v999, %v2478
        %v2480 = vrot.slane %v2278, %v2479
        %v2481 = vsel %vm1004, %v2480, %v2476
        %v2482 = vlaneseq
        %v2483 = vshrl.u32 %v2482, 7
        %v2484 = vsub.s32 %v1006, %v2483
        %v2485 = vrot.slane %v2281, %v2484
        %v2486 = vsel %vm1011, %v2485, %v2481
        %v2487 = vlaneseq
        %v2488 = vshrl.u32 %v2487, 7
        %v2489 = vsub.s32 %v1013, %v2488
        %v2490 = vrot.slane %v2284, %v2489
        %v2491 = vsel %vm1018, %v2490, %v2486
        %v2492 = vlaneseq
        %v2493 = vshrl.u32 %v2492, 7
        %v2494 = vsub.s32 %v966, %v2493
        %v2495 = vrot.slane %v2287, %v2494
        %v2496 = vlaneseq
        %v2497 = vshrl.u32 %v2496, 7
        %v2498 = vsub.s32 %v971, %v2497
        %v2499 = vrot.slane %v2290, %v2498
        %v2500 = vsel %vm976, %v2499, %v2495
        %v2501 = vlaneseq
        %v2502 = vshrl.u32 %v2501, 7
        %v2503 = vsub.s32 %v978, %v2502
        %v2504 = vrot.slane %v2293, %v2503
        %v2505 = vsel %vm983, %v2504, %v2500
        %v2506 = vlaneseq
        %v2507 = vshrl.u32 %v2506, 7
        %v2508 = vsub.s32 %v985, %v2507
        %v2509 = vrot.slane %v2296, %v2508
        %v2510 = vsel %vm990, %v2509, %v2505
        %v2511 = vlaneseq
        %v2512 = vshrl.u32 %v2511, 7
        %v2513 = vsub.s32 %v992, %v2512
        %v2514 = vrot.slane %v2299, %v2513
        %v2515 = vsel %vm997, %v2514, %v2510
        %v2516 = vlaneseq
        %v2517 = vshrl.u32 %v2516, 7
        %v2518 = vsub.s32 %v999, %v2517
        %v2519 = vrot.slane %v2302, %v2518
        %v2520 = vsel %vm1004, %v2519, %v2515
        %v2521 = vlaneseq
        %v2522 = vshrl.u32 %v2521, 7
        %v2523 = vsub.s32 %v1006, %v2522
        %v2524 = vrot.slane %v2305, %v2523
        %v2525 = vsel %vm1011, %v2524, %v2520
        %v2526 = vlaneseq
        %v2527 = vshrl.u32 %v2526, 7
        %v2528 = vsub.s32 %v1013, %v2527
        %v2529 = vrot.slane %v2308, %v2528
        %v2530 = vsel %vm1018, %v2529, %v2525
        %v2531 = vlaneseq
        %v2532 = vshrl.u32 %v2531, 7
        %v2533 = vsub.s32 %v966, %v2532
        %v2534 = vrot.slane %v2311, %v2533
        %v2535 = vlaneseq
        %v2536 = vshrl.u32 %v2535, 7
        %v2537 = vsub.s32 %v971, %v2536
        %v2538 = vrot.slane %v2314, %v2537
        %v2539 = vsel %vm976, %v2538, %v2534
        %v2540 = vlaneseq
        %v2541 = vshrl.u32 %v2540, 7
        %v2542 = vsub.s32 %v978, %v2541
        %v2543 = vrot.slane %v2317, %v2542
        %v2544 = vsel %vm983, %v2543, %v2539
        %v2545 = vlaneseq
        %v2546 = vshrl.u32 %v2545, 7
        %v2547 = vsub.s32 %v985, %v2546
        %v2548 = vrot.slane %v2320, %v2547
        %v2549 = vsel %vm990, %v2548, %v2544
        %v2550 = vlaneseq
        %v2551 = vshrl.u32 %v2550, 7
        %v2552 = vsub.s32 %v992, %v2551
        %v2553 = vrot.slane %v2323, %v2552
        %v2554 = vsel %vm997, %v2553, %v2549
        %v2555 = vlaneseq
        %v2556 = vshrl.u32 %v2555, 7
        %v2557 = vsub.s32 %v999, %v2556
        %v2558 = vrot.slane %v2326, %v2557
        %v2559 = vsel %vm1004, %v2558, %v2554
        %v2560 = vlaneseq
        %v2561 = vshrl.u32 %v2560, 7
        %v2562 = vsub.s32 %v1006, %v2561
        %v2563 = vrot.slane %v2329, %v2562
        %v2564 = vsel %vm1011, %v2563, %v2559
        %v2565 = vlaneseq
        %v2566 = vshrl.u32 %v2565, 7
        %v2567 = vsub.s32 %v1013, %v2566
        %v2568 = vrot.slane %v2332, %v2567
        %v2569 = vsel %vm1018, %v2568, %v2564
        %v2570 = vlaneseq
        %v2571 = vshrl.u32 %v2570, 7
        %v2572 = vsub.s32 %v966, %v2571
        %v2573 = vrot.slane %v2335, %v2572
        %v2574 = vlaneseq
        %v2575 = vshrl.u32 %v2574, 7
        %v2576 = vsub.s32 %v971, %v2575
        %v2577 = vrot.slane %v2338, %v2576
        %v2578 = vsel %vm976, %v2577, %v2573
        %v2579 = vlaneseq
        %v2580 = vshrl.u32 %v2579, 7
        %v2581 = vsub.s32 %v978, %v2580
        %v2582 = vrot.slane %v2341, %v2581
        %v2583 = vsel %vm983, %v2582, %v2578
        %v2584 = vlaneseq
        %v2585 = vshrl.u32 %v2584, 7
        %v2586 = vsub.s32 %v985, %v2585
        %v2587 = vrot.slane %v2344, %v2586
        %v2588 = vsel %vm990, %v2587, %v2583
        %v2589 = vlaneseq
        %v2590 = vshrl.u32 %v2589, 7
        %v2591 = vsub.s32 %v992, %v2590
        %v2592 = vrot.slane %v2347, %v2591
        %v2593 = vsel %vm997, %v2592, %v2588
        %v2594 = vlaneseq
        %v2595 = vshrl.u32 %v2594, 7
        %v2596 = vsub.s32 %v999, %v2595
        %v2597 = vrot.slane %v2350, %v2596
        %v2598 = vsel %vm1004, %v2597, %v2593
        %v2599 = vlaneseq
        %v2600 = vshrl.u32 %v2599, 7
        %v2601 = vsub.s32 %v1006, %v2600
        %v2602 = vrot.slane %v2353, %v2601
        %v2603 = vsel %vm1011, %v2602, %v2598
        %v2604 = vlaneseq
        %v2605 = vshrl.u32 %v2604, 7
        %v2606 = vsub.s32 %v1013, %v2605
        %v2607 = vrot.slane %v2356, %v2606
        %v2608 = vsel %vm1018, %v2607, %v2603
        %v2609 = vlaneseq
        %v2610 = vshrl.u32 %v2609, 7
        %v2611 = vsub.s32 %v966, %v2610
        %v2612 = vrot.slane %v2359, %v2611
        %v2613 = vlaneseq
        %v2614 = vshrl.u32 %v2613, 7
        %v2615 = vsub.s32 %v971, %v2614
        %v2616 = vrot.slane %v2362, %v2615
        %v2617 = vsel %vm976, %v2616, %v2612
        %v2618 = vlaneseq
        %v2619 = vshrl.u32 %v2618, 7
        %v2620 = vsub.s32 %v978, %v2619
        %v2621 = vrot.slane %v2365, %v2620
        %v2622 = vsel %vm983, %v2621, %v2617
        %v2623 = vlaneseq
        %v2624 = vshrl.u32 %v2623, 7
        %v2625 = vsub.s32 %v985, %v2624
        %v2626 = vrot.slane %v2368, %v2625
        %v2627 = vsel %vm990, %v2626, %v2622
        %v2628 = vlaneseq
        %v2629 = vshrl.u32 %v2628, 7
        %v2630 = vsub.s32 %v992, %v2629
        %v2631 = vrot.slane %v2371, %v2630
        %v2632 = vsel %vm997, %v2631, %v2627
        %v2633 = vlaneseq
        %v2634 = vshrl.u32 %v2633, 7
        %v2635 = vsub.s32 %v999, %v2634
        %v2636 = vrot.slane %v2374, %v2635
        %v2637 = vsel %vm1004, %v2636, %v2632
        %v2638 = vlaneseq
        %v2639 = vshrl.u32 %v2638, 7
        %v2640 = vsub.s32 %v1006, %v2639
        %v2641 = vrot.slane %v2377, %v2640
        %v2642 = vsel %vm1011, %v2641, %v2637
        %v2643 = vlaneseq
        %v2644 = vshrl.u32 %v2643, 7
        %v2645 = vsub.s32 %v1013, %v2644
        %v2646 = vrot.slane %v2380, %v2645
        %v2647 = vsel %vm1018, %v2646, %v2642
        %v2648 = vlaneseq
        %v2649 = vshrl.u32 %v2648, 7
        %v2650 = vsub.s32 %v966, %v2649
        %v2651 = vrot.slane %v2383, %v2650
        %v2652 = vlaneseq
        %v2653 = vshrl.u32 %v2652, 7
        %v2654 = vsub.s32 %v971, %v2653
        %v2655 = vrot.slane %v2386, %v2654
        %v2656 = vsel %vm976, %v2655, %v2651
        %v2657 = vlaneseq
        %v2658 = vshrl.u32 %v2657, 7
        %v2659 = vsub.s32 %v978, %v2658
        %v2660 = vrot.slane %v2389, %v2659
        %v2661 = vsel %vm983, %v2660, %v2656
        %v2662 = vlaneseq
        %v2663 = vshrl.u32 %v2662, 7
        %v2664 = vsub.s32 %v985, %v2663
        %v2665 = vrot.slane %v2392, %v2664
        %v2666 = vsel %vm990, %v2665, %v2661
        %v2667 = vlaneseq
        %v2668 = vshrl.u32 %v2667, 7
        %v2669 = vsub.s32 %v992, %v2668
        %v2670 = vrot.slane %v2395, %v2669
        %v2671 = vsel %vm997, %v2670, %v2666
        %v2672 = vlaneseq
        %v2673 = vshrl.u32 %v2672, 7
        %v2674 = vsub.s32 %v999, %v2673
        %v2675 = vrot.slane %v2398, %v2674
        %v2676 = vsel %vm1004, %v2675, %v2671
        %v2677 = vlaneseq
        %v2678 = vshrl.u32 %v2677, 7
        %v2679 = vsub.s32 %v1006, %v2678
        %v2680 = vrot.slane %v2401, %v2679
        %v2681 = vsel %vm1011, %v2680, %v2676
        %v2682 = vlaneseq
        %v2683 = vshrl.u32 %v2682, 7
        %v2684 = vsub.s32 %v1013, %v2683
        %v2685 = vrot.slane %v2404, %v2684
        %v2686 = vsel %vm1018, %v2685, %v2681
        %v2687 = vlaneseq
        %v2688 = vshrl.u32 %v2687, 7
        %v2689 = vsub.s32 %v966, %v2688
        %v2690 = vrot.slane %v2407, %v2689
        %v2691 = vlaneseq
        %v2692 = vshrl.u32 %v2691, 7
        %v2693 = vsub.s32 %v971, %v2692
        %v2694 = vrot.slane %v2410, %v2693
        %v2695 = vsel %vm976, %v2694, %v2690
        %v2696 = vlaneseq
        %v2697 = vshrl.u32 %v2696, 7
        %v2698 = vsub.s32 %v978, %v2697
        %v2699 = vrot.slane %v2413, %v2698
        %v2700 = vsel %vm983, %v2699, %v2695
        %v2701 = vlaneseq
        %v2702 = vshrl.u32 %v2701, 7
        %v2703 = vsub.s32 %v985, %v2702
        %v2704 = vrot.slane %v2416, %v2703
        %v2705 = vsel %vm990, %v2704, %v2700
        %v2706 = vlaneseq
        %v2707 = vshrl.u32 %v2706, 7
        %v2708 = vsub.s32 %v992, %v2707
        %v2709 = vrot.slane %v2419, %v2708
        %v2710 = vsel %vm997, %v2709, %v2705
        %v2711 = vlaneseq
        %v2712 = vshrl.u32 %v2711, 7
        %v2713 = vsub.s32 %v999, %v2712
        %v2714 = vrot.slane %v2422, %v2713
        %v2715 = vsel %vm1004, %v2714, %v2710
        %v2716 = vlaneseq
        %v2717 = vshrl.u32 %v2716, 7
        %v2718 = vsub.s32 %v1006, %v2717
        %v2719 = vrot.slane %v2425, %v2718
        %v2720 = vsel %vm1011, %v2719, %v2715
        %v2721 = vlaneseq
        %v2722 = vshrl.u32 %v2721, 7
        %v2723 = vsub.s32 %v1013, %v2722
        %v2724 = vrot.slane %v2428, %v2723
        %v2725 = vsel %vm1018, %v2724, %v2720
        %v2726 = vlaneseq
        %v2727 = vshrl.u32 %v2726, 7
        %v2728 = vsub.s32 %v966, %v2727
        %v2729 = vrot.slane %v2431, %v2728
        %v2730 = vlaneseq
        %v2731 = vshrl.u32 %v2730, 7
        %v2732 = vsub.s32 %v971, %v2731
        %v2733 = vrot.slane %v2434, %v2732
        %v2734 = vsel %vm976, %v2733, %v2729
        %v2735 = vlaneseq
        %v2736 = vshrl.u32 %v2735, 7
        %v2737 = vsub.s32 %v978, %v2736
        %v2738 = vrot.slane %v2437, %v2737
        %v2739 = vsel %vm983, %v2738, %v2734
        %v2740 = vlaneseq
        %v2741 = vshrl.u32 %v2740, 7
        %v2742 = vsub.s32 %v985, %v2741
        %v2743 = vrot.slane %v2440, %v2742
        %v2744 = vsel %vm990, %v2743, %v2739
        %v2745 = vlaneseq
        %v2746 = vshrl.u32 %v2745, 7
        %v2747 = vsub.s32 %v992, %v2746
        %v2748 = vrot.slane %v2443, %v2747
        %v2749 = vsel %vm997, %v2748, %v2744
        %v2750 = vlaneseq
        %v2751 = vshrl.u32 %v2750, 7
        %v2752 = vsub.s32 %v999, %v2751
        %v2753 = vrot.slane %v2446, %v2752
        %v2754 = vsel %vm1004, %v2753, %v2749
        %v2755 = vlaneseq
        %v2756 = vshrl.u32 %v2755, 7
        %v2757 = vsub.s32 %v1006, %v2756
        %v2758 = vrot.slane %v2449, %v2757
        %v2759 = vsel %vm1011, %v2758, %v2754
        %v2760 = vlaneseq
        %v2761 = vshrl.u32 %v2760, 7
        %v2762 = vsub.s32 %v1013, %v2761
        %v2763 = vrot.slane %v2452, %v2762
        %v2764 = vsel %vm1018, %v2763, %v2759
        %v2765 = vsel %vm1293, %v2530, %v2491
        %v2766 = vsel %vm1295, %v2569, %v2765
        %v2767 = vsel %vm1297, %v2608, %v2766
        %v2768 = vsel %vm1299, %v2647, %v2767
        %v2769 = vsel %vm1301, %v2686, %v2768
        %v2770 = vsel %vm1303, %v2725, %v2769
        %v2771 = vsel %vm1305, %v2764, %v2770
        %v2772 = vpack.c.b16 %v2771, %v2771
        %v2781 = vunpack.c.l.b16 %v2157
        %v2782 = vunpack.c.l.b16 %v2158
        %v2783 = vunpack.c.l.b16 %v2159
        %v2784 = vunpack.c.l.b16 %v2160
        %v2785 = vunpack.c.l.b16 %v2161
        %v2786 = vunpack.c.l.b16 %v2162
        %v2787 = vunpack.c.l.b16 %v2163
        %v2788 = vunpack.c.l.b16 %v2164
        %v2789 = vpack.c.b16 %v2782, %v2781
        %v2790 = vpack.c.b16 %v2784, %v2783
        %v2791 = vpack.c.b16 %v2786, %v2785
        %v2792 = vpack.c.b16 %v2788, %v2787
        %v2798 = vsel %vm1308, %v2772, 0
        %2800 = vmatprep.subr.bf16.mxu0 0
        %2801 = vmatpush1.bf16.msra.mxu0 %v2789
        %2802 = vmatprep.subr.bf16.mxu0 0
        %2803 = vmatpush1.bf16.msra.mxu0 %v2790
        %2804 = vmatprep.subr.bf16.mxu0 0
        %2805 = vmatpush1.bf16.msra.mxu0 %v2791
        %2806 = vmatprep.subr.bf16.mxu0 0
        %2807 = vmatpush1.bf16.msra.mxu0 %v2792
        %2808 = vmatprep.subr.bf16.mxu0 0
        %2809 = vmatpush1.bf16.msra.mxu0 0
        %2810 = vmatprep.subr.bf16.mxu0 0
        %2811 = vmatpush1.bf16.msra.mxu0 0
        %2812 = vmatprep.subr.bf16.mxu0 0
        %2813 = vmatpush1.bf16.msra.mxu0 0
        %2814 = vmatprep.subr.bf16.mxu0 0
        %2815 = vmatpush1.bf16.msra.mxu0 0
        %2816 = vmatprep.subr.bf16.mxu0 0
        %2817 = vmatpush1.bf16.msra.mxu0 0
        %2818 = vmatprep.subr.bf16.mxu0 0
        %2819 = vmatpush1.bf16.msra.mxu0 0
        %2820 = vmatprep.subr.bf16.mxu0 0
        %2821 = vmatpush1.bf16.msra.mxu0 0
        %2822 = vmatprep.subr.bf16.mxu0 0
        %2823 = vmatpush1.bf16.msra.mxu0 0
        %2824 = vmatprep.subr.bf16.mxu0 0
        %2825 = vmatpush1.bf16.msra.mxu0 0
        %2826 = vmatprep.subr.bf16.mxu0 0
        %2827 = vmatpush1.bf16.msra.mxu0 0
        %2828 = vmatprep.subr.bf16.mxu0 0
        %2829 = vmatpush1.bf16.msra.mxu0 0
        %2830 = vmatprep.subr.bf16.mxu0 0
        %2831 = vmatpush1.bf16.msra.mxu0 0
        %2832 = vmatprep.mubr.bf16.mxu0 0
        %2833 = vmatmul.mubr.bf16.gmra.mrb[0].mxu0 %v2798
        %v2834 = vpop.f32.mrb[0].mxu0
        %v2835 = vadd.f32 0.0, %v2834
        %v2836 = vpop.f32.mrb[0].mxu0
        %v2837 = vpop.f32.mrb[0].mxu0
        %v2838 = vpop.f32.mrb[0].mxu0
        %2839 = vdwg.mxu0
        %v2840 = vmul.f32 %v2835, %v2124
        %vm2841 = vcmask 130048
        %2842 = vst.msk [vmem:[%s220] sm:$0xff] %vm2841, %v2840
        %s2843 = scalar_lea.vmem [#allocation2], 64
        %v2844 = vld [vmem:[%s2843] sm:$0xff]
        %v2845 = vld [vmem:[%s2843 + $0x8] sm:$0xff]
        %v2846 = vld [vmem:[%s2843 + $0x10] sm:$0xff]
        %v2847 = vld [vmem:[%s2843 + $0x18] sm:$0xff]
        %v2848 = vld [vmem:[%s2843 + $0x20] sm:$0xff]
        %v2849 = vld [vmem:[%s2843 + $0x28] sm:$0xff]
        %v2850 = vld [vmem:[%s2843 + $0x30] sm:$0xff]
        %v2851 = vld [vmem:[%s2843 + $0x38] sm:$0xff]
        %v2852 = vmul.f32 %v2844, %v538
        %v2853 = vmul.f32 %v2845, %v538
        %v2854 = vmul.f32 %v2846, %v538
        %v2855 = vmul.f32 %v2847, %v538
        %v2856 = vmul.f32 %v2848, %v538
        %v2857 = vmul.f32 %v2849, %v538
        %v2858 = vmul.f32 %v2850, %v538
        %v2859 = vmul.f32 %v2851, %v538
        %v2860 = vmul.f32 %v2844, %v542
        %v2861 = vmul.f32 %v2845, %v542
        %v2862 = vmul.f32 %v2846, %v542
        %v2863 = vmul.f32 %v2847, %v542
        %v2864 = vmul.f32 %v2848, %v542
        %v2865 = vmul.f32 %v2849, %v542
        %v2866 = vmul.f32 %v2850, %v542
        %v2867 = vmul.f32 %v2851, %v542
        %v2868 = vmul.f32 %v2844, %v546
        %v2869 = vmul.f32 %v2845, %v546
        %v2870 = vmul.f32 %v2846, %v546
        %v2871 = vmul.f32 %v2847, %v546
        %v2872 = vmul.f32 %v2848, %v546
        %v2873 = vmul.f32 %v2849, %v546
        %v2874 = vmul.f32 %v2850, %v546
        %v2875 = vmul.f32 %v2851, %v546
        %v2876 = vmul.f32 %v2844, %v550
        %v2877 = vmul.f32 %v2845, %v550
        %v2878 = vmul.f32 %v2846, %v550
        %v2879 = vmul.f32 %v2847, %v550
        %v2880 = vmul.f32 %v2848, %v550
        %v2881 = vmul.f32 %v2849, %v550
        %v2882 = vmul.f32 %v2850, %v550
        %v2883 = vmul.f32 %v2851, %v550
        %v2884 = vmul.f32 %v2844, %v554
        %v2885 = vmul.f32 %v2845, %v554
        %v2886 = vmul.f32 %v2846, %v554
        %v2887 = vmul.f32 %v2847, %v554
        %v2888 = vmul.f32 %v2848, %v554
        %v2889 = vmul.f32 %v2849, %v554
        %v2890 = vmul.f32 %v2850, %v554
        %v2891 = vmul.f32 %v2851, %v554
        %v2892 = vmul.f32 %v2844, %v558
        %v2893 = vmul.f32 %v2845, %v558
        %v2894 = vmul.f32 %v2846, %v558
        %v2895 = vmul.f32 %v2847, %v558
        %v2896 = vmul.f32 %v2848, %v558
        %v2897 = vmul.f32 %v2849, %v558
        %v2898 = vmul.f32 %v2850, %v558
        %v2899 = vmul.f32 %v2851, %v558
        %v2900 = vmul.f32 %v2844, %v562
        %v2901 = vmul.f32 %v2845, %v562
        %v2902 = vmul.f32 %v2846, %v562
        %v2903 = vmul.f32 %v2847, %v562
        %v2904 = vmul.f32 %v2848, %v562
        %v2905 = vmul.f32 %v2849, %v562
        %v2906 = vmul.f32 %v2850, %v562
        %v2907 = vmul.f32 %v2851, %v562
        %v2908 = vmul.f32 %v2844, %v566
        %v2909 = vmul.f32 %v2845, %v566
        %v2910 = vmul.f32 %v2846, %v566
        %v2911 = vmul.f32 %v2847, %v566
        %v2912 = vmul.f32 %v2848, %v566
        %v2913 = vmul.f32 %v2849, %v566
        %v2914 = vmul.f32 %v2850, %v566
        %v2915 = vmul.f32 %v2851, %v566
        %v2916 = vtanh.pop %v2852
        %v2917 = vtanh.pop %v2853
        %v2918 = vtanh.pop %v2854
        %v2919 = vtanh.pop %v2855
        %v2920 = vtanh.pop %v2856
        %v2921 = vtanh.pop %v2857
        %v2922 = vtanh.pop %v2858
        %v2923 = vtanh.pop %v2859
        %v2924 = vtanh.pop %v2860
        %v2925 = vtanh.pop %v2861
        %v2926 = vtanh.pop %v2862
        %v2927 = vtanh.pop %v2863
        %v2928 = vtanh.pop %v2864
        %v2929 = vtanh.pop %v2865
        %v2930 = vtanh.pop %v2866
        %v2931 = vtanh.pop %v2867
        %v2932 = vtanh.pop %v2868
        %v2933 = vtanh.pop %v2869
        %v2934 = vtanh.pop %v2870
        %v2935 = vtanh.pop %v2871
        %v2936 = vtanh.pop %v2872
        %v2937 = vtanh.pop %v2873
        %v2938 = vtanh.pop %v2874
        %v2939 = vtanh.pop %v2875
        %v2940 = vtanh.pop %v2876
        %v2941 = vtanh.pop %v2877
        %v2942 = vtanh.pop %v2878
        %v2943 = vtanh.pop %v2879
        %v2944 = vtanh.pop %v2880
        %v2945 = vtanh.pop %v2881
        %v2946 = vtanh.pop %v2882
        %v2947 = vtanh.pop %v2883
        %v2948 = vtanh.pop %v2884
        %v2949 = vtanh.pop %v2885
        %v2950 = vtanh.pop %v2886
        %v2951 = vtanh.pop %v2887
        %v2952 = vtanh.pop %v2888
        %v2953 = vtanh.pop %v2889
        %v2954 = vtanh.pop %v2890
        %v2955 = vtanh.pop %v2891
        %v2956 = vtanh.pop %v2892
        %v2957 = vtanh.pop %v2893
        %v2958 = vtanh.pop %v2894
        %v2959 = vtanh.pop %v2895
        %v2960 = vtanh.pop %v2896
        %v2961 = vtanh.pop %v2897
        %v2962 = vtanh.pop %v2898
        %v2963 = vtanh.pop %v2899
        %v2964 = vtanh.pop %v2900
        %v2965 = vtanh.pop %v2901
        %v2966 = vtanh.pop %v2902
        %v2967 = vtanh.pop %v2903
        %v2968 = vtanh.pop %v2904
        %v2969 = vtanh.pop %v2905
        %v2970 = vtanh.pop %v2906
        %v2971 = vtanh.pop %v2907
        %v2972 = vtanh.pop %v2908
        %v2973 = vtanh.pop %v2909
        %v2974 = vtanh.pop %v2910
        %v2975 = vtanh.pop %v2911
        %v2976 = vtanh.pop %v2912
        %v2977 = vtanh.pop %v2913
        %v2978 = vtanh.pop %v2914
        %v2979 = vtanh.pop %v2915
        %v2980 = vmul.f32 %v2916, %v707
        %v2981 = vmul.f32 %v2917, %v707
        %v2982 = vmul.f32 %v2918, %v707
        %v2983 = vmul.f32 %v2919, %v707
        %v2984 = vmul.f32 %v2920, %v707
        %v2985 = vmul.f32 %v2921, %v707
        %v2986 = vmul.f32 %v2922, %v707
        %v2987 = vmul.f32 %v2923, %v707
        %v2988 = vmul.f32 %v2924, %v707
        %v2989 = vmul.f32 %v2925, %v707
        %v2990 = vmul.f32 %v2926, %v707
        %v2991 = vmul.f32 %v2927, %v707
        %v2992 = vmul.f32 %v2928, %v707
        %v2993 = vmul.f32 %v2929, %v707
        %v2994 = vmul.f32 %v2930, %v707
        %v2995 = vmul.f32 %v2931, %v707
        %v2996 = vmul.f32 %v2932, %v707
        %v2997 = vmul.f32 %v2933, %v707
        %v2998 = vmul.f32 %v2934, %v707
        %v2999 = vmul.f32 %v2935, %v707
        %v3000 = vmul.f32 %v2936, %v707
        %v3001 = vmul.f32 %v2937, %v707
        %v3002 = vmul.f32 %v2938, %v707
        %v3003 = vmul.f32 %v2939, %v707
        %v3004 = vmul.f32 %v2940, %v707
        %v3005 = vmul.f32 %v2941, %v707
        %v3006 = vmul.f32 %v2942, %v707
        %v3007 = vmul.f32 %v2943, %v707
        %v3008 = vmul.f32 %v2944, %v707
        %v3009 = vmul.f32 %v2945, %v707
        %v3010 = vmul.f32 %v2946, %v707
        %v3011 = vmul.f32 %v2947, %v707
        %v3012 = vmul.f32 %v2948, %v707
        %v3013 = vmul.f32 %v2949, %v707
        %v3014 = vmul.f32 %v2950, %v707
        %v3015 = vmul.f32 %v2951, %v707
        %v3016 = vmul.f32 %v2952, %v707
        %v3017 = vmul.f32 %v2953, %v707
        %v3018 = vmul.f32 %v2954, %v707
        %v3019 = vmul.f32 %v2955, %v707
        %v3020 = vmul.f32 %v2956, %v707
        %v3021 = vmul.f32 %v2957, %v707
        %v3022 = vmul.f32 %v2958, %v707
        %v3023 = vmul.f32 %v2959, %v707
        %v3024 = vmul.f32 %v2960, %v707
        %v3025 = vmul.f32 %v2961, %v707
        %v3026 = vmul.f32 %v2962, %v707
        %v3027 = vmul.f32 %v2963, %v707
        %v3028 = vmul.f32 %v2964, %v707
        %v3029 = vmul.f32 %v2965, %v707
        %v3030 = vmul.f32 %v2966, %v707
        %v3031 = vmul.f32 %v2967, %v707
        %v3032 = vmul.f32 %v2968, %v707
        %v3033 = vmul.f32 %v2969, %v707
        %v3034 = vmul.f32 %v2970, %v707
        %v3035 = vmul.f32 %v2971, %v707
        %v3036 = vmul.f32 %v2972, %v707
        %v3037 = vmul.f32 %v2973, %v707
        %v3038 = vmul.f32 %v2974, %v707
        %v3039 = vmul.f32 %v2975, %v707
        %v3040 = vmul.f32 %v2976, %v707
        %v3041 = vmul.f32 %v2977, %v707
        %v3042 = vmul.f32 %v2978, %v707
        %v3043 = vmul.f32 %v2979, %v707
        %3044 = vadd.xlane.f32.xlu0 %v2980
        %v3045 = vpop.xlane.xlu0 %3044
        %3046 = vadd.xlane.f32.xlu0 %v2981
        %v3047 = vpop.xlane.xlu0 %3046
        %3048 = vadd.xlane.f32.xlu0 %v2982
        %v3049 = vpop.xlane.xlu0 %3048
        %3050 = vadd.xlane.f32.xlu0 %v2983
        %v3051 = vpop.xlane.xlu0 %3050
        %3052 = vadd.xlane.f32.xlu0 %v2984
        %v3053 = vpop.xlane.xlu0 %3052
        %3054 = vadd.xlane.f32.xlu0 %v2985
        %v3055 = vpop.xlane.xlu0 %3054
        %3056 = vadd.xlane.f32.xlu0 %v2986
        %v3057 = vpop.xlane.xlu0 %3056
        %3058 = vadd.xlane.f32.xlu0 %v2987
        %v3059 = vpop.xlane.xlu0 %3058
        %3060 = vadd.xlane.f32.xlu0 %v2988
        %v3061 = vpop.xlane.xlu0 %3060
        %3062 = vadd.xlane.f32.xlu0 %v2989
        %v3063 = vpop.xlane.xlu0 %3062
        %3064 = vadd.xlane.f32.xlu0 %v2990
        %v3065 = vpop.xlane.xlu0 %3064
        %3066 = vadd.xlane.f32.xlu0 %v2991
        %v3067 = vpop.xlane.xlu0 %3066
        %3068 = vadd.xlane.f32.xlu0 %v2992
        %v3069 = vpop.xlane.xlu0 %3068
        %3070 = vadd.xlane.f32.xlu0 %v2993
        %v3071 = vpop.xlane.xlu0 %3070
        %3072 = vadd.xlane.f32.xlu0 %v2994
        %v3073 = vpop.xlane.xlu0 %3072
        %3074 = vadd.xlane.f32.xlu0 %v2995
        %v3075 = vpop.xlane.xlu0 %3074
        %3076 = vadd.xlane.f32.xlu0 %v2996
        %v3077 = vpop.xlane.xlu0 %3076
        %3078 = vadd.xlane.f32.xlu0 %v2997
        %v3079 = vpop.xlane.xlu0 %3078
        %3080 = vadd.xlane.f32.xlu0 %v2998
        %v3081 = vpop.xlane.xlu0 %3080
        %3082 = vadd.xlane.f32.xlu0 %v2999
        %v3083 = vpop.xlane.xlu0 %3082
        %3084 = vadd.xlane.f32.xlu0 %v3000
        %v3085 = vpop.xlane.xlu0 %3084
        %3086 = vadd.xlane.f32.xlu0 %v3001
        %v3087 = vpop.xlane.xlu0 %3086
        %3088 = vadd.xlane.f32.xlu0 %v3002
        %v3089 = vpop.xlane.xlu0 %3088
        %3090 = vadd.xlane.f32.xlu0 %v3003
        %v3091 = vpop.xlane.xlu0 %3090
        %3092 = vadd.xlane.f32.xlu0 %v3004
        %v3093 = vpop.xlane.xlu0 %3092
        %3094 = vadd.xlane.f32.xlu0 %v3005
        %v3095 = vpop.xlane.xlu0 %3094
        %3096 = vadd.xlane.f32.xlu0 %v3006
        %v3097 = vpop.xlane.xlu0 %3096
        %3098 = vadd.xlane.f32.xlu0 %v3007
        %v3099 = vpop.xlane.xlu0 %3098
        %3100 = vadd.xlane.f32.xlu0 %v3008
        %v3101 = vpop.xlane.xlu0 %3100
        %3102 = vadd.xlane.f32.xlu0 %v3009
        %v3103 = vpop.xlane.xlu0 %3102
        %3104 = vadd.xlane.f32.xlu0 %v3010
        %v3105 = vpop.xlane.xlu0 %3104
        %3106 = vadd.xlane.f32.xlu0 %v3011
        %v3107 = vpop.xlane.xlu0 %3106
        %3108 = vadd.xlane.f32.xlu0 %v3012
        %v3109 = vpop.xlane.xlu0 %3108
        %3110 = vadd.xlane.f32.xlu0 %v3013
        %v3111 = vpop.xlane.xlu0 %3110
        %3112 = vadd.xlane.f32.xlu0 %v3014
        %v3113 = vpop.xlane.xlu0 %3112
        %3114 = vadd.xlane.f32.xlu0 %v3015
        %v3115 = vpop.xlane.xlu0 %3114
        %3116 = vadd.xlane.f32.xlu0 %v3016
        %v3117 = vpop.xlane.xlu0 %3116
        %3118 = vadd.xlane.f32.xlu0 %v3017
        %v3119 = vpop.xlane.xlu0 %3118
        %3120 = vadd.xlane.f32.xlu0 %v3018
        %v3121 = vpop.xlane.xlu0 %3120
        %3122 = vadd.xlane.f32.xlu0 %v3019
        %v3123 = vpop.xlane.xlu0 %3122
        %3124 = vadd.xlane.f32.xlu0 %v3020
        %v3125 = vpop.xlane.xlu0 %3124
        %3126 = vadd.xlane.f32.xlu0 %v3021
        %v3127 = vpop.xlane.xlu0 %3126
        %3128 = vadd.xlane.f32.xlu0 %v3022
        %v3129 = vpop.xlane.xlu0 %3128
        %3130 = vadd.xlane.f32.xlu0 %v3023
        %v3131 = vpop.xlane.xlu0 %3130
        %3132 = vadd.xlane.f32.xlu0 %v3024
        %v3133 = vpop.xlane.xlu0 %3132
        %3134 = vadd.xlane.f32.xlu0 %v3025
        %v3135 = vpop.xlane.xlu0 %3134
        %3136 = vadd.xlane.f32.xlu0 %v3026
        %v3137 = vpop.xlane.xlu0 %3136
        %3138 = vadd.xlane.f32.xlu0 %v3027
        %v3139 = vpop.xlane.xlu0 %3138
        %3140 = vadd.xlane.f32.xlu0 %v3028
        %v3141 = vpop.xlane.xlu0 %3140
        %3142 = vadd.xlane.f32.xlu0 %v3029
        %v3143 = vpop.xlane.xlu0 %3142
        %3144 = vadd.xlane.f32.xlu0 %v3030
        %v3145 = vpop.xlane.xlu0 %3144
        %3146 = vadd.xlane.f32.xlu0 %v3031
        %v3147 = vpop.xlane.xlu0 %3146
        %3148 = vadd.xlane.f32.xlu0 %v3032
        %v3149 = vpop.xlane.xlu0 %3148
        %3150 = vadd.xlane.f32.xlu0 %v3033
        %v3151 = vpop.xlane.xlu0 %3150
        %3152 = vadd.xlane.f32.xlu0 %v3034
        %v3153 = vpop.xlane.xlu0 %3152
        %3154 = vadd.xlane.f32.xlu0 %v3035
        %v3155 = vpop.xlane.xlu0 %3154
        %3156 = vadd.xlane.f32.xlu0 %v3036
        %v3157 = vpop.xlane.xlu0 %3156
        %3158 = vadd.xlane.f32.xlu0 %v3037
        %v3159 = vpop.xlane.xlu0 %3158
        %3160 = vadd.xlane.f32.xlu0 %v3038
        %v3161 = vpop.xlane.xlu0 %3160
        %3162 = vadd.xlane.f32.xlu0 %v3039
        %v3163 = vpop.xlane.xlu0 %3162
        %3164 = vadd.xlane.f32.xlu0 %v3040
        %v3165 = vpop.xlane.xlu0 %3164
        %3166 = vadd.xlane.f32.xlu0 %v3041
        %v3167 = vpop.xlane.xlu0 %3166
        %3168 = vadd.xlane.f32.xlu0 %v3042
        %v3169 = vpop.xlane.xlu0 %3168
        %3170 = vadd.xlane.f32.xlu0 %v3043
        %v3171 = vpop.xlane.xlu0 %3170
        %v3236 = vlaneseq
        %v3237 = vshrl.u32 %v3236, 7
        %v3238 = vsub.s32 %v966, %v3237
        %v3239 = vrot.slane %v3045, %v3238
        %v3240 = vlaneseq
        %v3241 = vshrl.u32 %v3240, 7
        %v3242 = vsub.s32 %v971, %v3241
        %v3243 = vrot.slane %v3047, %v3242
        %v3244 = vsel %vm976, %v3243, %v3239
        %v3245 = vlaneseq
        %v3246 = vshrl.u32 %v3245, 7
        %v3247 = vsub.s32 %v978, %v3246
        %v3248 = vrot.slane %v3049, %v3247
        %v3249 = vsel %vm983, %v3248, %v3244
        %v3250 = vlaneseq
        %v3251 = vshrl.u32 %v3250, 7
        %v3252 = vsub.s32 %v985, %v3251
        %v3253 = vrot.slane %v3051, %v3252
        %v3254 = vsel %vm990, %v3253, %v3249
        %v3255 = vlaneseq
        %v3256 = vshrl.u32 %v3255, 7
        %v3257 = vsub.s32 %v992, %v3256
        %v3258 = vrot.slane %v3053, %v3257
        %v3259 = vsel %vm997, %v3258, %v3254
        %v3260 = vlaneseq
        %v3261 = vshrl.u32 %v3260, 7
        %v3262 = vsub.s32 %v999, %v3261
        %v3263 = vrot.slane %v3055, %v3262
        %v3264 = vsel %vm1004, %v3263, %v3259
        %v3265 = vlaneseq
        %v3266 = vshrl.u32 %v3265, 7
        %v3267 = vsub.s32 %v1006, %v3266
        %v3268 = vrot.slane %v3057, %v3267
        %v3269 = vsel %vm1011, %v3268, %v3264
        %v3270 = vlaneseq
        %v3271 = vshrl.u32 %v3270, 7
        %v3272 = vsub.s32 %v1013, %v3271
        %v3273 = vrot.slane %v3059, %v3272
        %v3274 = vsel %vm1018, %v3273, %v3269
        %v3275 = vlaneseq
        %v3276 = vshrl.u32 %v3275, 7
        %v3277 = vsub.s32 %v966, %v3276
        %v3278 = vrot.slane %v3061, %v3277
        %v3279 = vlaneseq
        %v3280 = vshrl.u32 %v3279, 7
        %v3281 = vsub.s32 %v971, %v3280
        %v3282 = vrot.slane %v3063, %v3281
        %v3283 = vsel %vm976, %v3282, %v3278
        %v3284 = vlaneseq
        %v3285 = vshrl.u32 %v3284, 7
        %v3286 = vsub.s32 %v978, %v3285
        %v3287 = vrot.slane %v3065, %v3286
        %v3288 = vsel %vm983, %v3287, %v3283
        %v3289 = vlaneseq
        %v3290 = vshrl.u32 %v3289, 7
        %v3291 = vsub.s32 %v985, %v3290
        %v3292 = vrot.slane %v3067, %v3291
        %v3293 = vsel %vm990, %v3292, %v3288
        %v3294 = vlaneseq
        %v3295 = vshrl.u32 %v3294, 7
        %v3296 = vsub.s32 %v992, %v3295
        %v3297 = vrot.slane %v3069, %v3296
        %v3298 = vsel %vm997, %v3297, %v3293
        %v3299 = vlaneseq
        %v3300 = vshrl.u32 %v3299, 7
        %v3301 = vsub.s32 %v999, %v3300
        %v3302 = vrot.slane %v3071, %v3301
        %v3303 = vsel %vm1004, %v3302, %v3298
        %v3304 = vlaneseq
        %v3305 = vshrl.u32 %v3304, 7
        %v3306 = vsub.s32 %v1006, %v3305
        %v3307 = vrot.slane %v3073, %v3306
        %v3308 = vsel %vm1011, %v3307, %v3303
        %v3309 = vlaneseq
        %v3310 = vshrl.u32 %v3309, 7
        %v3311 = vsub.s32 %v1013, %v3310
        %v3312 = vrot.slane %v3075, %v3311
        %v3313 = vsel %vm1018, %v3312, %v3308
        %v3314 = vlaneseq
        %v3315 = vshrl.u32 %v3314, 7
        %v3316 = vsub.s32 %v966, %v3315
        %v3317 = vrot.slane %v3077, %v3316
        %v3318 = vlaneseq
        %v3319 = vshrl.u32 %v3318, 7
        %v3320 = vsub.s32 %v971, %v3319
        %v3321 = vrot.slane %v3079, %v3320
        %v3322 = vsel %vm976, %v3321, %v3317
        %v3323 = vlaneseq
        %v3324 = vshrl.u32 %v3323, 7
        %v3325 = vsub.s32 %v978, %v3324
        %v3326 = vrot.slane %v3081, %v3325
        %v3327 = vsel %vm983, %v3326, %v3322
        %v3328 = vlaneseq
        %v3329 = vshrl.u32 %v3328, 7
        %v3330 = vsub.s32 %v985, %v3329
        %v3331 = vrot.slane %v3083, %v3330
        %v3332 = vsel %vm990, %v3331, %v3327
        %v3333 = vlaneseq
        %v3334 = vshrl.u32 %v3333, 7
        %v3335 = vsub.s32 %v992, %v3334
        %v3336 = vrot.slane %v3085, %v3335
        %v3337 = vsel %vm997, %v3336, %v3332
        %v3338 = vlaneseq
        %v3339 = vshrl.u32 %v3338, 7
        %v3340 = vsub.s32 %v999, %v3339
        %v3341 = vrot.slane %v3087, %v3340
        %v3342 = vsel %vm1004, %v3341, %v3337
        %v3343 = vlaneseq
        %v3344 = vshrl.u32 %v3343, 7
        %v3345 = vsub.s32 %v1006, %v3344
        %v3346 = vrot.slane %v3089, %v3345
        %v3347 = vsel %vm1011, %v3346, %v3342
        %v3348 = vlaneseq
        %v3349 = vshrl.u32 %v3348, 7
        %v3350 = vsub.s32 %v1013, %v3349
        %v3351 = vrot.slane %v3091, %v3350
        %v3352 = vsel %vm1018, %v3351, %v3347
        %v3353 = vlaneseq
        %v3354 = vshrl.u32 %v3353, 7
        %v3355 = vsub.s32 %v966, %v3354
        %v3356 = vrot.slane %v3093, %v3355
        %v3357 = vlaneseq
        %v3358 = vshrl.u32 %v3357, 7
        %v3359 = vsub.s32 %v971, %v3358
        %v3360 = vrot.slane %v3095, %v3359
        %v3361 = vsel %vm976, %v3360, %v3356
        %v3362 = vlaneseq
        %v3363 = vshrl.u32 %v3362, 7
        %v3364 = vsub.s32 %v978, %v3363
        %v3365 = vrot.slane %v3097, %v3364
        %v3366 = vsel %vm983, %v3365, %v3361
        %v3367 = vlaneseq
        %v3368 = vshrl.u32 %v3367, 7
        %v3369 = vsub.s32 %v985, %v3368
        %v3370 = vrot.slane %v3099, %v3369
        %v3371 = vsel %vm990, %v3370, %v3366
        %v3372 = vlaneseq
        %v3373 = vshrl.u32 %v3372, 7
        %v3374 = vsub.s32 %v992, %v3373
        %v3375 = vrot.slane %v3101, %v3374
        %v3376 = vsel %vm997, %v3375, %v3371
        %v3377 = vlaneseq
        %v3378 = vshrl.u32 %v3377, 7
        %v3379 = vsub.s32 %v999, %v3378
        %v3380 = vrot.slane %v3103, %v3379
        %v3381 = vsel %vm1004, %v3380, %v3376
        %v3382 = vlaneseq
        %v3383 = vshrl.u32 %v3382, 7
        %v3384 = vsub.s32 %v1006, %v3383
        %v3385 = vrot.slane %v3105, %v3384
        %v3386 = vsel %vm1011, %v3385, %v3381
        %v3387 = vlaneseq
        %v3388 = vshrl.u32 %v3387, 7
        %v3389 = vsub.s32 %v1013, %v3388
        %v3390 = vrot.slane %v3107, %v3389
        %v3391 = vsel %vm1018, %v3390, %v3386
        %v3392 = vlaneseq
        %v3393 = vshrl.u32 %v3392, 7
        %v3394 = vsub.s32 %v966, %v3393
        %v3395 = vrot.slane %v3109, %v3394
        %v3396 = vlaneseq
        %v3397 = vshrl.u32 %v3396, 7
        %v3398 = vsub.s32 %v971, %v3397
        %v3399 = vrot.slane %v3111, %v3398
        %v3400 = vsel %vm976, %v3399, %v3395
        %v3401 = vlaneseq
        %v3402 = vshrl.u32 %v3401, 7
        %v3403 = vsub.s32 %v978, %v3402
        %v3404 = vrot.slane %v3113, %v3403
        %v3405 = vsel %vm983, %v3404, %v3400
        %v3406 = vlaneseq
        %v3407 = vshrl.u32 %v3406, 7
        %v3408 = vsub.s32 %v985, %v3407
        %v3409 = vrot.slane %v3115, %v3408
        %v3410 = vsel %vm990, %v3409, %v3405
        %v3411 = vlaneseq
        %v3412 = vshrl.u32 %v3411, 7
        %v3413 = vsub.s32 %v992, %v3412
        %v3414 = vrot.slane %v3117, %v3413
        %v3415 = vsel %vm997, %v3414, %v3410
        %v3416 = vlaneseq
        %v3417 = vshrl.u32 %v3416, 7
        %v3418 = vsub.s32 %v999, %v3417
        %v3419 = vrot.slane %v3119, %v3418
        %v3420 = vsel %vm1004, %v3419, %v3415
        %v3421 = vlaneseq
        %v3422 = vshrl.u32 %v3421, 7
        %v3423 = vsub.s32 %v1006, %v3422
        %v3424 = vrot.slane %v3121, %v3423
        %v3425 = vsel %vm1011, %v3424, %v3420
        %v3426 = vlaneseq
        %v3427 = vshrl.u32 %v3426, 7
        %v3428 = vsub.s32 %v1013, %v3427
        %v3429 = vrot.slane %v3123, %v3428
        %v3430 = vsel %vm1018, %v3429, %v3425
        %v3431 = vlaneseq
        %v3432 = vshrl.u32 %v3431, 7
        %v3433 = vsub.s32 %v966, %v3432
        %v3434 = vrot.slane %v3125, %v3433
        %v3435 = vlaneseq
        %v3436 = vshrl.u32 %v3435, 7
        %v3437 = vsub.s32 %v971, %v3436
        %v3438 = vrot.slane %v3127, %v3437
        %v3439 = vsel %vm976, %v3438, %v3434
        %v3440 = vlaneseq
        %v3441 = vshrl.u32 %v3440, 7
        %v3442 = vsub.s32 %v978, %v3441
        %v3443 = vrot.slane %v3129, %v3442
        %v3444 = vsel %vm983, %v3443, %v3439
        %v3445 = vlaneseq
        %v3446 = vshrl.u32 %v3445, 7
        %v3447 = vsub.s32 %v985, %v3446
        %v3448 = vrot.slane %v3131, %v3447
        %v3449 = vsel %vm990, %v3448, %v3444
        %v3450 = vlaneseq
        %v3451 = vshrl.u32 %v3450, 7
        %v3452 = vsub.s32 %v992, %v3451
        %v3453 = vrot.slane %v3133, %v3452
        %v3454 = vsel %vm997, %v3453, %v3449
        %v3455 = vlaneseq
        %v3456 = vshrl.u32 %v3455, 7
        %v3457 = vsub.s32 %v999, %v3456
        %v3458 = vrot.slane %v3135, %v3457
        %v3459 = vsel %vm1004, %v3458, %v3454
        %v3460 = vlaneseq
        %v3461 = vshrl.u32 %v3460, 7
        %v3462 = vsub.s32 %v1006, %v3461
        %v3463 = vrot.slane %v3137, %v3462
        %v3464 = vsel %vm1011, %v3463, %v3459
        %v3465 = vlaneseq
        %v3466 = vshrl.u32 %v3465, 7
        %v3467 = vsub.s32 %v1013, %v3466
        %v3468 = vrot.slane %v3139, %v3467
        %v3469 = vsel %vm1018, %v3468, %v3464
        %v3470 = vlaneseq
        %v3471 = vshrl.u32 %v3470, 7
        %v3472 = vsub.s32 %v966, %v3471
        %v3473 = vrot.slane %v3141, %v3472
        %v3474 = vlaneseq
        %v3475 = vshrl.u32 %v3474, 7
        %v3476 = vsub.s32 %v971, %v3475
        %v3477 = vrot.slane %v3143, %v3476
        %v3478 = vsel %vm976, %v3477, %v3473
        %v3479 = vlaneseq
        %v3480 = vshrl.u32 %v3479, 7
        %v3481 = vsub.s32 %v978, %v3480
        %v3482 = vrot.slane %v3145, %v3481
        %v3483 = vsel %vm983, %v3482, %v3478
        %v3484 = vlaneseq
        %v3485 = vshrl.u32 %v3484, 7
        %v3486 = vsub.s32 %v985, %v3485
        %v3487 = vrot.slane %v3147, %v3486
        %v3488 = vsel %vm990, %v3487, %v3483
        %v3489 = vlaneseq
        %v3490 = vshrl.u32 %v3489, 7
        %v3491 = vsub.s32 %v992, %v3490
        %v3492 = vrot.slane %v3149, %v3491
        %v3493 = vsel %vm997, %v3492, %v3488
        %v3494 = vlaneseq
        %v3495 = vshrl.u32 %v3494, 7
        %v3496 = vsub.s32 %v999, %v3495
        %v3497 = vrot.slane %v3151, %v3496
        %v3498 = vsel %vm1004, %v3497, %v3493
        %v3499 = vlaneseq
        %v3500 = vshrl.u32 %v3499, 7
        %v3501 = vsub.s32 %v1006, %v3500
        %v3502 = vrot.slane %v3153, %v3501
        %v3503 = vsel %vm1011, %v3502, %v3498
        %v3504 = vlaneseq
        %v3505 = vshrl.u32 %v3504, 7
        %v3506 = vsub.s32 %v1013, %v3505
        %v3507 = vrot.slane %v3155, %v3506
        %v3508 = vsel %vm1018, %v3507, %v3503
        %v3509 = vlaneseq
        %v3510 = vshrl.u32 %v3509, 7
        %v3511 = vsub.s32 %v966, %v3510
        %v3512 = vrot.slane %v3157, %v3511
        %v3513 = vlaneseq
        %v3514 = vshrl.u32 %v3513, 7
        %v3515 = vsub.s32 %v971, %v3514
        %v3516 = vrot.slane %v3159, %v3515
        %v3517 = vsel %vm976, %v3516, %v3512
        %v3518 = vlaneseq
        %v3519 = vshrl.u32 %v3518, 7
        %v3520 = vsub.s32 %v978, %v3519
        %v3521 = vrot.slane %v3161, %v3520
        %v3522 = vsel %vm983, %v3521, %v3517
        %v3523 = vlaneseq
        %v3524 = vshrl.u32 %v3523, 7
        %v3525 = vsub.s32 %v985, %v3524
        %v3526 = vrot.slane %v3163, %v3525
        %v3527 = vsel %vm990, %v3526, %v3522
        %v3528 = vlaneseq
        %v3529 = vshrl.u32 %v3528, 7
        %v3530 = vsub.s32 %v992, %v3529
        %v3531 = vrot.slane %v3165, %v3530
        %v3532 = vsel %vm997, %v3531, %v3527
        %v3533 = vlaneseq
        %v3534 = vshrl.u32 %v3533, 7
        %v3535 = vsub.s32 %v999, %v3534
        %v3536 = vrot.slane %v3167, %v3535
        %v3537 = vsel %vm1004, %v3536, %v3532
        %v3538 = vlaneseq
        %v3539 = vshrl.u32 %v3538, 7
        %v3540 = vsub.s32 %v1006, %v3539
        %v3541 = vrot.slane %v3169, %v3540
        %v3542 = vsel %vm1011, %v3541, %v3537
        %v3543 = vlaneseq
        %v3544 = vshrl.u32 %v3543, 7
        %v3545 = vsub.s32 %v1013, %v3544
        %v3546 = vrot.slane %v3171, %v3545
        %v3547 = vsel %vm1018, %v3546, %v3542
        %v3548 = vsel %vm1293, %v3313, %v3274
        %v3549 = vsel %vm1295, %v3352, %v3548
        %v3550 = vsel %vm1297, %v3391, %v3549
        %v3551 = vsel %vm1299, %v3430, %v3550
        %v3552 = vsel %vm1301, %v3469, %v3551
        %v3553 = vsel %vm1303, %v3508, %v3552
        %v3554 = vsel %vm1305, %v3547, %v3553
        %v3556 = vsel %vm1308, %v3554, -inf
        %3557 = vmax.xlane.f32.xlu0 %v3556
        %v3558 = vpop.xlane.xlu0 %3557
        %v3560 = vlaneseq
        %v3561 = vshrl.u32 %v3560, 7
        %v3562 = vsub.s32 0, %v3561
        %v3563 = vrot.slane %v3558, %v3562
        %v3564 = vlaneseq
        %v3565 = vshrl.u32 %v3564, 7
        %v3566 = vsub.s32 1, %v3565
        %v3567 = vrot.slane %v3558, %v3566
        %v3568 = vlaneseq
        %v3569 = vshrl.u32 %v3568, 7
        %v3570 = vsub.s32 2, %v3569
        %v3571 = vrot.slane %v3558, %v3570
        %v3572 = vlaneseq
        %v3573 = vshrl.u32 %v3572, 7
        %v3574 = vsub.s32 3, %v3573
        %v3575 = vrot.slane %v3558, %v3574
        %v3576 = vlaneseq
        %v3577 = vshrl.u32 %v3576, 7
        %v3578 = vsub.s32 4, %v3577
        %v3579 = vrot.slane %v3558, %v3578
        %v3580 = vlaneseq
        %v3581 = vshrl.u32 %v3580, 7
        %v3582 = vsub.s32 5, %v3581
        %v3583 = vrot.slane %v3558, %v3582
        %v3584 = vlaneseq
        %v3585 = vshrl.u32 %v3584, 7
        %v3586 = vsub.s32 6, %v3585
        %v3587 = vrot.slane %v3558, %v3586
        %v3588 = vlaneseq
        %v3589 = vshrl.u32 %v3588, 7
        %v3590 = vsub.s32 7, %v3589
        %v3591 = vrot.slane %v3558, %v3590
        %v3600 = vsub.f32 %v3045, %v3563
        %v3601 = vsub.f32 %v3047, %v3563
        %v3602 = vsub.f32 %v3049, %v3563
        %v3603 = vsub.f32 %v3051, %v3563
        %v3604 = vsub.f32 %v3053, %v3563
        %v3605 = vsub.f32 %v3055, %v3563
        %v3606 = vsub.f32 %v3057, %v3563
        %v3607 = vsub.f32 %v3059, %v3563
        %v3608 = vsub.f32 %v3061, %v3567
        %v3609 = vsub.f32 %v3063, %v3567
        %v3610 = vsub.f32 %v3065, %v3567
        %v3611 = vsub.f32 %v3067, %v3567
        %v3612 = vsub.f32 %v3069, %v3567
        %v3613 = vsub.f32 %v3071, %v3567
        %v3614 = vsub.f32 %v3073, %v3567
        %v3615 = vsub.f32 %v3075, %v3567
        %v3616 = vsub.f32 %v3077, %v3571
        %v3617 = vsub.f32 %v3079, %v3571
        %v3618 = vsub.f32 %v3081, %v3571
        %v3619 = vsub.f32 %v3083, %v3571
        %v3620 = vsub.f32 %v3085, %v3571
        %v3621 = vsub.f32 %v3087, %v3571
        %v3622 = vsub.f32 %v3089, %v3571
        %v3623 = vsub.f32 %v3091, %v3571
        %v3624 = vsub.f32 %v3093, %v3575
        %v3625 = vsub.f32 %v3095, %v3575
        %v3626 = vsub.f32 %v3097, %v3575
        %v3627 = vsub.f32 %v3099, %v3575
        %v3628 = vsub.f32 %v3101, %v3575
        %v3629 = vsub.f32 %v3103, %v3575
        %v3630 = vsub.f32 %v3105, %v3575
        %v3631 = vsub.f32 %v3107, %v3575
        %v3632 = vsub.f32 %v3109, %v3579
        %v3633 = vsub.f32 %v3111, %v3579
        %v3634 = vsub.f32 %v3113, %v3579
        %v3635 = vsub.f32 %v3115, %v3579
        %v3636 = vsub.f32 %v3117, %v3579
        %v3637 = vsub.f32 %v3119, %v3579
        %v3638 = vsub.f32 %v3121, %v3579
        %v3639 = vsub.f32 %v3123, %v3579
        %v3640 = vsub.f32 %v3125, %v3583
        %v3641 = vsub.f32 %v3127, %v3583
        %v3642 = vsub.f32 %v3129, %v3583
        %v3643 = vsub.f32 %v3131, %v3583
        %v3644 = vsub.f32 %v3133, %v3583
        %v3645 = vsub.f32 %v3135, %v3583
        %v3646 = vsub.f32 %v3137, %v3583
        %v3647 = vsub.f32 %v3139, %v3583
        %v3648 = vsub.f32 %v3141, %v3587
        %v3649 = vsub.f32 %v3143, %v3587
        %v3650 = vsub.f32 %v3145, %v3587
        %v3651 = vsub.f32 %v3147, %v3587
        %v3652 = vsub.f32 %v3149, %v3587
        %v3653 = vsub.f32 %v3151, %v3587
        %v3654 = vsub.f32 %v3153, %v3587
        %v3655 = vsub.f32 %v3155, %v3587
        %v3656 = vsub.f32 %v3157, %v3591
        %v3657 = vsub.f32 %v3159, %v3591
        %v3658 = vsub.f32 %v3161, %v3591
        %v3659 = vsub.f32 %v3163, %v3591
        %v3660 = vsub.f32 %v3165, %v3591
        %v3661 = vsub.f32 %v3167, %v3591
        %v3662 = vsub.f32 %v3169, %v3591
        %v3663 = vsub.f32 %v3171, %v3591
        %v3664 = vmul.f32 %v3600, 1.442695
        %v3665 = vpow.pop %v3664
        %v3666 = vmul.f32 %v3601, 1.442695
        %v3667 = vpow.pop %v3666
        %v3668 = vmul.f32 %v3602, 1.442695
        %v3669 = vpow.pop %v3668
        %v3670 = vmul.f32 %v3603, 1.442695
        %v3671 = vpow.pop %v3670
        %v3672 = vmul.f32 %v3604, 1.442695
        %v3673 = vpow.pop %v3672
        %v3674 = vmul.f32 %v3605, 1.442695
        %v3675 = vpow.pop %v3674
        %v3676 = vmul.f32 %v3606, 1.442695
        %v3677 = vpow.pop %v3676
        %v3678 = vmul.f32 %v3607, 1.442695
        %v3679 = vpow.pop %v3678
        %v3680 = vmul.f32 %v3608, 1.442695
        %v3681 = vpow.pop %v3680
        %v3682 = vmul.f32 %v3609, 1.442695
        %v3683 = vpow.pop %v3682
        %v3684 = vmul.f32 %v3610, 1.442695
        %v3685 = vpow.pop %v3684
        %v3686 = vmul.f32 %v3611, 1.442695
        %v3687 = vpow.pop %v3686
        %v3688 = vmul.f32 %v3612, 1.442695
        %v3689 = vpow.pop %v3688
        %v3690 = vmul.f32 %v3613, 1.442695
        %v3691 = vpow.pop %v3690
        %v3692 = vmul.f32 %v3614, 1.442695
        %v3693 = vpow.pop %v3692
        %v3694 = vmul.f32 %v3615, 1.442695
        %v3695 = vpow.pop %v3694
        %v3696 = vmul.f32 %v3616, 1.442695
        %v3697 = vpow.pop %v3696
        %v3698 = vmul.f32 %v3617, 1.442695
        %v3699 = vpow.pop %v3698
        %v3700 = vmul.f32 %v3618, 1.442695
        %v3701 = vpow.pop %v3700
        %v3702 = vmul.f32 %v3619, 1.442695
        %v3703 = vpow.pop %v3702
        %v3704 = vmul.f32 %v3620, 1.442695
        %v3705 = vpow.pop %v3704
        %v3706 = vmul.f32 %v3621, 1.442695
        %v3707 = vpow.pop %v3706
        %v3708 = vmul.f32 %v3622, 1.442695
        %v3709 = vpow.pop %v3708
        %v3710 = vmul.f32 %v3623, 1.442695
        %v3711 = vpow.pop %v3710
        %v3712 = vmul.f32 %v3624, 1.442695
        %v3713 = vpow.pop %v3712
        %v3714 = vmul.f32 %v3625, 1.442695
        %v3715 = vpow.pop %v3714
        %v3716 = vmul.f32 %v3626, 1.442695
        %v3717 = vpow.pop %v3716
        %v3718 = vmul.f32 %v3627, 1.442695
        %v3719 = vpow.pop %v3718
        %v3720 = vmul.f32 %v3628, 1.442695
        %v3721 = vpow.pop %v3720
        %v3722 = vmul.f32 %v3629, 1.442695
        %v3723 = vpow.pop %v3722
        %v3724 = vmul.f32 %v3630, 1.442695
        %v3725 = vpow.pop %v3724
        %v3726 = vmul.f32 %v3631, 1.442695
        %v3727 = vpow.pop %v3726
        %v3728 = vmul.f32 %v3632, 1.442695
        %v3729 = vpow.pop %v3728
        %v3730 = vmul.f32 %v3633, 1.442695
        %v3731 = vpow.pop %v3730
        %v3732 = vmul.f32 %v3634, 1.442695
        %v3733 = vpow.pop %v3732
        %v3734 = vmul.f32 %v3635, 1.442695
        %v3735 = vpow.pop %v3734
        %v3736 = vmul.f32 %v3636, 1.442695
        %v3737 = vpow.pop %v3736
        %v3738 = vmul.f32 %v3637, 1.442695
        %v3739 = vpow.pop %v3738
        %v3740 = vmul.f32 %v3638, 1.442695
        %v3741 = vpow.pop %v3740
        %v3742 = vmul.f32 %v3639, 1.442695
        %v3743 = vpow.pop %v3742
        %v3744 = vmul.f32 %v3640, 1.442695
        %v3745 = vpow.pop %v3744
        %v3746 = vmul.f32 %v3641, 1.442695
        %v3747 = vpow.pop %v3746
        %v3748 = vmul.f32 %v3642, 1.442695
        %v3749 = vpow.pop %v3748
        %v3750 = vmul.f32 %v3643, 1.442695
        %v3751 = vpow.pop %v3750
        %v3752 = vmul.f32 %v3644, 1.442695
        %v3753 = vpow.pop %v3752
        %v3754 = vmul.f32 %v3645, 1.442695
        %v3755 = vpow.pop %v3754
        %v3756 = vmul.f32 %v3646, 1.442695
        %v3757 = vpow.pop %v3756
        %v3758 = vmul.f32 %v3647, 1.442695
        %v3759 = vpow.pop %v3758
        %v3760 = vmul.f32 %v3648, 1.442695
        %v3761 = vpow.pop %v3760
        %v3762 = vmul.f32 %v3649, 1.442695
        %v3763 = vpow.pop %v3762
        %v3764 = vmul.f32 %v3650, 1.442695
        %v3765 = vpow.pop %v3764
        %v3766 = vmul.f32 %v3651, 1.442695
        %v3767 = vpow.pop %v3766
        %v3768 = vmul.f32 %v3652, 1.442695
        %v3769 = vpow.pop %v3768
        %v3770 = vmul.f32 %v3653, 1.442695
        %v3771 = vpow.pop %v3770
        %v3772 = vmul.f32 %v3654, 1.442695
        %v3773 = vpow.pop %v3772
        %v3774 = vmul.f32 %v3655, 1.442695
        %v3775 = vpow.pop %v3774
        %v3776 = vmul.f32 %v3656, 1.442695
        %v3777 = vpow.pop %v3776
        %v3778 = vmul.f32 %v3657, 1.442695
        %v3779 = vpow.pop %v3778
        %v3780 = vmul.f32 %v3658, 1.442695
        %v3781 = vpow.pop %v3780
        %v3782 = vmul.f32 %v3659, 1.442695
        %v3783 = vpow.pop %v3782
        %v3784 = vmul.f32 %v3660, 1.442695
        %v3785 = vpow.pop %v3784
        %v3786 = vmul.f32 %v3661, 1.442695
        %v3787 = vpow.pop %v3786
        %v3788 = vmul.f32 %v3662, 1.442695
        %v3789 = vpow.pop %v3788
        %v3790 = vmul.f32 %v3663, 1.442695
        %v3791 = vpow.pop %v3790
        %3856 = vset.pattern.permute.xlu0 0
        %3857 = vperm.xlu0 %3856, %v3665
        %v3858 = vpop.permute.xlu0 %3857
        %3859 = vset.pattern.permute.xlu0 0
        %3860 = vperm.xlu0 %3859, %v3667
        %v3861 = vpop.permute.xlu0 %3860
        %3862 = vset.pattern.permute.xlu0 0
        %3863 = vperm.xlu0 %3862, %v3669
        %v3864 = vpop.permute.xlu0 %3863
        %3865 = vset.pattern.permute.xlu0 0
        %3866 = vperm.xlu0 %3865, %v3671
        %v3867 = vpop.permute.xlu0 %3866
        %3868 = vset.pattern.permute.xlu0 0
        %3869 = vperm.xlu0 %3868, %v3673
        %v3870 = vpop.permute.xlu0 %3869
        %3871 = vset.pattern.permute.xlu0 0
        %3872 = vperm.xlu0 %3871, %v3675
        %v3873 = vpop.permute.xlu0 %3872
        %3874 = vset.pattern.permute.xlu0 0
        %3875 = vperm.xlu0 %3874, %v3677
        %v3876 = vpop.permute.xlu0 %3875
        %3877 = vset.pattern.permute.xlu0 0
        %3878 = vperm.xlu0 %3877, %v3679
        %v3879 = vpop.permute.xlu0 %3878
        %3880 = vset.pattern.permute.xlu0 0
        %3881 = vperm.xlu0 %3880, %v3681
        %v3882 = vpop.permute.xlu0 %3881
        %3883 = vset.pattern.permute.xlu0 0
        %3884 = vperm.xlu0 %3883, %v3683
        %v3885 = vpop.permute.xlu0 %3884
        %3886 = vset.pattern.permute.xlu0 0
        %3887 = vperm.xlu0 %3886, %v3685
        %v3888 = vpop.permute.xlu0 %3887
        %3889 = vset.pattern.permute.xlu0 0
        %3890 = vperm.xlu0 %3889, %v3687
        %v3891 = vpop.permute.xlu0 %3890
        %3892 = vset.pattern.permute.xlu0 0
        %3893 = vperm.xlu0 %3892, %v3689
        %v3894 = vpop.permute.xlu0 %3893
        %3895 = vset.pattern.permute.xlu0 0
        %3896 = vperm.xlu0 %3895, %v3691
        %v3897 = vpop.permute.xlu0 %3896
        %3898 = vset.pattern.permute.xlu0 0
        %3899 = vperm.xlu0 %3898, %v3693
        %v3900 = vpop.permute.xlu0 %3899
        %3901 = vset.pattern.permute.xlu0 0
        %3902 = vperm.xlu0 %3901, %v3695
        %v3903 = vpop.permute.xlu0 %3902
        %3904 = vset.pattern.permute.xlu0 0
        %3905 = vperm.xlu0 %3904, %v3697
        %v3906 = vpop.permute.xlu0 %3905
        %3907 = vset.pattern.permute.xlu0 0
        %3908 = vperm.xlu0 %3907, %v3699
        %v3909 = vpop.permute.xlu0 %3908
        %3910 = vset.pattern.permute.xlu0 0
        %3911 = vperm.xlu0 %3910, %v3701
        %v3912 = vpop.permute.xlu0 %3911
        %3913 = vset.pattern.permute.xlu0 0
        %3914 = vperm.xlu0 %3913, %v3703
        %v3915 = vpop.permute.xlu0 %3914
        %3916 = vset.pattern.permute.xlu0 0
        %3917 = vperm.xlu0 %3916, %v3705
        %v3918 = vpop.permute.xlu0 %3917
        %3919 = vset.pattern.permute.xlu0 0
        %3920 = vperm.xlu0 %3919, %v3707
        %v3921 = vpop.permute.xlu0 %3920
        %3922 = vset.pattern.permute.xlu0 0
        %3923 = vperm.xlu0 %3922, %v3709
        %v3924 = vpop.permute.xlu0 %3923
        %3925 = vset.pattern.permute.xlu0 0
        %3926 = vperm.xlu0 %3925, %v3711
        %v3927 = vpop.permute.xlu0 %3926
        %3928 = vset.pattern.permute.xlu0 0
        %3929 = vperm.xlu0 %3928, %v3713
        %v3930 = vpop.permute.xlu0 %3929
        %3931 = vset.pattern.permute.xlu0 0
        %3932 = vperm.xlu0 %3931, %v3715
        %v3933 = vpop.permute.xlu0 %3932
        %3934 = vset.pattern.permute.xlu0 0
        %3935 = vperm.xlu0 %3934, %v3717
        %v3936 = vpop.permute.xlu0 %3935
        %3937 = vset.pattern.permute.xlu0 0
        %3938 = vperm.xlu0 %3937, %v3719
        %v3939 = vpop.permute.xlu0 %3938
        %3940 = vset.pattern.permute.xlu0 0
        %3941 = vperm.xlu0 %3940, %v3721
        %v3942 = vpop.permute.xlu0 %3941
        %3943 = vset.pattern.permute.xlu0 0
        %3944 = vperm.xlu0 %3943, %v3723
        %v3945 = vpop.permute.xlu0 %3944
        %3946 = vset.pattern.permute.xlu0 0
        %3947 = vperm.xlu0 %3946, %v3725
        %v3948 = vpop.permute.xlu0 %3947
        %3949 = vset.pattern.permute.xlu0 0
        %3950 = vperm.xlu0 %3949, %v3727
        %v3951 = vpop.permute.xlu0 %3950
        %3952 = vset.pattern.permute.xlu0 0
        %3953 = vperm.xlu0 %3952, %v3729
        %v3954 = vpop.permute.xlu0 %3953
        %3955 = vset.pattern.permute.xlu0 0
        %3956 = vperm.xlu0 %3955, %v3731
        %v3957 = vpop.permute.xlu0 %3956
        %3958 = vset.pattern.permute.xlu0 0
        %3959 = vperm.xlu0 %3958, %v3733
        %v3960 = vpop.permute.xlu0 %3959
        %3961 = vset.pattern.permute.xlu0 0
        %3962 = vperm.xlu0 %3961, %v3735
        %v3963 = vpop.permute.xlu0 %3962
        %3964 = vset.pattern.permute.xlu0 0
        %3965 = vperm.xlu0 %3964, %v3737
        %v3966 = vpop.permute.xlu0 %3965
        %3967 = vset.pattern.permute.xlu0 0
        %3968 = vperm.xlu0 %3967, %v3739
        %v3969 = vpop.permute.xlu0 %3968
        %3970 = vset.pattern.permute.xlu0 0
        %3971 = vperm.xlu0 %3970, %v3741
        %v3972 = vpop.permute.xlu0 %3971
        %3973 = vset.pattern.permute.xlu0 0
        %3974 = vperm.xlu0 %3973, %v3743
        %v3975 = vpop.permute.xlu0 %3974
        %3976 = vset.pattern.permute.xlu0 0
        %3977 = vperm.xlu0 %3976, %v3745
        %v3978 = vpop.permute.xlu0 %3977
        %3979 = vset.pattern.permute.xlu0 0
        %3980 = vperm.xlu0 %3979, %v3747
        %v3981 = vpop.permute.xlu0 %3980
        %3982 = vset.pattern.permute.xlu0 0
        %3983 = vperm.xlu0 %3982, %v3749
        %v3984 = vpop.permute.xlu0 %3983
        %3985 = vset.pattern.permute.xlu0 0
        %3986 = vperm.xlu0 %3985, %v3751
        %v3987 = vpop.permute.xlu0 %3986
        %3988 = vset.pattern.permute.xlu0 0
        %3989 = vperm.xlu0 %3988, %v3753
        %v3990 = vpop.permute.xlu0 %3989
        %3991 = vset.pattern.permute.xlu0 0
        %3992 = vperm.xlu0 %3991, %v3755
        %v3993 = vpop.permute.xlu0 %3992
        %3994 = vset.pattern.permute.xlu0 0
        %3995 = vperm.xlu0 %3994, %v3757
        %v3996 = vpop.permute.xlu0 %3995
        %3997 = vset.pattern.permute.xlu0 0
        %3998 = vperm.xlu0 %3997, %v3759
        %v3999 = vpop.permute.xlu0 %3998
        %4000 = vset.pattern.permute.xlu0 0
        %4001 = vperm.xlu0 %4000, %v3761
        %v4002 = vpop.permute.xlu0 %4001
        %4003 = vset.pattern.permute.xlu0 0
        %4004 = vperm.xlu0 %4003, %v3763
        %v4005 = vpop.permute.xlu0 %4004
        %4006 = vset.pattern.permute.xlu0 0
        %4007 = vperm.xlu0 %4006, %v3765
        %v4008 = vpop.permute.xlu0 %4007
        %4009 = vset.pattern.permute.xlu0 0
        %4010 = vperm.xlu0 %4009, %v3767
        %v4011 = vpop.permute.xlu0 %4010
        %4012 = vset.pattern.permute.xlu0 0
        %4013 = vperm.xlu0 %4012, %v3769
        %v4014 = vpop.permute.xlu0 %4013
        %4015 = vset.pattern.permute.xlu0 0
        %4016 = vperm.xlu0 %4015, %v3771
        %v4017 = vpop.permute.xlu0 %4016
        %4018 = vset.pattern.permute.xlu0 0
        %4019 = vperm.xlu0 %4018, %v3773
        %v4020 = vpop.permute.xlu0 %4019
        %4021 = vset.pattern.permute.xlu0 0
        %4022 = vperm.xlu0 %4021, %v3775
        %v4023 = vpop.permute.xlu0 %4022
        %4024 = vset.pattern.permute.xlu0 0
        %4025 = vperm.xlu0 %4024, %v3777
        %v4026 = vpop.permute.xlu0 %4025
        %4027 = vset.pattern.permute.xlu0 0
        %4028 = vperm.xlu0 %4027, %v3779
        %v4029 = vpop.permute.xlu0 %4028
        %4030 = vset.pattern.permute.xlu0 0
        %4031 = vperm.xlu0 %4030, %v3781
        %v4032 = vpop.permute.xlu0 %4031
        %4033 = vset.pattern.permute.xlu0 0
        %4034 = vperm.xlu0 %4033, %v3783
        %v4035 = vpop.permute.xlu0 %4034
        %4036 = vset.pattern.permute.xlu0 0
        %4037 = vperm.xlu0 %4036, %v3785
        %v4038 = vpop.permute.xlu0 %4037
        %4039 = vset.pattern.permute.xlu0 0
        %4040 = vperm.xlu0 %4039, %v3787
        %v4041 = vpop.permute.xlu0 %4040
        %4042 = vset.pattern.permute.xlu0 0
        %4043 = vperm.xlu0 %4042, %v3789
        %v4044 = vpop.permute.xlu0 %4043
        %4045 = vset.pattern.permute.xlu0 0
        %4046 = vperm.xlu0 %4045, %v3791
        %v4047 = vpop.permute.xlu0 %4046
        %v4048 = vlaneseq
        %v4049 = vshrl.u32 %v4048, 7
        %v4050 = vsub.s32 %v966, %v4049
        %v4051 = vrot.slane %v3858, %v4050
        %v4052 = vlaneseq
        %v4053 = vshrl.u32 %v4052, 7
        %v4054 = vsub.s32 %v971, %v4053
        %v4055 = vrot.slane %v3861, %v4054
        %v4056 = vsel %vm976, %v4055, %v4051
        %v4057 = vlaneseq
        %v4058 = vshrl.u32 %v4057, 7
        %v4059 = vsub.s32 %v978, %v4058
        %v4060 = vrot.slane %v3864, %v4059
        %v4061 = vsel %vm983, %v4060, %v4056
        %v4062 = vlaneseq
        %v4063 = vshrl.u32 %v4062, 7
        %v4064 = vsub.s32 %v985, %v4063
        %v4065 = vrot.slane %v3867, %v4064
        %v4066 = vsel %vm990, %v4065, %v4061
        %v4067 = vlaneseq
        %v4068 = vshrl.u32 %v4067, 7
        %v4069 = vsub.s32 %v992, %v4068
        %v4070 = vrot.slane %v3870, %v4069
        %v4071 = vsel %vm997, %v4070, %v4066
        %v4072 = vlaneseq
        %v4073 = vshrl.u32 %v4072, 7
        %v4074 = vsub.s32 %v999, %v4073
        %v4075 = vrot.slane %v3873, %v4074
        %v4076 = vsel %vm1004, %v4075, %v4071
        %v4077 = vlaneseq
        %v4078 = vshrl.u32 %v4077, 7
        %v4079 = vsub.s32 %v1006, %v4078
        %v4080 = vrot.slane %v3876, %v4079
        %v4081 = vsel %vm1011, %v4080, %v4076
        %v4082 = vlaneseq
        %v4083 = vshrl.u32 %v4082, 7
        %v4084 = vsub.s32 %v1013, %v4083
        %v4085 = vrot.slane %v3879, %v4084
        %v4086 = vsel %vm1018, %v4085, %v4081
        %v4087 = vlaneseq
        %v4088 = vshrl.u32 %v4087, 7
        %v4089 = vsub.s32 %v966, %v4088
        %v4090 = vrot.slane %v3882, %v4089
        %v4091 = vlaneseq
        %v4092 = vshrl.u32 %v4091, 7
        %v4093 = vsub.s32 %v971, %v4092
        %v4094 = vrot.slane %v3885, %v4093
        %v4095 = vsel %vm976, %v4094, %v4090
        %v4096 = vlaneseq
        %v4097 = vshrl.u32 %v4096, 7
        %v4098 = vsub.s32 %v978, %v4097
        %v4099 = vrot.slane %v3888, %v4098
        %v4100 = vsel %vm983, %v4099, %v4095
        %v4101 = vlaneseq
        %v4102 = vshrl.u32 %v4101, 7
        %v4103 = vsub.s32 %v985, %v4102
        %v4104 = vrot.slane %v3891, %v4103
        %v4105 = vsel %vm990, %v4104, %v4100
        %v4106 = vlaneseq
        %v4107 = vshrl.u32 %v4106, 7
        %v4108 = vsub.s32 %v992, %v4107
        %v4109 = vrot.slane %v3894, %v4108
        %v4110 = vsel %vm997, %v4109, %v4105
        %v4111 = vlaneseq
        %v4112 = vshrl.u32 %v4111, 7
        %v4113 = vsub.s32 %v999, %v4112
        %v4114 = vrot.slane %v3897, %v4113
        %v4115 = vsel %vm1004, %v4114, %v4110
        %v4116 = vlaneseq
        %v4117 = vshrl.u32 %v4116, 7
        %v4118 = vsub.s32 %v1006, %v4117
        %v4119 = vrot.slane %v3900, %v4118
        %v4120 = vsel %vm1011, %v4119, %v4115
        %v4121 = vlaneseq
        %v4122 = vshrl.u32 %v4121, 7
        %v4123 = vsub.s32 %v1013, %v4122
        %v4124 = vrot.slane %v3903, %v4123
        %v4125 = vsel %vm1018, %v4124, %v4120
        %v4126 = vlaneseq
        %v4127 = vshrl.u32 %v4126, 7
        %v4128 = vsub.s32 %v966, %v4127
        %v4129 = vrot.slane %v3906, %v4128
        %v4130 = vlaneseq
        %v4131 = vshrl.u32 %v4130, 7
        %v4132 = vsub.s32 %v971, %v4131
        %v4133 = vrot.slane %v3909, %v4132
        %v4134 = vsel %vm976, %v4133, %v4129
        %v4135 = vlaneseq
        %v4136 = vshrl.u32 %v4135, 7
        %v4137 = vsub.s32 %v978, %v4136
        %v4138 = vrot.slane %v3912, %v4137
        %v4139 = vsel %vm983, %v4138, %v4134
        %v4140 = vlaneseq
        %v4141 = vshrl.u32 %v4140, 7
        %v4142 = vsub.s32 %v985, %v4141
        %v4143 = vrot.slane %v3915, %v4142
        %v4144 = vsel %vm990, %v4143, %v4139
        %v4145 = vlaneseq
        %v4146 = vshrl.u32 %v4145, 7
        %v4147 = vsub.s32 %v992, %v4146
        %v4148 = vrot.slane %v3918, %v4147
        %v4149 = vsel %vm997, %v4148, %v4144
        %v4150 = vlaneseq
        %v4151 = vshrl.u32 %v4150, 7
        %v4152 = vsub.s32 %v999, %v4151
        %v4153 = vrot.slane %v3921, %v4152
        %v4154 = vsel %vm1004, %v4153, %v4149
        %v4155 = vlaneseq
        %v4156 = vshrl.u32 %v4155, 7
        %v4157 = vsub.s32 %v1006, %v4156
        %v4158 = vrot.slane %v3924, %v4157
        %v4159 = vsel %vm1011, %v4158, %v4154
        %v4160 = vlaneseq
        %v4161 = vshrl.u32 %v4160, 7
        %v4162 = vsub.s32 %v1013, %v4161
        %v4163 = vrot.slane %v3927, %v4162
        %v4164 = vsel %vm1018, %v4163, %v4159
        %v4165 = vlaneseq
        %v4166 = vshrl.u32 %v4165, 7
        %v4167 = vsub.s32 %v966, %v4166
        %v4168 = vrot.slane %v3930, %v4167
        %v4169 = vlaneseq
        %v4170 = vshrl.u32 %v4169, 7
        %v4171 = vsub.s32 %v971, %v4170
        %v4172 = vrot.slane %v3933, %v4171
        %v4173 = vsel %vm976, %v4172, %v4168
        %v4174 = vlaneseq
        %v4175 = vshrl.u32 %v4174, 7
        %v4176 = vsub.s32 %v978, %v4175
        %v4177 = vrot.slane %v3936, %v4176
        %v4178 = vsel %vm983, %v4177, %v4173
        %v4179 = vlaneseq
        %v4180 = vshrl.u32 %v4179, 7
        %v4181 = vsub.s32 %v985, %v4180
        %v4182 = vrot.slane %v3939, %v4181
        %v4183 = vsel %vm990, %v4182, %v4178
        %v4184 = vlaneseq
        %v4185 = vshrl.u32 %v4184, 7
        %v4186 = vsub.s32 %v992, %v4185
        %v4187 = vrot.slane %v3942, %v4186
        %v4188 = vsel %vm997, %v4187, %v4183
        %v4189 = vlaneseq
        %v4190 = vshrl.u32 %v4189, 7
        %v4191 = vsub.s32 %v999, %v4190
        %v4192 = vrot.slane %v3945, %v4191
        %v4193 = vsel %vm1004, %v4192, %v4188
        %v4194 = vlaneseq
        %v4195 = vshrl.u32 %v4194, 7
        %v4196 = vsub.s32 %v1006, %v4195
        %v4197 = vrot.slane %v3948, %v4196
        %v4198 = vsel %vm1011, %v4197, %v4193
        %v4199 = vlaneseq
        %v4200 = vshrl.u32 %v4199, 7
        %v4201 = vsub.s32 %v1013, %v4200
        %v4202 = vrot.slane %v3951, %v4201
        %v4203 = vsel %vm1018, %v4202, %v4198
        %v4204 = vlaneseq
        %v4205 = vshrl.u32 %v4204, 7
        %v4206 = vsub.s32 %v966, %v4205
        %v4207 = vrot.slane %v3954, %v4206
        %v4208 = vlaneseq
        %v4209 = vshrl.u32 %v4208, 7
        %v4210 = vsub.s32 %v971, %v4209
        %v4211 = vrot.slane %v3957, %v4210
        %v4212 = vsel %vm976, %v4211, %v4207
        %v4213 = vlaneseq
        %v4214 = vshrl.u32 %v4213, 7
        %v4215 = vsub.s32 %v978, %v4214
        %v4216 = vrot.slane %v3960, %v4215
        %v4217 = vsel %vm983, %v4216, %v4212
        %v4218 = vlaneseq
        %v4219 = vshrl.u32 %v4218, 7
        %v4220 = vsub.s32 %v985, %v4219
        %v4221 = vrot.slane %v3963, %v4220
        %v4222 = vsel %vm990, %v4221, %v4217
        %v4223 = vlaneseq
        %v4224 = vshrl.u32 %v4223, 7
        %v4225 = vsub.s32 %v992, %v4224
        %v4226 = vrot.slane %v3966, %v4225
        %v4227 = vsel %vm997, %v4226, %v4222
        %v4228 = vlaneseq
        %v4229 = vshrl.u32 %v4228, 7
        %v4230 = vsub.s32 %v999, %v4229
        %v4231 = vrot.slane %v3969, %v4230
        %v4232 = vsel %vm1004, %v4231, %v4227
        %v4233 = vlaneseq
        %v4234 = vshrl.u32 %v4233, 7
        %v4235 = vsub.s32 %v1006, %v4234
        %v4236 = vrot.slane %v3972, %v4235
        %v4237 = vsel %vm1011, %v4236, %v4232
        %v4238 = vlaneseq
        %v4239 = vshrl.u32 %v4238, 7
        %v4240 = vsub.s32 %v1013, %v4239
        %v4241 = vrot.slane %v3975, %v4240
        %v4242 = vsel %vm1018, %v4241, %v4237
        %v4243 = vlaneseq
        %v4244 = vshrl.u32 %v4243, 7
        %v4245 = vsub.s32 %v966, %v4244
        %v4246 = vrot.slane %v3978, %v4245
        %v4247 = vlaneseq
        %v4248 = vshrl.u32 %v4247, 7
        %v4249 = vsub.s32 %v971, %v4248
        %v4250 = vrot.slane %v3981, %v4249
        %v4251 = vsel %vm976, %v4250, %v4246
        %v4252 = vlaneseq
        %v4253 = vshrl.u32 %v4252, 7
        %v4254 = vsub.s32 %v978, %v4253
        %v4255 = vrot.slane %v3984, %v4254
        %v4256 = vsel %vm983, %v4255, %v4251
        %v4257 = vlaneseq
        %v4258 = vshrl.u32 %v4257, 7
        %v4259 = vsub.s32 %v985, %v4258
        %v4260 = vrot.slane %v3987, %v4259
        %v4261 = vsel %vm990, %v4260, %v4256
        %v4262 = vlaneseq
        %v4263 = vshrl.u32 %v4262, 7
        %v4264 = vsub.s32 %v992, %v4263
        %v4265 = vrot.slane %v3990, %v4264
        %v4266 = vsel %vm997, %v4265, %v4261
        %v4267 = vlaneseq
        %v4268 = vshrl.u32 %v4267, 7
        %v4269 = vsub.s32 %v999, %v4268
        %v4270 = vrot.slane %v3993, %v4269
        %v4271 = vsel %vm1004, %v4270, %v4266
        %v4272 = vlaneseq
        %v4273 = vshrl.u32 %v4272, 7
        %v4274 = vsub.s32 %v1006, %v4273
        %v4275 = vrot.slane %v3996, %v4274
        %v4276 = vsel %vm1011, %v4275, %v4271
        %v4277 = vlaneseq
        %v4278 = vshrl.u32 %v4277, 7
        %v4279 = vsub.s32 %v1013, %v4278
        %v4280 = vrot.slane %v3999, %v4279
        %v4281 = vsel %vm1018, %v4280, %v4276
        %v4282 = vlaneseq
        %v4283 = vshrl.u32 %v4282, 7
        %v4284 = vsub.s32 %v966, %v4283
        %v4285 = vrot.slane %v4002, %v4284
        %v4286 = vlaneseq
        %v4287 = vshrl.u32 %v4286, 7
        %v4288 = vsub.s32 %v971, %v4287
        %v4289 = vrot.slane %v4005, %v4288
        %v4290 = vsel %vm976, %v4289, %v4285
        %v4291 = vlaneseq
        %v4292 = vshrl.u32 %v4291, 7
        %v4293 = vsub.s32 %v978, %v4292
        %v4294 = vrot.slane %v4008, %v4293
        %v4295 = vsel %vm983, %v4294, %v4290
        %v4296 = vlaneseq
        %v4297 = vshrl.u32 %v4296, 7
        %v4298 = vsub.s32 %v985, %v4297
        %v4299 = vrot.slane %v4011, %v4298
        %v4300 = vsel %vm990, %v4299, %v4295
        %v4301 = vlaneseq
        %v4302 = vshrl.u32 %v4301, 7
        %v4303 = vsub.s32 %v992, %v4302
        %v4304 = vrot.slane %v4014, %v4303
        %v4305 = vsel %vm997, %v4304, %v4300
        %v4306 = vlaneseq
        %v4307 = vshrl.u32 %v4306, 7
        %v4308 = vsub.s32 %v999, %v4307
        %v4309 = vrot.slane %v4017, %v4308
        %v4310 = vsel %vm1004, %v4309, %v4305
        %v4311 = vlaneseq
        %v4312 = vshrl.u32 %v4311, 7
        %v4313 = vsub.s32 %v1006, %v4312
        %v4314 = vrot.slane %v4020, %v4313
        %v4315 = vsel %vm1011, %v4314, %v4310
        %v4316 = vlaneseq
        %v4317 = vshrl.u32 %v4316, 7
        %v4318 = vsub.s32 %v1013, %v4317
        %v4319 = vrot.slane %v4023, %v4318
        %v4320 = vsel %vm1018, %v4319, %v4315
        %v4321 = vlaneseq
        %v4322 = vshrl.u32 %v4321, 7
        %v4323 = vsub.s32 %v966, %v4322
        %v4324 = vrot.slane %v4026, %v4323
        %v4325 = vlaneseq
        %v4326 = vshrl.u32 %v4325, 7
        %v4327 = vsub.s32 %v971, %v4326
        %v4328 = vrot.slane %v4029, %v4327
        %v4329 = vsel %vm976, %v4328, %v4324
        %v4330 = vlaneseq
        %v4331 = vshrl.u32 %v4330, 7
        %v4332 = vsub.s32 %v978, %v4331
        %v4333 = vrot.slane %v4032, %v4332
        %v4334 = vsel %vm983, %v4333, %v4329
        %v4335 = vlaneseq
        %v4336 = vshrl.u32 %v4335, 7
        %v4337 = vsub.s32 %v985, %v4336
        %v4338 = vrot.slane %v4035, %v4337
        %v4339 = vsel %vm990, %v4338, %v4334
        %v4340 = vlaneseq
        %v4341 = vshrl.u32 %v4340, 7
        %v4342 = vsub.s32 %v992, %v4341
        %v4343 = vrot.slane %v4038, %v4342
        %v4344 = vsel %vm997, %v4343, %v4339
        %v4345 = vlaneseq
        %v4346 = vshrl.u32 %v4345, 7
        %v4347 = vsub.s32 %v999, %v4346
        %v4348 = vrot.slane %v4041, %v4347
        %v4349 = vsel %vm1004, %v4348, %v4344
        %v4350 = vlaneseq
        %v4351 = vshrl.u32 %v4350, 7
        %v4352 = vsub.s32 %v1006, %v4351
        %v4353 = vrot.slane %v4044, %v4352
        %v4354 = vsel %vm1011, %v4353, %v4349
        %v4355 = vlaneseq
        %v4356 = vshrl.u32 %v4355, 7
        %v4357 = vsub.s32 %v1013, %v4356
        %v4358 = vrot.slane %v4047, %v4357
        %v4359 = vsel %vm1018, %v4358, %v4354
        %v4360 = vsel %vm1293, %v4125, %v4086
        %v4361 = vsel %vm1295, %v4164, %v4360
        %v4362 = vsel %vm1297, %v4203, %v4361
        %v4363 = vsel %vm1299, %v4242, %v4362
        %v4364 = vsel %vm1301, %v4281, %v4363
        %v4365 = vsel %vm1303, %v4320, %v4364
        %v4366 = vsel %vm1305, %v4359, %v4365
        %v4368 = vsel %vm1308, %v4366, 0.0
        %4369 = vadd.xlane.f32.xlu0 %v4368
        %v4370 = vpop.xlane.xlu0 %4369
        %v4371 = vrcp.pop %v4370
        %v4372 = vpack.c.bf16 %v3667, %v3665
        %v4373 = vpack.c.bf16 %v3671, %v3669
        %v4374 = vpack.c.bf16 %v3675, %v3673
        %v4375 = vpack.c.bf16 %v3679, %v3677
        %v4376 = vpack.c.bf16 %v3683, %v3681
        %v4377 = vpack.c.bf16 %v3687, %v3685
        %v4378 = vpack.c.bf16 %v3691, %v3689
        %v4379 = vpack.c.bf16 %v3695, %v3693
        %v4380 = vpack.c.bf16 %v3699, %v3697
        %v4381 = vpack.c.bf16 %v3703, %v3701
        %v4382 = vpack.c.bf16 %v3707, %v3705
        %v4383 = vpack.c.bf16 %v3711, %v3709
        %v4384 = vpack.c.bf16 %v3715, %v3713
        %v4385 = vpack.c.bf16 %v3719, %v3717
        %v4386 = vpack.c.bf16 %v3723, %v3721
        %v4387 = vpack.c.bf16 %v3727, %v3725
        %v4388 = vpack.c.bf16 %v3731, %v3729
        %v4389 = vpack.c.bf16 %v3735, %v3733
        %v4390 = vpack.c.bf16 %v3739, %v3737
        %v4391 = vpack.c.bf16 %v3743, %v3741
        %v4392 = vpack.c.bf16 %v3747, %v3745
        %v4393 = vpack.c.bf16 %v3751, %v3749
        %v4394 = vpack.c.bf16 %v3755, %v3753
        %v4395 = vpack.c.bf16 %v3759, %v3757
        %v4396 = vpack.c.bf16 %v3763, %v3761
        %v4397 = vpack.c.bf16 %v3767, %v3765
        %v4398 = vpack.c.bf16 %v3771, %v3769
        %v4399 = vpack.c.bf16 %v3775, %v3773
        %v4400 = vpack.c.bf16 %v3779, %v3777
        %v4401 = vpack.c.bf16 %v3783, %v3781
        %v4402 = vpack.c.bf16 %v3787, %v3785
        %v4403 = vpack.c.bf16 %v3791, %v3789
        %s4404 = scalar_lea.vmem %s226, 32
        %v4405 = vld [vmem:[%s4404] sm:$0xf]
        %v4406 = vld [vmem:[%s4404 + $0x4] sm:$0xf]
        %v4407 = vld [vmem:[%s4404 + $0x8] sm:$0xf]
        %v4408 = vld [vmem:[%s4404 + $0xc] sm:$0xf]
        %v4409 = vld [vmem:[%s4404 + $0x10] sm:$0xf]
        %v4410 = vld [vmem:[%s4404 + $0x14] sm:$0xf]
        %v4411 = vld [vmem:[%s4404 + $0x18] sm:$0xf]
        %v4412 = vld [vmem:[%s4404 + $0x1c] sm:$0xf]
        %v4445 = vunpack.c.l.b16 %v4372
        %v4446 = vunpack.c.h.b16 %v4372
        %v4447 = vunpack.c.l.b16 %v4373
        %v4448 = vunpack.c.h.b16 %v4373
        %v4449 = vunpack.c.l.b16 %v4374
        %v4450 = vunpack.c.h.b16 %v4374
        %v4451 = vunpack.c.l.b16 %v4375
        %v4452 = vunpack.c.h.b16 %v4375
        %v4453 = vunpack.c.l.b16 %v4376
        %v4454 = vunpack.c.h.b16 %v4376
        %v4455 = vunpack.c.l.b16 %v4377
        %v4456 = vunpack.c.h.b16 %v4377
        %v4457 = vunpack.c.l.b16 %v4378
        %v4458 = vunpack.c.h.b16 %v4378
        %v4459 = vunpack.c.l.b16 %v4379
        %v4460 = vunpack.c.h.b16 %v4379
        %v4461 = vunpack.c.l.b16 %v4380
        %v4462 = vunpack.c.h.b16 %v4380
        %v4463 = vunpack.c.l.b16 %v4381
        %v4464 = vunpack.c.h.b16 %v4381
        %v4465 = vunpack.c.l.b16 %v4382
        %v4466 = vunpack.c.h.b16 %v4382
        %v4467 = vunpack.c.l.b16 %v4383
        %v4468 = vunpack.c.h.b16 %v4383
        %v4469 = vunpack.c.l.b16 %v4384
        %v4470 = vunpack.c.h.b16 %v4384
        %v4471 = vunpack.c.l.b16 %v4385
        %v4472 = vunpack.c.h.b16 %v4385
        %v4473 = vunpack.c.l.b16 %v4386
        %v4474 = vunpack.c.h.b16 %v4386
        %v4475 = vunpack.c.l.b16 %v4387
        %v4476 = vunpack.c.h.b16 %v4387
        %v4477 = vunpack.c.l.b16 %v4388
        %v4478 = vunpack.c.h.b16 %v4388
        %v4479 = vunpack.c.l.b16 %v4389
        %v4480 = vunpack.c.h.b16 %v4389
        %v4481 = vunpack.c.l.b16 %v4390
        %v4482 = vunpack.c.h.b16 %v4390
        %v4483 = vunpack.c.l.b16 %v4391
        %v4484 = vunpack.c.h.b16 %v4391
        %v4485 = vunpack.c.l.b16 %v4392
        %v4486 = vunpack.c.h.b16 %v4392
        %v4487 = vunpack.c.l.b16 %v4393
        %v4488 = vunpack.c.h.b16 %v4393
        %v4489 = vunpack.c.l.b16 %v4394
        %v4490 = vunpack.c.h.b16 %v4394
        %v4491 = vunpack.c.l.b16 %v4395
        %v4492 = vunpack.c.h.b16 %v4395
        %v4493 = vunpack.c.l.b16 %v4396
        %v4494 = vunpack.c.h.b16 %v4396
        %v4495 = vunpack.c.l.b16 %v4397
        %v4496 = vunpack.c.h.b16 %v4397
        %v4497 = vunpack.c.l.b16 %v4398
        %v4498 = vunpack.c.h.b16 %v4398
        %v4499 = vunpack.c.l.b16 %v4399
        %v4500 = vunpack.c.h.b16 %v4399
        %v4501 = vunpack.c.l.b16 %v4400
        %v4502 = vunpack.c.h.b16 %v4400
        %v4503 = vunpack.c.l.b16 %v4401
        %v4504 = vunpack.c.h.b16 %v4401
        %v4505 = vunpack.c.l.b16 %v4402
        %v4506 = vunpack.c.h.b16 %v4402
        %v4507 = vunpack.c.l.b16 %v4403
        %v4508 = vunpack.c.h.b16 %v4403
        %4509 = vset.pattern.permute.xlu0 0
        %4510 = vperm.xlu0 %4509, %v4445
        %v4511 = vpop.permute.xlu0 %4510
        %4512 = vset.pattern.permute.xlu0 0
        %4513 = vperm.xlu0 %4512, %v4446
        %v4514 = vpop.permute.xlu0 %4513
        %4515 = vset.pattern.permute.xlu0 0
        %4516 = vperm.xlu0 %4515, %v4447
        %v4517 = vpop.permute.xlu0 %4516
        %4518 = vset.pattern.permute.xlu0 0
        %4519 = vperm.xlu0 %4518, %v4448
        %v4520 = vpop.permute.xlu0 %4519
        %4521 = vset.pattern.permute.xlu0 0
        %4522 = vperm.xlu0 %4521, %v4449
        %v4523 = vpop.permute.xlu0 %4522
        %4524 = vset.pattern.permute.xlu0 0
        %4525 = vperm.xlu0 %4524, %v4450
        %v4526 = vpop.permute.xlu0 %4525
        %4527 = vset.pattern.permute.xlu0 0
        %4528 = vperm.xlu0 %4527, %v4451
        %v4529 = vpop.permute.xlu0 %4528
        %4530 = vset.pattern.permute.xlu0 0
        %4531 = vperm.xlu0 %4530, %v4452
        %v4532 = vpop.permute.xlu0 %4531
        %4533 = vset.pattern.permute.xlu0 0
        %4534 = vperm.xlu0 %4533, %v4453
        %v4535 = vpop.permute.xlu0 %4534
        %4536 = vset.pattern.permute.xlu0 0
        %4537 = vperm.xlu0 %4536, %v4454
        %v4538 = vpop.permute.xlu0 %4537
        %4539 = vset.pattern.permute.xlu0 0
        %4540 = vperm.xlu0 %4539, %v4455
        %v4541 = vpop.permute.xlu0 %4540
        %4542 = vset.pattern.permute.xlu0 0
        %4543 = vperm.xlu0 %4542, %v4456
        %v4544 = vpop.permute.xlu0 %4543
        %4545 = vset.pattern.permute.xlu0 0
        %4546 = vperm.xlu0 %4545, %v4457
        %v4547 = vpop.permute.xlu0 %4546
        %4548 = vset.pattern.permute.xlu0 0
        %4549 = vperm.xlu0 %4548, %v4458
        %v4550 = vpop.permute.xlu0 %4549
        %4551 = vset.pattern.permute.xlu0 0
        %4552 = vperm.xlu0 %4551, %v4459
        %v4553 = vpop.permute.xlu0 %4552
        %4554 = vset.pattern.permute.xlu0 0
        %4555 = vperm.xlu0 %4554, %v4460
        %v4556 = vpop.permute.xlu0 %4555
        %4557 = vset.pattern.permute.xlu0 0
        %4558 = vperm.xlu0 %4557, %v4461
        %v4559 = vpop.permute.xlu0 %4558
        %4560 = vset.pattern.permute.xlu0 0
        %4561 = vperm.xlu0 %4560, %v4462
        %v4562 = vpop.permute.xlu0 %4561
        %4563 = vset.pattern.permute.xlu0 0
        %4564 = vperm.xlu0 %4563, %v4463
        %v4565 = vpop.permute.xlu0 %4564
        %4566 = vset.pattern.permute.xlu0 0
        %4567 = vperm.xlu0 %4566, %v4464
        %v4568 = vpop.permute.xlu0 %4567
        %4569 = vset.pattern.permute.xlu0 0
        %4570 = vperm.xlu0 %4569, %v4465
        %v4571 = vpop.permute.xlu0 %4570
        %4572 = vset.pattern.permute.xlu0 0
        %4573 = vperm.xlu0 %4572, %v4466
        %v4574 = vpop.permute.xlu0 %4573
        %4575 = vset.pattern.permute.xlu0 0
        %4576 = vperm.xlu0 %4575, %v4467
        %v4577 = vpop.permute.xlu0 %4576
        %4578 = vset.pattern.permute.xlu0 0
        %4579 = vperm.xlu0 %4578, %v4468
        %v4580 = vpop.permute.xlu0 %4579
        %4581 = vset.pattern.permute.xlu0 0
        %4582 = vperm.xlu0 %4581, %v4469
        %v4583 = vpop.permute.xlu0 %4582
        %4584 = vset.pattern.permute.xlu0 0
        %4585 = vperm.xlu0 %4584, %v4470
        %v4586 = vpop.permute.xlu0 %4585
        %4587 = vset.pattern.permute.xlu0 0
        %4588 = vperm.xlu0 %4587, %v4471
        %v4589 = vpop.permute.xlu0 %4588
        %4590 = vset.pattern.permute.xlu0 0
        %4591 = vperm.xlu0 %4590, %v4472
        %v4592 = vpop.permute.xlu0 %4591
        %4593 = vset.pattern.permute.xlu0 0
        %4594 = vperm.xlu0 %4593, %v4473
        %v4595 = vpop.permute.xlu0 %4594
        %4596 = vset.pattern.permute.xlu0 0
        %4597 = vperm.xlu0 %4596, %v4474
        %v4598 = vpop.permute.xlu0 %4597
        %4599 = vset.pattern.permute.xlu0 0
        %4600 = vperm.xlu0 %4599, %v4475
        %v4601 = vpop.permute.xlu0 %4600
        %4602 = vset.pattern.permute.xlu0 0
        %4603 = vperm.xlu0 %4602, %v4476
        %v4604 = vpop.permute.xlu0 %4603
        %4605 = vset.pattern.permute.xlu0 0
        %4606 = vperm.xlu0 %4605, %v4477
        %v4607 = vpop.permute.xlu0 %4606
        %4608 = vset.pattern.permute.xlu0 0
        %4609 = vperm.xlu0 %4608, %v4478
        %v4610 = vpop.permute.xlu0 %4609
        %4611 = vset.pattern.permute.xlu0 0
        %4612 = vperm.xlu0 %4611, %v4479
        %v4613 = vpop.permute.xlu0 %4612
        %4614 = vset.pattern.permute.xlu0 0
        %4615 = vperm.xlu0 %4614, %v4480
        %v4616 = vpop.permute.xlu0 %4615
        %4617 = vset.pattern.permute.xlu0 0
        %4618 = vperm.xlu0 %4617, %v4481
        %v4619 = vpop.permute.xlu0 %4618
        %4620 = vset.pattern.permute.xlu0 0
        %4621 = vperm.xlu0 %4620, %v4482
        %v4622 = vpop.permute.xlu0 %4621
        %4623 = vset.pattern.permute.xlu0 0
        %4624 = vperm.xlu0 %4623, %v4483
        %v4625 = vpop.permute.xlu0 %4624
        %4626 = vset.pattern.permute.xlu0 0
        %4627 = vperm.xlu0 %4626, %v4484
        %v4628 = vpop.permute.xlu0 %4627
        %4629 = vset.pattern.permute.xlu0 0
        %4630 = vperm.xlu0 %4629, %v4485
        %v4631 = vpop.permute.xlu0 %4630
        %4632 = vset.pattern.permute.xlu0 0
        %4633 = vperm.xlu0 %4632, %v4486
        %v4634 = vpop.permute.xlu0 %4633
        %4635 = vset.pattern.permute.xlu0 0
        %4636 = vperm.xlu0 %4635, %v4487
        %v4637 = vpop.permute.xlu0 %4636
        %4638 = vset.pattern.permute.xlu0 0
        %4639 = vperm.xlu0 %4638, %v4488
        %v4640 = vpop.permute.xlu0 %4639
        %4641 = vset.pattern.permute.xlu0 0
        %4642 = vperm.xlu0 %4641, %v4489
        %v4643 = vpop.permute.xlu0 %4642
        %4644 = vset.pattern.permute.xlu0 0
        %4645 = vperm.xlu0 %4644, %v4490
        %v4646 = vpop.permute.xlu0 %4645
        %4647 = vset.pattern.permute.xlu0 0
        %4648 = vperm.xlu0 %4647, %v4491
        %v4649 = vpop.permute.xlu0 %4648
        %4650 = vset.pattern.permute.xlu0 0
        %4651 = vperm.xlu0 %4650, %v4492
        %v4652 = vpop.permute.xlu0 %4651
        %4653 = vset.pattern.permute.xlu0 0
        %4654 = vperm.xlu0 %4653, %v4493
        %v4655 = vpop.permute.xlu0 %4654
        %4656 = vset.pattern.permute.xlu0 0
        %4657 = vperm.xlu0 %4656, %v4494
        %v4658 = vpop.permute.xlu0 %4657
        %4659 = vset.pattern.permute.xlu0 0
        %4660 = vperm.xlu0 %4659, %v4495
        %v4661 = vpop.permute.xlu0 %4660
        %4662 = vset.pattern.permute.xlu0 0
        %4663 = vperm.xlu0 %4662, %v4496
        %v4664 = vpop.permute.xlu0 %4663
        %4665 = vset.pattern.permute.xlu0 0
        %4666 = vperm.xlu0 %4665, %v4497
        %v4667 = vpop.permute.xlu0 %4666
        %4668 = vset.pattern.permute.xlu0 0
        %4669 = vperm.xlu0 %4668, %v4498
        %v4670 = vpop.permute.xlu0 %4669
        %4671 = vset.pattern.permute.xlu0 0
        %4672 = vperm.xlu0 %4671, %v4499
        %v4673 = vpop.permute.xlu0 %4672
        %4674 = vset.pattern.permute.xlu0 0
        %4675 = vperm.xlu0 %4674, %v4500
        %v4676 = vpop.permute.xlu0 %4675
        %4677 = vset.pattern.permute.xlu0 0
        %4678 = vperm.xlu0 %4677, %v4501
        %v4679 = vpop.permute.xlu0 %4678
        %4680 = vset.pattern.permute.xlu0 0
        %4681 = vperm.xlu0 %4680, %v4502
        %v4682 = vpop.permute.xlu0 %4681
        %4683 = vset.pattern.permute.xlu0 0
        %4684 = vperm.xlu0 %4683, %v4503
        %v4685 = vpop.permute.xlu0 %4684
        %4686 = vset.pattern.permute.xlu0 0
        %4687 = vperm.xlu0 %4686, %v4504
        %v4688 = vpop.permute.xlu0 %4687
        %4689 = vset.pattern.permute.xlu0 0
        %4690 = vperm.xlu0 %4689, %v4505
        %v4691 = vpop.permute.xlu0 %4690
        %4692 = vset.pattern.permute.xlu0 0
        %4693 = vperm.xlu0 %4692, %v4506
        %v4694 = vpop.permute.xlu0 %4693
        %4695 = vset.pattern.permute.xlu0 0
        %4696 = vperm.xlu0 %4695, %v4507
        %v4697 = vpop.permute.xlu0 %4696
        %4698 = vset.pattern.permute.xlu0 0
        %4699 = vperm.xlu0 %4698, %v4508
        %v4700 = vpop.permute.xlu0 %4699
        %v4701 = vlaneseq
        %v4702 = vshrl.u32 %v4701, 7
        %v4703 = vsub.s32 %v966, %v4702
        %v4704 = vrot.slane %v4511, %v4703
        %v4705 = vlaneseq
        %v4706 = vshrl.u32 %v4705, 7
        %v4707 = vsub.s32 %v971, %v4706
        %v4708 = vrot.slane %v4514, %v4707
        %v4709 = vsel %vm976, %v4708, %v4704
        %v4710 = vlaneseq
        %v4711 = vshrl.u32 %v4710, 7
        %v4712 = vsub.s32 %v978, %v4711
        %v4713 = vrot.slane %v4517, %v4712
        %v4714 = vsel %vm983, %v4713, %v4709
        %v4715 = vlaneseq
        %v4716 = vshrl.u32 %v4715, 7
        %v4717 = vsub.s32 %v985, %v4716
        %v4718 = vrot.slane %v4520, %v4717
        %v4719 = vsel %vm990, %v4718, %v4714
        %v4720 = vlaneseq
        %v4721 = vshrl.u32 %v4720, 7
        %v4722 = vsub.s32 %v992, %v4721
        %v4723 = vrot.slane %v4523, %v4722
        %v4724 = vsel %vm997, %v4723, %v4719
        %v4725 = vlaneseq
        %v4726 = vshrl.u32 %v4725, 7
        %v4727 = vsub.s32 %v999, %v4726
        %v4728 = vrot.slane %v4526, %v4727
        %v4729 = vsel %vm1004, %v4728, %v4724
        %v4730 = vlaneseq
        %v4731 = vshrl.u32 %v4730, 7
        %v4732 = vsub.s32 %v1006, %v4731
        %v4733 = vrot.slane %v4529, %v4732
        %v4734 = vsel %vm1011, %v4733, %v4729
        %v4735 = vlaneseq
        %v4736 = vshrl.u32 %v4735, 7
        %v4737 = vsub.s32 %v1013, %v4736
        %v4738 = vrot.slane %v4532, %v4737
        %v4739 = vsel %vm1018, %v4738, %v4734
        %v4740 = vlaneseq
        %v4741 = vshrl.u32 %v4740, 7
        %v4742 = vsub.s32 %v966, %v4741
        %v4743 = vrot.slane %v4535, %v4742
        %v4744 = vlaneseq
        %v4745 = vshrl.u32 %v4744, 7
        %v4746 = vsub.s32 %v971, %v4745
        %v4747 = vrot.slane %v4538, %v4746
        %v4748 = vsel %vm976, %v4747, %v4743
        %v4749 = vlaneseq
        %v4750 = vshrl.u32 %v4749, 7
        %v4751 = vsub.s32 %v978, %v4750
        %v4752 = vrot.slane %v4541, %v4751
        %v4753 = vsel %vm983, %v4752, %v4748
        %v4754 = vlaneseq
        %v4755 = vshrl.u32 %v4754, 7
        %v4756 = vsub.s32 %v985, %v4755
        %v4757 = vrot.slane %v4544, %v4756
        %v4758 = vsel %vm990, %v4757, %v4753
        %v4759 = vlaneseq
        %v4760 = vshrl.u32 %v4759, 7
        %v4761 = vsub.s32 %v992, %v4760
        %v4762 = vrot.slane %v4547, %v4761
        %v4763 = vsel %vm997, %v4762, %v4758
        %v4764 = vlaneseq
        %v4765 = vshrl.u32 %v4764, 7
        %v4766 = vsub.s32 %v999, %v4765
        %v4767 = vrot.slane %v4550, %v4766
        %v4768 = vsel %vm1004, %v4767, %v4763
        %v4769 = vlaneseq
        %v4770 = vshrl.u32 %v4769, 7
        %v4771 = vsub.s32 %v1006, %v4770
        %v4772 = vrot.slane %v4553, %v4771
        %v4773 = vsel %vm1011, %v4772, %v4768
        %v4774 = vlaneseq
        %v4775 = vshrl.u32 %v4774, 7
        %v4776 = vsub.s32 %v1013, %v4775
        %v4777 = vrot.slane %v4556, %v4776
        %v4778 = vsel %vm1018, %v4777, %v4773
        %v4779 = vlaneseq
        %v4780 = vshrl.u32 %v4779, 7
        %v4781 = vsub.s32 %v966, %v4780
        %v4782 = vrot.slane %v4559, %v4781
        %v4783 = vlaneseq
        %v4784 = vshrl.u32 %v4783, 7
        %v4785 = vsub.s32 %v971, %v4784
        %v4786 = vrot.slane %v4562, %v4785
        %v4787 = vsel %vm976, %v4786, %v4782
        %v4788 = vlaneseq
        %v4789 = vshrl.u32 %v4788, 7
        %v4790 = vsub.s32 %v978, %v4789
        %v4791 = vrot.slane %v4565, %v4790
        %v4792 = vsel %vm983, %v4791, %v4787
        %v4793 = vlaneseq
        %v4794 = vshrl.u32 %v4793, 7
        %v4795 = vsub.s32 %v985, %v4794
        %v4796 = vrot.slane %v4568, %v4795
        %v4797 = vsel %vm990, %v4796, %v4792
        %v4798 = vlaneseq
        %v4799 = vshrl.u32 %v4798, 7
        %v4800 = vsub.s32 %v992, %v4799
        %v4801 = vrot.slane %v4571, %v4800
        %v4802 = vsel %vm997, %v4801, %v4797
        %v4803 = vlaneseq
        %v4804 = vshrl.u32 %v4803, 7
        %v4805 = vsub.s32 %v999, %v4804
        %v4806 = vrot.slane %v4574, %v4805
        %v4807 = vsel %vm1004, %v4806, %v4802
        %v4808 = vlaneseq
        %v4809 = vshrl.u32 %v4808, 7
        %v4810 = vsub.s32 %v1006, %v4809
        %v4811 = vrot.slane %v4577, %v4810
        %v4812 = vsel %vm1011, %v4811, %v4807
        %v4813 = vlaneseq
        %v4814 = vshrl.u32 %v4813, 7
        %v4815 = vsub.s32 %v1013, %v4814
        %v4816 = vrot.slane %v4580, %v4815
        %v4817 = vsel %vm1018, %v4816, %v4812
        %v4818 = vlaneseq
        %v4819 = vshrl.u32 %v4818, 7
        %v4820 = vsub.s32 %v966, %v4819
        %v4821 = vrot.slane %v4583, %v4820
        %v4822 = vlaneseq
        %v4823 = vshrl.u32 %v4822, 7
        %v4824 = vsub.s32 %v971, %v4823
        %v4825 = vrot.slane %v4586, %v4824
        %v4826 = vsel %vm976, %v4825, %v4821
        %v4827 = vlaneseq
        %v4828 = vshrl.u32 %v4827, 7
        %v4829 = vsub.s32 %v978, %v4828
        %v4830 = vrot.slane %v4589, %v4829
        %v4831 = vsel %vm983, %v4830, %v4826
        %v4832 = vlaneseq
        %v4833 = vshrl.u32 %v4832, 7
        %v4834 = vsub.s32 %v985, %v4833
        %v4835 = vrot.slane %v4592, %v4834
        %v4836 = vsel %vm990, %v4835, %v4831
        %v4837 = vlaneseq
        %v4838 = vshrl.u32 %v4837, 7
        %v4839 = vsub.s32 %v992, %v4838
        %v4840 = vrot.slane %v4595, %v4839
        %v4841 = vsel %vm997, %v4840, %v4836
        %v4842 = vlaneseq
        %v4843 = vshrl.u32 %v4842, 7
        %v4844 = vsub.s32 %v999, %v4843
        %v4845 = vrot.slane %v4598, %v4844
        %v4846 = vsel %vm1004, %v4845, %v4841
        %v4847 = vlaneseq
        %v4848 = vshrl.u32 %v4847, 7
        %v4849 = vsub.s32 %v1006, %v4848
        %v4850 = vrot.slane %v4601, %v4849
        %v4851 = vsel %vm1011, %v4850, %v4846
        %v4852 = vlaneseq
        %v4853 = vshrl.u32 %v4852, 7
        %v4854 = vsub.s32 %v1013, %v4853
        %v4855 = vrot.slane %v4604, %v4854
        %v4856 = vsel %vm1018, %v4855, %v4851
        %v4857 = vlaneseq
        %v4858 = vshrl.u32 %v4857, 7
        %v4859 = vsub.s32 %v966, %v4858
        %v4860 = vrot.slane %v4607, %v4859
        %v4861 = vlaneseq
        %v4862 = vshrl.u32 %v4861, 7
        %v4863 = vsub.s32 %v971, %v4862
        %v4864 = vrot.slane %v4610, %v4863
        %v4865 = vsel %vm976, %v4864, %v4860
        %v4866 = vlaneseq
        %v4867 = vshrl.u32 %v4866, 7
        %v4868 = vsub.s32 %v978, %v4867
        %v4869 = vrot.slane %v4613, %v4868
        %v4870 = vsel %vm983, %v4869, %v4865
        %v4871 = vlaneseq
        %v4872 = vshrl.u32 %v4871, 7
        %v4873 = vsub.s32 %v985, %v4872
        %v4874 = vrot.slane %v4616, %v4873
        %v4875 = vsel %vm990, %v4874, %v4870
        %v4876 = vlaneseq
        %v4877 = vshrl.u32 %v4876, 7
        %v4878 = vsub.s32 %v992, %v4877
        %v4879 = vrot.slane %v4619, %v4878
        %v4880 = vsel %vm997, %v4879, %v4875
        %v4881 = vlaneseq
        %v4882 = vshrl.u32 %v4881, 7
        %v4883 = vsub.s32 %v999, %v4882
        %v4884 = vrot.slane %v4622, %v4883
        %v4885 = vsel %vm1004, %v4884, %v4880
        %v4886 = vlaneseq
        %v4887 = vshrl.u32 %v4886, 7
        %v4888 = vsub.s32 %v1006, %v4887
        %v4889 = vrot.slane %v4625, %v4888
        %v4890 = vsel %vm1011, %v4889, %v4885
        %v4891 = vlaneseq
        %v4892 = vshrl.u32 %v4891, 7
        %v4893 = vsub.s32 %v1013, %v4892
        %v4894 = vrot.slane %v4628, %v4893
        %v4895 = vsel %vm1018, %v4894, %v4890
        %v4896 = vlaneseq
        %v4897 = vshrl.u32 %v4896, 7
        %v4898 = vsub.s32 %v966, %v4897
        %v4899 = vrot.slane %v4631, %v4898
        %v4900 = vlaneseq
        %v4901 = vshrl.u32 %v4900, 7
        %v4902 = vsub.s32 %v971, %v4901
        %v4903 = vrot.slane %v4634, %v4902
        %v4904 = vsel %vm976, %v4903, %v4899
        %v4905 = vlaneseq
        %v4906 = vshrl.u32 %v4905, 7
        %v4907 = vsub.s32 %v978, %v4906
        %v4908 = vrot.slane %v4637, %v4907
        %v4909 = vsel %vm983, %v4908, %v4904
        %v4910 = vlaneseq
        %v4911 = vshrl.u32 %v4910, 7
        %v4912 = vsub.s32 %v985, %v4911
        %v4913 = vrot.slane %v4640, %v4912
        %v4914 = vsel %vm990, %v4913, %v4909
        %v4915 = vlaneseq
        %v4916 = vshrl.u32 %v4915, 7
        %v4917 = vsub.s32 %v992, %v4916
        %v4918 = vrot.slane %v4643, %v4917
        %v4919 = vsel %vm997, %v4918, %v4914
        %v4920 = vlaneseq
        %v4921 = vshrl.u32 %v4920, 7
        %v4922 = vsub.s32 %v999, %v4921
        %v4923 = vrot.slane %v4646, %v4922
        %v4924 = vsel %vm1004, %v4923, %v4919
        %v4925 = vlaneseq
        %v4926 = vshrl.u32 %v4925, 7
        %v4927 = vsub.s32 %v1006, %v4926
        %v4928 = vrot.slane %v4649, %v4927
        %v4929 = vsel %vm1011, %v4928, %v4924
        %v4930 = vlaneseq
        %v4931 = vshrl.u32 %v4930, 7
        %v4932 = vsub.s32 %v1013, %v4931
        %v4933 = vrot.slane %v4652, %v4932
        %v4934 = vsel %vm1018, %v4933, %v4929
        %v4935 = vlaneseq
        %v4936 = vshrl.u32 %v4935, 7
        %v4937 = vsub.s32 %v966, %v4936
        %v4938 = vrot.slane %v4655, %v4937
        %v4939 = vlaneseq
        %v4940 = vshrl.u32 %v4939, 7
        %v4941 = vsub.s32 %v971, %v4940
        %v4942 = vrot.slane %v4658, %v4941
        %v4943 = vsel %vm976, %v4942, %v4938
        %v4944 = vlaneseq
        %v4945 = vshrl.u32 %v4944, 7
        %v4946 = vsub.s32 %v978, %v4945
        %v4947 = vrot.slane %v4661, %v4946
        %v4948 = vsel %vm983, %v4947, %v4943
        %v4949 = vlaneseq
        %v4950 = vshrl.u32 %v4949, 7
        %v4951 = vsub.s32 %v985, %v4950
        %v4952 = vrot.slane %v4664, %v4951
        %v4953 = vsel %vm990, %v4952, %v4948
        %v4954 = vlaneseq
        %v4955 = vshrl.u32 %v4954, 7
        %v4956 = vsub.s32 %v992, %v4955
        %v4957 = vrot.slane %v4667, %v4956
        %v4958 = vsel %vm997, %v4957, %v4953
        %v4959 = vlaneseq
        %v4960 = vshrl.u32 %v4959, 7
        %v4961 = vsub.s32 %v999, %v4960
        %v4962 = vrot.slane %v4670, %v4961
        %v4963 = vsel %vm1004, %v4962, %v4958
        %v4964 = vlaneseq
        %v4965 = vshrl.u32 %v4964, 7
        %v4966 = vsub.s32 %v1006, %v4965
        %v4967 = vrot.slane %v4673, %v4966
        %v4968 = vsel %vm1011, %v4967, %v4963
        %v4969 = vlaneseq
        %v4970 = vshrl.u32 %v4969, 7
        %v4971 = vsub.s32 %v1013, %v4970
        %v4972 = vrot.slane %v4676, %v4971
        %v4973 = vsel %vm1018, %v4972, %v4968
        %v4974 = vlaneseq
        %v4975 = vshrl.u32 %v4974, 7
        %v4976 = vsub.s32 %v966, %v4975
        %v4977 = vrot.slane %v4679, %v4976
        %v4978 = vlaneseq
        %v4979 = vshrl.u32 %v4978, 7
        %v4980 = vsub.s32 %v971, %v4979
        %v4981 = vrot.slane %v4682, %v4980
        %v4982 = vsel %vm976, %v4981, %v4977
        %v4983 = vlaneseq
        %v4984 = vshrl.u32 %v4983, 7
        %v4985 = vsub.s32 %v978, %v4984
        %v4986 = vrot.slane %v4685, %v4985
        %v4987 = vsel %vm983, %v4986, %v4982
        %v4988 = vlaneseq
        %v4989 = vshrl.u32 %v4988, 7
        %v4990 = vsub.s32 %v985, %v4989
        %v4991 = vrot.slane %v4688, %v4990
        %v4992 = vsel %vm990, %v4991, %v4987
        %v4993 = vlaneseq
        %v4994 = vshrl.u32 %v4993, 7
        %v4995 = vsub.s32 %v992, %v4994
        %v4996 = vrot.slane %v4691, %v4995
        %v4997 = vsel %vm997, %v4996, %v4992
        %v4998 = vlaneseq
        %v4999 = vshrl.u32 %v4998, 7
        %v5000 = vsub.s32 %v999, %v4999
        %v5001 = vrot.slane %v4694, %v5000
        %v5002 = vsel %vm1004, %v5001, %v4997
        %v5003 = vlaneseq
        %v5004 = vshrl.u32 %v5003, 7
        %v5005 = vsub.s32 %v1006, %v5004
        %v5006 = vrot.slane %v4697, %v5005
        %v5007 = vsel %vm1011, %v5006, %v5002
        %v5008 = vlaneseq
        %v5009 = vshrl.u32 %v5008, 7
        %v5010 = vsub.s32 %v1013, %v5009
        %v5011 = vrot.slane %v4700, %v5010
        %v5012 = vsel %vm1018, %v5011, %v5007
        %v5013 = vsel %vm1293, %v4778, %v4739
        %v5014 = vsel %vm1295, %v4817, %v5013
        %v5015 = vsel %vm1297, %v4856, %v5014
        %v5016 = vsel %vm1299, %v4895, %v5015
        %v5017 = vsel %vm1301, %v4934, %v5016
        %v5018 = vsel %vm1303, %v4973, %v5017
        %v5019 = vsel %vm1305, %v5012, %v5018
        %v5020 = vpack.c.b16 %v5019, %v5019
        %v5029 = vunpack.c.l.b16 %v4405
        %v5030 = vunpack.c.l.b16 %v4406
        %v5031 = vunpack.c.l.b16 %v4407
        %v5032 = vunpack.c.l.b16 %v4408
        %v5033 = vunpack.c.l.b16 %v4409
        %v5034 = vunpack.c.l.b16 %v4410
        %v5035 = vunpack.c.l.b16 %v4411
        %v5036 = vunpack.c.l.b16 %v4412
        %v5037 = vpack.c.b16 %v5030, %v5029
        %v5038 = vpack.c.b16 %v5032, %v5031
        %v5039 = vpack.c.b16 %v5034, %v5033
        %v5040 = vpack.c.b16 %v5036, %v5035
        %v5046 = vsel %vm1308, %v5020, 0
        %5048 = vmatprep.subr.bf16.mxu0 0
        %5049 = vmatpush1.bf16.msra.mxu0 %v5037
        %5050 = vmatprep.subr.bf16.mxu0 0
        %5051 = vmatpush1.bf16.msra.mxu0 %v5038
        %5052 = vmatprep.subr.bf16.mxu0 0
        %5053 = vmatpush1.bf16.msra.mxu0 %v5039
        %5054 = vmatprep.subr.bf16.mxu0 0
        %5055 = vmatpush1.bf16.msra.mxu0 %v5040
        %5056 = vmatprep.subr.bf16.mxu0 0
        %5057 = vmatpush1.bf16.msra.mxu0 0
        %5058 = vmatprep.subr.bf16.mxu0 0
        %5059 = vmatpush1.bf16.msra.mxu0 0
        %5060 = vmatprep.subr.bf16.mxu0 0
        %5061 = vmatpush1.bf16.msra.mxu0 0
        %5062 = vmatprep.subr.bf16.mxu0 0
        %5063 = vmatpush1.bf16.msra.mxu0 0
        %5064 = vmatprep.subr.bf16.mxu0 0
        %5065 = vmatpush1.bf16.msra.mxu0 0
        %5066 = vmatprep.subr.bf16.mxu0 0
        %5067 = vmatpush1.bf16.msra.mxu0 0
        %5068 = vmatprep.subr.bf16.mxu0 0
        %5069 = vmatpush1.bf16.msra.mxu0 0
        %5070 = vmatprep.subr.bf16.mxu0 0
        %5071 = vmatpush1.bf16.msra.mxu0 0
        %5072 = vmatprep.subr.bf16.mxu0 0
        %5073 = vmatpush1.bf16.msra.mxu0 0
        %5074 = vmatprep.subr.bf16.mxu0 0
        %5075 = vmatpush1.bf16.msra.mxu0 0
        %5076 = vmatprep.subr.bf16.mxu0 0
        %5077 = vmatpush1.bf16.msra.mxu0 0
        %5078 = vmatprep.subr.bf16.mxu0 0
        %5079 = vmatpush1.bf16.msra.mxu0 0
        %5080 = vmatprep.mubr.bf16.mxu0 0
        %5081 = vmatmul.mubr.bf16.gmra.mrb[0].mxu0 %v5046
        %v5082 = vpop.f32.mrb[0].mxu0
        %v5083 = vadd.f32 0.0, %v5082
        %v5084 = vpop.f32.mrb[0].mxu0
        %v5085 = vpop.f32.mrb[0].mxu0
        %v5086 = vpop.f32.mrb[0].mxu0
        %5087 = vdwg.mxu0
        %v5088 = vmul.f32 %v5083, %v4371
        %s5089 = scalar_lea.vmem %s220, 8 [#allocation3]
        %5090 = vst.msk [vmem:[%s5089] sm:$0xff] %vm2841, %v5088
        %s5091 = sand.u32 %s134, 1
        %s5092 = scalar_lea.sflag [#allocation4], %s5091
        %s5093 = sand.u32 %s134, 1
        %s5094 = smul.addr %s5093, 16
        %s5095 = scalar_lea.vmem [#allocation3], %s5094
        // Predicated region
        $region41: #{tpu_custom_call.1} parent=35 // pred_check
          %p5096 = pneg %p144
        $region42: #{tpu_custom_call.1} parent=35 // pred_check_branch
          %5098 = sbr.rel (%p5096) target = $region44
        $region43: #{tpu_custom_call.1} parent=35 // pred_region
          %s5099 = smul.u32 2, %s22
          %s5101 = ssub.s32 256, 256
          %5102 = vsyncadd %s5092, %s5101
          %s5103 = smul.addr %s5099, 2
          %s5104 = sadd.s32 %s23, %s5103
          %s5105 = smul.addr %s5104, 128
          %s5106 = scalar_lea.hbm %s4, %s5105
          %s5107 = sshll.u32 %s5095, 4
          %s5108 = int_to_ptr.vmem [resolvable:$true] %s5107
          %5113 = dma.vmem_to_hbm [thread:$0]  %s5108, 256, %s5106, %s5092, 128, 256, 8
        $region44: #{tpu_custom_call.1} parent=35 // pred_fallthru
          _
      $region36: #{tpu_custom_call.1} parent=5 // pred_fallthru
        _
      %p5114 = scmp.le.s32.totalorder 2, %s13
      // Predicated region
      $region45: #{tpu_custom_call.1} parent=5 // pred_check
        %p5115 = pneg %p5114
      $region46: #{tpu_custom_call.1} parent=5 // pred_check_branch
        %5117 = sbr.rel (%p5115) target = $region48
      $region47: #{tpu_custom_call.1} parent=5 // pred_region
        %s5118 = ssub.s32 %s13, 2
        // Predicated region
        $region49: #{tpu_custom_call.1} parent=47 // pred_check
          %p5119 = pneg %p150
        $region50: #{tpu_custom_call.1} parent=47 // pred_check_branch
          %5121 = sbr.rel (%p5119) target = $region52
        $region51: #{tpu_custom_call.1} parent=47 // pred_region
          %s5122 = sand.u32 %s135, 1
          %s5123 = scalar_lea.sflag [#allocation4], %s5122
          %s5124 = sand.u32 %s135, 1
          %s5125 = smul.addr %s5124, 16
          %s5126 = scalar_lea.vmem [#allocation3], %s5125
          %5127 = dma.done %s5123, 256
        $region52: #{tpu_custom_call.1} parent=47 // pred_fallthru
          _
      $region48: #{tpu_custom_call.1} parent=5 // pred_fallthru
        _
    $region6: #{tpu_custom_call.1} parent=1 // loop_footer
      %s17 = sadd.s32 1, %s13
    $region7: #{tpu_custom_call.1} parent=1 // loop_footer_branch
      %12 = sbr.rel target = $region3
    $region8: #{tpu_custom_call.1} parent=1 // loop_exit
      _
    %5128 = vsyncpa [#allocation4], 1
    %s5129 = scalar_lea.sflag [#allocation4], 1
    %5130 = vsyncpa %s5129, 1

</llo_original>
